<compile_context>
chip_gen: v7x
topology: tpu7x:2x2x1
jax: 0.10.0
libtpu: 0.0.40
codegen_flags: <defaults>
</compile_context>

<pallas_src>
import math

import jax
import jax.numpy as jnp
import numpy as np
from jax import lax
from jax.experimental import pallas as pl
from jax.experimental.pallas import tpu as pltpu


_VMEM_LIMIT = 32 * 1024 * 1024   # safe on v5e/v6e (128 MiB) and v7x (64 MiB physical)
_TM = 512                        # conv matmul row-tile (multiple of 8)


def _round_up(x, m):
    return (x + m - 1) // m * m


# ----------------------------- Pallas kernels ------------------------------ #

def _matmul_bias_relu_kernel(p_ref, w_ref, b_ref, o_ref):
    # p_ref: (tm, K) bf16 im2col patches; w_ref: (K, Cout) bf16 (VMEM-resident);
    # b_ref: (1, Cout) f32; o_ref: (tm, Cout) bf16.  One MXU matmul per tile.
    acc = jnp.dot(p_ref[...], w_ref[...], preferred_element_type=jnp.float32)
    o_ref[...] = jnp.maximum(acc + b_ref[...], 0.0).astype(o_ref.dtype)


def matmul_bias_relu(patches, wmat, bias, out_dtype=jnp.bfloat16, tm=_TM):
    M, K = patches.shape
    Cout = wmat.shape[1]
    tm_eff = min(tm, _round_up(M, 8))
    Mp = _round_up(M, tm_eff)
    if Mp != M:
        patches = jnp.pad(patches, ((0, Mp - M), (0, 0)))
    grid = (Mp // tm_eff,)

    flops = 2 * M * K * Cout
    bytes_accessed = (Mp * K * patches.dtype.itemsize
                      + K * Cout * wmat.dtype.itemsize
                      + Mp * Cout * np.dtype(out_dtype).itemsize)

    out = pl.pallas_call(
        _matmul_bias_relu_kernel,
        out_shape=jax.ShapeDtypeStruct((Mp, Cout), out_dtype),
        grid=grid,
        in_specs=[
            pl.BlockSpec((tm_eff, K), lambda i: (i, 0)),
            pl.BlockSpec((K, Cout), lambda i: (0, 0)),   # weight stays resident
            pl.BlockSpec((1, Cout), lambda i: (0, 0)),
        ],
        out_specs=pl.BlockSpec((tm_eff, Cout), lambda i: (i, 0)),
        compiler_params=pltpu.CompilerParams(
            dimension_semantics=("parallel",),
            vmem_limit_bytes=_VMEM_LIMIT),
        cost_estimate=pl.CostEstimate(flops=flops, transcendentals=0,
                                      bytes_accessed=bytes_accessed),
    )(patches, wmat, bias)
    if Mp != M:
        out = out[:M]
    return out


def _maxpool2x2_kernel(x_ref, o_ref):
    # x_ref: (rb, 2, Wo, 2*C)  — rb (image-row-pair) blocks of the reshaped input
    # o_ref: (rb, Wo, C)
    C = o_ref.shape[-1]
    x = x_ref[...]
    h = jnp.maximum(x[:, 0], x[:, 1])                     # reduce the H pair (VPU)
    o_ref[...] = jnp.maximum(h[..., :C], h[..., C:])      # reduce the W pair


def maxpool2x2(x):
    # x: (N, H, W, C); H, W even.  Wrapper-side contiguous reshape (free) exposes
    # both pool axes without strided sublane loads inside the kernel.
    N, H, W, C = x.shape
    assert H % 2 == 0 and W % 2 == 0, "maxpool2x2 expects even H, W"
    Ho, Wo = H // 2, W // 2
    R = N * Ho
    rb = next(r for r in (8, 4, 2, 1) if R % r == 0)      # rows per grid step
    xr = x.reshape(R, 2, Wo, 2 * C)                       # pure view of (N,H,W,C)
    out = pl.pallas_call(
        _maxpool2x2_kernel,
        out_shape=jax.ShapeDtypeStruct((R, Wo, C), x.dtype),
        grid=(R // rb,),
        in_specs=[pl.BlockSpec((rb, 2, Wo, 2 * C), lambda i: (i, 0, 0, 0))],
        out_specs=pl.BlockSpec((rb, Wo, C), lambda i: (i, 0, 0)),
        compiler_params=pltpu.CompilerParams(
            dimension_semantics=("parallel",),
            vmem_limit_bytes=_VMEM_LIMIT),
    )(xr)
    return out.reshape(N, Ho, Wo, C)


# ------------------------------- XLA glue ----------------------------------- #

def _im2col(x):
    # x: (N, H, W, C) -> reflection-padded 3x3 patches (N*H*W, 9*C), same dtype.
    N, H, W, C = x.shape
    xp = jnp.pad(x, ((0, 0), (1, 1), (1, 1), (0, 0)), mode="reflect")
    taps = [xp[:, ky:ky + H, kx:kx + W, :] for ky in range(3) for kx in range(3)]
    patches = jnp.concatenate(taps, axis=-1)              # (N, H, W, 9*C)
    return patches.reshape(N * H * W, 9 * C)


def _conv3x3_relu(x, w_oihw, b, out_dtype=jnp.bfloat16):
    # x: (N, H, W, Cin); w_oihw: (Cout, Cin, 3, 3) PyTorch layout; b: (Cout,)
    N, H, W, Cin = x.shape
    Cout = w_oihw.shape[0]
    # (Cout, Cin, ky, kx) -> (ky, kx, Cin, Cout) -> (9*Cin, Cout); row order matches
    # im2col column order (ky*3 + kx)*Cin + ci.
    wmat = jnp.transpose(w_oihw, (2, 3, 1, 0)).reshape(9 * Cin, Cout)
    y = matmul_bias_relu(_im2col(x.astype(jnp.bfloat16)),
                         wmat.astype(jnp.bfloat16),
                         b.reshape(1, Cout).astype(jnp.float32),
                         out_dtype=out_dtype)
    return y.reshape(N, H, W, Cout)


# ------------------------- parameters & forward pass ------------------------ #

_CONV_CFG = [  # (name, Cin, Cout, k) -- matches LSTEncoder4.__init__
    ("conv1", 3, 3, 1), ("conv2", 3, 64, 3), ("conv3", 64, 64, 3),
    ("conv4", 64, 128, 3), ("conv5", 128, 128, 3), ("conv6", 128, 256, 3),
    ("conv7", 256, 256, 3), ("conv8", 256, 256, 3), ("conv9", 256, 256, 3),
    ("conv10", 256, 512, 3),
]


def init_params(key):
    params = {}
    for name, cin, cout, k in _CONV_CFG:
        key, kw, kb = jax.random.split(key, 3)
        fan_in = cin * k * k
        w = jax.random.normal(kw, (cout, cin, k, k), jnp.float32) / math.sqrt(fan_in)
        b = jax.random.normal(kb, (cout,), jnp.float32) * 0.01
        params[name] = (w, b)   # PyTorch layout: (Cout, Cin, kh, kw), (Cout,)
    return params


def lst_encoder4_forward(params, x_nchw):
    """Pallas implementation of LSTEncoder4.forward(x) with matrix31=None."""
    x = jnp.transpose(x_nchw, (0, 2, 3, 1)).astype(jnp.float32)   # NCHW -> NHWC

    # Fold conv1 (1x1, linear, no activation) into conv2.  Exact: a 1x1 conv is
    # pointwise, so reflect(conv1(x)) == conv1(reflect(x)); conv2 o conv1 composes.
    w1, b1 = params["conv1"]                      # (3, 3, 1, 1), (3,)
    w2, b2 = params["conv2"]                      # (64, 3, 3, 3), (64,)
    w1m = w1[:, :, 0, 0]                          # (Cout1=3, Cin=3)
    hp = lax.Precision.HIGHEST
    w2f = jnp.einsum("ojyx,ji->oiyx", w2, w1m, precision=hp)
    b2f = b2 + jnp.einsum("ojyx,j->o", w2, b1, precision=hp)

    r11 = _conv3x3_relu(x, w2f, b2f)
    r12 = _conv3x3_relu(r11, *params["conv3"])
    p1 = maxpool2x2(r12)
    r21 = _conv3x3_relu(p1, *params["conv4"])
    r22 = _conv3x3_relu(r21, *params["conv5"])
    p2 = maxpool2x2(r22)
    r31 = _conv3x3_relu(p2, *params["conv6"])
    # matrix31 is None -> plain path (feature-transform branch not taken)
    r32 = _conv3x3_relu(r31, *params["conv7"])
    r33 = _conv3x3_relu(r32, *params["conv8"])
    r34 = _conv3x3_relu(r33, *params["conv9"])
    p3 = maxpool2x2(r34)
    r41 = _conv3x3_relu(p3, *params["conv10"])

    feats = dict(r11=r11, r12=r12, p1=p1, r21=r21, r22=r22, p2=p2,
                 r31=r31, r32=r32, r33=r33, r34=r34, p3=p3, r41=r41)
    # Module returns NCHW float32; one fused transpose+cast per output at the end.
    return {k: jnp.transpose(v, (0, 3, 1, 2)).astype(jnp.float32)
            for k, v in feats.items()}


# ----------------------------- pure-JAX reference --------------------------- #

def _ref_forward(params, x_nchw):
    x = jnp.transpose(x_nchw, (0, 2, 3, 1))

    def conv(inp, name, pad, relu):
        w, b = params[name]
        if pad:
            inp = jnp.pad(inp, ((0, 0), (1, 1), (1, 1), (0, 0)), mode="reflect")
        rhs = jnp.transpose(w, (2, 3, 1, 0))          # HWIO
        o = lax.conv_general_dilated(inp, rhs, (1, 1), "VALID",
                                     dimension_numbers=("NHWC", "HWIO", "NHWC"))
        o = o + b[None, None, None, :]
        return jnp.maximum(o, 0.0) if relu else o

    def pool(inp):
        return lax.reduce_window(inp, -jnp.inf, lax.max,
                                 (1, 2, 2, 1), (1, 2, 2, 1), "VALID")

    out = conv(x, "conv1", False, False)
    r11 = conv(out, "conv2", True, True)
    r12 = conv(r11, "conv3", True, True)
    p1 = pool(r12)
    r21 = conv(p1, "conv4", True, True)
    r22 = conv(r21, "conv5", True, True)
    p2 = pool(r22)
    r31 = conv(p2, "conv6", True, True)
    r32 = conv(r31, "conv7", True, True)
    r33 = conv(r32, "conv8", True, True)
    r34 = conv(r33, "conv9", True, True)
    p3 = pool(r34)
    r41 = conv(p3, "conv10", True, True)
    feats = dict(r11=r11, r12=r12, p1=p1, r21=r21, r22=r22, p2=p2,
                 r31=r31, r32=r32, r33=r33, r34=r34, p3=p3, r41=r41)
    return {k: jnp.transpose(v, (0, 3, 1, 2)) for k, v in feats.items()}


# ----------------------------------- main ----------------------------------- #

if __name__ == "__main__":
    key = jax.random.PRNGKey(0)
    k_x, k_p = jax.random.split(key)
    x = jax.random.normal(k_x, (2, 3, 16, 16), jnp.float32)   # NCHW like the module
    params = init_params(k_p)

    fwd = jax.jit(lst_encoder4_forward)
    out = fwd(params, x)
    jax.block_until_ready(out)

    ref = jax.jit(_ref_forward)(params, x)
    jax.block_until_ready(ref)
    # bf16 MXU operands + bf16 intermediate activations (f32 accumulation) over a
    # 10-layer stack => tolerance loosened vs. pure-f32; structural errors would be
    # orders of magnitude larger.
    for name in sorted(out.keys()):
        np.testing.assert_allclose(np.asarray(out[name]), np.asarray(ref[name]),
                                   rtol=5e-2, atol=2e-2)

    print("KERNEL_OK")
</pallas_src>

<mosaic_0001>
module attributes {stable_mosaic.version = 11 : i64} {
  func.func @_matmul_bias_relu_kernel(%arg0: i32, %arg1: memref<512x27xbf16, #tpu.memory_space<vmem>>, %arg2: memref<27x64xbf16, #tpu.memory_space<vmem>>, %arg3: memref<1x64xf32, #tpu.memory_space<vmem>>, %arg4: memref<512x64xbf16, #tpu.memory_space<vmem>>) attributes {dimension_semantics = [#tpu.dimension_semantics<parallel>], iteration_bounds = array<i64: 1>, scalar_prefetch = 0 : i64, scratch_operands = 0 : i64, tpu.core_type = #tpu.core_type<tc>, window_params = [{transform_indices = @transform_0, window_bounds = array<i64: 512, 27>}, {pipeline_mode = #tpu.pipeline_mode<synchronous>, transform_indices = @transform_1, window_bounds = array<i64: 27, 64>}, {pipeline_mode = #tpu.pipeline_mode<synchronous>, transform_indices = @transform_2, window_bounds = array<i64: 1, 64>}, {transform_indices = @transform_3, window_bounds = array<i64: 512, 64>}]} {
    %c0 = arith.constant 0 : index
    %c0_0 = arith.constant 0 : index
    %0 = vector.load %arg1[%c0, %c0_0] : memref<512x27xbf16, #tpu.memory_space<vmem>>, vector<512x27xbf16>
    %c0_1 = arith.constant 0 : index
    %c0_2 = arith.constant 0 : index
    %1 = vector.load %arg2[%c0_1, %c0_2] : memref<27x64xbf16, #tpu.memory_space<vmem>>, vector<27x64xbf16>
    %cst = arith.constant dense<0.000000e+00> : vector<512x64xf32>
    %2 = tpu.matmul %0, %1, %cst {dimension_numbers = #tpu.dot_dimension_numbers<[1], [0], [0], [1], [0, 0, 1, 1], [], []>} : vector<512x27xbf16>, vector<27x64xbf16>, vector<512x64xf32> -> vector<512x64xf32>
    %c0_3 = arith.constant 0 : index
    %c0_4 = arith.constant 0 : index
    %3 = vector.load %arg3[%c0_3, %c0_4] : memref<1x64xf32, #tpu.memory_space<vmem>>, vector<1x64xf32>
    %4 = vector.broadcast %3 : vector<1x64xf32> to vector<512x64xf32>
    %5 = arith.addf %2, %4 : vector<512x64xf32>
    %cst_5 = arith.constant 0.000000e+00 : f32
    %6 = vector.broadcast %cst_5 : f32 to vector<512x64xf32>
    %7 = arith.maximumf %5, %6 : vector<512x64xf32>
    %8 = arith.truncf %7 : vector<512x64xf32> to vector<512x64xbf16>
    %c0_6 = arith.constant 0 : index
    %c0_7 = arith.constant 0 : index
    %9 = vector.load %arg4[%c0_6, %c0_7] : memref<512x64xbf16, #tpu.memory_space<vmem>>, vector<512x64xbf16>
    tpu.vector_store %arg4[%c0_6, %c0_7], %8 {strides = array<i32>} : memref<512x64xbf16, #tpu.memory_space<vmem>>, vector<512x64xbf16>,
    return
  }
  func.func @transform_0(%arg0: i32) -> (i32, i32) {
    %c0_i32 = arith.constant 0 : i32
    %c0_i32_0 = arith.constant 0 : i32
    return %arg0, %c0_i32 : i32, i32
  }
  func.func @transform_1(%arg0: i32) -> (i32, i32) {
    %c0_i32 = arith.constant 0 : i32
    %c0_i32_0 = arith.constant 0 : i32
    %c0_i32_1 = arith.constant 0 : i32
    return %c0_i32, %c0_i32_0 : i32, i32
  }
  func.func @transform_2(%arg0: i32) -> (i32, i32) {
    %c0_i32 = arith.constant 0 : i32
    %c0_i32_0 = arith.constant 0 : i32
    %c0_i32_1 = arith.constant 0 : i32
    return %c0_i32, %c0_i32_0 : i32, i32
  }
  func.func @transform_3(%arg0: i32) -> (i32, i32) {
    %c0_i32 = arith.constant 0 : i32
    %c0_i32_0 = arith.constant 0 : i32
    return %arg0, %c0_i32 : i32, i32
  }
}

module attributes {stable_mosaic.version = 11 : i64} {
  func.func @_matmul_bias_relu_kernel(%arg0: i32, %arg1: memref<512x576xbf16, #tpu.memory_space<vmem>>, %arg2: memref<576x64xbf16, #tpu.memory_space<vmem>>, %arg3: memref<1x64xf32, #tpu.memory_space<vmem>>, %arg4: memref<512x64xbf16, #tpu.memory_space<vmem>>) attributes {dimension_semantics = [#tpu.dimension_semantics<parallel>], iteration_bounds = array<i64: 1>, scalar_prefetch = 0 : i64, scratch_operands = 0 : i64, tpu.core_type = #tpu.core_type<tc>, window_params = [{transform_indices = @transform_0, window_bounds = array<i64: 512, 576>}, {pipeline_mode = #tpu.pipeline_mode<synchronous>, transform_indices = @transform_1, window_bounds = array<i64: 576, 64>}, {pipeline_mode = #tpu.pipeline_mode<synchronous>, transform_indices = @transform_2, window_bounds = array<i64: 1, 64>}, {transform_indices = @transform_3, window_bounds = array<i64: 512, 64>}]} {
    %c0 = arith.constant 0 : index
    %c0_0 = arith.constant 0 : index
    %0 = vector.load %arg1[%c0, %c0_0] : memref<512x576xbf16, #tpu.memory_space<vmem>>, vector<512x576xbf16>
    %c0_1 = arith.constant 0 : index
    %c0_2 = arith.constant 0 : index
    %1 = vector.load %arg2[%c0_1, %c0_2] : memref<576x64xbf16, #tpu.memory_space<vmem>>, vector<576x64xbf16>
    %cst = arith.constant dense<0.000000e+00> : vector<512x64xf32>
    %2 = tpu.matmul %0, %1, %cst {dimension_numbers = #tpu.dot_dimension_numbers<[1], [0], [0], [1], [0, 0, 1, 1], [], []>} : vector<512x576xbf16>, vector<576x64xbf16>, vector<512x64xf32> -> vector<512x64xf32>
    %c0_3 = arith.constant 0 : index
    %c0_4 = arith.constant 0 : index
    %3 = vector.load %arg3[%c0_3, %c0_4] : memref<1x64xf32, #tpu.memory_space<vmem>>, vector<1x64xf32>
    %4 = vector.broadcast %3 : vector<1x64xf32> to vector<512x64xf32>
    %5 = arith.addf %2, %4 : vector<512x64xf32>
    %cst_5 = arith.constant 0.000000e+00 : f32
    %6 = vector.broadcast %cst_5 : f32 to vector<512x64xf32>
    %7 = arith.maximumf %5, %6 : vector<512x64xf32>
    %8 = arith.truncf %7 : vector<512x64xf32> to vector<512x64xbf16>
    %c0_6 = arith.constant 0 : index
    %c0_7 = arith.constant 0 : index
    %9 = vector.load %arg4[%c0_6, %c0_7] : memref<512x64xbf16, #tpu.memory_space<vmem>>, vector<512x64xbf16>
    tpu.vector_store %arg4[%c0_6, %c0_7], %8 {strides = array<i32>} : memref<512x64xbf16, #tpu.memory_space<vmem>>, vector<512x64xbf16>,
    return
  }
  func.func @transform_0(%arg0: i32) -> (i32, i32) {
    %c0_i32 = arith.constant 0 : i32
    %c0_i32_0 = arith.constant 0 : i32
    return %arg0, %c0_i32 : i32, i32
  }
  func.func @transform_1(%arg0: i32) -> (i32, i32) {
    %c0_i32 = arith.constant 0 : i32
    %c0_i32_0 = arith.constant 0 : i32
    %c0_i32_1 = arith.constant 0 : i32
    return %c0_i32, %c0_i32_0 : i32, i32
  }
  func.func @transform_2(%arg0: i32) -> (i32, i32) {
    %c0_i32 = arith.constant 0 : i32
    %c0_i32_0 = arith.constant 0 : i32
    %c0_i32_1 = arith.constant 0 : i32
    return %c0_i32, %c0_i32_0 : i32, i32
  }
  func.func @transform_3(%arg0: i32) -> (i32, i32) {
    %c0_i32 = arith.constant 0 : i32
    %c0_i32_0 = arith.constant 0 : i32
    return %arg0, %c0_i32 : i32, i32
  }
}

module attributes {stable_mosaic.version = 11 : i64} {
  func.func @_maxpool2x2_kernel(%arg0: i32, %arg1: memref<8x2x8x128xbf16, #tpu.memory_space<vmem>>, %arg2: memref<8x8x64xbf16, #tpu.memory_space<vmem>>) attributes {dimension_semantics = [#tpu.dimension_semantics<parallel>], iteration_bounds = array<i64: 2>, scalar_prefetch = 0 : i64, scratch_operands = 0 : i64, tpu.core_type = #tpu.core_type<tc>, window_params = [{transform_indices = @transform_0, window_bounds = array<i64: 8, 2, 8, 128>}, {transform_indices = @transform_1, window_bounds = array<i64: 8, 8, 64>}]} {
    %c0 = arith.constant 0 : index
    %c0_0 = arith.constant 0 : index
    %c0_1 = arith.constant 0 : index
    %c0_2 = arith.constant 0 : index
    %0 = vector.load %arg1[%c0, %c0_0, %c0_1, %c0_2] : memref<8x2x8x128xbf16, #tpu.memory_space<vmem>>, vector<8x2x8x128xbf16>
    %1 = vector.extract_strided_slice %0 {offsets = [0, 0, 0, 0], sizes = [8, 1, 8, 128], strides = [1, 1, 1, 1]} : vector<8x2x8x128xbf16> to vector<8x1x8x128xbf16>
    %2 = vector.shape_cast %1 : vector<8x1x8x128xbf16> to vector<8x8x128xbf16>
    %3 = vector.extract_strided_slice %0 {offsets = [0, 1, 0, 0], sizes = [8, 1, 8, 128], strides = [1, 1, 1, 1]} : vector<8x2x8x128xbf16> to vector<8x1x8x128xbf16>
    %4 = vector.shape_cast %3 : vector<8x1x8x128xbf16> to vector<8x8x128xbf16>
    %5 = arith.maximumf %2, %4 : vector<8x8x128xbf16>
    %6 = vector.extract_strided_slice %5 {offsets = [0, 0, 0], sizes = [8, 8, 64], strides = [1, 1, 1]} : vector<8x8x128xbf16> to vector<8x8x64xbf16>
    %7 = vector.extract_strided_slice %5 {offsets = [0, 0, 64], sizes = [8, 8, 64], strides = [1, 1, 1]} : vector<8x8x128xbf16> to vector<8x8x64xbf16>
    %8 = arith.maximumf %6, %7 : vector<8x8x64xbf16>
    %c0_3 = arith.constant 0 : index
    %c0_4 = arith.constant 0 : index
    %c0_5 = arith.constant 0 : index
    %9 = vector.load %arg2[%c0_3, %c0_4, %c0_5] : memref<8x8x64xbf16, #tpu.memory_space<vmem>>, vector<8x8x64xbf16>
    tpu.vector_store %arg2[%c0_3, %c0_4, %c0_5], %8 {strides = array<i32>} : memref<8x8x64xbf16, #tpu.memory_space<vmem>>, vector<8x8x64xbf16>,
    return
  }
  func.func @transform_0(%arg0: i32) -> (i32, i32, i32, i32) {
    %c0_i32 = arith.constant 0 : i32
    %c0_i32_0 = arith.constant 0 : i32
    %c0_i32_1 = arith.constant 0 : i32
    %c0_i32_2 = arith.constant 0 : i32
    return %arg0, %c0_i32, %c0_i32_0, %c0_i32_1 : i32, i32, i32, i32
  }
  func.func @transform_1(%arg0: i32) -> (i32, i32, i32) {
    %c0_i32 = arith.constant 0 : i32
    %c0_i32_0 = arith.constant 0 : i32
    %c0_i32_1 = arith.constant 0 : i32
    return %arg0, %c0_i32, %c0_i32_0 : i32, i32, i32
  }
}

module attributes {stable_mosaic.version = 11 : i64} {
  func.func @_matmul_bias_relu_kernel(%arg0: i32, %arg1: memref<128x576xbf16, #tpu.memory_space<vmem>>, %arg2: memref<576x128xbf16, #tpu.memory_space<vmem>>, %arg3: memref<1x128xf32, #tpu.memory_space<vmem>>, %arg4: memref<128x128xbf16, #tpu.memory_space<vmem>>) attributes {dimension_semantics = [#tpu.dimension_semantics<parallel>], iteration_bounds = array<i64: 1>, scalar_prefetch = 0 : i64, scratch_operands = 0 : i64, tpu.core_type = #tpu.core_type<tc>, window_params = [{transform_indices = @transform_0, window_bounds = array<i64: 128, 576>}, {pipeline_mode = #tpu.pipeline_mode<synchronous>, transform_indices = @transform_1, window_bounds = array<i64: 576, 128>}, {pipeline_mode = #tpu.pipeline_mode<synchronous>, transform_indices = @transform_2, window_bounds = array<i64: 1, 128>}, {transform_indices = @transform_3, window_bounds = array<i64: 128, 128>}]} {
    %c0 = arith.constant 0 : index
    %c0_0 = arith.constant 0 : index
    %0 = vector.load %arg1[%c0, %c0_0] : memref<128x576xbf16, #tpu.memory_space<vmem>>, vector<128x576xbf16>
    %c0_1 = arith.constant 0 : index
    %c0_2 = arith.constant 0 : index
    %1 = vector.load %arg2[%c0_1, %c0_2] : memref<576x128xbf16, #tpu.memory_space<vmem>>, vector<576x128xbf16>
    %cst = arith.constant dense<0.000000e+00> : vector<128x128xf32>
    %2 = tpu.matmul %0, %1, %cst {dimension_numbers = #tpu.dot_dimension_numbers<[1], [0], [0], [1], [0, 0, 1, 1], [], []>} : vector<128x576xbf16>, vector<576x128xbf16>, vector<128x128xf32> -> vector<128x128xf32>
    %c0_3 = arith.constant 0 : index
    %c0_4 = arith.constant 0 : index
    %3 = vector.load %arg3[%c0_3, %c0_4] : memref<1x128xf32, #tpu.memory_space<vmem>>, vector<1x128xf32>
    %4 = vector.broadcast %3 : vector<1x128xf32> to vector<128x128xf32>
    %5 = arith.addf %2, %4 : vector<128x128xf32>
    %cst_5 = arith.constant 0.000000e+00 : f32
    %6 = vector.broadcast %cst_5 : f32 to vector<128x128xf32>
    %7 = arith.maximumf %5, %6 : vector<128x128xf32>
    %8 = arith.truncf %7 : vector<128x128xf32> to vector<128x128xbf16>
    %c0_6 = arith.constant 0 : index
    %c0_7 = arith.constant 0 : index
    %9 = vector.load %arg4[%c0_6, %c0_7] : memref<128x128xbf16, #tpu.memory_space<vmem>>, vector<128x128xbf16>
    tpu.vector_store %arg4[%c0_6, %c0_7], %8 {strides = array<i32>} : memref<128x128xbf16, #tpu.memory_space<vmem>>, vector<128x128xbf16>,
    return
  }
  func.func @transform_0(%arg0: i32) -> (i32, i32) {
    %c0_i32 = arith.constant 0 : i32
    %c0_i32_0 = arith.constant 0 : i32
    return %arg0, %c0_i32 : i32, i32
  }
  func.func @transform_1(%arg0: i32) -> (i32, i32) {
    %c0_i32 = arith.constant 0 : i32
    %c0_i32_0 = arith.constant 0 : i32
    %c0_i32_1 = arith.constant 0 : i32
    return %c0_i32, %c0_i32_0 : i32, i32
  }
  func.func @transform_2(%arg0: i32) -> (i32, i32) {
    %c0_i32 = arith.constant 0 : i32
    %c0_i32_0 = arith.constant 0 : i32
    %c0_i32_1 = arith.constant 0 : i32
    return %c0_i32, %c0_i32_0 : i32, i32
  }
  func.func @transform_3(%arg0: i32) -> (i32, i32) {
    %c0_i32 = arith.constant 0 : i32
    %c0_i32_0 = arith.constant 0 : i32
    return %arg0, %c0_i32 : i32, i32
  }
}

module attributes {stable_mosaic.version = 11 : i64} {
  func.func @_matmul_bias_relu_kernel(%arg0: i32, %arg1: memref<128x1152xbf16, #tpu.memory_space<vmem>>, %arg2: memref<1152x128xbf16, #tpu.memory_space<vmem>>, %arg3: memref<1x128xf32, #tpu.memory_space<vmem>>, %arg4: memref<128x128xbf16, #tpu.memory_space<vmem>>) attributes {dimension_semantics = [#tpu.dimension_semantics<parallel>], iteration_bounds = array<i64: 1>, scalar_prefetch = 0 : i64, scratch_operands = 0 : i64, tpu.core_type = #tpu.core_type<tc>, window_params = [{transform_indices = @transform_0, window_bounds = array<i64: 128, 1152>}, {pipeline_mode = #tpu.pipeline_mode<synchronous>, transform_indices = @transform_1, window_bounds = array<i64: 1152, 128>}, {pipeline_mode = #tpu.pipeline_mode<synchronous>, transform_indices = @transform_2, window_bounds = array<i64: 1, 128>}, {transform_indices = @transform_3, window_bounds = array<i64: 128, 128>}]} {
    %c0 = arith.constant 0 : index
    %c0_0 = arith.constant 0 : index
    %0 = vector.load %arg1[%c0, %c0_0] : memref<128x1152xbf16, #tpu.memory_space<vmem>>, vector<128x1152xbf16>
    %c0_1 = arith.constant 0 : index
    %c0_2 = arith.constant 0 : index
    %1 = vector.load %arg2[%c0_1, %c0_2] : memref<1152x128xbf16, #tpu.memory_space<vmem>>, vector<1152x128xbf16>
    %cst = arith.constant dense<0.000000e+00> : vector<128x128xf32>
    %2 = tpu.matmul %0, %1, %cst {dimension_numbers = #tpu.dot_dimension_numbers<[1], [0], [0], [1], [0, 0, 1, 1], [], []>} : vector<128x1152xbf16>, vector<1152x128xbf16>, vector<128x128xf32> -> vector<128x128xf32>
    %c0_3 = arith.constant 0 : index
    %c0_4 = arith.constant 0 : index
    %3 = vector.load %arg3[%c0_3, %c0_4] : memref<1x128xf32, #tpu.memory_space<vmem>>, vector<1x128xf32>
    %4 = vector.broadcast %3 : vector<1x128xf32> to vector<128x128xf32>
    %5 = arith.addf %2, %4 : vector<128x128xf32>
    %cst_5 = arith.constant 0.000000e+00 : f32
    %6 = vector.broadcast %cst_5 : f32 to vector<128x128xf32>
    %7 = arith.maximumf %5, %6 : vector<128x128xf32>
    %8 = arith.truncf %7 : vector<128x128xf32> to vector<128x128xbf16>
    %c0_6 = arith.constant 0 : index
    %c0_7 = arith.constant 0 : index
    %9 = vector.load %arg4[%c0_6, %c0_7] : memref<128x128xbf16, #tpu.memory_space<vmem>>, vector<128x128xbf16>
    tpu.vector_store %arg4[%c0_6, %c0_7], %8 {strides = array<i32>} : memref<128x128xbf16, #tpu.memory_space<vmem>>, vector<128x128xbf16>,
    return
  }
  func.func @transform_0(%arg0: i32) -> (i32, i32) {
    %c0_i32 = arith.constant 0 : i32
    %c0_i32_0 = arith.constant 0 : i32
    return %arg0, %c0_i32 : i32, i32
  }
  func.func @transform_1(%arg0: i32) -> (i32, i32) {
    %c0_i32 = arith.constant 0 : i32
    %c0_i32_0 = arith.constant 0 : i32
    %c0_i32_1 = arith.constant 0 : i32
    return %c0_i32, %c0_i32_0 : i32, i32
  }
  func.func @transform_2(%arg0: i32) -> (i32, i32) {
    %c0_i32 = arith.constant 0 : i32
    %c0_i32_0 = arith.constant 0 : i32
    %c0_i32_1 = arith.constant 0 : i32
    return %c0_i32, %c0_i32_0 : i32, i32
  }
  func.func @transform_3(%arg0: i32) -> (i32, i32) {
    %c0_i32 = arith.constant 0 : i32
    %c0_i32_0 = arith.constant 0 : i32
    return %arg0, %c0_i32 : i32, i32
  }
}

module attributes {stable_mosaic.version = 11 : i64} {
  func.func @_maxpool2x2_kernel(%arg0: i32, %arg1: memref<8x2x4x256xbf16, #tpu.memory_space<vmem>>, %arg2: memref<8x4x128xbf16, #tpu.memory_space<vmem>>) attributes {dimension_semantics = [#tpu.dimension_semantics<parallel>], iteration_bounds = array<i64: 1>, scalar_prefetch = 0 : i64, scratch_operands = 0 : i64, tpu.core_type = #tpu.core_type<tc>, window_params = [{transform_indices = @transform_0, window_bounds = array<i64: 8, 2, 4, 256>}, {transform_indices = @transform_1, window_bounds = array<i64: 8, 4, 128>}]} {
    %c0 = arith.constant 0 : index
    %c0_0 = arith.constant 0 : index
    %c0_1 = arith.constant 0 : index
    %c0_2 = arith.constant 0 : index
    %0 = vector.load %arg1[%c0, %c0_0, %c0_1, %c0_2] : memref<8x2x4x256xbf16, #tpu.memory_space<vmem>>, vector<8x2x4x256xbf16>
    %1 = vector.extract_strided_slice %0 {offsets = [0, 0, 0, 0], sizes = [8, 1, 4, 256], strides = [1, 1, 1, 1]} : vector<8x2x4x256xbf16> to vector<8x1x4x256xbf16>
    %2 = vector.shape_cast %1 : vector<8x1x4x256xbf16> to vector<8x4x256xbf16>
    %3 = vector.extract_strided_slice %0 {offsets = [0, 1, 0, 0], sizes = [8, 1, 4, 256], strides = [1, 1, 1, 1]} : vector<8x2x4x256xbf16> to vector<8x1x4x256xbf16>
    %4 = vector.shape_cast %3 : vector<8x1x4x256xbf16> to vector<8x4x256xbf16>
    %5 = arith.maximumf %2, %4 : vector<8x4x256xbf16>
    %6 = vector.extract_strided_slice %5 {offsets = [0, 0, 0], sizes = [8, 4, 128], strides = [1, 1, 1]} : vector<8x4x256xbf16> to vector<8x4x128xbf16>
    %7 = vector.extract_strided_slice %5 {offsets = [0, 0, 128], sizes = [8, 4, 128], strides = [1, 1, 1]} : vector<8x4x256xbf16> to vector<8x4x128xbf16>
    %8 = arith.maximumf %6, %7 : vector<8x4x128xbf16>
    %c0_3 = arith.constant 0 : index
    %c0_4 = arith.constant 0 : index
    %c0_5 = arith.constant 0 : index
    %9 = vector.load %arg2[%c0_3, %c0_4, %c0_5] : memref<8x4x128xbf16, #tpu.memory_space<vmem>>, vector<8x4x128xbf16>
    tpu.vector_store %arg2[%c0_3, %c0_4, %c0_5], %8 {strides = array<i32>} : memref<8x4x128xbf16, #tpu.memory_space<vmem>>, vector<8x4x128xbf16>,
    return
  }
  func.func @transform_0(%arg0: i32) -> (i32, i32, i32, i32) {
    %c0_i32 = arith.constant 0 : i32
    %c0_i32_0 = arith.constant 0 : i32
    %c0_i32_1 = arith.constant 0 : i32
    %c0_i32_2 = arith.constant 0 : i32
    return %arg0, %c0_i32, %c0_i32_0, %c0_i32_1 : i32, i32, i32, i32
  }
  func.func @transform_1(%arg0: i32) -> (i32, i32, i32) {
    %c0_i32 = arith.constant 0 : i32
    %c0_i32_0 = arith.constant 0 : i32
    %c0_i32_1 = arith.constant 0 : i32
    return %arg0, %c0_i32, %c0_i32_0 : i32, i32, i32
  }
}

module attributes {stable_mosaic.version = 11 : i64} {
  func.func @_matmul_bias_relu_kernel(%arg0: i32, %arg1: memref<32x1152xbf16, #tpu.memory_space<vmem>>, %arg2: memref<1152x256xbf16, #tpu.memory_space<vmem>>, %arg3: memref<1x256xf32, #tpu.memory_space<vmem>>, %arg4: memref<32x256xbf16, #tpu.memory_space<vmem>>) attributes {dimension_semantics = [#tpu.dimension_semantics<parallel>], iteration_bounds = array<i64: 1>, scalar_prefetch = 0 : i64, scratch_operands = 0 : i64, tpu.core_type = #tpu.core_type<tc>, window_params = [{transform_indices = @transform_0, window_bounds = array<i64: 32, 1152>}, {pipeline_mode = #tpu.pipeline_mode<synchronous>, transform_indices = @transform_1, window_bounds = array<i64: 1152, 256>}, {pipeline_mode = #tpu.pipeline_mode<synchronous>, transform_indices = @transform_2, window_bounds = array<i64: 1, 256>}, {transform_indices = @transform_3, window_bounds = array<i64: 32, 256>}]} {
    %c0 = arith.constant 0 : index
    %c0_0 = arith.constant 0 : index
    %0 = vector.load %arg1[%c0, %c0_0] : memref<32x1152xbf16, #tpu.memory_space<vmem>>, vector<32x1152xbf16>
    %c0_1 = arith.constant 0 : index
    %c0_2 = arith.constant 0 : index
    %1 = vector.load %arg2[%c0_1, %c0_2] : memref<1152x256xbf16, #tpu.memory_space<vmem>>, vector<1152x256xbf16>
    %cst = arith.constant dense<0.000000e+00> : vector<32x256xf32>
    %2 = tpu.matmul %0, %1, %cst {dimension_numbers = #tpu.dot_dimension_numbers<[1], [0], [0], [1], [0, 0, 1, 1], [], []>} : vector<32x1152xbf16>, vector<1152x256xbf16>, vector<32x256xf32> -> vector<32x256xf32>
    %c0_3 = arith.constant 0 : index
    %c0_4 = arith.constant 0 : index
    %3 = vector.load %arg3[%c0_3, %c0_4] : memref<1x256xf32, #tpu.memory_space<vmem>>, vector<1x256xf32>
    %4 = vector.broadcast %3 : vector<1x256xf32> to vector<32x256xf32>
    %5 = arith.addf %2, %4 : vector<32x256xf32>
    %cst_5 = arith.constant 0.000000e+00 : f32
    %6 = vector.broadcast %cst_5 : f32 to vector<32x256xf32>
    %7 = arith.maximumf %5, %6 : vector<32x256xf32>
    %8 = arith.truncf %7 : vector<32x256xf32> to vector<32x256xbf16>
    %c0_6 = arith.constant 0 : index
    %c0_7 = arith.constant 0 : index
    %9 = vector.load %arg4[%c0_6, %c0_7] : memref<32x256xbf16, #tpu.memory_space<vmem>>, vector<32x256xbf16>
    tpu.vector_store %arg4[%c0_6, %c0_7], %8 {strides = array<i32>} : memref<32x256xbf16, #tpu.memory_space<vmem>>, vector<32x256xbf16>,
    return
  }
  func.func @transform_0(%arg0: i32) -> (i32, i32) {
    %c0_i32 = arith.constant 0 : i32
    %c0_i32_0 = arith.constant 0 : i32
    return %arg0, %c0_i32 : i32, i32
  }
  func.func @transform_1(%arg0: i32) -> (i32, i32) {
    %c0_i32 = arith.constant 0 : i32
    %c0_i32_0 = arith.constant 0 : i32
    %c0_i32_1 = arith.constant 0 : i32
    return %c0_i32, %c0_i32_0 : i32, i32
  }
  func.func @transform_2(%arg0: i32) -> (i32, i32) {
    %c0_i32 = arith.constant 0 : i32
    %c0_i32_0 = arith.constant 0 : i32
    %c0_i32_1 = arith.constant 0 : i32
    return %c0_i32, %c0_i32_0 : i32, i32
  }
  func.func @transform_3(%arg0: i32) -> (i32, i32) {
    %c0_i32 = arith.constant 0 : i32
    %c0_i32_0 = arith.constant 0 : i32
    return %arg0, %c0_i32 : i32, i32
  }
}

module attributes {stable_mosaic.version = 11 : i64} {
  func.func @_matmul_bias_relu_kernel(%arg0: i32, %arg1: memref<32x2304xbf16, #tpu.memory_space<vmem>>, %arg2: memref<2304x256xbf16, #tpu.memory_space<vmem>>, %arg3: memref<1x256xf32, #tpu.memory_space<vmem>>, %arg4: memref<32x256xbf16, #tpu.memory_space<vmem>>) attributes {dimension_semantics = [#tpu.dimension_semantics<parallel>], iteration_bounds = array<i64: 1>, scalar_prefetch = 0 : i64, scratch_operands = 0 : i64, tpu.core_type = #tpu.core_type<tc>, window_params = [{transform_indices = @transform_0, window_bounds = array<i64: 32, 2304>}, {pipeline_mode = #tpu.pipeline_mode<synchronous>, transform_indices = @transform_1, window_bounds = array<i64: 2304, 256>}, {pipeline_mode = #tpu.pipeline_mode<synchronous>, transform_indices = @transform_2, window_bounds = array<i64: 1, 256>}, {transform_indices = @transform_3, window_bounds = array<i64: 32, 256>}]} {
    %c0 = arith.constant 0 : index
    %c0_0 = arith.constant 0 : index
    %0 = vector.load %arg1[%c0, %c0_0] : memref<32x2304xbf16, #tpu.memory_space<vmem>>, vector<32x2304xbf16>
    %c0_1 = arith.constant 0 : index
    %c0_2 = arith.constant 0 : index
    %1 = vector.load %arg2[%c0_1, %c0_2] : memref<2304x256xbf16, #tpu.memory_space<vmem>>, vector<2304x256xbf16>
    %cst = arith.constant dense<0.000000e+00> : vector<32x256xf32>
    %2 = tpu.matmul %0, %1, %cst {dimension_numbers = #tpu.dot_dimension_numbers<[1], [0], [0], [1], [0, 0, 1, 1], [], []>} : vector<32x2304xbf16>, vector<2304x256xbf16>, vector<32x256xf32> -> vector<32x256xf32>
    %c0_3 = arith.constant 0 : index
    %c0_4 = arith.constant 0 : index
    %3 = vector.load %arg3[%c0_3, %c0_4] : memref<1x256xf32, #tpu.memory_space<vmem>>, vector<1x256xf32>
    %4 = vector.broadcast %3 : vector<1x256xf32> to vector<32x256xf32>
    %5 = arith.addf %2, %4 : vector<32x256xf32>
    %cst_5 = arith.constant 0.000000e+00 : f32
    %6 = vector.broadcast %cst_5 : f32 to vector<32x256xf32>
    %7 = arith.maximumf %5, %6 : vector<32x256xf32>
    %8 = arith.truncf %7 : vector<32x256xf32> to vector<32x256xbf16>
    %c0_6 = arith.constant 0 : index
    %c0_7 = arith.constant 0 : index
    %9 = vector.load %arg4[%c0_6, %c0_7] : memref<32x256xbf16, #tpu.memory_space<vmem>>, vector<32x256xbf16>
    tpu.vector_store %arg4[%c0_6, %c0_7], %8 {strides = array<i32>} : memref<32x256xbf16, #tpu.memory_space<vmem>>, vector<32x256xbf16>,
    return
  }
  func.func @transform_0(%arg0: i32) -> (i32, i32) {
    %c0_i32 = arith.constant 0 : i32
    %c0_i32_0 = arith.constant 0 : i32
    return %arg0, %c0_i32 : i32, i32
  }
  func.func @transform_1(%arg0: i32) -> (i32, i32) {
    %c0_i32 = arith.constant 0 : i32
    %c0_i32_0 = arith.constant 0 : i32
    %c0_i32_1 = arith.constant 0 : i32
    return %c0_i32, %c0_i32_0 : i32, i32
  }
  func.func @transform_2(%arg0: i32) -> (i32, i32) {
    %c0_i32 = arith.constant 0 : i32
    %c0_i32_0 = arith.constant 0 : i32
    %c0_i32_1 = arith.constant 0 : i32
    return %c0_i32, %c0_i32_0 : i32, i32
  }
  func.func @transform_3(%arg0: i32) -> (i32, i32) {
    %c0_i32 = arith.constant 0 : i32
    %c0_i32_0 = arith.constant 0 : i32
    return %arg0, %c0_i32 : i32, i32
  }
}

module attributes {stable_mosaic.version = 11 : i64} {
  func.func @_maxpool2x2_kernel(%arg0: i32, %arg1: memref<4x2x2x512xbf16, #tpu.memory_space<vmem>>, %arg2: memref<4x2x256xbf16, #tpu.memory_space<vmem>>) attributes {dimension_semantics = [#tpu.dimension_semantics<parallel>], iteration_bounds = array<i64: 1>, scalar_prefetch = 0 : i64, scratch_operands = 0 : i64, tpu.core_type = #tpu.core_type<tc>, window_params = [{transform_indices = @transform_0, window_bounds = array<i64: 4, 2, 2, 512>}, {transform_indices = @transform_1, window_bounds = array<i64: 4, 2, 256>}]} {
    %c0 = arith.constant 0 : index
    %c0_0 = arith.constant 0 : index
    %c0_1 = arith.constant 0 : index
    %c0_2 = arith.constant 0 : index
    %0 = vector.load %arg1[%c0, %c0_0, %c0_1, %c0_2] : memref<4x2x2x512xbf16, #tpu.memory_space<vmem>>, vector<4x2x2x512xbf16>
    %1 = vector.extract_strided_slice %0 {offsets = [0, 0, 0, 0], sizes = [4, 1, 2, 512], strides = [1, 1, 1, 1]} : vector<4x2x2x512xbf16> to vector<4x1x2x512xbf16>
    %2 = vector.shape_cast %1 : vector<4x1x2x512xbf16> to vector<4x2x512xbf16>
    %3 = vector.extract_strided_slice %0 {offsets = [0, 1, 0, 0], sizes = [4, 1, 2, 512], strides = [1, 1, 1, 1]} : vector<4x2x2x512xbf16> to vector<4x1x2x512xbf16>
    %4 = vector.shape_cast %3 : vector<4x1x2x512xbf16> to vector<4x2x512xbf16>
    %5 = arith.maximumf %2, %4 : vector<4x2x512xbf16>
    %6 = vector.extract_strided_slice %5 {offsets = [0, 0, 0], sizes = [4, 2, 256], strides = [1, 1, 1]} : vector<4x2x512xbf16> to vector<4x2x256xbf16>
    %7 = vector.extract_strided_slice %5 {offsets = [0, 0, 256], sizes = [4, 2, 256], strides = [1, 1, 1]} : vector<4x2x512xbf16> to vector<4x2x256xbf16>
    %8 = arith.maximumf %6, %7 : vector<4x2x256xbf16>
    %c0_3 = arith.constant 0 : index
    %c0_4 = arith.constant 0 : index
    %c0_5 = arith.constant 0 : index
    %9 = vector.load %arg2[%c0_3, %c0_4, %c0_5] : memref<4x2x256xbf16, #tpu.memory_space<vmem>>, vector<4x2x256xbf16>
    tpu.vector_store %arg2[%c0_3, %c0_4, %c0_5], %8 {strides = array<i32>} : memref<4x2x256xbf16, #tpu.memory_space<vmem>>, vector<4x2x256xbf16>,
    return
  }
  func.func @transform_0(%arg0: i32) -> (i32, i32, i32, i32) {
    %c0_i32 = arith.constant 0 : i32
    %c0_i32_0 = arith.constant 0 : i32
    %c0_i32_1 = arith.constant 0 : i32
    %c0_i32_2 = arith.constant 0 : i32
    return %arg0, %c0_i32, %c0_i32_0, %c0_i32_1 : i32, i32, i32, i32
  }
  func.func @transform_1(%arg0: i32) -> (i32, i32, i32) {
    %c0_i32 = arith.constant 0 : i32
    %c0_i32_0 = arith.constant 0 : i32
    %c0_i32_1 = arith.constant 0 : i32
    return %arg0, %c0_i32, %c0_i32_0 : i32, i32, i32
  }
}

module attributes {stable_mosaic.version = 11 : i64} {
  func.func @_matmul_bias_relu_kernel(%arg0: i32, %arg1: memref<8x2304xbf16, #tpu.memory_space<vmem>>, %arg2: memref<2304x512xbf16, #tpu.memory_space<vmem>>, %arg3: memref<1x512xf32, #tpu.memory_space<vmem>>, %arg4: memref<8x512xbf16, #tpu.memory_space<vmem>>) attributes {dimension_semantics = [#tpu.dimension_semantics<parallel>], iteration_bounds = array<i64: 1>, scalar_prefetch = 0 : i64, scratch_operands = 0 : i64, tpu.core_type = #tpu.core_type<tc>, window_params = [{transform_indices = @transform_0, window_bounds = array<i64: 8, 2304>}, {pipeline_mode = #tpu.pipeline_mode<synchronous>, transform_indices = @transform_1, window_bounds = array<i64: 2304, 512>}, {pipeline_mode = #tpu.pipeline_mode<synchronous>, transform_indices = @transform_2, window_bounds = array<i64: 1, 512>}, {transform_indices = @transform_3, window_bounds = array<i64: 8, 512>}]} {
    %c0 = arith.constant 0 : index
    %c0_0 = arith.constant 0 : index
    %0 = vector.load %arg1[%c0, %c0_0] : memref<8x2304xbf16, #tpu.memory_space<vmem>>, vector<8x2304xbf16>
    %c0_1 = arith.constant 0 : index
    %c0_2 = arith.constant 0 : index
    %1 = vector.load %arg2[%c0_1, %c0_2] : memref<2304x512xbf16, #tpu.memory_space<vmem>>, vector<2304x512xbf16>
    %cst = arith.constant dense<0.000000e+00> : vector<8x512xf32>
    %2 = tpu.matmul %0, %1, %cst {dimension_numbers = #tpu.dot_dimension_numbers<[1], [0], [0], [1], [0, 0, 1, 1], [], []>} : vector<8x2304xbf16>, vector<2304x512xbf16>, vector<8x512xf32> -> vector<8x512xf32>
    %c0_3 = arith.constant 0 : index
    %c0_4 = arith.constant 0 : index
    %3 = vector.load %arg3[%c0_3, %c0_4] : memref<1x512xf32, #tpu.memory_space<vmem>>, vector<1x512xf32>
    %4 = vector.broadcast %3 : vector<1x512xf32> to vector<8x512xf32>
    %5 = arith.addf %2, %4 : vector<8x512xf32>
    %cst_5 = arith.constant 0.000000e+00 : f32
    %6 = vector.broadcast %cst_5 : f32 to vector<8x512xf32>
    %7 = arith.maximumf %5, %6 : vector<8x512xf32>
    %8 = arith.truncf %7 : vector<8x512xf32> to vector<8x512xbf16>
    %c0_6 = arith.constant 0 : index
    %c0_7 = arith.constant 0 : index
    %9 = vector.load %arg4[%c0_6, %c0_7] : memref<8x512xbf16, #tpu.memory_space<vmem>>, vector<8x512xbf16>
    tpu.vector_store %arg4[%c0_6, %c0_7], %8 {strides = array<i32>} : memref<8x512xbf16, #tpu.memory_space<vmem>>, vector<8x512xbf16>,
    return
  }
  func.func @transform_0(%arg0: i32) -> (i32, i32) {
    %c0_i32 = arith.constant 0 : i32
    %c0_i32_0 = arith.constant 0 : i32
    return %arg0, %c0_i32 : i32, i32
  }
  func.func @transform_1(%arg0: i32) -> (i32, i32) {
    %c0_i32 = arith.constant 0 : i32
    %c0_i32_0 = arith.constant 0 : i32
    %c0_i32_1 = arith.constant 0 : i32
    return %c0_i32, %c0_i32_0 : i32, i32
  }
  func.func @transform_2(%arg0: i32) -> (i32, i32) {
    %c0_i32 = arith.constant 0 : i32
    %c0_i32_0 = arith.constant 0 : i32
    %c0_i32_1 = arith.constant 0 : i32
    return %c0_i32, %c0_i32_0 : i32, i32
  }
  func.func @transform_3(%arg0: i32) -> (i32, i32) {
    %c0_i32 = arith.constant 0 : i32
    %c0_i32_0 = arith.constant 0 : i32
    return %arg0, %c0_i32 : i32, i32
  }
}

</mosaic_0001>

<llo_original>
// kernel: lst_encoder4_forward.12
$region0: #{lst_encoder4_forward.12}
  #allocation0 [shape = 'u32[]', space=smem, size = 0x4, offset = 0x4, fixed_abs, tag = 'smem constant byte address 0x4 - core index']
  #allocation1 [shape = 'u32[144,128]{1,0:T(1,128)}', space=vmem, size = 0x12000, scoped, tag = 'internal scratch']
  %s0 = inlined_call_operand.vmem [shape: bf16[512,27], index: 0, kind: input, shape index: {}]
  %s1 = inlined_call_operand.vmem [shape: bf16[27,64], index: 1, kind: input, shape index: {}]
  %s2 = inlined_call_operand.vmem [shape: f32[1,64], index: 2, kind: input, shape index: {}]
  %s3 = inlined_call_operand.vmem [shape: bf16[512,64], index: 3, kind: output, shape index: {}]
  %s4 = sld [smem:[#allocation0]]
  $region22: #{lst_encoder4_forward.12} parent=0
    _
  %s6 = ssub.s32 1, %s4
  %s7 = scalar_select 0, %s6, %s4
  // Predicated region
  $region2: #{lst_encoder4_forward.12} parent=0 // pred_check
    _
  $region3: #{lst_encoder4_forward.12} parent=0 // pred_check_branch
    %9 = sbr.rel (0) target = $region5
  $region4: #{lst_encoder4_forward.12} parent=0 // pred_region
    _
  $region5: #{lst_encoder4_forward.12} parent=0 // pred_fallthru
    _
  // Predicated region
  $region6: #{lst_encoder4_forward.12} parent=0 // pred_check
    _
  $region7: #{lst_encoder4_forward.12} parent=0 // pred_check_branch
    %11 = sbr.rel (0) target = $region9
  $region8: #{lst_encoder4_forward.12} parent=0 // pred_region
    _
  $region9: #{lst_encoder4_forward.12} parent=0 // pred_fallthru
    _
  // Predicated region
  $region10: #{lst_encoder4_forward.12} parent=0 // pred_check
    _
  $region11: #{lst_encoder4_forward.12} parent=0 // pred_check_branch
    %13 = sbr.rel (0) target = $region13
  $region12: #{lst_encoder4_forward.12} parent=0 // pred_region
    _
  $region13: #{lst_encoder4_forward.12} parent=0 // pred_fallthru
    _
  %v15 = vld [vmem:[%s0] sm:$0xf]
  %v16 = vld [vmem:[%s0 + $0x4] sm:$0xf]
  %v17 = vld [vmem:[%s0 + $0x8] sm:$0xf]
  %v18 = vld [vmem:[%s0 + $0xc] sm:$0xf]
  %v19 = vld [vmem:[%s0 + $0x10] sm:$0xf]
  %v20 = vld [vmem:[%s0 + $0x14] sm:$0xf]
  %v21 = vld [vmem:[%s0 + $0x18] sm:$0xf]
  %v22 = vld [vmem:[%s0 + $0x1c] sm:$0xf]
  %v23 = vld [vmem:[%s0 + $0x20] sm:$0xf]
  %v24 = vld [vmem:[%s0 + $0x24] sm:$0xf]
  %v25 = vld [vmem:[%s0 + $0x28] sm:$0xf]
  %v26 = vld [vmem:[%s0 + $0x2c] sm:$0xf]
  %v27 = vld [vmem:[%s0 + $0x30] sm:$0xf]
  %v28 = vld [vmem:[%s0 + $0x34] sm:$0xf]
  %v29 = vld [vmem:[%s0 + $0x38] sm:$0xf]
  %v30 = vld [vmem:[%s0 + $0x3c] sm:$0xf]
  %v31 = vld [vmem:[%s0 + $0x40] sm:$0xf]
  %v32 = vld [vmem:[%s0 + $0x44] sm:$0xf]
  %v33 = vld [vmem:[%s0 + $0x48] sm:$0xf]
  %v34 = vld [vmem:[%s0 + $0x4c] sm:$0xf]
  %v35 = vld [vmem:[%s0 + $0x50] sm:$0xf]
  %v36 = vld [vmem:[%s0 + $0x54] sm:$0xf]
  %v37 = vld [vmem:[%s0 + $0x58] sm:$0xf]
  %v38 = vld [vmem:[%s0 + $0x5c] sm:$0xf]
  %v39 = vld [vmem:[%s0 + $0x60] sm:$0xf]
  %v40 = vld [vmem:[%s0 + $0x64] sm:$0xf]
  %v41 = vld [vmem:[%s0 + $0x68] sm:$0xf]
  %v42 = vld [vmem:[%s0 + $0x6c] sm:$0xf]
  %v43 = vld [vmem:[%s0 + $0x70] sm:$0xf]
  %v44 = vld [vmem:[%s0 + $0x74] sm:$0xf]
  %v45 = vld [vmem:[%s0 + $0x78] sm:$0xf]
  %v46 = vld [vmem:[%s0 + $0x7c] sm:$0xf]
  %v47 = vld [vmem:[%s0 + $0x80] sm:$0xf]
  %v48 = vld [vmem:[%s0 + $0x84] sm:$0xf]
  %v49 = vld [vmem:[%s0 + $0x88] sm:$0xf]
  %v50 = vld [vmem:[%s0 + $0x8c] sm:$0xf]
  %v51 = vld [vmem:[%s0 + $0x90] sm:$0xf]
  %v52 = vld [vmem:[%s0 + $0x94] sm:$0xf]
  %v53 = vld [vmem:[%s0 + $0x98] sm:$0xf]
  %v54 = vld [vmem:[%s0 + $0x9c] sm:$0xf]
  %v55 = vld [vmem:[%s0 + $0xa0] sm:$0xf]
  %v56 = vld [vmem:[%s0 + $0xa4] sm:$0xf]
  %v57 = vld [vmem:[%s0 + $0xa8] sm:$0xf]
  %v58 = vld [vmem:[%s0 + $0xac] sm:$0xf]
  %v59 = vld [vmem:[%s0 + $0xb0] sm:$0xf]
  %v60 = vld [vmem:[%s0 + $0xb4] sm:$0xf]
  %v61 = vld [vmem:[%s0 + $0xb8] sm:$0xf]
  %v62 = vld [vmem:[%s0 + $0xbc] sm:$0xf]
  %v63 = vld [vmem:[%s0 + $0xc0] sm:$0xf]
  %v64 = vld [vmem:[%s0 + $0xc4] sm:$0xf]
  %v65 = vld [vmem:[%s0 + $0xc8] sm:$0xf]
  %v66 = vld [vmem:[%s0 + $0xcc] sm:$0xf]
  %v67 = vld [vmem:[%s0 + $0xd0] sm:$0xf]
  %v68 = vld [vmem:[%s0 + $0xd4] sm:$0xf]
  %v69 = vld [vmem:[%s0 + $0xd8] sm:$0xf]
  %v70 = vld [vmem:[%s0 + $0xdc] sm:$0xf]
  %v71 = vld [vmem:[%s0 + $0xe0] sm:$0xf]
  %v72 = vld [vmem:[%s0 + $0xe4] sm:$0xf]
  %v73 = vld [vmem:[%s0 + $0xe8] sm:$0xf]
  %v74 = vld [vmem:[%s0 + $0xec] sm:$0xf]
  %v75 = vld [vmem:[%s0 + $0xf0] sm:$0xf]
  %v76 = vld [vmem:[%s0 + $0xf4] sm:$0xf]
  %v77 = vld [vmem:[%s0 + $0xf8] sm:$0xf]
  %v78 = vld [vmem:[%s0 + $0xfc] sm:$0xf]
  %v79 = vld [vmem:[%s1] sm:$0xf]
  %v80 = vld [vmem:[%s1 + $0x4] sm:$0xf]
  %v81 = vld [vmem:[%s1 + $0x8] sm:$0xf]
  %v82 = vld [vmem:[%s1 + $0xc] sm:$0x3]
  %v83 = vld [vmem:[%s2] sm:$0x1]
  %v85 = vlaneseq
  %v86 = vshrl.u32 %v85, 7
  %v87 = vsub.s32 0, %v86
  %v88 = vrot.slane %v83, %v87
  %v154 = vunpack.c.l.b16 %v15
  %v155 = vunpack.c.l.b16 %v16
  %v156 = vunpack.c.l.b16 %v17
  %v157 = vunpack.c.l.b16 %v18
  %v158 = vunpack.c.l.b16 %v19
  %v159 = vunpack.c.l.b16 %v20
  %v160 = vunpack.c.l.b16 %v21
  %v161 = vunpack.c.l.b16 %v22
  %v162 = vunpack.c.l.b16 %v23
  %v163 = vunpack.c.l.b16 %v24
  %v164 = vunpack.c.l.b16 %v25
  %v165 = vunpack.c.l.b16 %v26
  %v166 = vunpack.c.l.b16 %v27
  %v167 = vunpack.c.l.b16 %v28
  %v168 = vunpack.c.l.b16 %v29
  %v169 = vunpack.c.l.b16 %v30
  %v170 = vunpack.c.l.b16 %v31
  %v171 = vunpack.c.l.b16 %v32
  %v172 = vunpack.c.l.b16 %v33
  %v173 = vunpack.c.l.b16 %v34
  %v174 = vunpack.c.l.b16 %v35
  %v175 = vunpack.c.l.b16 %v36
  %v176 = vunpack.c.l.b16 %v37
  %v177 = vunpack.c.l.b16 %v38
  %v178 = vunpack.c.l.b16 %v39
  %v179 = vunpack.c.l.b16 %v40
  %v180 = vunpack.c.l.b16 %v41
  %v181 = vunpack.c.l.b16 %v42
  %v182 = vunpack.c.l.b16 %v43
  %v183 = vunpack.c.l.b16 %v44
  %v184 = vunpack.c.l.b16 %v45
  %v185 = vunpack.c.l.b16 %v46
  %v186 = vunpack.c.l.b16 %v47
  %v187 = vunpack.c.l.b16 %v48
  %v188 = vunpack.c.l.b16 %v49
  %v189 = vunpack.c.l.b16 %v50
  %v190 = vunpack.c.l.b16 %v51
  %v191 = vunpack.c.l.b16 %v52
  %v192 = vunpack.c.l.b16 %v53
  %v193 = vunpack.c.l.b16 %v54
  %v194 = vunpack.c.l.b16 %v55
  %v195 = vunpack.c.l.b16 %v56
  %v196 = vunpack.c.l.b16 %v57
  %v197 = vunpack.c.l.b16 %v58
  %v198 = vunpack.c.l.b16 %v59
  %v199 = vunpack.c.l.b16 %v60
  %v200 = vunpack.c.l.b16 %v61
  %v201 = vunpack.c.l.b16 %v62
  %v202 = vunpack.c.l.b16 %v63
  %v203 = vunpack.c.l.b16 %v64
  %v204 = vunpack.c.l.b16 %v65
  %v205 = vunpack.c.l.b16 %v66
  %v206 = vunpack.c.l.b16 %v67
  %v207 = vunpack.c.l.b16 %v68
  %v208 = vunpack.c.l.b16 %v69
  %v209 = vunpack.c.l.b16 %v70
  %v210 = vunpack.c.l.b16 %v71
  %v211 = vunpack.c.l.b16 %v72
  %v212 = vunpack.c.l.b16 %v73
  %v213 = vunpack.c.l.b16 %v74
  %v214 = vunpack.c.l.b16 %v75
  %v215 = vunpack.c.l.b16 %v76
  %v216 = vunpack.c.l.b16 %v77
  %v217 = vunpack.c.l.b16 %v78
  %v218 = vpack.c.b16 %v155, %v154
  %v219 = vpack.c.b16 %v157, %v156
  %v220 = vpack.c.b16 %v159, %v158
  %v221 = vpack.c.b16 %v161, %v160
  %v222 = vpack.c.b16 %v163, %v162
  %v223 = vpack.c.b16 %v165, %v164
  %v224 = vpack.c.b16 %v167, %v166
  %v225 = vpack.c.b16 %v169, %v168
  %v226 = vpack.c.b16 %v171, %v170
  %v227 = vpack.c.b16 %v173, %v172
  %v228 = vpack.c.b16 %v175, %v174
  %v229 = vpack.c.b16 %v177, %v176
  %v230 = vpack.c.b16 %v179, %v178
  %v231 = vpack.c.b16 %v181, %v180
  %v232 = vpack.c.b16 %v183, %v182
  %v233 = vpack.c.b16 %v185, %v184
  %v234 = vpack.c.b16 %v187, %v186
  %v235 = vpack.c.b16 %v189, %v188
  %v236 = vpack.c.b16 %v191, %v190
  %v237 = vpack.c.b16 %v193, %v192
  %v238 = vpack.c.b16 %v195, %v194
  %v239 = vpack.c.b16 %v197, %v196
  %v240 = vpack.c.b16 %v199, %v198
  %v241 = vpack.c.b16 %v201, %v200
  %v242 = vpack.c.b16 %v203, %v202
  %v243 = vpack.c.b16 %v205, %v204
  %v244 = vpack.c.b16 %v207, %v206
  %v245 = vpack.c.b16 %v209, %v208
  %v246 = vpack.c.b16 %v211, %v210
  %v247 = vpack.c.b16 %v213, %v212
  %v248 = vpack.c.b16 %v215, %v214
  %v249 = vpack.c.b16 %v217, %v216
  %v254 = vunpack.c.l.b16 %v79
  %v255 = vunpack.c.l.b16 %v80
  %v256 = vunpack.c.l.b16 %v81
  %v257 = vunpack.c.l.b16 %v82
  %v258 = vpack.c.b16 %v255, %v254
  %v259 = vpack.c.b16 %v257, %v256
  %vm261 = vcmask 220160
  %v263 = vsel %vm261, %v218, 0
  %v266 = vsel %vm261, %v219, 0
  %v269 = vsel %vm261, %v220, 0
  %v272 = vsel %vm261, %v221, 0
  %v275 = vsel %vm261, %v222, 0
  %v278 = vsel %vm261, %v223, 0
  %v281 = vsel %vm261, %v224, 0
  %v284 = vsel %vm261, %v225, 0
  %v287 = vsel %vm261, %v226, 0
  %v290 = vsel %vm261, %v227, 0
  %v293 = vsel %vm261, %v228, 0
  %v296 = vsel %vm261, %v229, 0
  %v299 = vsel %vm261, %v230, 0
  %v302 = vsel %vm261, %v231, 0
  %v305 = vsel %vm261, %v232, 0
  %v308 = vsel %vm261, %v233, 0
  %v311 = vsel %vm261, %v234, 0
  %v314 = vsel %vm261, %v235, 0
  %v317 = vsel %vm261, %v236, 0
  %v320 = vsel %vm261, %v237, 0
  %v323 = vsel %vm261, %v238, 0
  %v326 = vsel %vm261, %v239, 0
  %v329 = vsel %vm261, %v240, 0
  %v332 = vsel %vm261, %v241, 0
  %v335 = vsel %vm261, %v242, 0
  %v338 = vsel %vm261, %v243, 0
  %v341 = vsel %vm261, %v244, 0
  %v344 = vsel %vm261, %v245, 0
  %v347 = vsel %vm261, %v246, 0
  %v350 = vsel %vm261, %v247, 0
  %v353 = vsel %vm261, %v248, 0
  %v356 = vsel %vm261, %v249, 0
  %vm358 = vcmask 1044480
  %vm359 = vcmask 1045504
  %v360 = vsel %vm358, 4294967295, 65535
  %v361 = vsel %vm359, %v360, 0
  %v363 = vand.u32 %v259, %v361
  %365 = vmatprep.subr.bf16.mxu0 0
  %366 = vmatpush1.bf16.msra.mxu0 %v258
  %367 = vmatprep.subr.bf16.mxu0 0
  %368 = vmatpush1.bf16.msra.mxu0 %v363
  %369 = vmatprep.subr.bf16.mxu0 0
  %370 = vmatpush1.bf16.msra.mxu0 0
  %371 = vmatprep.subr.bf16.mxu0 0
  %372 = vmatpush1.bf16.msra.mxu0 0
  %373 = vmatprep.subr.bf16.mxu0 0
  %374 = vmatpush1.bf16.msra.mxu0 0
  %375 = vmatprep.subr.bf16.mxu0 0
  %376 = vmatpush1.bf16.msra.mxu0 0
  %377 = vmatprep.subr.bf16.mxu0 0
  %378 = vmatpush1.bf16.msra.mxu0 0
  %379 = vmatprep.subr.bf16.mxu0 0
  %380 = vmatpush1.bf16.msra.mxu0 0
  %381 = vmatprep.subr.bf16.mxu0 0
  %382 = vmatpush1.bf16.msra.mxu0 0
  %383 = vmatprep.subr.bf16.mxu0 0
  %384 = vmatpush1.bf16.msra.mxu0 0
  %385 = vmatprep.subr.bf16.mxu0 0
  %386 = vmatpush1.bf16.msra.mxu0 0
  %387 = vmatprep.subr.bf16.mxu0 0
  %388 = vmatpush1.bf16.msra.mxu0 0
  %389 = vmatprep.subr.bf16.mxu0 0
  %390 = vmatpush1.bf16.msra.mxu0 0
  %391 = vmatprep.subr.bf16.mxu0 0
  %392 = vmatpush1.bf16.msra.mxu0 0
  %393 = vmatprep.subr.bf16.mxu0 0
  %394 = vmatpush1.bf16.msra.mxu0 0
  %395 = vmatprep.subr.bf16.mxu0 0
  %396 = vmatpush1.bf16.msra.mxu0 0
  %397 = vmatprep.mubr.bf16.mxu0 0
  %398 = vmatmul.mubr.bf16.gmra.mrb[0].mxu0 %v263
  %v399 = vpop.f32.mrb[0].mxu0
  %v400 = vadd.f32 %v88, %v399
  %v401 = vpop.f32.mrb[0].mxu0
  %v402 = vpop.f32.mrb[0].mxu0
  %v403 = vadd.f32 %v88, %v402
  %v404 = vpop.f32.mrb[0].mxu0
  %405 = vmatprep.mubr.bf16.mxu0 0
  %406 = vmatmul.mubr.bf16.gmra.mrb[0].mxu0 %v266
  %v407 = vpop.f32.mrb[0].mxu0
  %v408 = vadd.f32 %v88, %v407
  %v409 = vpop.f32.mrb[0].mxu0
  %v410 = vpop.f32.mrb[0].mxu0
  %v411 = vadd.f32 %v88, %v410
  %v412 = vpop.f32.mrb[0].mxu0
  %413 = vmatprep.mubr.bf16.mxu0 0
  %414 = vmatmul.mubr.bf16.gmra.mrb[0].mxu0 %v269
  %v415 = vpop.f32.mrb[0].mxu0
  %v416 = vadd.f32 %v88, %v415
  %v417 = vpop.f32.mrb[0].mxu0
  %v418 = vpop.f32.mrb[0].mxu0
  %v419 = vadd.f32 %v88, %v418
  %v420 = vpop.f32.mrb[0].mxu0
  %421 = vmatprep.mubr.bf16.mxu0 0
  %422 = vmatmul.mubr.bf16.gmra.mrb[0].mxu0 %v272
  %v423 = vpop.f32.mrb[0].mxu0
  %v424 = vadd.f32 %v88, %v423
  %v425 = vpop.f32.mrb[0].mxu0
  %v426 = vpop.f32.mrb[0].mxu0
  %v427 = vadd.f32 %v88, %v426
  %v428 = vpop.f32.mrb[0].mxu0
  %429 = vmatprep.mubr.bf16.mxu0 0
  %430 = vmatmul.mubr.bf16.gmra.mrb[0].mxu0 %v275
  %v431 = vpop.f32.mrb[0].mxu0
  %v432 = vadd.f32 %v88, %v431
  %v433 = vpop.f32.mrb[0].mxu0
  %v434 = vpop.f32.mrb[0].mxu0
  %v435 = vadd.f32 %v88, %v434
  %v436 = vpop.f32.mrb[0].mxu0
  %437 = vmatprep.mubr.bf16.mxu0 0
  %438 = vmatmul.mubr.bf16.gmra.mrb[0].mxu0 %v278
  %v439 = vpop.f32.mrb[0].mxu0
  %v440 = vadd.f32 %v88, %v439
  %v441 = vpop.f32.mrb[0].mxu0
  %v442 = vpop.f32.mrb[0].mxu0
  %v443 = vadd.f32 %v88, %v442
  %v444 = vpop.f32.mrb[0].mxu0
  %445 = vmatprep.mubr.bf16.mxu0 0
  %446 = vmatmul.mubr.bf16.gmra.mrb[0].mxu0 %v281
  %v447 = vpop.f32.mrb[0].mxu0
  %v448 = vadd.f32 %v88, %v447
  %v449 = vpop.f32.mrb[0].mxu0
  %v450 = vpop.f32.mrb[0].mxu0
  %v451 = vadd.f32 %v88, %v450
  %v452 = vpop.f32.mrb[0].mxu0
  %453 = vmatprep.mubr.bf16.mxu0 0
  %454 = vmatmul.mubr.bf16.gmra.mrb[0].mxu0 %v284
  %v455 = vpop.f32.mrb[0].mxu0
  %v456 = vadd.f32 %v88, %v455
  %v457 = vpop.f32.mrb[0].mxu0
  %v458 = vpop.f32.mrb[0].mxu0
  %v459 = vadd.f32 %v88, %v458
  %v460 = vpop.f32.mrb[0].mxu0
  %461 = vmatprep.mubr.bf16.mxu0 0
  %462 = vmatmul.mubr.bf16.gmra.mrb[0].mxu0 %v287
  %v463 = vpop.f32.mrb[0].mxu0
  %v464 = vadd.f32 %v88, %v463
  %v465 = vpop.f32.mrb[0].mxu0
  %v466 = vpop.f32.mrb[0].mxu0
  %v467 = vadd.f32 %v88, %v466
  %v468 = vpop.f32.mrb[0].mxu0
  %469 = vmatprep.mubr.bf16.mxu0 0
  %470 = vmatmul.mubr.bf16.gmra.mrb[0].mxu0 %v290
  %v471 = vpop.f32.mrb[0].mxu0
  %v472 = vadd.f32 %v88, %v471
  %v473 = vpop.f32.mrb[0].mxu0
  %v474 = vpop.f32.mrb[0].mxu0
  %v475 = vadd.f32 %v88, %v474
  %v476 = vpop.f32.mrb[0].mxu0
  %477 = vmatprep.mubr.bf16.mxu0 0
  %478 = vmatmul.mubr.bf16.gmra.mrb[0].mxu0 %v293
  %v479 = vpop.f32.mrb[0].mxu0
  %v480 = vadd.f32 %v88, %v479
  %v481 = vpop.f32.mrb[0].mxu0
  %v482 = vpop.f32.mrb[0].mxu0
  %v483 = vadd.f32 %v88, %v482
  %v484 = vpop.f32.mrb[0].mxu0
  %485 = vmatprep.mubr.bf16.mxu0 0
  %486 = vmatmul.mubr.bf16.gmra.mrb[0].mxu0 %v296
  %v487 = vpop.f32.mrb[0].mxu0
  %v488 = vadd.f32 %v88, %v487
  %v489 = vpop.f32.mrb[0].mxu0
  %v490 = vpop.f32.mrb[0].mxu0
  %v491 = vadd.f32 %v88, %v490
  %v492 = vpop.f32.mrb[0].mxu0
  %493 = vmatprep.mubr.bf16.mxu0 0
  %494 = vmatmul.mubr.bf16.gmra.mrb[0].mxu0 %v299
  %v495 = vpop.f32.mrb[0].mxu0
  %v496 = vadd.f32 %v88, %v495
  %v497 = vpop.f32.mrb[0].mxu0
  %v498 = vpop.f32.mrb[0].mxu0
  %v499 = vadd.f32 %v88, %v498
  %v500 = vpop.f32.mrb[0].mxu0
  %501 = vmatprep.mubr.bf16.mxu0 0
  %502 = vmatmul.mubr.bf16.gmra.mrb[0].mxu0 %v302
  %v503 = vpop.f32.mrb[0].mxu0
  %v504 = vadd.f32 %v88, %v503
  %v505 = vpop.f32.mrb[0].mxu0
  %v506 = vpop.f32.mrb[0].mxu0
  %v507 = vadd.f32 %v88, %v506
  %v508 = vpop.f32.mrb[0].mxu0
  %509 = vmatprep.mubr.bf16.mxu0 0
  %510 = vmatmul.mubr.bf16.gmra.mrb[0].mxu0 %v305
  %v511 = vpop.f32.mrb[0].mxu0
  %v512 = vadd.f32 %v88, %v511
  %v513 = vpop.f32.mrb[0].mxu0
  %v514 = vpop.f32.mrb[0].mxu0
  %v515 = vadd.f32 %v88, %v514
  %v516 = vpop.f32.mrb[0].mxu0
  %517 = vmatprep.mubr.bf16.mxu0 0
  %518 = vmatmul.mubr.bf16.gmra.mrb[0].mxu0 %v308
  %v519 = vpop.f32.mrb[0].mxu0
  %v520 = vadd.f32 %v88, %v519
  %v521 = vpop.f32.mrb[0].mxu0
  %v522 = vpop.f32.mrb[0].mxu0
  %v523 = vadd.f32 %v88, %v522
  %v524 = vpop.f32.mrb[0].mxu0
  %525 = vmatprep.mubr.bf16.mxu0 0
  %526 = vmatmul.mubr.bf16.gmra.mrb[0].mxu0 %v311
  %v527 = vpop.f32.mrb[0].mxu0
  %v528 = vadd.f32 %v88, %v527
  %v529 = vpop.f32.mrb[0].mxu0
  %v530 = vpop.f32.mrb[0].mxu0
  %v531 = vadd.f32 %v88, %v530
  %v532 = vpop.f32.mrb[0].mxu0
  %533 = vmatprep.mubr.bf16.mxu0 0
  %534 = vmatmul.mubr.bf16.gmra.mrb[0].mxu0 %v314
  %v535 = vpop.f32.mrb[0].mxu0
  %v536 = vadd.f32 %v88, %v535
  %v537 = vpop.f32.mrb[0].mxu0
  %v538 = vpop.f32.mrb[0].mxu0
  %v539 = vadd.f32 %v88, %v538
  %v540 = vpop.f32.mrb[0].mxu0
  %541 = vmatprep.mubr.bf16.mxu0 0
  %542 = vmatmul.mubr.bf16.gmra.mrb[0].mxu0 %v317
  %v543 = vpop.f32.mrb[0].mxu0
  %v544 = vadd.f32 %v88, %v543
  %v545 = vpop.f32.mrb[0].mxu0
  %v546 = vpop.f32.mrb[0].mxu0
  %v547 = vadd.f32 %v88, %v546
  %v548 = vpop.f32.mrb[0].mxu0
  %549 = vmatprep.mubr.bf16.mxu0 0
  %550 = vmatmul.mubr.bf16.gmra.mrb[0].mxu0 %v320
  %v551 = vpop.f32.mrb[0].mxu0
  %v552 = vadd.f32 %v88, %v551
  %v553 = vpop.f32.mrb[0].mxu0
  %v554 = vpop.f32.mrb[0].mxu0
  %v555 = vadd.f32 %v88, %v554
  %v556 = vpop.f32.mrb[0].mxu0
  %557 = vmatprep.mubr.bf16.mxu0 0
  %558 = vmatmul.mubr.bf16.gmra.mrb[0].mxu0 %v323
  %v559 = vpop.f32.mrb[0].mxu0
  %v560 = vadd.f32 %v88, %v559
  %v561 = vpop.f32.mrb[0].mxu0
  %v562 = vpop.f32.mrb[0].mxu0
  %v563 = vadd.f32 %v88, %v562
  %v564 = vpop.f32.mrb[0].mxu0
  %565 = vmatprep.mubr.bf16.mxu0 0
  %566 = vmatmul.mubr.bf16.gmra.mrb[0].mxu0 %v326
  %v567 = vpop.f32.mrb[0].mxu0
  %v568 = vadd.f32 %v88, %v567
  %v569 = vpop.f32.mrb[0].mxu0
  %v570 = vpop.f32.mrb[0].mxu0
  %v571 = vadd.f32 %v88, %v570
  %v572 = vpop.f32.mrb[0].mxu0
  %573 = vmatprep.mubr.bf16.mxu0 0
  %574 = vmatmul.mubr.bf16.gmra.mrb[0].mxu0 %v329
  %v575 = vpop.f32.mrb[0].mxu0
  %v576 = vadd.f32 %v88, %v575
  %v577 = vpop.f32.mrb[0].mxu0
  %v578 = vpop.f32.mrb[0].mxu0
  %v579 = vadd.f32 %v88, %v578
  %v580 = vpop.f32.mrb[0].mxu0
  %581 = vmatprep.mubr.bf16.mxu0 0
  %582 = vmatmul.mubr.bf16.gmra.mrb[0].mxu0 %v332
  %v583 = vpop.f32.mrb[0].mxu0
  %v584 = vadd.f32 %v88, %v583
  %v585 = vpop.f32.mrb[0].mxu0
  %v586 = vpop.f32.mrb[0].mxu0
  %v587 = vadd.f32 %v88, %v586
  %v588 = vpop.f32.mrb[0].mxu0
  %589 = vmatprep.mubr.bf16.mxu0 0
  %590 = vmatmul.mubr.bf16.gmra.mrb[0].mxu0 %v335
  %v591 = vpop.f32.mrb[0].mxu0
  %v592 = vadd.f32 %v88, %v591
  %v593 = vpop.f32.mrb[0].mxu0
  %v594 = vpop.f32.mrb[0].mxu0
  %v595 = vadd.f32 %v88, %v594
  %v596 = vpop.f32.mrb[0].mxu0
  %597 = vmatprep.mubr.bf16.mxu0 0
  %598 = vmatmul.mubr.bf16.gmra.mrb[0].mxu0 %v338
  %v599 = vpop.f32.mrb[0].mxu0
  %v600 = vadd.f32 %v88, %v599
  %v601 = vpop.f32.mrb[0].mxu0
  %v602 = vpop.f32.mrb[0].mxu0
  %v603 = vadd.f32 %v88, %v602
  %v604 = vpop.f32.mrb[0].mxu0
  %605 = vmatprep.mubr.bf16.mxu0 0
  %606 = vmatmul.mubr.bf16.gmra.mrb[0].mxu0 %v341
  %v607 = vpop.f32.mrb[0].mxu0
  %v608 = vadd.f32 %v88, %v607
  %v609 = vpop.f32.mrb[0].mxu0
  %v610 = vpop.f32.mrb[0].mxu0
  %v611 = vadd.f32 %v88, %v610
  %v612 = vpop.f32.mrb[0].mxu0
  %613 = vmatprep.mubr.bf16.mxu0 0
  %614 = vmatmul.mubr.bf16.gmra.mrb[0].mxu0 %v344
  %v615 = vpop.f32.mrb[0].mxu0
  %v616 = vadd.f32 %v88, %v615
  %v617 = vpop.f32.mrb[0].mxu0
  %v618 = vpop.f32.mrb[0].mxu0
  %v619 = vadd.f32 %v88, %v618
  %v620 = vpop.f32.mrb[0].mxu0
  %621 = vmatprep.mubr.bf16.mxu0 0
  %622 = vmatmul.mubr.bf16.gmra.mrb[0].mxu0 %v347
  %v623 = vpop.f32.mrb[0].mxu0
  %v624 = vadd.f32 %v88, %v623
  %v625 = vpop.f32.mrb[0].mxu0
  %v626 = vpop.f32.mrb[0].mxu0
  %v627 = vadd.f32 %v88, %v626
  %v628 = vpop.f32.mrb[0].mxu0
  %629 = vmatprep.mubr.bf16.mxu0 0
  %630 = vmatmul.mubr.bf16.gmra.mrb[0].mxu0 %v350
  %v631 = vpop.f32.mrb[0].mxu0
  %v632 = vadd.f32 %v88, %v631
  %v633 = vpop.f32.mrb[0].mxu0
  %v634 = vpop.f32.mrb[0].mxu0
  %v635 = vadd.f32 %v88, %v634
  %v636 = vpop.f32.mrb[0].mxu0
  %637 = vmatprep.mubr.bf16.mxu0 0
  %638 = vmatmul.mubr.bf16.gmra.mrb[0].mxu0 %v353
  %v639 = vpop.f32.mrb[0].mxu0
  %v640 = vadd.f32 %v88, %v639
  %v641 = vpop.f32.mrb[0].mxu0
  %v642 = vpop.f32.mrb[0].mxu0
  %v643 = vadd.f32 %v88, %v642
  %v644 = vpop.f32.mrb[0].mxu0
  %645 = vmatprep.mubr.bf16.mxu0 0
  %646 = vmatmul.mubr.bf16.gmra.mrb[0].mxu0 %v356
  %v647 = vpop.f32.mrb[0].mxu0
  %v648 = vadd.f32 %v88, %v647
  %v649 = vpop.f32.mrb[0].mxu0
  %v650 = vpop.f32.mrb[0].mxu0
  %v651 = vadd.f32 %v88, %v650
  %v652 = vpop.f32.mrb[0].mxu0
  %653 = vdwg.mxu0
  %v654 = vmax.f32 %v400, 0.0
  %v655 = vmax.f32 %v403, 0.0
  %v656 = vmax.f32 %v408, 0.0
  %v657 = vmax.f32 %v411, 0.0
  %v658 = vmax.f32 %v416, 0.0
  %v659 = vmax.f32 %v419, 0.0
  %v660 = vmax.f32 %v424, 0.0
  %v661 = vmax.f32 %v427, 0.0
  %v662 = vmax.f32 %v432, 0.0
  %v663 = vmax.f32 %v435, 0.0
  %v664 = vmax.f32 %v440, 0.0
  %v665 = vmax.f32 %v443, 0.0
  %v666 = vmax.f32 %v448, 0.0
  %v667 = vmax.f32 %v451, 0.0
  %v668 = vmax.f32 %v456, 0.0
  %v669 = vmax.f32 %v459, 0.0
  %v670 = vmax.f32 %v464, 0.0
  %v671 = vmax.f32 %v467, 0.0
  %v672 = vmax.f32 %v472, 0.0
  %v673 = vmax.f32 %v475, 0.0
  %v674 = vmax.f32 %v480, 0.0
  %v675 = vmax.f32 %v483, 0.0
  %v676 = vmax.f32 %v488, 0.0
  %v677 = vmax.f32 %v491, 0.0
  %v678 = vmax.f32 %v496, 0.0
  %v679 = vmax.f32 %v499, 0.0
  %v680 = vmax.f32 %v504, 0.0
  %v681 = vmax.f32 %v507, 0.0
  %v682 = vmax.f32 %v512, 0.0
  %v683 = vmax.f32 %v515, 0.0
  %v684 = vmax.f32 %v520, 0.0
  %v685 = vmax.f32 %v523, 0.0
  %v686 = vmax.f32 %v528, 0.0
  %v687 = vmax.f32 %v531, 0.0
  %v688 = vmax.f32 %v536, 0.0
  %v689 = vmax.f32 %v539, 0.0
  %v690 = vmax.f32 %v544, 0.0
  %v691 = vmax.f32 %v547, 0.0
  %v692 = vmax.f32 %v552, 0.0
  %v693 = vmax.f32 %v555, 0.0
  %v694 = vmax.f32 %v560, 0.0
  %v695 = vmax.f32 %v563, 0.0
  %v696 = vmax.f32 %v568, 0.0
  %v697 = vmax.f32 %v571, 0.0
  %v698 = vmax.f32 %v576, 0.0
  %v699 = vmax.f32 %v579, 0.0
  %v700 = vmax.f32 %v584, 0.0
  %v701 = vmax.f32 %v587, 0.0
  %v702 = vmax.f32 %v592, 0.0
  %v703 = vmax.f32 %v595, 0.0
  %v704 = vmax.f32 %v600, 0.0
  %v705 = vmax.f32 %v603, 0.0
  %v706 = vmax.f32 %v608, 0.0
  %v707 = vmax.f32 %v611, 0.0
  %v708 = vmax.f32 %v616, 0.0
  %v709 = vmax.f32 %v619, 0.0
  %v710 = vmax.f32 %v624, 0.0
  %v711 = vmax.f32 %v627, 0.0
  %v712 = vmax.f32 %v632, 0.0
  %v713 = vmax.f32 %v635, 0.0
  %v714 = vmax.f32 %v640, 0.0
  %v715 = vmax.f32 %v643, 0.0
  %v716 = vmax.f32 %v648, 0.0
  %v717 = vmax.f32 %v651, 0.0
  %v718 = vpack.c.bf16 %v655, %v654
  %v719 = vpack.c.bf16 %v657, %v656
  %v720 = vpack.c.bf16 %v659, %v658
  %v721 = vpack.c.bf16 %v661, %v660
  %v722 = vpack.c.bf16 %v663, %v662
  %v723 = vpack.c.bf16 %v665, %v664
  %v724 = vpack.c.bf16 %v667, %v666
  %v725 = vpack.c.bf16 %v669, %v668
  %v726 = vpack.c.bf16 %v671, %v670
  %v727 = vpack.c.bf16 %v673, %v672
  %v728 = vpack.c.bf16 %v675, %v674
  %v729 = vpack.c.bf16 %v677, %v676
  %v730 = vpack.c.bf16 %v679, %v678
  %v731 = vpack.c.bf16 %v681, %v680
  %v732 = vpack.c.bf16 %v683, %v682
  %v733 = vpack.c.bf16 %v685, %v684
  %v734 = vpack.c.bf16 %v687, %v686
  %v735 = vpack.c.bf16 %v689, %v688
  %v736 = vpack.c.bf16 %v691, %v690
  %v737 = vpack.c.bf16 %v693, %v692
  %v738 = vpack.c.bf16 %v695, %v694
  %v739 = vpack.c.bf16 %v697, %v696
  %v740 = vpack.c.bf16 %v699, %v698
  %v741 = vpack.c.bf16 %v701, %v700
  %v742 = vpack.c.bf16 %v703, %v702
  %v743 = vpack.c.bf16 %v705, %v704
  %v744 = vpack.c.bf16 %v707, %v706
  %v745 = vpack.c.bf16 %v709, %v708
  %v746 = vpack.c.bf16 %v711, %v710
  %v747 = vpack.c.bf16 %v713, %v712
  %v748 = vpack.c.bf16 %v715, %v714
  %v749 = vpack.c.bf16 %v717, %v716
  %v782 = vunpack.c.l.b16 %v718
  %v783 = vunpack.c.h.b16 %v718
  %v784 = vunpack.c.l.b16 %v719
  %v785 = vunpack.c.h.b16 %v719
  %v786 = vunpack.c.l.b16 %v720
  %v787 = vunpack.c.h.b16 %v720
  %v788 = vunpack.c.l.b16 %v721
  %v789 = vunpack.c.h.b16 %v721
  %v790 = vunpack.c.l.b16 %v722
  %v791 = vunpack.c.h.b16 %v722
  %v792 = vunpack.c.l.b16 %v723
  %v793 = vunpack.c.h.b16 %v723
  %v794 = vunpack.c.l.b16 %v724
  %v795 = vunpack.c.h.b16 %v724
  %v796 = vunpack.c.l.b16 %v725
  %v797 = vunpack.c.h.b16 %v725
  %v798 = vunpack.c.l.b16 %v726
  %v799 = vunpack.c.h.b16 %v726
  %v800 = vunpack.c.l.b16 %v727
  %v801 = vunpack.c.h.b16 %v727
  %v802 = vunpack.c.l.b16 %v728
  %v803 = vunpack.c.h.b16 %v728
  %v804 = vunpack.c.l.b16 %v729
  %v805 = vunpack.c.h.b16 %v729
  %v806 = vunpack.c.l.b16 %v730
  %v807 = vunpack.c.h.b16 %v730
  %v808 = vunpack.c.l.b16 %v731
  %v809 = vunpack.c.h.b16 %v731
  %v810 = vunpack.c.l.b16 %v732
  %v811 = vunpack.c.h.b16 %v732
  %v812 = vunpack.c.l.b16 %v733
  %v813 = vunpack.c.h.b16 %v733
  %v814 = vunpack.c.l.b16 %v734
  %v815 = vunpack.c.h.b16 %v734
  %v816 = vunpack.c.l.b16 %v735
  %v817 = vunpack.c.h.b16 %v735
  %v818 = vunpack.c.l.b16 %v736
  %v819 = vunpack.c.h.b16 %v736
  %v820 = vunpack.c.l.b16 %v737
  %v821 = vunpack.c.h.b16 %v737
  %v822 = vunpack.c.l.b16 %v738
  %v823 = vunpack.c.h.b16 %v738
  %v824 = vunpack.c.l.b16 %v739
  %v825 = vunpack.c.h.b16 %v739
  %v826 = vunpack.c.l.b16 %v740
  %v827 = vunpack.c.h.b16 %v740
  %v828 = vunpack.c.l.b16 %v741
  %v829 = vunpack.c.h.b16 %v741
  %v830 = vunpack.c.l.b16 %v742
  %v831 = vunpack.c.h.b16 %v742
  %v832 = vunpack.c.l.b16 %v743
  %v833 = vunpack.c.h.b16 %v743
  %v834 = vunpack.c.l.b16 %v744
  %v835 = vunpack.c.h.b16 %v744
  %v836 = vunpack.c.l.b16 %v745
  %v837 = vunpack.c.h.b16 %v745
  %v838 = vunpack.c.l.b16 %v746
  %v839 = vunpack.c.h.b16 %v746
  %v840 = vunpack.c.l.b16 %v747
  %v841 = vunpack.c.h.b16 %v747
  %v842 = vunpack.c.l.b16 %v748
  %v843 = vunpack.c.h.b16 %v748
  %v844 = vunpack.c.l.b16 %v749
  %v845 = vunpack.c.h.b16 %v749
  %v846 = vpack.c.b16 %v782, %v782
  %v847 = vpack.c.b16 %v783, %v783
  %v848 = vpack.c.b16 %v784, %v784
  %v849 = vpack.c.b16 %v785, %v785
  %v850 = vpack.c.b16 %v786, %v786
  %v851 = vpack.c.b16 %v787, %v787
  %v852 = vpack.c.b16 %v788, %v788
  %v853 = vpack.c.b16 %v789, %v789
  %v854 = vpack.c.b16 %v790, %v790
  %v855 = vpack.c.b16 %v791, %v791
  %v856 = vpack.c.b16 %v792, %v792
  %v857 = vpack.c.b16 %v793, %v793
  %v858 = vpack.c.b16 %v794, %v794
  %v859 = vpack.c.b16 %v795, %v795
  %v860 = vpack.c.b16 %v796, %v796
  %v861 = vpack.c.b16 %v797, %v797
  %v862 = vpack.c.b16 %v798, %v798
  %v863 = vpack.c.b16 %v799, %v799
  %v864 = vpack.c.b16 %v800, %v800
  %v865 = vpack.c.b16 %v801, %v801
  %v866 = vpack.c.b16 %v802, %v802
  %v867 = vpack.c.b16 %v803, %v803
  %v868 = vpack.c.b16 %v804, %v804
  %v869 = vpack.c.b16 %v805, %v805
  %v870 = vpack.c.b16 %v806, %v806
  %v871 = vpack.c.b16 %v807, %v807
  %v872 = vpack.c.b16 %v808, %v808
  %v873 = vpack.c.b16 %v809, %v809
  %v874 = vpack.c.b16 %v810, %v810
  %v875 = vpack.c.b16 %v811, %v811
  %v876 = vpack.c.b16 %v812, %v812
  %v877 = vpack.c.b16 %v813, %v813
  %v878 = vpack.c.b16 %v814, %v814
  %v879 = vpack.c.b16 %v815, %v815
  %v880 = vpack.c.b16 %v816, %v816
  %v881 = vpack.c.b16 %v817, %v817
  %v882 = vpack.c.b16 %v818, %v818
  %v883 = vpack.c.b16 %v819, %v819
  %v884 = vpack.c.b16 %v820, %v820
  %v885 = vpack.c.b16 %v821, %v821
  %v886 = vpack.c.b16 %v822, %v822
  %v887 = vpack.c.b16 %v823, %v823
  %v888 = vpack.c.b16 %v824, %v824
  %v889 = vpack.c.b16 %v825, %v825
  %v890 = vpack.c.b16 %v826, %v826
  %v891 = vpack.c.b16 %v827, %v827
  %v892 = vpack.c.b16 %v828, %v828
  %v893 = vpack.c.b16 %v829, %v829
  %v894 = vpack.c.b16 %v830, %v830
  %v895 = vpack.c.b16 %v831, %v831
  %v896 = vpack.c.b16 %v832, %v832
  %v897 = vpack.c.b16 %v833, %v833
  %v898 = vpack.c.b16 %v834, %v834
  %v899 = vpack.c.b16 %v835, %v835
  %v900 = vpack.c.b16 %v836, %v836
  %v901 = vpack.c.b16 %v837, %v837
  %v902 = vpack.c.b16 %v838, %v838
  %v903 = vpack.c.b16 %v839, %v839
  %v904 = vpack.c.b16 %v840, %v840
  %v905 = vpack.c.b16 %v841, %v841
  %v906 = vpack.c.b16 %v842, %v842
  %v907 = vpack.c.b16 %v843, %v843
  %v908 = vpack.c.b16 %v844, %v844
  %v909 = vpack.c.b16 %v845, %v845
  %vm974 = vcmask 519168
  %975 = vst.msk [vmem:[%s3] sm:$0xf] %vm974, %v846
  %976 = vst.msk [vmem:[%s3 + $0x4] sm:$0xf] %vm974, %v847
  %977 = vst.msk [vmem:[%s3 + $0x8] sm:$0xf] %vm974, %v848
  %978 = vst.msk [vmem:[%s3 + $0xc] sm:$0xf] %vm974, %v849
  %979 = vst.msk [vmem:[%s3 + $0x10] sm:$0xf] %vm974, %v850
  %980 = vst.msk [vmem:[%s3 + $0x14] sm:$0xf] %vm974, %v851
  %981 = vst.msk [vmem:[%s3 + $0x18] sm:$0xf] %vm974, %v852
  %982 = vst.msk [vmem:[%s3 + $0x1c] sm:$0xf] %vm974, %v853
  %983 = vst.msk [vmem:[%s3 + $0x20] sm:$0xf] %vm974, %v854
  %984 = vst.msk [vmem:[%s3 + $0x24] sm:$0xf] %vm974, %v855
  %985 = vst.msk [vmem:[%s3 + $0x28] sm:$0xf] %vm974, %v856
  %986 = vst.msk [vmem:[%s3 + $0x2c] sm:$0xf] %vm974, %v857
  %987 = vst.msk [vmem:[%s3 + $0x30] sm:$0xf] %vm974, %v858
  %988 = vst.msk [vmem:[%s3 + $0x34] sm:$0xf] %vm974, %v859
  %989 = vst.msk [vmem:[%s3 + $0x38] sm:$0xf] %vm974, %v860
  %990 = vst.msk [vmem:[%s3 + $0x3c] sm:$0xf] %vm974, %v861
  %991 = vst.msk [vmem:[%s3 + $0x40] sm:$0xf] %vm974, %v862
  %992 = vst.msk [vmem:[%s3 + $0x44] sm:$0xf] %vm974, %v863
  %993 = vst.msk [vmem:[%s3 + $0x48] sm:$0xf] %vm974, %v864
  %994 = vst.msk [vmem:[%s3 + $0x4c] sm:$0xf] %vm974, %v865
  %995 = vst.msk [vmem:[%s3 + $0x50] sm:$0xf] %vm974, %v866
  %996 = vst.msk [vmem:[%s3 + $0x54] sm:$0xf] %vm974, %v867
  %997 = vst.msk [vmem:[%s3 + $0x58] sm:$0xf] %vm974, %v868
  %998 = vst.msk [vmem:[%s3 + $0x5c] sm:$0xf] %vm974, %v869
  %999 = vst.msk [vmem:[%s3 + $0x60] sm:$0xf] %vm974, %v870
  %1000 = vst.msk [vmem:[%s3 + $0x64] sm:$0xf] %vm974, %v871
  %1001 = vst.msk [vmem:[%s3 + $0x68] sm:$0xf] %vm974, %v872
  %1002 = vst.msk [vmem:[%s3 + $0x6c] sm:$0xf] %vm974, %v873
  %1003 = vst.msk [vmem:[%s3 + $0x70] sm:$0xf] %vm974, %v874
  %1004 = vst.msk [vmem:[%s3 + $0x74] sm:$0xf] %vm974, %v875
  %1005 = vst.msk [vmem:[%s3 + $0x78] sm:$0xf] %vm974, %v876
  %1006 = vst.msk [vmem:[%s3 + $0x7c] sm:$0xf] %vm974, %v877
  %1007 = vst.msk [vmem:[%s3 + $0x80] sm:$0xf] %vm974, %v878
  %1008 = vst.msk [vmem:[%s3 + $0x84] sm:$0xf] %vm974, %v879
  %1009 = vst.msk [vmem:[%s3 + $0x88] sm:$0xf] %vm974, %v880
  %1010 = vst.msk [vmem:[%s3 + $0x8c] sm:$0xf] %vm974, %v881
  %1011 = vst.msk [vmem:[%s3 + $0x90] sm:$0xf] %vm974, %v882
  %1012 = vst.msk [vmem:[%s3 + $0x94] sm:$0xf] %vm974, %v883
  %1013 = vst.msk [vmem:[%s3 + $0x98] sm:$0xf] %vm974, %v884
  %1014 = vst.msk [vmem:[%s3 + $0x9c] sm:$0xf] %vm974, %v885
  %1015 = vst.msk [vmem:[%s3 + $0xa0] sm:$0xf] %vm974, %v886
  %1016 = vst.msk [vmem:[%s3 + $0xa4] sm:$0xf] %vm974, %v887
  %1017 = vst.msk [vmem:[%s3 + $0xa8] sm:$0xf] %vm974, %v888
  %1018 = vst.msk [vmem:[%s3 + $0xac] sm:$0xf] %vm974, %v889
  %1019 = vst.msk [vmem:[%s3 + $0xb0] sm:$0xf] %vm974, %v890
  %1020 = vst.msk [vmem:[%s3 + $0xb4] sm:$0xf] %vm974, %v891
  %1021 = vst.msk [vmem:[%s3 + $0xb8] sm:$0xf] %vm974, %v892
  %1022 = vst.msk [vmem:[%s3 + $0xbc] sm:$0xf] %vm974, %v893
  %1023 = vst.msk [vmem:[%s3 + $0xc0] sm:$0xf] %vm974, %v894
  %1024 = vst.msk [vmem:[%s3 + $0xc4] sm:$0xf] %vm974, %v895
  %1025 = vst.msk [vmem:[%s3 + $0xc8] sm:$0xf] %vm974, %v896
  %1026 = vst.msk [vmem:[%s3 + $0xcc] sm:$0xf] %vm974, %v897
  %1027 = vst.msk [vmem:[%s3 + $0xd0] sm:$0xf] %vm974, %v898
  %1028 = vst.msk [vmem:[%s3 + $0xd4] sm:$0xf] %vm974, %v899
  %1029 = vst.msk [vmem:[%s3 + $0xd8] sm:$0xf] %vm974, %v900
  %1030 = vst.msk [vmem:[%s3 + $0xdc] sm:$0xf] %vm974, %v901
  %1031 = vst.msk [vmem:[%s3 + $0xe0] sm:$0xf] %vm974, %v902
  %1032 = vst.msk [vmem:[%s3 + $0xe4] sm:$0xf] %vm974, %v903
  %1033 = vst.msk [vmem:[%s3 + $0xe8] sm:$0xf] %vm974, %v904
  %1034 = vst.msk [vmem:[%s3 + $0xec] sm:$0xf] %vm974, %v905
  %1035 = vst.msk [vmem:[%s3 + $0xf0] sm:$0xf] %vm974, %v906
  %1036 = vst.msk [vmem:[%s3 + $0xf4] sm:$0xf] %vm974, %v907
  %1037 = vst.msk [vmem:[%s3 + $0xf8] sm:$0xf] %vm974, %v908
  %1038 = vst.msk [vmem:[%s3 + $0xfc] sm:$0xf] %vm974, %v909
  // Predicated region
  $region14: #{lst_encoder4_forward.12} parent=0 // pred_check
    _
  $region15: #{lst_encoder4_forward.12} parent=0 // pred_check_branch
    %1040 = sbr.rel (0) target = $region17
  $region16: #{lst_encoder4_forward.12} parent=0 // pred_region
    _
  $region17: #{lst_encoder4_forward.12} parent=0 // pred_fallthru
    _
  // Predicated region
  $region18: #{lst_encoder4_forward.12} parent=0 // pred_check
    _
  $region19: #{lst_encoder4_forward.12} parent=0 // pred_check_branch
    %1042 = sbr.rel (0) target = $region21
  $region20: #{lst_encoder4_forward.12} parent=0 // pred_region
    _
  $region21: #{lst_encoder4_forward.12} parent=0 // pred_fallthru
    _

// kernel: lst_encoder4_forward.14
$region0: #{lst_encoder4_forward.14}
  #allocation0 [shape = 'u32[]', space=smem, size = 0x4, offset = 0x4, fixed_abs, tag = 'smem constant byte address 0x4 - core index']
  #allocation1 [shape = 'u32[144,128]{1,0:T(1,128)}', space=vmem, size = 0x12000, scoped, tag = 'internal scratch']
  %s0 = inlined_call_operand.vmem [shape: bf16[16,2,8,128], index: 0, kind: input, shape index: {}]
  %s1 = inlined_call_operand.vmem [shape: bf16[16,8,64], index: 1, kind: output, shape index: {}]
  %s2 = sld [smem:[#allocation0]]
  $region37: #{lst_encoder4_forward.14} parent=0
    _
  %s4 = ssub.s32 1, %s2
  %s5 = scalar_select 0, %s4, %s2
  loop: start=0, step=1, limit=4
  $region2: #{lst_encoder4_forward.14} parent=0 // loop_pre_header
    _
  $region3: #{lst_encoder4_forward.14} parent=0 // loop_header
    %s7 = sphi 0, %s11
    %p8 = scmp.ge.s32.totalorder %s7, 4
    %s17 = sphi 0, %s19
    %s20 = sphi 0, %s17
    %s21 = sphi 0, %s20
    %s37 = sphi 0, %s21
    %s43 = sphi 0, %s45
    %s46 = sphi 0, %s43
    %s47 = sphi 0, %s46
    %s63 = sphi 0, %s47
  $region4: #{lst_encoder4_forward.14} parent=0 // loop_header_branch
    %10 = sbr.rel (%p8) target = $region8
  $region5: #{lst_encoder4_forward.14} parent=0 // loop_body
    %s12 = ssub.s32 %s7, 1
    %s13 = ssub.s32 %s7, 2
    %s14 = sadd.s32 %s7, 1
    %s15 = ssub.s32 %s7, %s14
    %p16 = scmp.eq.s32.totalorder %s15, 0
    %s18 = sadd.s32 %s17, 1
    %s19 = scalar_select %p16, %s17, %s18
    %p22 = pneg %p16
    %p23 = scmp.eq.s32.totalorder %s7, 1
    %p24 = por %p22, %p23
    %p25 = scmp.ne.s32.totalorder %s17, %s20
    %p26 = scmp.eq.s32.totalorder %s7, 0
    %p27 = por %p25, %p26
    %p28 = scmp.ne.s32.totalorder %s17, %s20
    %p29 = scmp.eq.s32.totalorder %s12, 1
    %p30 = por %p28, %p29
    %p31 = scmp.ne.s32.totalorder %s20, %s21
    %p32 = scmp.eq.s32.totalorder %s12, 0
    %p33 = por %p31, %p32
    %p34 = scmp.ne.s32.totalorder %s20, %s21
    %p35 = scmp.eq.s32.totalorder %s13, 1
    %p36 = por %p34, %p35
    %p38 = scmp.ne.s32.totalorder %s21, %s37
    %p39 = scmp.eq.s32.totalorder %s13, 0
    %p40 = por %p38, %p39
    %s41 = ssub.s32 %s7, %s14
    %p42 = scmp.eq.s32.totalorder %s41, 0
    %s44 = sadd.s32 %s43, 1
    %s45 = scalar_select %p42, %s43, %s44
    %p48 = pneg %p42
    %p49 = scmp.eq.s32.totalorder %s7, 1
    %p50 = por %p48, %p49
    %p51 = scmp.ne.s32.totalorder %s43, %s46
    %p52 = scmp.eq.s32.totalorder %s7, 0
    %p53 = por %p51, %p52
    %p54 = scmp.ne.s32.totalorder %s43, %s46
    %p55 = scmp.eq.s32.totalorder %s12, 1
    %p56 = por %p54, %p55
    %p57 = scmp.ne.s32.totalorder %s46, %s47
    %p58 = scmp.eq.s32.totalorder %s12, 0
    %p59 = por %p57, %p58
    %p60 = scmp.ne.s32.totalorder %s46, %s47
    %p61 = scmp.eq.s32.totalorder %s13, 1
    %p62 = por %p60, %p61
    %p64 = scmp.ne.s32.totalorder %s47, %s63
    %p65 = scmp.eq.s32.totalorder %s13, 0
    %p66 = por %p64, %p65
    %p67 = scmp.le.s32.totalorder 1, %s7
    %p68 = scmp.lt.s32.totalorder %s7, 3
    %p69 = pnand %p67, %p68
    %p70 = pneg %p69
    // Predicated region
    $region9: #{lst_encoder4_forward.14} parent=5 // pred_check
      _
    $region10: #{lst_encoder4_forward.14} parent=5 // pred_check_branch
      %72 = sbr.rel (%p69) target = $region12
    $region11: #{lst_encoder4_forward.14} parent=5 // pred_region
      %s73 = ssub.s32 %s7, 1
    $region12: #{lst_encoder4_forward.14} parent=5 // pred_fallthru
      _
    %p74 = scmp.lt.s32.totalorder %s7, 2
    // Predicated region
    $region13: #{lst_encoder4_forward.14} parent=5 // pred_check
      %p75 = pneg %p74
    $region14: #{lst_encoder4_forward.14} parent=5 // pred_check_branch
      %77 = sbr.rel (%p75) target = $region16
    $region15: #{lst_encoder4_forward.14} parent=5 // pred_region
      // Predicated region
      $region17: #{lst_encoder4_forward.14} parent=15 // pred_check
        %p78 = pneg %p27
      $region18: #{lst_encoder4_forward.14} parent=15 // pred_check_branch
        %80 = sbr.rel (%p78) target = $region20
      $region19: #{lst_encoder4_forward.14} parent=15 // pred_region
        %s81 = smul.u32 8, %s7
        %p82 = scmp.lt.s32.totalorder %s81, 15
        %s83 = scalar_select %p82, %s81, 15
        %s84 = smul.addr %s83, 2
        %s85 = smul.addr %s84, 4
        %s86 = scalar_lea.vmem %s0, %s85
        %s87 = smul.u32 8, %s7
      $region20: #{lst_encoder4_forward.14} parent=15 // pred_fallthru
        _
    $region16: #{lst_encoder4_forward.14} parent=5 // pred_fallthru
      _
    %p88 = scmp.le.s32.totalorder 1, %s7
    %p89 = scmp.lt.s32.totalorder %s7, 3
    %p90 = pnand %p88, %p89
    %p91 = pneg %p90
    // Predicated region
    $region21: #{lst_encoder4_forward.14} parent=5 // pred_check
      _
    $region22: #{lst_encoder4_forward.14} parent=5 // pred_check_branch
      %93 = sbr.rel (%p90) target = $region24
    $region23: #{lst_encoder4_forward.14} parent=5 // pred_region
      %s94 = ssub.s32 %s7, 1
      %s95 = smul.u32 8, %s12
      %p96 = scmp.lt.s32.totalorder %s95, 15
      %s97 = scalar_select %p96, %s95, 15
      %s98 = smul.addr %s97, 2
      %s99 = smul.addr %s98, 4
      %s100 = scalar_lea.vmem %s0, %s99
      %p101 = pneg %p33
      %p102 = pneg %p30
      %p103 = pneg %p59
      %p104 = pneg %p56
      %s105 = smul.u32 8, %s12
      %p106 = scmp.lt.s32.totalorder %s105, 15
      %s107 = scalar_select %p106, %s105, 15
      %s108 = smul.addr %s107, 4
      %s109 = scalar_lea.vmem %s1, %s108
      %s110 = smul.u32 8, %s12
      %p111 = scmp.lt.s32.totalorder %s110, 15
      %s112 = scalar_select %p111, %s110, 15
      %s113 = smul.addr %s112, 2
      %s114 = smul.addr %s113, 4
      %s115 = scalar_lea.vmem %s0, %s114
      %s116 = smul.u32 8, %s12
      %s117 = smul.u32 8, %s12
      %p118 = scmp.lt.s32.totalorder %s117, 15
      %s119 = scalar_select %p118, %s117, 15
      %s120 = smul.addr %s119, 4
      %s121 = scalar_lea.vmem %s1, %s120
      %s122 = smul.u32 8, %s12
      %v123 = vld [vmem:[%s115] sm:$0xf]
      %v124 = vld [vmem:[%s115 + $0x4] sm:$0xf]
      %v125 = vld [vmem:[%s115 + $0x8] sm:$0xf]
      %v126 = vld [vmem:[%s115 + $0xc] sm:$0xf]
      %v127 = vld [vmem:[%s115 + $0x10] sm:$0xf]
      %v128 = vld [vmem:[%s115 + $0x14] sm:$0xf]
      %v129 = vld [vmem:[%s115 + $0x18] sm:$0xf]
      %v130 = vld [vmem:[%s115 + $0x1c] sm:$0xf]
      %v131 = vld [vmem:[%s115 + $0x20] sm:$0xf]
      %v132 = vld [vmem:[%s115 + $0x24] sm:$0xf]
      %v133 = vld [vmem:[%s115 + $0x28] sm:$0xf]
      %v134 = vld [vmem:[%s115 + $0x2c] sm:$0xf]
      %v135 = vld [vmem:[%s115 + $0x30] sm:$0xf]
      %v136 = vld [vmem:[%s115 + $0x34] sm:$0xf]
      %v137 = vld [vmem:[%s115 + $0x38] sm:$0xf]
      %v138 = vld [vmem:[%s115 + $0x3c] sm:$0xf]
      %v139 = vmax.bf16 %v123, %v124
      %v140 = vmax.bf16 %v125, %v126
      %v141 = vmax.bf16 %v127, %v128
      %v142 = vmax.bf16 %v129, %v130
      %v143 = vmax.bf16 %v131, %v132
      %v144 = vmax.bf16 %v133, %v134
      %v145 = vmax.bf16 %v135, %v136
      %v146 = vmax.bf16 %v137, %v138
      %155 = vrot.lane.b32.xlu0 %v139, 64
      %v156 = vpop.permute.xlu0 %155
      %157 = vrot.lane.b32.xlu0 %v140, 64
      %v158 = vpop.permute.xlu0 %157
      %159 = vrot.lane.b32.xlu0 %v141, 64
      %v160 = vpop.permute.xlu0 %159
      %161 = vrot.lane.b32.xlu0 %v142, 64
      %v162 = vpop.permute.xlu0 %161
      %163 = vrot.lane.b32.xlu0 %v143, 64
      %v164 = vpop.permute.xlu0 %163
      %165 = vrot.lane.b32.xlu0 %v144, 64
      %v166 = vpop.permute.xlu0 %165
      %167 = vrot.lane.b32.xlu0 %v145, 64
      %v168 = vpop.permute.xlu0 %167
      %169 = vrot.lane.b32.xlu0 %v146, 64
      %v170 = vpop.permute.xlu0 %169
      %v179 = vmax.bf16 %v139, %v156
      %v180 = vmax.bf16 %v140, %v158
      %v181 = vmax.bf16 %v141, %v160
      %v182 = vmax.bf16 %v142, %v162
      %v183 = vmax.bf16 %v143, %v164
      %v184 = vmax.bf16 %v144, %v166
      %v185 = vmax.bf16 %v145, %v168
      %v186 = vmax.bf16 %v146, %v170
      %vm187 = vcmask 519168
      %188 = vst.msk [vmem:[%s121] sm:$0xf] %vm187, %v179
      %189 = vst.msk [vmem:[%s121 + $0x4] sm:$0xf] %vm187, %v180
      %190 = vst.msk [vmem:[%s121 + $0x8] sm:$0xf] %vm187, %v181
      %191 = vst.msk [vmem:[%s121 + $0xc] sm:$0xf] %vm187, %v182
      %192 = vst.msk [vmem:[%s121 + $0x10] sm:$0xf] %vm187, %v183
      %193 = vst.msk [vmem:[%s121 + $0x14] sm:$0xf] %vm187, %v184
      %194 = vst.msk [vmem:[%s121 + $0x18] sm:$0xf] %vm187, %v185
      %195 = vst.msk [vmem:[%s121 + $0x1c] sm:$0xf] %vm187, %v186
      %s196 = smul.u32 8, %s12
      %p197 = scmp.lt.s32.totalorder %s196, 15
      %s198 = scalar_select %p197, %s196, 15
      %s199 = smul.addr %s198, 4
      %s200 = scalar_lea.vmem %s1, %s199
      // Predicated region
      $region25: #{lst_encoder4_forward.14} parent=23 // pred_check
        %p201 = pneg %p56
      $region26: #{lst_encoder4_forward.14} parent=23 // pred_check_branch
        %203 = sbr.rel (%p201) target = $region28
      $region27: #{lst_encoder4_forward.14} parent=23 // pred_region
        %s204 = smul.u32 8, %s12
      $region28: #{lst_encoder4_forward.14} parent=23 // pred_fallthru
        _
    $region24: #{lst_encoder4_forward.14} parent=5 // pred_fallthru
      _
    %p205 = scmp.le.s32.totalorder 2, %s7
    // Predicated region
    $region29: #{lst_encoder4_forward.14} parent=5 // pred_check
      %p206 = pneg %p205
    $region30: #{lst_encoder4_forward.14} parent=5 // pred_check_branch
      %208 = sbr.rel (%p206) target = $region32
    $region31: #{lst_encoder4_forward.14} parent=5 // pred_region
      %s209 = ssub.s32 %s7, 2
      // Predicated region
      $region33: #{lst_encoder4_forward.14} parent=31 // pred_check
        %p210 = pneg %p62
      $region34: #{lst_encoder4_forward.14} parent=31 // pred_check_branch
        %212 = sbr.rel (%p210) target = $region36
      $region35: #{lst_encoder4_forward.14} parent=31 // pred_region
        %s213 = smul.u32 8, %s13
        %p214 = scmp.lt.s32.totalorder %s213, 15
        %s215 = scalar_select %p214, %s213, 15
        %s216 = smul.addr %s215, 4
        %s217 = scalar_lea.vmem %s1, %s216
      $region36: #{lst_encoder4_forward.14} parent=31 // pred_fallthru
        _
    $region32: #{lst_encoder4_forward.14} parent=5 // pred_fallthru
      _
  $region6: #{lst_encoder4_forward.14} parent=0 // loop_footer
    %s11 = sadd.s32 1, %s7
  $region7: #{lst_encoder4_forward.14} parent=0 // loop_footer_branch
    %6 = sbr.rel target = $region3
  $region8: #{lst_encoder4_forward.14} parent=0 // loop_exit
    _

// kernel: lst_encoder4_forward.13
$region0: #{lst_encoder4_forward.13}
  #allocation0 [shape = 'u32[]', space=smem, size = 0x4, offset = 0x4, fixed_abs, tag = 'smem constant byte address 0x4 - core index']
  #allocation1 [shape = 'u32[144,128]{1,0:T(1,128)}', space=vmem, size = 0x12000, scoped, tag = 'internal scratch']
  %s0 = inlined_call_operand.vmem [shape: bf16[512,576], index: 0, kind: input, shape index: {}]
  %s1 = inlined_call_operand.vmem [shape: bf16[576,64], index: 1, kind: input, shape index: {}]
  %s2 = inlined_call_operand.vmem [shape: f32[1,64], index: 2, kind: input, shape index: {}]
  %s3 = inlined_call_operand.vmem [shape: bf16[512,64], index: 3, kind: output, shape index: {}]
  %s4 = sld [smem:[#allocation0]]
  $region22: #{lst_encoder4_forward.13} parent=0
    _
  %s6 = ssub.s32 1, %s4
  %s7 = scalar_select 0, %s6, %s4
  // Predicated region
  $region2: #{lst_encoder4_forward.13} parent=0 // pred_check
    _
  $region3: #{lst_encoder4_forward.13} parent=0 // pred_check_branch
    %9 = sbr.rel (0) target = $region5
  $region4: #{lst_encoder4_forward.13} parent=0 // pred_region
    _
  $region5: #{lst_encoder4_forward.13} parent=0 // pred_fallthru
    _
  // Predicated region
  $region6: #{lst_encoder4_forward.13} parent=0 // pred_check
    _
  $region7: #{lst_encoder4_forward.13} parent=0 // pred_check_branch
    %11 = sbr.rel (0) target = $region9
  $region8: #{lst_encoder4_forward.13} parent=0 // pred_region
    _
  $region9: #{lst_encoder4_forward.13} parent=0 // pred_fallthru
    _
  // Predicated region
  $region10: #{lst_encoder4_forward.13} parent=0 // pred_check
    _
  $region11: #{lst_encoder4_forward.13} parent=0 // pred_check_branch
    %13 = sbr.rel (0) target = $region13
  $region12: #{lst_encoder4_forward.13} parent=0 // pred_region
    _
  $region13: #{lst_encoder4_forward.13} parent=0 // pred_fallthru
    _
  %v15 = vld [vmem:[%s0] sm:$0xff]
  %v16 = vld [vmem:[%s0 + $0x8] sm:$0xff]
  %v17 = vld [vmem:[%s0 + $0x10] sm:$0xf]
  %v18 = vld [vmem:[%s0 + $0x14] sm:$0xff]
  %v19 = vld [vmem:[%s0 + $0x1c] sm:$0xff]
  %v20 = vld [vmem:[%s0 + $0x24] sm:$0xf]
  %v21 = vld [vmem:[%s0 + $0x28] sm:$0xff]
  %v22 = vld [vmem:[%s0 + $0x30] sm:$0xff]
  %v23 = vld [vmem:[%s0 + $0x38] sm:$0xf]
  %v24 = vld [vmem:[%s0 + $0x3c] sm:$0xff]
  %v25 = vld [vmem:[%s0 + $0x44] sm:$0xff]
  %v26 = vld [vmem:[%s0 + $0x4c] sm:$0xf]
  %v27 = vld [vmem:[%s0 + $0x50] sm:$0xff]
  %v28 = vld [vmem:[%s0 + $0x58] sm:$0xff]
  %v29 = vld [vmem:[%s0 + $0x60] sm:$0xf]
  %v30 = vld [vmem:[%s0 + $0x64] sm:$0xff]
  %v31 = vld [vmem:[%s0 + $0x6c] sm:$0xff]
  %v32 = vld [vmem:[%s0 + $0x74] sm:$0xf]
  %v33 = vld [vmem:[%s0 + $0x78] sm:$0xff]
  %v34 = vld [vmem:[%s0 + $0x80] sm:$0xff]
  %v35 = vld [vmem:[%s0 + $0x88] sm:$0xf]
  %v36 = vld [vmem:[%s0 + $0x8c] sm:$0xff]
  %v37 = vld [vmem:[%s0 + $0x94] sm:$0xff]
  %v38 = vld [vmem:[%s0 + $0x9c] sm:$0xf]
  %v39 = vld [vmem:[%s0 + $0xa0] sm:$0xff]
  %v40 = vld [vmem:[%s0 + $0xa8] sm:$0xff]
  %v41 = vld [vmem:[%s0 + $0xb0] sm:$0xf]
  %v42 = vld [vmem:[%s0 + $0xb4] sm:$0xff]
  %v43 = vld [vmem:[%s0 + $0xbc] sm:$0xff]
  %v44 = vld [vmem:[%s0 + $0xc4] sm:$0xf]
  %v45 = vld [vmem:[%s0 + $0xc8] sm:$0xff]
  %v46 = vld [vmem:[%s0 + $0xd0] sm:$0xff]
  %v47 = vld [vmem:[%s0 + $0xd8] sm:$0xf]
  %v48 = vld [vmem:[%s0 + $0xdc] sm:$0xff]
  %v49 = vld [vmem:[%s0 + $0xe4] sm:$0xff]
  %v50 = vld [vmem:[%s0 + $0xec] sm:$0xf]
  %v51 = vld [vmem:[%s0 + $0xf0] sm:$0xff]
  %v52 = vld [vmem:[%s0 + $0xf8] sm:$0xff]
  %v53 = vld [vmem:[%s0 + $0x100] sm:$0xf]
  %v54 = vld [vmem:[%s0 + $0x104] sm:$0xff]
  %v55 = vld [vmem:[%s0 + $0x10c] sm:$0xff]
  %v56 = vld [vmem:[%s0 + $0x114] sm:$0xf]
  %v57 = vld [vmem:[%s0 + $0x118] sm:$0xff]
  %v58 = vld [vmem:[%s0 + $0x120] sm:$0xff]
  %v59 = vld [vmem:[%s0 + $0x128] sm:$0xf]
  %v60 = vld [vmem:[%s0 + $0x12c] sm:$0xff]
  %v61 = vld [vmem:[%s0 + $0x134] sm:$0xff]
  %v62 = vld [vmem:[%s0 + $0x13c] sm:$0xf]
  %v63 = vld [vmem:[%s0 + $0x140] sm:$0xff]
  %v64 = vld [vmem:[%s0 + $0x148] sm:$0xff]
  %v65 = vld [vmem:[%s0 + $0x150] sm:$0xf]
  %v66 = vld [vmem:[%s0 + $0x154] sm:$0xff]
  %v67 = vld [vmem:[%s0 + $0x15c] sm:$0xff]
  %v68 = vld [vmem:[%s0 + $0x164] sm:$0xf]
  %v69 = vld [vmem:[%s0 + $0x168] sm:$0xff]
  %v70 = vld [vmem:[%s0 + $0x170] sm:$0xff]
  %v71 = vld [vmem:[%s0 + $0x178] sm:$0xf]
  %v72 = vld [vmem:[%s0 + $0x17c] sm:$0xff]
  %v73 = vld [vmem:[%s0 + $0x184] sm:$0xff]
  %v74 = vld [vmem:[%s0 + $0x18c] sm:$0xf]
  %v75 = vld [vmem:[%s0 + $0x190] sm:$0xff]
  %v76 = vld [vmem:[%s0 + $0x198] sm:$0xff]
  %v77 = vld [vmem:[%s0 + $0x1a0] sm:$0xf]
  %v78 = vld [vmem:[%s0 + $0x1a4] sm:$0xff]
  %v79 = vld [vmem:[%s0 + $0x1ac] sm:$0xff]
  %v80 = vld [vmem:[%s0 + $0x1b4] sm:$0xf]
  %v81 = vld [vmem:[%s0 + $0x1b8] sm:$0xff]
  %v82 = vld [vmem:[%s0 + $0x1c0] sm:$0xff]
  %v83 = vld [vmem:[%s0 + $0x1c8] sm:$0xf]
  %v84 = vld [vmem:[%s0 + $0x1cc] sm:$0xff]
  %v85 = vld [vmem:[%s0 + $0x1d4] sm:$0xff]
  %v86 = vld [vmem:[%s0 + $0x1dc] sm:$0xf]
  %v87 = vld [vmem:[%s0 + $0x1e0] sm:$0xff]
  %v88 = vld [vmem:[%s0 + $0x1e8] sm:$0xff]
  %v89 = vld [vmem:[%s0 + $0x1f0] sm:$0xf]
  %v90 = vld [vmem:[%s0 + $0x1f4] sm:$0xff]
  %v91 = vld [vmem:[%s0 + $0x1fc] sm:$0xff]
  %v92 = vld [vmem:[%s0 + $0x204] sm:$0xf]
  %v93 = vld [vmem:[%s0 + $0x208] sm:$0xff]
  %v94 = vld [vmem:[%s0 + $0x210] sm:$0xff]
  %v95 = vld [vmem:[%s0 + $0x218] sm:$0xf]
  %v96 = vld [vmem:[%s0 + $0x21c] sm:$0xff]
  %v97 = vld [vmem:[%s0 + $0x224] sm:$0xff]
  %v98 = vld [vmem:[%s0 + $0x22c] sm:$0xf]
  %v99 = vld [vmem:[%s0 + $0x230] sm:$0xff]
  %v100 = vld [vmem:[%s0 + $0x238] sm:$0xff]
  %v101 = vld [vmem:[%s0 + $0x240] sm:$0xf]
  %v102 = vld [vmem:[%s0 + $0x244] sm:$0xff]
  %v103 = vld [vmem:[%s0 + $0x24c] sm:$0xff]
  %v104 = vld [vmem:[%s0 + $0x254] sm:$0xf]
  %v105 = vld [vmem:[%s0 + $0x258] sm:$0xff]
  %v106 = vld [vmem:[%s0 + $0x260] sm:$0xff]
  %v107 = vld [vmem:[%s0 + $0x268] sm:$0xf]
  %v108 = vld [vmem:[%s0 + $0x26c] sm:$0xff]
  %v109 = vld [vmem:[%s0 + $0x274] sm:$0xff]
  %v110 = vld [vmem:[%s0 + $0x27c] sm:$0xf]
  %v111 = vld [vmem:[%s0 + $0x280] sm:$0xff]
  %v112 = vld [vmem:[%s0 + $0x288] sm:$0xff]
  %v113 = vld [vmem:[%s0 + $0x290] sm:$0xf]
  %v114 = vld [vmem:[%s0 + $0x294] sm:$0xff]
  %v115 = vld [vmem:[%s0 + $0x29c] sm:$0xff]
  %v116 = vld [vmem:[%s0 + $0x2a4] sm:$0xf]
  %v117 = vld [vmem:[%s0 + $0x2a8] sm:$0xff]
  %v118 = vld [vmem:[%s0 + $0x2b0] sm:$0xff]
  %v119 = vld [vmem:[%s0 + $0x2b8] sm:$0xf]
  %v120 = vld [vmem:[%s0 + $0x2bc] sm:$0xff]
  %v121 = vld [vmem:[%s0 + $0x2c4] sm:$0xff]
  %v122 = vld [vmem:[%s0 + $0x2cc] sm:$0xf]
  %v123 = vld [vmem:[%s0 + $0x2d0] sm:$0xff]
  %v124 = vld [vmem:[%s0 + $0x2d8] sm:$0xff]
  %v125 = vld [vmem:[%s0 + $0x2e0] sm:$0xf]
  %v126 = vld [vmem:[%s0 + $0x2e4] sm:$0xff]
  %v127 = vld [vmem:[%s0 + $0x2ec] sm:$0xff]
  %v128 = vld [vmem:[%s0 + $0x2f4] sm:$0xf]
  %v129 = vld [vmem:[%s0 + $0x2f8] sm:$0xff]
  %v130 = vld [vmem:[%s0 + $0x300] sm:$0xff]
  %v131 = vld [vmem:[%s0 + $0x308] sm:$0xf]
  %v132 = vld [vmem:[%s0 + $0x30c] sm:$0xff]
  %v133 = vld [vmem:[%s0 + $0x314] sm:$0xff]
  %v134 = vld [vmem:[%s0 + $0x31c] sm:$0xf]
  %v135 = vld [vmem:[%s0 + $0x320] sm:$0xff]
  %v136 = vld [vmem:[%s0 + $0x328] sm:$0xff]
  %v137 = vld [vmem:[%s0 + $0x330] sm:$0xf]
  %v138 = vld [vmem:[%s0 + $0x334] sm:$0xff]
  %v139 = vld [vmem:[%s0 + $0x33c] sm:$0xff]
  %v140 = vld [vmem:[%s0 + $0x344] sm:$0xf]
  %v141 = vld [vmem:[%s0 + $0x348] sm:$0xff]
  %v142 = vld [vmem:[%s0 + $0x350] sm:$0xff]
  %v143 = vld [vmem:[%s0 + $0x358] sm:$0xf]
  %v144 = vld [vmem:[%s0 + $0x35c] sm:$0xff]
  %v145 = vld [vmem:[%s0 + $0x364] sm:$0xff]
  %v146 = vld [vmem:[%s0 + $0x36c] sm:$0xf]
  %v147 = vld [vmem:[%s0 + $0x370] sm:$0xff]
  %v148 = vld [vmem:[%s0 + $0x378] sm:$0xff]
  %v149 = vld [vmem:[%s0 + $0x380] sm:$0xf]
  %v150 = vld [vmem:[%s0 + $0x384] sm:$0xff]
  %v151 = vld [vmem:[%s0 + $0x38c] sm:$0xff]
  %v152 = vld [vmem:[%s0 + $0x394] sm:$0xf]
  %v153 = vld [vmem:[%s0 + $0x398] sm:$0xff]
  %v154 = vld [vmem:[%s0 + $0x3a0] sm:$0xff]
  %v155 = vld [vmem:[%s0 + $0x3a8] sm:$0xf]
  %v156 = vld [vmem:[%s0 + $0x3ac] sm:$0xff]
  %v157 = vld [vmem:[%s0 + $0x3b4] sm:$0xff]
  %v158 = vld [vmem:[%s0 + $0x3bc] sm:$0xf]
  %v159 = vld [vmem:[%s0 + $0x3c0] sm:$0xff]
  %v160 = vld [vmem:[%s0 + $0x3c8] sm:$0xff]
  %v161 = vld [vmem:[%s0 + $0x3d0] sm:$0xf]
  %v162 = vld [vmem:[%s0 + $0x3d4] sm:$0xff]
  %v163 = vld [vmem:[%s0 + $0x3dc] sm:$0xff]
  %v164 = vld [vmem:[%s0 + $0x3e4] sm:$0xf]
  %v165 = vld [vmem:[%s0 + $0x3e8] sm:$0xff]
  %v166 = vld [vmem:[%s0 + $0x3f0] sm:$0xff]
  %v167 = vld [vmem:[%s0 + $0x3f8] sm:$0xf]
  %v168 = vld [vmem:[%s0 + $0x3fc] sm:$0xff]
  %v169 = vld [vmem:[%s0 + $0x404] sm:$0xff]
  %v170 = vld [vmem:[%s0 + $0x40c] sm:$0xf]
  %v171 = vld [vmem:[%s0 + $0x410] sm:$0xff]
  %v172 = vld [vmem:[%s0 + $0x418] sm:$0xff]
  %v173 = vld [vmem:[%s0 + $0x420] sm:$0xf]
  %v174 = vld [vmem:[%s0 + $0x424] sm:$0xff]
  %v175 = vld [vmem:[%s0 + $0x42c] sm:$0xff]
  %v176 = vld [vmem:[%s0 + $0x434] sm:$0xf]
  %v177 = vld [vmem:[%s0 + $0x438] sm:$0xff]
  %v178 = vld [vmem:[%s0 + $0x440] sm:$0xff]
  %v179 = vld [vmem:[%s0 + $0x448] sm:$0xf]
  %v180 = vld [vmem:[%s0 + $0x44c] sm:$0xff]
  %v181 = vld [vmem:[%s0 + $0x454] sm:$0xff]
  %v182 = vld [vmem:[%s0 + $0x45c] sm:$0xf]
  %v183 = vld [vmem:[%s0 + $0x460] sm:$0xff]
  %v184 = vld [vmem:[%s0 + $0x468] sm:$0xff]
  %v185 = vld [vmem:[%s0 + $0x470] sm:$0xf]
  %v186 = vld [vmem:[%s0 + $0x474] sm:$0xff]
  %v187 = vld [vmem:[%s0 + $0x47c] sm:$0xff]
  %v188 = vld [vmem:[%s0 + $0x484] sm:$0xf]
  %v189 = vld [vmem:[%s0 + $0x488] sm:$0xff]
  %v190 = vld [vmem:[%s0 + $0x490] sm:$0xff]
  %v191 = vld [vmem:[%s0 + $0x498] sm:$0xf]
  %v192 = vld [vmem:[%s0 + $0x49c] sm:$0xff]
  %v193 = vld [vmem:[%s0 + $0x4a4] sm:$0xff]
  %v194 = vld [vmem:[%s0 + $0x4ac] sm:$0xf]
  %v195 = vld [vmem:[%s0 + $0x4b0] sm:$0xff]
  %v196 = vld [vmem:[%s0 + $0x4b8] sm:$0xff]
  %v197 = vld [vmem:[%s0 + $0x4c0] sm:$0xf]
  %v198 = vld [vmem:[%s0 + $0x4c4] sm:$0xff]
  %v199 = vld [vmem:[%s0 + $0x4cc] sm:$0xff]
  %v200 = vld [vmem:[%s0 + $0x4d4] sm:$0xf]
  %v201 = vld [vmem:[%s0 + $0x4d8] sm:$0xff]
  %v202 = vld [vmem:[%s0 + $0x4e0] sm:$0xff]
  %v203 = vld [vmem:[%s0 + $0x4e8] sm:$0xf]
  %v204 = vld [vmem:[%s0 + $0x4ec] sm:$0xff]
  %v205 = vld [vmem:[%s0 + $0x4f4] sm:$0xff]
  %v206 = vld [vmem:[%s0 + $0x4fc] sm:$0xf]
  %v207 = vld [vmem:[%s1] sm:$0xf]
  %v208 = vld [vmem:[%s1 + $0x4] sm:$0xf]
  %v209 = vld [vmem:[%s1 + $0x8] sm:$0xf]
  %v210 = vld [vmem:[%s1 + $0xc] sm:$0xf]
  %v211 = vld [vmem:[%s1 + $0x10] sm:$0xf]
  %v212 = vld [vmem:[%s1 + $0x14] sm:$0xf]
  %v213 = vld [vmem:[%s1 + $0x18] sm:$0xf]
  %v214 = vld [vmem:[%s1 + $0x1c] sm:$0xf]
  %v215 = vld [vmem:[%s1 + $0x20] sm:$0xf]
  %v216 = vld [vmem:[%s1 + $0x24] sm:$0xf]
  %v217 = vld [vmem:[%s1 + $0x28] sm:$0xf]
  %v218 = vld [vmem:[%s1 + $0x2c] sm:$0xf]
  %v219 = vld [vmem:[%s1 + $0x30] sm:$0xf]
  %v220 = vld [vmem:[%s1 + $0x34] sm:$0xf]
  %v221 = vld [vmem:[%s1 + $0x38] sm:$0xf]
  %v222 = vld [vmem:[%s1 + $0x3c] sm:$0xf]
  %v223 = vld [vmem:[%s1 + $0x40] sm:$0xf]
  %v224 = vld [vmem:[%s1 + $0x44] sm:$0xf]
  %v225 = vld [vmem:[%s1 + $0x48] sm:$0xf]
  %v226 = vld [vmem:[%s1 + $0x4c] sm:$0xf]
  %v227 = vld [vmem:[%s1 + $0x50] sm:$0xf]
  %v228 = vld [vmem:[%s1 + $0x54] sm:$0xf]
  %v229 = vld [vmem:[%s1 + $0x58] sm:$0xf]
  %v230 = vld [vmem:[%s1 + $0x5c] sm:$0xf]
  %v231 = vld [vmem:[%s1 + $0x60] sm:$0xf]
  %v232 = vld [vmem:[%s1 + $0x64] sm:$0xf]
  %v233 = vld [vmem:[%s1 + $0x68] sm:$0xf]
  %v234 = vld [vmem:[%s1 + $0x6c] sm:$0xf]
  %v235 = vld [vmem:[%s1 + $0x70] sm:$0xf]
  %v236 = vld [vmem:[%s1 + $0x74] sm:$0xf]
  %v237 = vld [vmem:[%s1 + $0x78] sm:$0xf]
  %v238 = vld [vmem:[%s1 + $0x7c] sm:$0xf]
  %v239 = vld [vmem:[%s1 + $0x80] sm:$0xf]
  %v240 = vld [vmem:[%s1 + $0x84] sm:$0xf]
  %v241 = vld [vmem:[%s1 + $0x88] sm:$0xf]
  %v242 = vld [vmem:[%s1 + $0x8c] sm:$0xf]
  %v243 = vld [vmem:[%s1 + $0x90] sm:$0xf]
  %v244 = vld [vmem:[%s1 + $0x94] sm:$0xf]
  %v245 = vld [vmem:[%s1 + $0x98] sm:$0xf]
  %v246 = vld [vmem:[%s1 + $0x9c] sm:$0xf]
  %v247 = vld [vmem:[%s1 + $0xa0] sm:$0xf]
  %v248 = vld [vmem:[%s1 + $0xa4] sm:$0xf]
  %v249 = vld [vmem:[%s1 + $0xa8] sm:$0xf]
  %v250 = vld [vmem:[%s1 + $0xac] sm:$0xf]
  %v251 = vld [vmem:[%s1 + $0xb0] sm:$0xf]
  %v252 = vld [vmem:[%s1 + $0xb4] sm:$0xf]
  %v253 = vld [vmem:[%s1 + $0xb8] sm:$0xf]
  %v254 = vld [vmem:[%s1 + $0xbc] sm:$0xf]
  %v255 = vld [vmem:[%s1 + $0xc0] sm:$0xf]
  %v256 = vld [vmem:[%s1 + $0xc4] sm:$0xf]
  %v257 = vld [vmem:[%s1 + $0xc8] sm:$0xf]
  %v258 = vld [vmem:[%s1 + $0xcc] sm:$0xf]
  %v259 = vld [vmem:[%s1 + $0xd0] sm:$0xf]
  %v260 = vld [vmem:[%s1 + $0xd4] sm:$0xf]
  %v261 = vld [vmem:[%s1 + $0xd8] sm:$0xf]
  %v262 = vld [vmem:[%s1 + $0xdc] sm:$0xf]
  %v263 = vld [vmem:[%s1 + $0xe0] sm:$0xf]
  %v264 = vld [vmem:[%s1 + $0xe4] sm:$0xf]
  %v265 = vld [vmem:[%s1 + $0xe8] sm:$0xf]
  %v266 = vld [vmem:[%s1 + $0xec] sm:$0xf]
  %v267 = vld [vmem:[%s1 + $0xf0] sm:$0xf]
  %v268 = vld [vmem:[%s1 + $0xf4] sm:$0xf]
  %v269 = vld [vmem:[%s1 + $0xf8] sm:$0xf]
  %v270 = vld [vmem:[%s1 + $0xfc] sm:$0xf]
  %v271 = vld [vmem:[%s1 + $0x100] sm:$0xf]
  %v272 = vld [vmem:[%s1 + $0x104] sm:$0xf]
  %v273 = vld [vmem:[%s1 + $0x108] sm:$0xf]
  %v274 = vld [vmem:[%s1 + $0x10c] sm:$0xf]
  %v275 = vld [vmem:[%s1 + $0x110] sm:$0xf]
  %v276 = vld [vmem:[%s1 + $0x114] sm:$0xf]
  %v277 = vld [vmem:[%s1 + $0x118] sm:$0xf]
  %v278 = vld [vmem:[%s1 + $0x11c] sm:$0xf]
  %v279 = vld [vmem:[%s2] sm:$0x1]
  %v281 = vlaneseq
  %v282 = vshrl.u32 %v281, 7
  %v283 = vsub.s32 0, %v282
  %v284 = vrot.slane %v279, %v283
  %v478 = vunpack.c.l.b16 %v15
  %v479 = vunpack.c.h.b16 %v15
  %v480 = vunpack.c.l.b16 %v16
  %v481 = vunpack.c.h.b16 %v16
  %v482 = vunpack.c.l.b16 %v17
  %v483 = vunpack.c.l.b16 %v18
  %v484 = vunpack.c.h.b16 %v18
  %v485 = vunpack.c.l.b16 %v19
  %v486 = vunpack.c.h.b16 %v19
  %v487 = vunpack.c.l.b16 %v20
  %v488 = vunpack.c.l.b16 %v21
  %v489 = vunpack.c.h.b16 %v21
  %v490 = vunpack.c.l.b16 %v22
  %v491 = vunpack.c.h.b16 %v22
  %v492 = vunpack.c.l.b16 %v23
  %v493 = vunpack.c.l.b16 %v24
  %v494 = vunpack.c.h.b16 %v24
  %v495 = vunpack.c.l.b16 %v25
  %v496 = vunpack.c.h.b16 %v25
  %v497 = vunpack.c.l.b16 %v26
  %v498 = vunpack.c.l.b16 %v27
  %v499 = vunpack.c.h.b16 %v27
  %v500 = vunpack.c.l.b16 %v28
  %v501 = vunpack.c.h.b16 %v28
  %v502 = vunpack.c.l.b16 %v29
  %v503 = vunpack.c.l.b16 %v30
  %v504 = vunpack.c.h.b16 %v30
  %v505 = vunpack.c.l.b16 %v31
  %v506 = vunpack.c.h.b16 %v31
  %v507 = vunpack.c.l.b16 %v32
  %v508 = vunpack.c.l.b16 %v33
  %v509 = vunpack.c.h.b16 %v33
  %v510 = vunpack.c.l.b16 %v34
  %v511 = vunpack.c.h.b16 %v34
  %v512 = vunpack.c.l.b16 %v35
  %v513 = vunpack.c.l.b16 %v36
  %v514 = vunpack.c.h.b16 %v36
  %v515 = vunpack.c.l.b16 %v37
  %v516 = vunpack.c.h.b16 %v37
  %v517 = vunpack.c.l.b16 %v38
  %v518 = vunpack.c.l.b16 %v39
  %v519 = vunpack.c.h.b16 %v39
  %v520 = vunpack.c.l.b16 %v40
  %v521 = vunpack.c.h.b16 %v40
  %v522 = vunpack.c.l.b16 %v41
  %v523 = vunpack.c.l.b16 %v42
  %v524 = vunpack.c.h.b16 %v42
  %v525 = vunpack.c.l.b16 %v43
  %v526 = vunpack.c.h.b16 %v43
  %v527 = vunpack.c.l.b16 %v44
  %v528 = vunpack.c.l.b16 %v45
  %v529 = vunpack.c.h.b16 %v45
  %v530 = vunpack.c.l.b16 %v46
  %v531 = vunpack.c.h.b16 %v46
  %v532 = vunpack.c.l.b16 %v47
  %v533 = vunpack.c.l.b16 %v48
  %v534 = vunpack.c.h.b16 %v48
  %v535 = vunpack.c.l.b16 %v49
  %v536 = vunpack.c.h.b16 %v49
  %v537 = vunpack.c.l.b16 %v50
  %v538 = vunpack.c.l.b16 %v51
  %v539 = vunpack.c.h.b16 %v51
  %v540 = vunpack.c.l.b16 %v52
  %v541 = vunpack.c.h.b16 %v52
  %v542 = vunpack.c.l.b16 %v53
  %v543 = vunpack.c.l.b16 %v54
  %v544 = vunpack.c.h.b16 %v54
  %v545 = vunpack.c.l.b16 %v55
  %v546 = vunpack.c.h.b16 %v55
  %v547 = vunpack.c.l.b16 %v56
  %v548 = vunpack.c.l.b16 %v57
  %v549 = vunpack.c.h.b16 %v57
  %v550 = vunpack.c.l.b16 %v58
  %v551 = vunpack.c.h.b16 %v58
  %v552 = vunpack.c.l.b16 %v59
  %v553 = vunpack.c.l.b16 %v60
  %v554 = vunpack.c.h.b16 %v60
  %v555 = vunpack.c.l.b16 %v61
  %v556 = vunpack.c.h.b16 %v61
  %v557 = vunpack.c.l.b16 %v62
  %v558 = vunpack.c.l.b16 %v63
  %v559 = vunpack.c.h.b16 %v63
  %v560 = vunpack.c.l.b16 %v64
  %v561 = vunpack.c.h.b16 %v64
  %v562 = vunpack.c.l.b16 %v65
  %v563 = vunpack.c.l.b16 %v66
  %v564 = vunpack.c.h.b16 %v66
  %v565 = vunpack.c.l.b16 %v67
  %v566 = vunpack.c.h.b16 %v67
  %v567 = vunpack.c.l.b16 %v68
  %v568 = vunpack.c.l.b16 %v69
  %v569 = vunpack.c.h.b16 %v69
  %v570 = vunpack.c.l.b16 %v70
  %v571 = vunpack.c.h.b16 %v70
  %v572 = vunpack.c.l.b16 %v71
  %v573 = vunpack.c.l.b16 %v72
  %v574 = vunpack.c.h.b16 %v72
  %v575 = vunpack.c.l.b16 %v73
  %v576 = vunpack.c.h.b16 %v73
  %v577 = vunpack.c.l.b16 %v74
  %v578 = vunpack.c.l.b16 %v75
  %v579 = vunpack.c.h.b16 %v75
  %v580 = vunpack.c.l.b16 %v76
  %v581 = vunpack.c.h.b16 %v76
  %v582 = vunpack.c.l.b16 %v77
  %v583 = vunpack.c.l.b16 %v78
  %v584 = vunpack.c.h.b16 %v78
  %v585 = vunpack.c.l.b16 %v79
  %v586 = vunpack.c.h.b16 %v79
  %v587 = vunpack.c.l.b16 %v80
  %v588 = vunpack.c.l.b16 %v81
  %v589 = vunpack.c.h.b16 %v81
  %v590 = vunpack.c.l.b16 %v82
  %v591 = vunpack.c.h.b16 %v82
  %v592 = vunpack.c.l.b16 %v83
  %v593 = vunpack.c.l.b16 %v84
  %v594 = vunpack.c.h.b16 %v84
  %v595 = vunpack.c.l.b16 %v85
  %v596 = vunpack.c.h.b16 %v85
  %v597 = vunpack.c.l.b16 %v86
  %v598 = vunpack.c.l.b16 %v87
  %v599 = vunpack.c.h.b16 %v87
  %v600 = vunpack.c.l.b16 %v88
  %v601 = vunpack.c.h.b16 %v88
  %v602 = vunpack.c.l.b16 %v89
  %v603 = vunpack.c.l.b16 %v90
  %v604 = vunpack.c.h.b16 %v90
  %v605 = vunpack.c.l.b16 %v91
  %v606 = vunpack.c.h.b16 %v91
  %v607 = vunpack.c.l.b16 %v92
  %v608 = vunpack.c.l.b16 %v93
  %v609 = vunpack.c.h.b16 %v93
  %v610 = vunpack.c.l.b16 %v94
  %v611 = vunpack.c.h.b16 %v94
  %v612 = vunpack.c.l.b16 %v95
  %v613 = vunpack.c.l.b16 %v96
  %v614 = vunpack.c.h.b16 %v96
  %v615 = vunpack.c.l.b16 %v97
  %v616 = vunpack.c.h.b16 %v97
  %v617 = vunpack.c.l.b16 %v98
  %v618 = vunpack.c.l.b16 %v99
  %v619 = vunpack.c.h.b16 %v99
  %v620 = vunpack.c.l.b16 %v100
  %v621 = vunpack.c.h.b16 %v100
  %v622 = vunpack.c.l.b16 %v101
  %v623 = vunpack.c.l.b16 %v102
  %v624 = vunpack.c.h.b16 %v102
  %v625 = vunpack.c.l.b16 %v103
  %v626 = vunpack.c.h.b16 %v103
  %v627 = vunpack.c.l.b16 %v104
  %v628 = vunpack.c.l.b16 %v105
  %v629 = vunpack.c.h.b16 %v105
  %v630 = vunpack.c.l.b16 %v106
  %v631 = vunpack.c.h.b16 %v106
  %v632 = vunpack.c.l.b16 %v107
  %v633 = vunpack.c.l.b16 %v108
  %v634 = vunpack.c.h.b16 %v108
  %v635 = vunpack.c.l.b16 %v109
  %v636 = vunpack.c.h.b16 %v109
  %v637 = vunpack.c.l.b16 %v110
  %v638 = vunpack.c.l.b16 %v111
  %v639 = vunpack.c.h.b16 %v111
  %v640 = vunpack.c.l.b16 %v112
  %v641 = vunpack.c.h.b16 %v112
  %v642 = vunpack.c.l.b16 %v113
  %v643 = vunpack.c.l.b16 %v114
  %v644 = vunpack.c.h.b16 %v114
  %v645 = vunpack.c.l.b16 %v115
  %v646 = vunpack.c.h.b16 %v115
  %v647 = vunpack.c.l.b16 %v116
  %v648 = vunpack.c.l.b16 %v117
  %v649 = vunpack.c.h.b16 %v117
  %v650 = vunpack.c.l.b16 %v118
  %v651 = vunpack.c.h.b16 %v118
  %v652 = vunpack.c.l.b16 %v119
  %v653 = vunpack.c.l.b16 %v120
  %v654 = vunpack.c.h.b16 %v120
  %v655 = vunpack.c.l.b16 %v121
  %v656 = vunpack.c.h.b16 %v121
  %v657 = vunpack.c.l.b16 %v122
  %v658 = vunpack.c.l.b16 %v123
  %v659 = vunpack.c.h.b16 %v123
  %v660 = vunpack.c.l.b16 %v124
  %v661 = vunpack.c.h.b16 %v124
  %v662 = vunpack.c.l.b16 %v125
  %v663 = vunpack.c.l.b16 %v126
  %v664 = vunpack.c.h.b16 %v126
  %v665 = vunpack.c.l.b16 %v127
  %v666 = vunpack.c.h.b16 %v127
  %v667 = vunpack.c.l.b16 %v128
  %v668 = vunpack.c.l.b16 %v129
  %v669 = vunpack.c.h.b16 %v129
  %v670 = vunpack.c.l.b16 %v130
  %v671 = vunpack.c.h.b16 %v130
  %v672 = vunpack.c.l.b16 %v131
  %v673 = vunpack.c.l.b16 %v132
  %v674 = vunpack.c.h.b16 %v132
  %v675 = vunpack.c.l.b16 %v133
  %v676 = vunpack.c.h.b16 %v133
  %v677 = vunpack.c.l.b16 %v134
  %v678 = vunpack.c.l.b16 %v135
  %v679 = vunpack.c.h.b16 %v135
  %v680 = vunpack.c.l.b16 %v136
  %v681 = vunpack.c.h.b16 %v136
  %v682 = vunpack.c.l.b16 %v137
  %v683 = vunpack.c.l.b16 %v138
  %v684 = vunpack.c.h.b16 %v138
  %v685 = vunpack.c.l.b16 %v139
  %v686 = vunpack.c.h.b16 %v139
  %v687 = vunpack.c.l.b16 %v140
  %v688 = vunpack.c.l.b16 %v141
  %v689 = vunpack.c.h.b16 %v141
  %v690 = vunpack.c.l.b16 %v142
  %v691 = vunpack.c.h.b16 %v142
  %v692 = vunpack.c.l.b16 %v143
  %v693 = vunpack.c.l.b16 %v144
  %v694 = vunpack.c.h.b16 %v144
  %v695 = vunpack.c.l.b16 %v145
  %v696 = vunpack.c.h.b16 %v145
  %v697 = vunpack.c.l.b16 %v146
  %v698 = vunpack.c.l.b16 %v147
  %v699 = vunpack.c.h.b16 %v147
  %v700 = vunpack.c.l.b16 %v148
  %v701 = vunpack.c.h.b16 %v148
  %v702 = vunpack.c.l.b16 %v149
  %v703 = vunpack.c.l.b16 %v150
  %v704 = vunpack.c.h.b16 %v150
  %v705 = vunpack.c.l.b16 %v151
  %v706 = vunpack.c.h.b16 %v151
  %v707 = vunpack.c.l.b16 %v152
  %v708 = vunpack.c.l.b16 %v153
  %v709 = vunpack.c.h.b16 %v153
  %v710 = vunpack.c.l.b16 %v154
  %v711 = vunpack.c.h.b16 %v154
  %v712 = vunpack.c.l.b16 %v155
  %v713 = vunpack.c.l.b16 %v156
  %v714 = vunpack.c.h.b16 %v156
  %v715 = vunpack.c.l.b16 %v157
  %v716 = vunpack.c.h.b16 %v157
  %v717 = vunpack.c.l.b16 %v158
  %v718 = vunpack.c.l.b16 %v159
  %v719 = vunpack.c.h.b16 %v159
  %v720 = vunpack.c.l.b16 %v160
  %v721 = vunpack.c.h.b16 %v160
  %v722 = vunpack.c.l.b16 %v161
  %v723 = vunpack.c.l.b16 %v162
  %v724 = vunpack.c.h.b16 %v162
  %v725 = vunpack.c.l.b16 %v163
  %v726 = vunpack.c.h.b16 %v163
  %v727 = vunpack.c.l.b16 %v164
  %v728 = vunpack.c.l.b16 %v165
  %v729 = vunpack.c.h.b16 %v165
  %v730 = vunpack.c.l.b16 %v166
  %v731 = vunpack.c.h.b16 %v166
  %v732 = vunpack.c.l.b16 %v167
  %v733 = vunpack.c.l.b16 %v168
  %v734 = vunpack.c.h.b16 %v168
  %v735 = vunpack.c.l.b16 %v169
  %v736 = vunpack.c.h.b16 %v169
  %v737 = vunpack.c.l.b16 %v170
  %v738 = vunpack.c.l.b16 %v171
  %v739 = vunpack.c.h.b16 %v171
  %v740 = vunpack.c.l.b16 %v172
  %v741 = vunpack.c.h.b16 %v172
  %v742 = vunpack.c.l.b16 %v173
  %v743 = vunpack.c.l.b16 %v174
  %v744 = vunpack.c.h.b16 %v174
  %v745 = vunpack.c.l.b16 %v175
  %v746 = vunpack.c.h.b16 %v175
  %v747 = vunpack.c.l.b16 %v176
  %v748 = vunpack.c.l.b16 %v177
  %v749 = vunpack.c.h.b16 %v177
  %v750 = vunpack.c.l.b16 %v178
  %v751 = vunpack.c.h.b16 %v178
  %v752 = vunpack.c.l.b16 %v179
  %v753 = vunpack.c.l.b16 %v180
  %v754 = vunpack.c.h.b16 %v180
  %v755 = vunpack.c.l.b16 %v181
  %v756 = vunpack.c.h.b16 %v181
  %v757 = vunpack.c.l.b16 %v182
  %v758 = vunpack.c.l.b16 %v183
  %v759 = vunpack.c.h.b16 %v183
  %v760 = vunpack.c.l.b16 %v184
  %v761 = vunpack.c.h.b16 %v184
  %v762 = vunpack.c.l.b16 %v185
  %v763 = vunpack.c.l.b16 %v186
  %v764 = vunpack.c.h.b16 %v186
  %v765 = vunpack.c.l.b16 %v187
  %v766 = vunpack.c.h.b16 %v187
  %v767 = vunpack.c.l.b16 %v188
  %v768 = vunpack.c.l.b16 %v189
  %v769 = vunpack.c.h.b16 %v189
  %v770 = vunpack.c.l.b16 %v190
  %v771 = vunpack.c.h.b16 %v190
  %v772 = vunpack.c.l.b16 %v191
  %v773 = vunpack.c.l.b16 %v192
  %v774 = vunpack.c.h.b16 %v192
  %v775 = vunpack.c.l.b16 %v193
  %v776 = vunpack.c.h.b16 %v193
  %v777 = vunpack.c.l.b16 %v194
  %v778 = vunpack.c.l.b16 %v195
  %v779 = vunpack.c.h.b16 %v195
  %v780 = vunpack.c.l.b16 %v196
  %v781 = vunpack.c.h.b16 %v196
  %v782 = vunpack.c.l.b16 %v197
  %v783 = vunpack.c.l.b16 %v198
  %v784 = vunpack.c.h.b16 %v198
  %v785 = vunpack.c.l.b16 %v199
  %v786 = vunpack.c.h.b16 %v199
  %v787 = vunpack.c.l.b16 %v200
  %v788 = vunpack.c.l.b16 %v201
  %v789 = vunpack.c.h.b16 %v201
  %v790 = vunpack.c.l.b16 %v202
  %v791 = vunpack.c.h.b16 %v202
  %v792 = vunpack.c.l.b16 %v203
  %v793 = vunpack.c.l.b16 %v204
  %v794 = vunpack.c.h.b16 %v204
  %v795 = vunpack.c.l.b16 %v205
  %v796 = vunpack.c.h.b16 %v205
  %v797 = vunpack.c.l.b16 %v206
  %v798 = vpack.c.b16 %v483, %v478
  %v799 = vpack.c.b16 %v484, %v479
  %v800 = vpack.c.b16 %v485, %v480
  %v801 = vpack.c.b16 %v486, %v481
  %v802 = vpack.c.b16 %v487, %v482
  %v803 = vpack.c.b16 %v493, %v488
  %v804 = vpack.c.b16 %v494, %v489
  %v805 = vpack.c.b16 %v495, %v490
  %v806 = vpack.c.b16 %v496, %v491
  %v807 = vpack.c.b16 %v497, %v492
  %v808 = vpack.c.b16 %v503, %v498
  %v809 = vpack.c.b16 %v504, %v499
  %v810 = vpack.c.b16 %v505, %v500
  %v811 = vpack.c.b16 %v506, %v501
  %v812 = vpack.c.b16 %v507, %v502
  %v813 = vpack.c.b16 %v513, %v508
  %v814 = vpack.c.b16 %v514, %v509
  %v815 = vpack.c.b16 %v515, %v510
  %v816 = vpack.c.b16 %v516, %v511
  %v817 = vpack.c.b16 %v517, %v512
  %v818 = vpack.c.b16 %v523, %v518
  %v819 = vpack.c.b16 %v524, %v519
  %v820 = vpack.c.b16 %v525, %v520
  %v821 = vpack.c.b16 %v526, %v521
  %v822 = vpack.c.b16 %v527, %v522
  %v823 = vpack.c.b16 %v533, %v528
  %v824 = vpack.c.b16 %v534, %v529
  %v825 = vpack.c.b16 %v535, %v530
  %v826 = vpack.c.b16 %v536, %v531
  %v827 = vpack.c.b16 %v537, %v532
  %v828 = vpack.c.b16 %v543, %v538
  %v829 = vpack.c.b16 %v544, %v539
  %v830 = vpack.c.b16 %v545, %v540
  %v831 = vpack.c.b16 %v546, %v541
  %v832 = vpack.c.b16 %v547, %v542
  %v833 = vpack.c.b16 %v553, %v548
  %v834 = vpack.c.b16 %v554, %v549
  %v835 = vpack.c.b16 %v555, %v550
  %v836 = vpack.c.b16 %v556, %v551
  %v837 = vpack.c.b16 %v557, %v552
  %v838 = vpack.c.b16 %v563, %v558
  %v839 = vpack.c.b16 %v564, %v559
  %v840 = vpack.c.b16 %v565, %v560
  %v841 = vpack.c.b16 %v566, %v561
  %v842 = vpack.c.b16 %v567, %v562
  %v843 = vpack.c.b16 %v573, %v568
  %v844 = vpack.c.b16 %v574, %v569
  %v845 = vpack.c.b16 %v575, %v570
  %v846 = vpack.c.b16 %v576, %v571
  %v847 = vpack.c.b16 %v577, %v572
  %v848 = vpack.c.b16 %v583, %v578
  %v849 = vpack.c.b16 %v584, %v579
  %v850 = vpack.c.b16 %v585, %v580
  %v851 = vpack.c.b16 %v586, %v581
  %v852 = vpack.c.b16 %v587, %v582
  %v853 = vpack.c.b16 %v593, %v588
  %v854 = vpack.c.b16 %v594, %v589
  %v855 = vpack.c.b16 %v595, %v590
  %v856 = vpack.c.b16 %v596, %v591
  %v857 = vpack.c.b16 %v597, %v592
  %v858 = vpack.c.b16 %v603, %v598
  %v859 = vpack.c.b16 %v604, %v599
  %v860 = vpack.c.b16 %v605, %v600
  %v861 = vpack.c.b16 %v606, %v601
  %v862 = vpack.c.b16 %v607, %v602
  %v863 = vpack.c.b16 %v613, %v608
  %v864 = vpack.c.b16 %v614, %v609
  %v865 = vpack.c.b16 %v615, %v610
  %v866 = vpack.c.b16 %v616, %v611
  %v867 = vpack.c.b16 %v617, %v612
  %v868 = vpack.c.b16 %v623, %v618
  %v869 = vpack.c.b16 %v624, %v619
  %v870 = vpack.c.b16 %v625, %v620
  %v871 = vpack.c.b16 %v626, %v621
  %v872 = vpack.c.b16 %v627, %v622
  %v873 = vpack.c.b16 %v633, %v628
  %v874 = vpack.c.b16 %v634, %v629
  %v875 = vpack.c.b16 %v635, %v630
  %v876 = vpack.c.b16 %v636, %v631
  %v877 = vpack.c.b16 %v637, %v632
  %v878 = vpack.c.b16 %v643, %v638
  %v879 = vpack.c.b16 %v644, %v639
  %v880 = vpack.c.b16 %v645, %v640
  %v881 = vpack.c.b16 %v646, %v641
  %v882 = vpack.c.b16 %v647, %v642
  %v883 = vpack.c.b16 %v653, %v648
  %v884 = vpack.c.b16 %v654, %v649
  %v885 = vpack.c.b16 %v655, %v650
  %v886 = vpack.c.b16 %v656, %v651
  %v887 = vpack.c.b16 %v657, %v652
  %v888 = vpack.c.b16 %v663, %v658
  %v889 = vpack.c.b16 %v664, %v659
  %v890 = vpack.c.b16 %v665, %v660
  %v891 = vpack.c.b16 %v666, %v661
  %v892 = vpack.c.b16 %v667, %v662
  %v893 = vpack.c.b16 %v673, %v668
  %v894 = vpack.c.b16 %v674, %v669
  %v895 = vpack.c.b16 %v675, %v670
  %v896 = vpack.c.b16 %v676, %v671
  %v897 = vpack.c.b16 %v677, %v672
  %v898 = vpack.c.b16 %v683, %v678
  %v899 = vpack.c.b16 %v684, %v679
  %v900 = vpack.c.b16 %v685, %v680
  %v901 = vpack.c.b16 %v686, %v681
  %v902 = vpack.c.b16 %v687, %v682
  %v903 = vpack.c.b16 %v693, %v688
  %v904 = vpack.c.b16 %v694, %v689
  %v905 = vpack.c.b16 %v695, %v690
  %v906 = vpack.c.b16 %v696, %v691
  %v907 = vpack.c.b16 %v697, %v692
  %v908 = vpack.c.b16 %v703, %v698
  %v909 = vpack.c.b16 %v704, %v699
  %v910 = vpack.c.b16 %v705, %v700
  %v911 = vpack.c.b16 %v706, %v701
  %v912 = vpack.c.b16 %v707, %v702
  %v913 = vpack.c.b16 %v713, %v708
  %v914 = vpack.c.b16 %v714, %v709
  %v915 = vpack.c.b16 %v715, %v710
  %v916 = vpack.c.b16 %v716, %v711
  %v917 = vpack.c.b16 %v717, %v712
  %v918 = vpack.c.b16 %v723, %v718
  %v919 = vpack.c.b16 %v724, %v719
  %v920 = vpack.c.b16 %v725, %v720
  %v921 = vpack.c.b16 %v726, %v721
  %v922 = vpack.c.b16 %v727, %v722
  %v923 = vpack.c.b16 %v733, %v728
  %v924 = vpack.c.b16 %v734, %v729
  %v925 = vpack.c.b16 %v735, %v730
  %v926 = vpack.c.b16 %v736, %v731
  %v927 = vpack.c.b16 %v737, %v732
  %v928 = vpack.c.b16 %v743, %v738
  %v929 = vpack.c.b16 %v744, %v739
  %v930 = vpack.c.b16 %v745, %v740
  %v931 = vpack.c.b16 %v746, %v741
  %v932 = vpack.c.b16 %v747, %v742
  %v933 = vpack.c.b16 %v753, %v748
  %v934 = vpack.c.b16 %v754, %v749
  %v935 = vpack.c.b16 %v755, %v750
  %v936 = vpack.c.b16 %v756, %v751
  %v937 = vpack.c.b16 %v757, %v752
  %v938 = vpack.c.b16 %v763, %v758
  %v939 = vpack.c.b16 %v764, %v759
  %v940 = vpack.c.b16 %v765, %v760
  %v941 = vpack.c.b16 %v766, %v761
  %v942 = vpack.c.b16 %v767, %v762
  %v943 = vpack.c.b16 %v773, %v768
  %v944 = vpack.c.b16 %v774, %v769
  %v945 = vpack.c.b16 %v775, %v770
  %v946 = vpack.c.b16 %v776, %v771
  %v947 = vpack.c.b16 %v777, %v772
  %v948 = vpack.c.b16 %v783, %v778
  %v949 = vpack.c.b16 %v784, %v779
  %v950 = vpack.c.b16 %v785, %v780
  %v951 = vpack.c.b16 %v786, %v781
  %v952 = vpack.c.b16 %v787, %v782
  %v953 = vpack.c.b16 %v793, %v788
  %v954 = vpack.c.b16 %v794, %v789
  %v955 = vpack.c.b16 %v795, %v790
  %v956 = vpack.c.b16 %v796, %v791
  %v957 = vpack.c.b16 %v797, %v792
  %v1158 = vunpack.c.l.b16 %v207
  %v1159 = vunpack.c.l.b16 %v208
  %v1160 = vunpack.c.l.b16 %v209
  %v1161 = vunpack.c.l.b16 %v210
  %v1162 = vunpack.c.l.b16 %v211
  %v1163 = vunpack.c.l.b16 %v212
  %v1164 = vunpack.c.l.b16 %v213
  %v1165 = vunpack.c.l.b16 %v214
  %v1166 = vunpack.c.l.b16 %v215
  %v1167 = vunpack.c.l.b16 %v216
  %v1168 = vunpack.c.l.b16 %v217
  %v1169 = vunpack.c.l.b16 %v218
  %v1170 = vunpack.c.l.b16 %v219
  %v1171 = vunpack.c.l.b16 %v220
  %v1172 = vunpack.c.l.b16 %v221
  %v1173 = vunpack.c.l.b16 %v222
  %v1174 = vunpack.c.l.b16 %v223
  %v1175 = vunpack.c.l.b16 %v224
  %v1176 = vunpack.c.l.b16 %v225
  %v1177 = vunpack.c.l.b16 %v226
  %v1178 = vunpack.c.l.b16 %v227
  %v1179 = vunpack.c.l.b16 %v228
  %v1180 = vunpack.c.l.b16 %v229
  %v1181 = vunpack.c.l.b16 %v230
  %v1182 = vunpack.c.l.b16 %v231
  %v1183 = vunpack.c.l.b16 %v232
  %v1184 = vunpack.c.l.b16 %v233
  %v1185 = vunpack.c.l.b16 %v234
  %v1186 = vunpack.c.l.b16 %v235
  %v1187 = vunpack.c.l.b16 %v236
  %v1188 = vunpack.c.l.b16 %v237
  %v1189 = vunpack.c.l.b16 %v238
  %v1190 = vunpack.c.l.b16 %v239
  %v1191 = vunpack.c.l.b16 %v240
  %v1192 = vunpack.c.l.b16 %v241
  %v1193 = vunpack.c.l.b16 %v242
  %v1194 = vunpack.c.l.b16 %v243
  %v1195 = vunpack.c.l.b16 %v244
  %v1196 = vunpack.c.l.b16 %v245
  %v1197 = vunpack.c.l.b16 %v246
  %v1198 = vunpack.c.l.b16 %v247
  %v1199 = vunpack.c.l.b16 %v248
  %v1200 = vunpack.c.l.b16 %v249
  %v1201 = vunpack.c.l.b16 %v250
  %v1202 = vunpack.c.l.b16 %v251
  %v1203 = vunpack.c.l.b16 %v252
  %v1204 = vunpack.c.l.b16 %v253
  %v1205 = vunpack.c.l.b16 %v254
  %v1206 = vunpack.c.l.b16 %v255
  %v1207 = vunpack.c.l.b16 %v256
  %v1208 = vunpack.c.l.b16 %v257
  %v1209 = vunpack.c.l.b16 %v258
  %v1210 = vunpack.c.l.b16 %v259
  %v1211 = vunpack.c.l.b16 %v260
  %v1212 = vunpack.c.l.b16 %v261
  %v1213 = vunpack.c.l.b16 %v262
  %v1214 = vunpack.c.l.b16 %v263
  %v1215 = vunpack.c.l.b16 %v264
  %v1216 = vunpack.c.l.b16 %v265
  %v1217 = vunpack.c.l.b16 %v266
  %v1218 = vunpack.c.l.b16 %v267
  %v1219 = vunpack.c.l.b16 %v268
  %v1220 = vunpack.c.l.b16 %v269
  %v1221 = vunpack.c.l.b16 %v270
  %v1222 = vunpack.c.l.b16 %v271
  %v1223 = vunpack.c.l.b16 %v272
  %v1224 = vunpack.c.l.b16 %v273
  %v1225 = vunpack.c.l.b16 %v274
  %v1226 = vunpack.c.l.b16 %v275
  %v1227 = vunpack.c.l.b16 %v276
  %v1228 = vunpack.c.l.b16 %v277
  %v1229 = vunpack.c.l.b16 %v278
  %v1230 = vpack.c.b16 %v1159, %v1158
  %v1231 = vpack.c.b16 %v1161, %v1160
  %v1232 = vpack.c.b16 %v1163, %v1162
  %v1233 = vpack.c.b16 %v1165, %v1164
  %v1234 = vpack.c.b16 %v1167, %v1166
  %v1235 = vpack.c.b16 %v1169, %v1168
  %v1236 = vpack.c.b16 %v1171, %v1170
  %v1237 = vpack.c.b16 %v1173, %v1172
  %v1238 = vpack.c.b16 %v1175, %v1174
  %v1239 = vpack.c.b16 %v1177, %v1176
  %v1240 = vpack.c.b16 %v1179, %v1178
  %v1241 = vpack.c.b16 %v1181, %v1180
  %v1242 = vpack.c.b16 %v1183, %v1182
  %v1243 = vpack.c.b16 %v1185, %v1184
  %v1244 = vpack.c.b16 %v1187, %v1186
  %v1245 = vpack.c.b16 %v1189, %v1188
  %v1246 = vpack.c.b16 %v1191, %v1190
  %v1247 = vpack.c.b16 %v1193, %v1192
  %v1248 = vpack.c.b16 %v1195, %v1194
  %v1249 = vpack.c.b16 %v1197, %v1196
  %v1250 = vpack.c.b16 %v1199, %v1198
  %v1251 = vpack.c.b16 %v1201, %v1200
  %v1252 = vpack.c.b16 %v1203, %v1202
  %v1253 = vpack.c.b16 %v1205, %v1204
  %v1254 = vpack.c.b16 %v1207, %v1206
  %v1255 = vpack.c.b16 %v1209, %v1208
  %v1256 = vpack.c.b16 %v1211, %v1210
  %v1257 = vpack.c.b16 %v1213, %v1212
  %v1258 = vpack.c.b16 %v1215, %v1214
  %v1259 = vpack.c.b16 %v1217, %v1216
  %v1260 = vpack.c.b16 %v1219, %v1218
  %v1261 = vpack.c.b16 %v1221, %v1220
  %v1262 = vpack.c.b16 %v1223, %v1222
  %v1263 = vpack.c.b16 %v1225, %v1224
  %v1264 = vpack.c.b16 %v1227, %v1226
  %v1265 = vpack.c.b16 %v1229, %v1228
  %vm1302 = vcmask 523264
  %v1304 = vsel %vm1302, %v802, 0
  %v1307 = vsel %vm1302, %v807, 0
  %v1310 = vsel %vm1302, %v812, 0
  %v1313 = vsel %vm1302, %v817, 0
  %v1316 = vsel %vm1302, %v822, 0
  %v1319 = vsel %vm1302, %v827, 0
  %v1322 = vsel %vm1302, %v832, 0
  %v1325 = vsel %vm1302, %v837, 0
  %v1328 = vsel %vm1302, %v842, 0
  %v1331 = vsel %vm1302, %v847, 0
  %v1334 = vsel %vm1302, %v852, 0
  %v1337 = vsel %vm1302, %v857, 0
  %v1340 = vsel %vm1302, %v862, 0
  %v1343 = vsel %vm1302, %v867, 0
  %v1346 = vsel %vm1302, %v872, 0
  %v1349 = vsel %vm1302, %v877, 0
  %v1352 = vsel %vm1302, %v882, 0
  %v1355 = vsel %vm1302, %v887, 0
  %v1358 = vsel %vm1302, %v892, 0
  %v1361 = vsel %vm1302, %v897, 0
  %v1364 = vsel %vm1302, %v902, 0
  %v1367 = vsel %vm1302, %v907, 0
  %v1370 = vsel %vm1302, %v912, 0
  %v1373 = vsel %vm1302, %v917, 0
  %v1376 = vsel %vm1302, %v922, 0
  %v1379 = vsel %vm1302, %v927, 0
  %v1382 = vsel %vm1302, %v932, 0
  %v1385 = vsel %vm1302, %v937, 0
  %v1388 = vsel %vm1302, %v942, 0
  %v1391 = vsel %vm1302, %v947, 0
  %v1394 = vsel %vm1302, %v952, 0
  %v1397 = vsel %vm1302, %v957, 0
  %1399 = vmatprep.subr.bf16.mxu0 0
  %1400 = vmatpush1.bf16.msra.mxu0 %v1230
  %1401 = vmatprep.subr.bf16.mxu0 0
  %1402 = vmatpush1.bf16.msra.mxu0 %v1231
  %1403 = vmatprep.subr.bf16.mxu0 0
  %1404 = vmatpush1.bf16.msra.mxu0 %v1232
  %1405 = vmatprep.subr.bf16.mxu0 0
  %1406 = vmatpush1.bf16.msra.mxu0 %v1233
  %1407 = vmatprep.subr.bf16.mxu0 0
  %1408 = vmatpush1.bf16.msra.mxu0 %v1234
  %1409 = vmatprep.subr.bf16.mxu0 0
  %1410 = vmatpush1.bf16.msra.mxu0 %v1235
  %1411 = vmatprep.subr.bf16.mxu0 0
  %1412 = vmatpush1.bf16.msra.mxu0 %v1236
  %1413 = vmatprep.subr.bf16.mxu0 0
  %1414 = vmatpush1.bf16.msra.mxu0 %v1237
  %1415 = vmatprep.subr.bf16.mxu0 0
  %1416 = vmatpush1.bf16.msra.mxu0 %v1238
  %1417 = vmatprep.subr.bf16.mxu0 0
  %1418 = vmatpush1.bf16.msra.mxu0 %v1239
  %1419 = vmatprep.subr.bf16.mxu0 0
  %1420 = vmatpush1.bf16.msra.mxu0 %v1240
  %1421 = vmatprep.subr.bf16.mxu0 0
  %1422 = vmatpush1.bf16.msra.mxu0 %v1241
  %1423 = vmatprep.subr.bf16.mxu0 0
  %1424 = vmatpush1.bf16.msra.mxu0 %v1242
  %1425 = vmatprep.subr.bf16.mxu0 0
  %1426 = vmatpush1.bf16.msra.mxu0 %v1243
  %1427 = vmatprep.subr.bf16.mxu0 0
  %1428 = vmatpush1.bf16.msra.mxu0 %v1244
  %1429 = vmatprep.subr.bf16.mxu0 0
  %1430 = vmatpush1.bf16.msra.mxu0 %v1245
  %1431 = vmatprep.mubr.bf16.mxu0 %v799
  %1432 = vmatmul.mubr.bf16.gmra.mrb[0].mxu0 %v798
  %v1433 = vpop.f32.mrb[0].mxu0
  %v1434 = vadd.f32 %v284, %v1433
  %v1435 = vpop.f32.mrb[0].mxu0
  %v1436 = vpop.f32.mrb[0].mxu0
  %v1437 = vadd.f32 %v284, %v1436
  %v1438 = vpop.f32.mrb[0].mxu0
  %1439 = vmatprep.mubr.bf16.mxu0 %v804
  %1440 = vmatmul.mubr.bf16.gmra.mrb[0].mxu0 %v803
  %v1441 = vpop.f32.mrb[0].mxu0
  %v1442 = vadd.f32 %v284, %v1441
  %v1443 = vpop.f32.mrb[0].mxu0
  %v1444 = vpop.f32.mrb[0].mxu0
  %v1445 = vadd.f32 %v284, %v1444
  %v1446 = vpop.f32.mrb[0].mxu0
  %1447 = vmatprep.mubr.bf16.mxu0 %v809
  %1448 = vmatmul.mubr.bf16.gmra.mrb[0].mxu0 %v808
  %v1449 = vpop.f32.mrb[0].mxu0
  %v1450 = vadd.f32 %v284, %v1449
  %v1451 = vpop.f32.mrb[0].mxu0
  %v1452 = vpop.f32.mrb[0].mxu0
  %v1453 = vadd.f32 %v284, %v1452
  %v1454 = vpop.f32.mrb[0].mxu0
  %1455 = vmatprep.mubr.bf16.mxu0 %v814
  %1456 = vmatmul.mubr.bf16.gmra.mrb[0].mxu0 %v813
  %v1457 = vpop.f32.mrb[0].mxu0
  %v1458 = vadd.f32 %v284, %v1457
  %v1459 = vpop.f32.mrb[0].mxu0
  %v1460 = vpop.f32.mrb[0].mxu0
  %v1461 = vadd.f32 %v284, %v1460
  %v1462 = vpop.f32.mrb[0].mxu0
  %1463 = vmatprep.mubr.bf16.mxu0 %v819
  %1464 = vmatmul.mubr.bf16.gmra.mrb[0].mxu0 %v818
  %v1465 = vpop.f32.mrb[0].mxu0
  %v1466 = vadd.f32 %v284, %v1465
  %v1467 = vpop.f32.mrb[0].mxu0
  %v1468 = vpop.f32.mrb[0].mxu0
  %v1469 = vadd.f32 %v284, %v1468
  %v1470 = vpop.f32.mrb[0].mxu0
  %1471 = vmatprep.mubr.bf16.mxu0 %v824
  %1472 = vmatmul.mubr.bf16.gmra.mrb[0].mxu0 %v823
  %v1473 = vpop.f32.mrb[0].mxu0
  %v1474 = vadd.f32 %v284, %v1473
  %v1475 = vpop.f32.mrb[0].mxu0
  %v1476 = vpop.f32.mrb[0].mxu0
  %v1477 = vadd.f32 %v284, %v1476
  %v1478 = vpop.f32.mrb[0].mxu0
  %1479 = vmatprep.mubr.bf16.mxu0 %v829
  %1480 = vmatmul.mubr.bf16.gmra.mrb[0].mxu0 %v828
  %v1481 = vpop.f32.mrb[0].mxu0
  %v1482 = vadd.f32 %v284, %v1481
  %v1483 = vpop.f32.mrb[0].mxu0
  %v1484 = vpop.f32.mrb[0].mxu0
  %v1485 = vadd.f32 %v284, %v1484
  %v1486 = vpop.f32.mrb[0].mxu0
  %1487 = vmatprep.mubr.bf16.mxu0 %v834
  %1488 = vmatmul.mubr.bf16.gmra.mrb[0].mxu0 %v833
  %v1489 = vpop.f32.mrb[0].mxu0
  %v1490 = vadd.f32 %v284, %v1489
  %v1491 = vpop.f32.mrb[0].mxu0
  %v1492 = vpop.f32.mrb[0].mxu0
  %v1493 = vadd.f32 %v284, %v1492
  %v1494 = vpop.f32.mrb[0].mxu0
  %1495 = vmatprep.mubr.bf16.mxu0 %v839
  %1496 = vmatmul.mubr.bf16.gmra.mrb[0].mxu0 %v838
  %v1497 = vpop.f32.mrb[0].mxu0
  %v1498 = vadd.f32 %v284, %v1497
  %v1499 = vpop.f32.mrb[0].mxu0
  %v1500 = vpop.f32.mrb[0].mxu0
  %v1501 = vadd.f32 %v284, %v1500
  %v1502 = vpop.f32.mrb[0].mxu0
  %1503 = vmatprep.mubr.bf16.mxu0 %v844
  %1504 = vmatmul.mubr.bf16.gmra.mrb[0].mxu0 %v843
  %v1505 = vpop.f32.mrb[0].mxu0
  %v1506 = vadd.f32 %v284, %v1505
  %v1507 = vpop.f32.mrb[0].mxu0
  %v1508 = vpop.f32.mrb[0].mxu0
  %v1509 = vadd.f32 %v284, %v1508
  %v1510 = vpop.f32.mrb[0].mxu0
  %1511 = vmatprep.mubr.bf16.mxu0 %v849
  %1512 = vmatmul.mubr.bf16.gmra.mrb[0].mxu0 %v848
  %v1513 = vpop.f32.mrb[0].mxu0
  %v1514 = vadd.f32 %v284, %v1513
  %v1515 = vpop.f32.mrb[0].mxu0
  %v1516 = vpop.f32.mrb[0].mxu0
  %v1517 = vadd.f32 %v284, %v1516
  %v1518 = vpop.f32.mrb[0].mxu0
  %1519 = vmatprep.mubr.bf16.mxu0 %v854
  %1520 = vmatmul.mubr.bf16.gmra.mrb[0].mxu0 %v853
  %v1521 = vpop.f32.mrb[0].mxu0
  %v1522 = vadd.f32 %v284, %v1521
  %v1523 = vpop.f32.mrb[0].mxu0
  %v1524 = vpop.f32.mrb[0].mxu0
  %v1525 = vadd.f32 %v284, %v1524
  %v1526 = vpop.f32.mrb[0].mxu0
  %1527 = vmatprep.mubr.bf16.mxu0 %v859
  %1528 = vmatmul.mubr.bf16.gmra.mrb[0].mxu0 %v858
  %v1529 = vpop.f32.mrb[0].mxu0
  %v1530 = vadd.f32 %v284, %v1529
  %v1531 = vpop.f32.mrb[0].mxu0
  %v1532 = vpop.f32.mrb[0].mxu0
  %v1533 = vadd.f32 %v284, %v1532
  %v1534 = vpop.f32.mrb[0].mxu0
  %1535 = vmatprep.mubr.bf16.mxu0 %v864
  %1536 = vmatmul.mubr.bf16.gmra.mrb[0].mxu0 %v863
  %v1537 = vpop.f32.mrb[0].mxu0
  %v1538 = vadd.f32 %v284, %v1537
  %v1539 = vpop.f32.mrb[0].mxu0
  %v1540 = vpop.f32.mrb[0].mxu0
  %v1541 = vadd.f32 %v284, %v1540
  %v1542 = vpop.f32.mrb[0].mxu0
  %1543 = vmatprep.mubr.bf16.mxu0 %v869
  %1544 = vmatmul.mubr.bf16.gmra.mrb[0].mxu0 %v868
  %v1545 = vpop.f32.mrb[0].mxu0
  %v1546 = vadd.f32 %v284, %v1545
  %v1547 = vpop.f32.mrb[0].mxu0
  %v1548 = vpop.f32.mrb[0].mxu0
  %v1549 = vadd.f32 %v284, %v1548
  %v1550 = vpop.f32.mrb[0].mxu0
  %1551 = vmatprep.mubr.bf16.mxu0 %v874
  %1552 = vmatmul.mubr.bf16.gmra.mrb[0].mxu0 %v873
  %v1553 = vpop.f32.mrb[0].mxu0
  %v1554 = vadd.f32 %v284, %v1553
  %v1555 = vpop.f32.mrb[0].mxu0
  %v1556 = vpop.f32.mrb[0].mxu0
  %v1557 = vadd.f32 %v284, %v1556
  %v1558 = vpop.f32.mrb[0].mxu0
  %1559 = vmatprep.mubr.bf16.mxu0 %v879
  %1560 = vmatmul.mubr.bf16.gmra.mrb[0].mxu0 %v878
  %v1561 = vpop.f32.mrb[0].mxu0
  %v1562 = vadd.f32 %v284, %v1561
  %v1563 = vpop.f32.mrb[0].mxu0
  %v1564 = vpop.f32.mrb[0].mxu0
  %v1565 = vadd.f32 %v284, %v1564
  %v1566 = vpop.f32.mrb[0].mxu0
  %1567 = vmatprep.mubr.bf16.mxu0 %v884
  %1568 = vmatmul.mubr.bf16.gmra.mrb[0].mxu0 %v883
  %v1569 = vpop.f32.mrb[0].mxu0
  %v1570 = vadd.f32 %v284, %v1569
  %v1571 = vpop.f32.mrb[0].mxu0
  %v1572 = vpop.f32.mrb[0].mxu0
  %v1573 = vadd.f32 %v284, %v1572
  %v1574 = vpop.f32.mrb[0].mxu0
  %1575 = vmatprep.mubr.bf16.mxu0 %v889
  %1576 = vmatmul.mubr.bf16.gmra.mrb[0].mxu0 %v888
  %v1577 = vpop.f32.mrb[0].mxu0
  %v1578 = vadd.f32 %v284, %v1577
  %v1579 = vpop.f32.mrb[0].mxu0
  %v1580 = vpop.f32.mrb[0].mxu0
  %v1581 = vadd.f32 %v284, %v1580
  %v1582 = vpop.f32.mrb[0].mxu0
  %1583 = vmatprep.mubr.bf16.mxu0 %v894
  %1584 = vmatmul.mubr.bf16.gmra.mrb[0].mxu0 %v893
  %v1585 = vpop.f32.mrb[0].mxu0
  %v1586 = vadd.f32 %v284, %v1585
  %v1587 = vpop.f32.mrb[0].mxu0
  %v1588 = vpop.f32.mrb[0].mxu0
  %v1589 = vadd.f32 %v284, %v1588
  %v1590 = vpop.f32.mrb[0].mxu0
  %1591 = vmatprep.mubr.bf16.mxu0 %v899
  %1592 = vmatmul.mubr.bf16.gmra.mrb[0].mxu0 %v898
  %v1593 = vpop.f32.mrb[0].mxu0
  %v1594 = vadd.f32 %v284, %v1593
  %v1595 = vpop.f32.mrb[0].mxu0
  %v1596 = vpop.f32.mrb[0].mxu0
  %v1597 = vadd.f32 %v284, %v1596
  %v1598 = vpop.f32.mrb[0].mxu0
  %1599 = vmatprep.mubr.bf16.mxu0 %v904
  %1600 = vmatmul.mubr.bf16.gmra.mrb[0].mxu0 %v903
  %v1601 = vpop.f32.mrb[0].mxu0
  %v1602 = vadd.f32 %v284, %v1601
  %v1603 = vpop.f32.mrb[0].mxu0
  %v1604 = vpop.f32.mrb[0].mxu0
  %v1605 = vadd.f32 %v284, %v1604
  %v1606 = vpop.f32.mrb[0].mxu0
  %1607 = vmatprep.mubr.bf16.mxu0 %v909
  %1608 = vmatmul.mubr.bf16.gmra.mrb[0].mxu0 %v908
  %v1609 = vpop.f32.mrb[0].mxu0
  %v1610 = vadd.f32 %v284, %v1609
  %v1611 = vpop.f32.mrb[0].mxu0
  %v1612 = vpop.f32.mrb[0].mxu0
  %v1613 = vadd.f32 %v284, %v1612
  %v1614 = vpop.f32.mrb[0].mxu0
  %1615 = vmatprep.mubr.bf16.mxu0 %v914
  %1616 = vmatmul.mubr.bf16.gmra.mrb[0].mxu0 %v913
  %v1617 = vpop.f32.mrb[0].mxu0
  %v1618 = vadd.f32 %v284, %v1617
  %v1619 = vpop.f32.mrb[0].mxu0
  %v1620 = vpop.f32.mrb[0].mxu0
  %v1621 = vadd.f32 %v284, %v1620
  %v1622 = vpop.f32.mrb[0].mxu0
  %1623 = vmatprep.mubr.bf16.mxu0 %v919
  %1624 = vmatmul.mubr.bf16.gmra.mrb[0].mxu0 %v918
  %v1625 = vpop.f32.mrb[0].mxu0
  %v1626 = vadd.f32 %v284, %v1625
  %v1627 = vpop.f32.mrb[0].mxu0
  %v1628 = vpop.f32.mrb[0].mxu0
  %v1629 = vadd.f32 %v284, %v1628
  %v1630 = vpop.f32.mrb[0].mxu0
  %1631 = vmatprep.mubr.bf16.mxu0 %v924
  %1632 = vmatmul.mubr.bf16.gmra.mrb[0].mxu0 %v923
  %v1633 = vpop.f32.mrb[0].mxu0
  %v1634 = vadd.f32 %v284, %v1633
  %v1635 = vpop.f32.mrb[0].mxu0
  %v1636 = vpop.f32.mrb[0].mxu0
  %v1637 = vadd.f32 %v284, %v1636
  %v1638 = vpop.f32.mrb[0].mxu0
  %1639 = vmatprep.mubr.bf16.mxu0 %v929
  %1640 = vmatmul.mubr.bf16.gmra.mrb[0].mxu0 %v928
  %v1641 = vpop.f32.mrb[0].mxu0
  %v1642 = vadd.f32 %v284, %v1641
  %v1643 = vpop.f32.mrb[0].mxu0
  %v1644 = vpop.f32.mrb[0].mxu0
  %v1645 = vadd.f32 %v284, %v1644
  %v1646 = vpop.f32.mrb[0].mxu0
  %1647 = vmatprep.mubr.bf16.mxu0 %v934
  %1648 = vmatmul.mubr.bf16.gmra.mrb[0].mxu0 %v933
  %v1649 = vpop.f32.mrb[0].mxu0
  %v1650 = vadd.f32 %v284, %v1649
  %v1651 = vpop.f32.mrb[0].mxu0
  %v1652 = vpop.f32.mrb[0].mxu0
  %v1653 = vadd.f32 %v284, %v1652
  %v1654 = vpop.f32.mrb[0].mxu0
  %1655 = vmatprep.mubr.bf16.mxu0 %v939
  %1656 = vmatmul.mubr.bf16.gmra.mrb[0].mxu0 %v938
  %v1657 = vpop.f32.mrb[0].mxu0
  %v1658 = vadd.f32 %v284, %v1657
  %v1659 = vpop.f32.mrb[0].mxu0
  %v1660 = vpop.f32.mrb[0].mxu0
  %v1661 = vadd.f32 %v284, %v1660
  %v1662 = vpop.f32.mrb[0].mxu0
  %1663 = vmatprep.mubr.bf16.mxu0 %v944
  %1664 = vmatmul.mubr.bf16.gmra.mrb[0].mxu0 %v943
  %v1665 = vpop.f32.mrb[0].mxu0
  %v1666 = vadd.f32 %v284, %v1665
  %v1667 = vpop.f32.mrb[0].mxu0
  %v1668 = vpop.f32.mrb[0].mxu0
  %v1669 = vadd.f32 %v284, %v1668
  %v1670 = vpop.f32.mrb[0].mxu0
  %1671 = vmatprep.mubr.bf16.mxu0 %v949
  %1672 = vmatmul.mubr.bf16.gmra.mrb[0].mxu0 %v948
  %v1673 = vpop.f32.mrb[0].mxu0
  %v1674 = vadd.f32 %v284, %v1673
  %v1675 = vpop.f32.mrb[0].mxu0
  %v1676 = vpop.f32.mrb[0].mxu0
  %v1677 = vadd.f32 %v284, %v1676
  %v1678 = vpop.f32.mrb[0].mxu0
  %1679 = vmatprep.mubr.bf16.mxu0 %v954
  %1680 = vmatmul.mubr.bf16.gmra.mrb[0].mxu0 %v953
  %v1681 = vpop.f32.mrb[0].mxu0
  %v1682 = vadd.f32 %v284, %v1681
  %v1683 = vpop.f32.mrb[0].mxu0
  %v1684 = vpop.f32.mrb[0].mxu0
  %v1685 = vadd.f32 %v284, %v1684
  %v1686 = vpop.f32.mrb[0].mxu0
  %1687 = vdwg.mxu0
  %1688 = vmatprep.subr.bf16.mxu0 0
  %1689 = vmatpush1.bf16.msra.mxu0 %v1246
  %1690 = vmatprep.subr.bf16.mxu0 0
  %1691 = vmatpush1.bf16.msra.mxu0 %v1247
  %1692 = vmatprep.subr.bf16.mxu0 0
  %1693 = vmatpush1.bf16.msra.mxu0 %v1248
  %1694 = vmatprep.subr.bf16.mxu0 0
  %1695 = vmatpush1.bf16.msra.mxu0 %v1249
  %1696 = vmatprep.subr.bf16.mxu0 0
  %1697 = vmatpush1.bf16.msra.mxu0 %v1250
  %1698 = vmatprep.subr.bf16.mxu0 0
  %1699 = vmatpush1.bf16.msra.mxu0 %v1251
  %1700 = vmatprep.subr.bf16.mxu0 0
  %1701 = vmatpush1.bf16.msra.mxu0 %v1252
  %1702 = vmatprep.subr.bf16.mxu0 0
  %1703 = vmatpush1.bf16.msra.mxu0 %v1253
  %1704 = vmatprep.subr.bf16.mxu0 0
  %1705 = vmatpush1.bf16.msra.mxu0 %v1254
  %1706 = vmatprep.subr.bf16.mxu0 0
  %1707 = vmatpush1.bf16.msra.mxu0 %v1255
  %1708 = vmatprep.subr.bf16.mxu0 0
  %1709 = vmatpush1.bf16.msra.mxu0 %v1256
  %1710 = vmatprep.subr.bf16.mxu0 0
  %1711 = vmatpush1.bf16.msra.mxu0 %v1257
  %1712 = vmatprep.subr.bf16.mxu0 0
  %1713 = vmatpush1.bf16.msra.mxu0 %v1258
  %1714 = vmatprep.subr.bf16.mxu0 0
  %1715 = vmatpush1.bf16.msra.mxu0 %v1259
  %1716 = vmatprep.subr.bf16.mxu0 0
  %1717 = vmatpush1.bf16.msra.mxu0 %v1260
  %1718 = vmatprep.subr.bf16.mxu0 0
  %1719 = vmatpush1.bf16.msra.mxu0 %v1261
  %1720 = vmatprep.mubr.bf16.mxu0 %v801
  %1721 = vmatmul.mubr.bf16.gmra.mrb[0].mxu0 %v800
  %v1722 = vpop.f32.mrb[0].mxu0
  %v1723 = vadd.f32 %v1434, %v1722
  %v1724 = vpop.f32.mrb[0].mxu0
  %v1725 = vpop.f32.mrb[0].mxu0
  %v1726 = vadd.f32 %v1437, %v1725
  %v1727 = vpop.f32.mrb[0].mxu0
  %1728 = vmatprep.mubr.bf16.mxu0 %v806
  %1729 = vmatmul.mubr.bf16.gmra.mrb[0].mxu0 %v805
  %v1730 = vpop.f32.mrb[0].mxu0
  %v1731 = vadd.f32 %v1442, %v1730
  %v1732 = vpop.f32.mrb[0].mxu0
  %v1733 = vpop.f32.mrb[0].mxu0
  %v1734 = vadd.f32 %v1445, %v1733
  %v1735 = vpop.f32.mrb[0].mxu0
  %1736 = vmatprep.mubr.bf16.mxu0 %v811
  %1737 = vmatmul.mubr.bf16.gmra.mrb[0].mxu0 %v810
  %v1738 = vpop.f32.mrb[0].mxu0
  %v1739 = vadd.f32 %v1450, %v1738
  %v1740 = vpop.f32.mrb[0].mxu0
  %v1741 = vpop.f32.mrb[0].mxu0
  %v1742 = vadd.f32 %v1453, %v1741
  %v1743 = vpop.f32.mrb[0].mxu0
  %1744 = vmatprep.mubr.bf16.mxu0 %v816
  %1745 = vmatmul.mubr.bf16.gmra.mrb[0].mxu0 %v815
  %v1746 = vpop.f32.mrb[0].mxu0
  %v1747 = vadd.f32 %v1458, %v1746
  %v1748 = vpop.f32.mrb[0].mxu0
  %v1749 = vpop.f32.mrb[0].mxu0
  %v1750 = vadd.f32 %v1461, %v1749
  %v1751 = vpop.f32.mrb[0].mxu0
  %1752 = vmatprep.mubr.bf16.mxu0 %v821
  %1753 = vmatmul.mubr.bf16.gmra.mrb[0].mxu0 %v820
  %v1754 = vpop.f32.mrb[0].mxu0
  %v1755 = vadd.f32 %v1466, %v1754
  %v1756 = vpop.f32.mrb[0].mxu0
  %v1757 = vpop.f32.mrb[0].mxu0
  %v1758 = vadd.f32 %v1469, %v1757
  %v1759 = vpop.f32.mrb[0].mxu0
  %1760 = vmatprep.mubr.bf16.mxu0 %v826
  %1761 = vmatmul.mubr.bf16.gmra.mrb[0].mxu0 %v825
  %v1762 = vpop.f32.mrb[0].mxu0
  %v1763 = vadd.f32 %v1474, %v1762
  %v1764 = vpop.f32.mrb[0].mxu0
  %v1765 = vpop.f32.mrb[0].mxu0
  %v1766 = vadd.f32 %v1477, %v1765
  %v1767 = vpop.f32.mrb[0].mxu0
  %1768 = vmatprep.mubr.bf16.mxu0 %v831
  %1769 = vmatmul.mubr.bf16.gmra.mrb[0].mxu0 %v830
  %v1770 = vpop.f32.mrb[0].mxu0
  %v1771 = vadd.f32 %v1482, %v1770
  %v1772 = vpop.f32.mrb[0].mxu0
  %v1773 = vpop.f32.mrb[0].mxu0
  %v1774 = vadd.f32 %v1485, %v1773
  %v1775 = vpop.f32.mrb[0].mxu0
  %1776 = vmatprep.mubr.bf16.mxu0 %v836
  %1777 = vmatmul.mubr.bf16.gmra.mrb[0].mxu0 %v835
  %v1778 = vpop.f32.mrb[0].mxu0
  %v1779 = vadd.f32 %v1490, %v1778
  %v1780 = vpop.f32.mrb[0].mxu0
  %v1781 = vpop.f32.mrb[0].mxu0
  %v1782 = vadd.f32 %v1493, %v1781
  %v1783 = vpop.f32.mrb[0].mxu0
  %1784 = vmatprep.mubr.bf16.mxu0 %v841
  %1785 = vmatmul.mubr.bf16.gmra.mrb[0].mxu0 %v840
  %v1786 = vpop.f32.mrb[0].mxu0
  %v1787 = vadd.f32 %v1498, %v1786
  %v1788 = vpop.f32.mrb[0].mxu0
  %v1789 = vpop.f32.mrb[0].mxu0
  %v1790 = vadd.f32 %v1501, %v1789
  %v1791 = vpop.f32.mrb[0].mxu0
  %1792 = vmatprep.mubr.bf16.mxu0 %v846
  %1793 = vmatmul.mubr.bf16.gmra.mrb[0].mxu0 %v845
  %v1794 = vpop.f32.mrb[0].mxu0
  %v1795 = vadd.f32 %v1506, %v1794
  %v1796 = vpop.f32.mrb[0].mxu0
  %v1797 = vpop.f32.mrb[0].mxu0
  %v1798 = vadd.f32 %v1509, %v1797
  %v1799 = vpop.f32.mrb[0].mxu0
  %1800 = vmatprep.mubr.bf16.mxu0 %v851
  %1801 = vmatmul.mubr.bf16.gmra.mrb[0].mxu0 %v850
  %v1802 = vpop.f32.mrb[0].mxu0
  %v1803 = vadd.f32 %v1514, %v1802
  %v1804 = vpop.f32.mrb[0].mxu0
  %v1805 = vpop.f32.mrb[0].mxu0
  %v1806 = vadd.f32 %v1517, %v1805
  %v1807 = vpop.f32.mrb[0].mxu0
  %1808 = vmatprep.mubr.bf16.mxu0 %v856
  %1809 = vmatmul.mubr.bf16.gmra.mrb[0].mxu0 %v855
  %v1810 = vpop.f32.mrb[0].mxu0
  %v1811 = vadd.f32 %v1522, %v1810
  %v1812 = vpop.f32.mrb[0].mxu0
  %v1813 = vpop.f32.mrb[0].mxu0
  %v1814 = vadd.f32 %v1525, %v1813
  %v1815 = vpop.f32.mrb[0].mxu0
  %1816 = vmatprep.mubr.bf16.mxu0 %v861
  %1817 = vmatmul.mubr.bf16.gmra.mrb[0].mxu0 %v860
  %v1818 = vpop.f32.mrb[0].mxu0
  %v1819 = vadd.f32 %v1530, %v1818
  %v1820 = vpop.f32.mrb[0].mxu0
  %v1821 = vpop.f32.mrb[0].mxu0
  %v1822 = vadd.f32 %v1533, %v1821
  %v1823 = vpop.f32.mrb[0].mxu0
  %1824 = vmatprep.mubr.bf16.mxu0 %v866
  %1825 = vmatmul.mubr.bf16.gmra.mrb[0].mxu0 %v865
  %v1826 = vpop.f32.mrb[0].mxu0
  %v1827 = vadd.f32 %v1538, %v1826
  %v1828 = vpop.f32.mrb[0].mxu0
  %v1829 = vpop.f32.mrb[0].mxu0
  %v1830 = vadd.f32 %v1541, %v1829
  %v1831 = vpop.f32.mrb[0].mxu0
  %1832 = vmatprep.mubr.bf16.mxu0 %v871
  %1833 = vmatmul.mubr.bf16.gmra.mrb[0].mxu0 %v870
  %v1834 = vpop.f32.mrb[0].mxu0
  %v1835 = vadd.f32 %v1546, %v1834
  %v1836 = vpop.f32.mrb[0].mxu0
  %v1837 = vpop.f32.mrb[0].mxu0
  %v1838 = vadd.f32 %v1549, %v1837
  %v1839 = vpop.f32.mrb[0].mxu0
  %1840 = vmatprep.mubr.bf16.mxu0 %v876
  %1841 = vmatmul.mubr.bf16.gmra.mrb[0].mxu0 %v875
  %v1842 = vpop.f32.mrb[0].mxu0
  %v1843 = vadd.f32 %v1554, %v1842
  %v1844 = vpop.f32.mrb[0].mxu0
  %v1845 = vpop.f32.mrb[0].mxu0
  %v1846 = vadd.f32 %v1557, %v1845
  %v1847 = vpop.f32.mrb[0].mxu0
  %1848 = vmatprep.mubr.bf16.mxu0 %v881
  %1849 = vmatmul.mubr.bf16.gmra.mrb[0].mxu0 %v880
  %v1850 = vpop.f32.mrb[0].mxu0
  %v1851 = vadd.f32 %v1562, %v1850
  %v1852 = vpop.f32.mrb[0].mxu0
  %v1853 = vpop.f32.mrb[0].mxu0
  %v1854 = vadd.f32 %v1565, %v1853
  %v1855 = vpop.f32.mrb[0].mxu0
  %1856 = vmatprep.mubr.bf16.mxu0 %v886
  %1857 = vmatmul.mubr.bf16.gmra.mrb[0].mxu0 %v885
  %v1858 = vpop.f32.mrb[0].mxu0
  %v1859 = vadd.f32 %v1570, %v1858
  %v1860 = vpop.f32.mrb[0].mxu0
  %v1861 = vpop.f32.mrb[0].mxu0
  %v1862 = vadd.f32 %v1573, %v1861
  %v1863 = vpop.f32.mrb[0].mxu0
  %1864 = vmatprep.mubr.bf16.mxu0 %v891
  %1865 = vmatmul.mubr.bf16.gmra.mrb[0].mxu0 %v890
  %v1866 = vpop.f32.mrb[0].mxu0
  %v1867 = vadd.f32 %v1578, %v1866
  %v1868 = vpop.f32.mrb[0].mxu0
  %v1869 = vpop.f32.mrb[0].mxu0
  %v1870 = vadd.f32 %v1581, %v1869
  %v1871 = vpop.f32.mrb[0].mxu0
  %1872 = vmatprep.mubr.bf16.mxu0 %v896
  %1873 = vmatmul.mubr.bf16.gmra.mrb[0].mxu0 %v895
  %v1874 = vpop.f32.mrb[0].mxu0
  %v1875 = vadd.f32 %v1586, %v1874
  %v1876 = vpop.f32.mrb[0].mxu0
  %v1877 = vpop.f32.mrb[0].mxu0
  %v1878 = vadd.f32 %v1589, %v1877
  %v1879 = vpop.f32.mrb[0].mxu0
  %1880 = vmatprep.mubr.bf16.mxu0 %v901
  %1881 = vmatmul.mubr.bf16.gmra.mrb[0].mxu0 %v900
  %v1882 = vpop.f32.mrb[0].mxu0
  %v1883 = vadd.f32 %v1594, %v1882
  %v1884 = vpop.f32.mrb[0].mxu0
  %v1885 = vpop.f32.mrb[0].mxu0
  %v1886 = vadd.f32 %v1597, %v1885
  %v1887 = vpop.f32.mrb[0].mxu0
  %1888 = vmatprep.mubr.bf16.mxu0 %v906
  %1889 = vmatmul.mubr.bf16.gmra.mrb[0].mxu0 %v905
  %v1890 = vpop.f32.mrb[0].mxu0
  %v1891 = vadd.f32 %v1602, %v1890
  %v1892 = vpop.f32.mrb[0].mxu0
  %v1893 = vpop.f32.mrb[0].mxu0
  %v1894 = vadd.f32 %v1605, %v1893
  %v1895 = vpop.f32.mrb[0].mxu0
  %1896 = vmatprep.mubr.bf16.mxu0 %v911
  %1897 = vmatmul.mubr.bf16.gmra.mrb[0].mxu0 %v910
  %v1898 = vpop.f32.mrb[0].mxu0
  %v1899 = vadd.f32 %v1610, %v1898
  %v1900 = vpop.f32.mrb[0].mxu0
  %v1901 = vpop.f32.mrb[0].mxu0
  %v1902 = vadd.f32 %v1613, %v1901
  %v1903 = vpop.f32.mrb[0].mxu0
  %1904 = vmatprep.mubr.bf16.mxu0 %v916
  %1905 = vmatmul.mubr.bf16.gmra.mrb[0].mxu0 %v915
  %v1906 = vpop.f32.mrb[0].mxu0
  %v1907 = vadd.f32 %v1618, %v1906
  %v1908 = vpop.f32.mrb[0].mxu0
  %v1909 = vpop.f32.mrb[0].mxu0
  %v1910 = vadd.f32 %v1621, %v1909
  %v1911 = vpop.f32.mrb[0].mxu0
  %1912 = vmatprep.mubr.bf16.mxu0 %v921
  %1913 = vmatmul.mubr.bf16.gmra.mrb[0].mxu0 %v920
  %v1914 = vpop.f32.mrb[0].mxu0
  %v1915 = vadd.f32 %v1626, %v1914
  %v1916 = vpop.f32.mrb[0].mxu0
  %v1917 = vpop.f32.mrb[0].mxu0
  %v1918 = vadd.f32 %v1629, %v1917
  %v1919 = vpop.f32.mrb[0].mxu0
  %1920 = vmatprep.mubr.bf16.mxu0 %v926
  %1921 = vmatmul.mubr.bf16.gmra.mrb[0].mxu0 %v925
  %v1922 = vpop.f32.mrb[0].mxu0
  %v1923 = vadd.f32 %v1634, %v1922
  %v1924 = vpop.f32.mrb[0].mxu0
  %v1925 = vpop.f32.mrb[0].mxu0
  %v1926 = vadd.f32 %v1637, %v1925
  %v1927 = vpop.f32.mrb[0].mxu0
  %1928 = vmatprep.mubr.bf16.mxu0 %v931
  %1929 = vmatmul.mubr.bf16.gmra.mrb[0].mxu0 %v930
  %v1930 = vpop.f32.mrb[0].mxu0
  %v1931 = vadd.f32 %v1642, %v1930
  %v1932 = vpop.f32.mrb[0].mxu0
  %v1933 = vpop.f32.mrb[0].mxu0
  %v1934 = vadd.f32 %v1645, %v1933
  %v1935 = vpop.f32.mrb[0].mxu0
  %1936 = vmatprep.mubr.bf16.mxu0 %v936
  %1937 = vmatmul.mubr.bf16.gmra.mrb[0].mxu0 %v935
  %v1938 = vpop.f32.mrb[0].mxu0
  %v1939 = vadd.f32 %v1650, %v1938
  %v1940 = vpop.f32.mrb[0].mxu0
  %v1941 = vpop.f32.mrb[0].mxu0
  %v1942 = vadd.f32 %v1653, %v1941
  %v1943 = vpop.f32.mrb[0].mxu0
  %1944 = vmatprep.mubr.bf16.mxu0 %v941
  %1945 = vmatmul.mubr.bf16.gmra.mrb[0].mxu0 %v940
  %v1946 = vpop.f32.mrb[0].mxu0
  %v1947 = vadd.f32 %v1658, %v1946
  %v1948 = vpop.f32.mrb[0].mxu0
  %v1949 = vpop.f32.mrb[0].mxu0
  %v1950 = vadd.f32 %v1661, %v1949
  %v1951 = vpop.f32.mrb[0].mxu0
  %1952 = vmatprep.mubr.bf16.mxu0 %v946
  %1953 = vmatmul.mubr.bf16.gmra.mrb[0].mxu0 %v945
  %v1954 = vpop.f32.mrb[0].mxu0
  %v1955 = vadd.f32 %v1666, %v1954
  %v1956 = vpop.f32.mrb[0].mxu0
  %v1957 = vpop.f32.mrb[0].mxu0
  %v1958 = vadd.f32 %v1669, %v1957
  %v1959 = vpop.f32.mrb[0].mxu0
  %1960 = vmatprep.mubr.bf16.mxu0 %v951
  %1961 = vmatmul.mubr.bf16.gmra.mrb[0].mxu0 %v950
  %v1962 = vpop.f32.mrb[0].mxu0
  %v1963 = vadd.f32 %v1674, %v1962
  %v1964 = vpop.f32.mrb[0].mxu0
  %v1965 = vpop.f32.mrb[0].mxu0
  %v1966 = vadd.f32 %v1677, %v1965
  %v1967 = vpop.f32.mrb[0].mxu0
  %1968 = vmatprep.mubr.bf16.mxu0 %v956
  %1969 = vmatmul.mubr.bf16.gmra.mrb[0].mxu0 %v955
  %v1970 = vpop.f32.mrb[0].mxu0
  %v1971 = vadd.f32 %v1682, %v1970
  %v1972 = vpop.f32.mrb[0].mxu0
  %v1973 = vpop.f32.mrb[0].mxu0
  %v1974 = vadd.f32 %v1685, %v1973
  %v1975 = vpop.f32.mrb[0].mxu0
  %1976 = vdwg.mxu0
  %1977 = vmatprep.subr.bf16.mxu0 0
  %1978 = vmatpush1.bf16.msra.mxu0 %v1262
  %1979 = vmatprep.subr.bf16.mxu0 0
  %1980 = vmatpush1.bf16.msra.mxu0 %v1263
  %1981 = vmatprep.subr.bf16.mxu0 0
  %1982 = vmatpush1.bf16.msra.mxu0 %v1264
  %1983 = vmatprep.subr.bf16.mxu0 0
  %1984 = vmatpush1.bf16.msra.mxu0 %v1265
  %1985 = vmatprep.subr.bf16.mxu0 0
  %1986 = vmatpush1.bf16.msra.mxu0 0
  %1987 = vmatprep.subr.bf16.mxu0 0
  %1988 = vmatpush1.bf16.msra.mxu0 0
  %1989 = vmatprep.subr.bf16.mxu0 0
  %1990 = vmatpush1.bf16.msra.mxu0 0
  %1991 = vmatprep.subr.bf16.mxu0 0
  %1992 = vmatpush1.bf16.msra.mxu0 0
  %1993 = vmatprep.subr.bf16.mxu0 0
  %1994 = vmatpush1.bf16.msra.mxu0 0
  %1995 = vmatprep.subr.bf16.mxu0 0
  %1996 = vmatpush1.bf16.msra.mxu0 0
  %1997 = vmatprep.subr.bf16.mxu0 0
  %1998 = vmatpush1.bf16.msra.mxu0 0
  %1999 = vmatprep.subr.bf16.mxu0 0
  %2000 = vmatpush1.bf16.msra.mxu0 0
  %2001 = vmatprep.subr.bf16.mxu0 0
  %2002 = vmatpush1.bf16.msra.mxu0 0
  %2003 = vmatprep.subr.bf16.mxu0 0
  %2004 = vmatpush1.bf16.msra.mxu0 0
  %2005 = vmatprep.subr.bf16.mxu0 0
  %2006 = vmatpush1.bf16.msra.mxu0 0
  %2007 = vmatprep.subr.bf16.mxu0 0
  %2008 = vmatpush1.bf16.msra.mxu0 0
  %2009 = vmatprep.mubr.bf16.mxu0 0
  %2010 = vmatmul.mubr.bf16.gmra.mrb[0].mxu0 %v1304
  %v2011 = vpop.f32.mrb[0].mxu0
  %v2012 = vadd.f32 %v1723, %v2011
  %v2013 = vpop.f32.mrb[0].mxu0
  %v2014 = vpop.f32.mrb[0].mxu0
  %v2015 = vadd.f32 %v1726, %v2014
  %v2016 = vpop.f32.mrb[0].mxu0
  %2017 = vmatprep.mubr.bf16.mxu0 0
  %2018 = vmatmul.mubr.bf16.gmra.mrb[0].mxu0 %v1307
  %v2019 = vpop.f32.mrb[0].mxu0
  %v2020 = vadd.f32 %v1731, %v2019
  %v2021 = vpop.f32.mrb[0].mxu0
  %v2022 = vpop.f32.mrb[0].mxu0
  %v2023 = vadd.f32 %v1734, %v2022
  %v2024 = vpop.f32.mrb[0].mxu0
  %2025 = vmatprep.mubr.bf16.mxu0 0
  %2026 = vmatmul.mubr.bf16.gmra.mrb[0].mxu0 %v1310
  %v2027 = vpop.f32.mrb[0].mxu0
  %v2028 = vadd.f32 %v1739, %v2027
  %v2029 = vpop.f32.mrb[0].mxu0
  %v2030 = vpop.f32.mrb[0].mxu0
  %v2031 = vadd.f32 %v1742, %v2030
  %v2032 = vpop.f32.mrb[0].mxu0
  %2033 = vmatprep.mubr.bf16.mxu0 0
  %2034 = vmatmul.mubr.bf16.gmra.mrb[0].mxu0 %v1313
  %v2035 = vpop.f32.mrb[0].mxu0
  %v2036 = vadd.f32 %v1747, %v2035
  %v2037 = vpop.f32.mrb[0].mxu0
  %v2038 = vpop.f32.mrb[0].mxu0
  %v2039 = vadd.f32 %v1750, %v2038
  %v2040 = vpop.f32.mrb[0].mxu0
  %2041 = vmatprep.mubr.bf16.mxu0 0
  %2042 = vmatmul.mubr.bf16.gmra.mrb[0].mxu0 %v1316
  %v2043 = vpop.f32.mrb[0].mxu0
  %v2044 = vadd.f32 %v1755, %v2043
  %v2045 = vpop.f32.mrb[0].mxu0
  %v2046 = vpop.f32.mrb[0].mxu0
  %v2047 = vadd.f32 %v1758, %v2046
  %v2048 = vpop.f32.mrb[0].mxu0
  %2049 = vmatprep.mubr.bf16.mxu0 0
  %2050 = vmatmul.mubr.bf16.gmra.mrb[0].mxu0 %v1319
  %v2051 = vpop.f32.mrb[0].mxu0
  %v2052 = vadd.f32 %v1763, %v2051
  %v2053 = vpop.f32.mrb[0].mxu0
  %v2054 = vpop.f32.mrb[0].mxu0
  %v2055 = vadd.f32 %v1766, %v2054
  %v2056 = vpop.f32.mrb[0].mxu0
  %2057 = vmatprep.mubr.bf16.mxu0 0
  %2058 = vmatmul.mubr.bf16.gmra.mrb[0].mxu0 %v1322
  %v2059 = vpop.f32.mrb[0].mxu0
  %v2060 = vadd.f32 %v1771, %v2059
  %v2061 = vpop.f32.mrb[0].mxu0
  %v2062 = vpop.f32.mrb[0].mxu0
  %v2063 = vadd.f32 %v1774, %v2062
  %v2064 = vpop.f32.mrb[0].mxu0
  %2065 = vmatprep.mubr.bf16.mxu0 0
  %2066 = vmatmul.mubr.bf16.gmra.mrb[0].mxu0 %v1325
  %v2067 = vpop.f32.mrb[0].mxu0
  %v2068 = vadd.f32 %v1779, %v2067
  %v2069 = vpop.f32.mrb[0].mxu0
  %v2070 = vpop.f32.mrb[0].mxu0
  %v2071 = vadd.f32 %v1782, %v2070
  %v2072 = vpop.f32.mrb[0].mxu0
  %2073 = vmatprep.mubr.bf16.mxu0 0
  %2074 = vmatmul.mubr.bf16.gmra.mrb[0].mxu0 %v1328
  %v2075 = vpop.f32.mrb[0].mxu0
  %v2076 = vadd.f32 %v1787, %v2075
  %v2077 = vpop.f32.mrb[0].mxu0
  %v2078 = vpop.f32.mrb[0].mxu0
  %v2079 = vadd.f32 %v1790, %v2078
  %v2080 = vpop.f32.mrb[0].mxu0
  %2081 = vmatprep.mubr.bf16.mxu0 0
  %2082 = vmatmul.mubr.bf16.gmra.mrb[0].mxu0 %v1331
  %v2083 = vpop.f32.mrb[0].mxu0
  %v2084 = vadd.f32 %v1795, %v2083
  %v2085 = vpop.f32.mrb[0].mxu0
  %v2086 = vpop.f32.mrb[0].mxu0
  %v2087 = vadd.f32 %v1798, %v2086
  %v2088 = vpop.f32.mrb[0].mxu0
  %2089 = vmatprep.mubr.bf16.mxu0 0
  %2090 = vmatmul.mubr.bf16.gmra.mrb[0].mxu0 %v1334
  %v2091 = vpop.f32.mrb[0].mxu0
  %v2092 = vadd.f32 %v1803, %v2091
  %v2093 = vpop.f32.mrb[0].mxu0
  %v2094 = vpop.f32.mrb[0].mxu0
  %v2095 = vadd.f32 %v1806, %v2094
  %v2096 = vpop.f32.mrb[0].mxu0
  %2097 = vmatprep.mubr.bf16.mxu0 0
  %2098 = vmatmul.mubr.bf16.gmra.mrb[0].mxu0 %v1337
  %v2099 = vpop.f32.mrb[0].mxu0
  %v2100 = vadd.f32 %v1811, %v2099
  %v2101 = vpop.f32.mrb[0].mxu0
  %v2102 = vpop.f32.mrb[0].mxu0
  %v2103 = vadd.f32 %v1814, %v2102
  %v2104 = vpop.f32.mrb[0].mxu0
  %2105 = vmatprep.mubr.bf16.mxu0 0
  %2106 = vmatmul.mubr.bf16.gmra.mrb[0].mxu0 %v1340
  %v2107 = vpop.f32.mrb[0].mxu0
  %v2108 = vadd.f32 %v1819, %v2107
  %v2109 = vpop.f32.mrb[0].mxu0
  %v2110 = vpop.f32.mrb[0].mxu0
  %v2111 = vadd.f32 %v1822, %v2110
  %v2112 = vpop.f32.mrb[0].mxu0
  %2113 = vmatprep.mubr.bf16.mxu0 0
  %2114 = vmatmul.mubr.bf16.gmra.mrb[0].mxu0 %v1343
  %v2115 = vpop.f32.mrb[0].mxu0
  %v2116 = vadd.f32 %v1827, %v2115
  %v2117 = vpop.f32.mrb[0].mxu0
  %v2118 = vpop.f32.mrb[0].mxu0
  %v2119 = vadd.f32 %v1830, %v2118
  %v2120 = vpop.f32.mrb[0].mxu0
  %2121 = vmatprep.mubr.bf16.mxu0 0
  %2122 = vmatmul.mubr.bf16.gmra.mrb[0].mxu0 %v1346
  %v2123 = vpop.f32.mrb[0].mxu0
  %v2124 = vadd.f32 %v1835, %v2123
  %v2125 = vpop.f32.mrb[0].mxu0
  %v2126 = vpop.f32.mrb[0].mxu0
  %v2127 = vadd.f32 %v1838, %v2126
  %v2128 = vpop.f32.mrb[0].mxu0
  %2129 = vmatprep.mubr.bf16.mxu0 0
  %2130 = vmatmul.mubr.bf16.gmra.mrb[0].mxu0 %v1349
  %v2131 = vpop.f32.mrb[0].mxu0
  %v2132 = vadd.f32 %v1843, %v2131
  %v2133 = vpop.f32.mrb[0].mxu0
  %v2134 = vpop.f32.mrb[0].mxu0
  %v2135 = vadd.f32 %v1846, %v2134
  %v2136 = vpop.f32.mrb[0].mxu0
  %2137 = vmatprep.mubr.bf16.mxu0 0
  %2138 = vmatmul.mubr.bf16.gmra.mrb[0].mxu0 %v1352
  %v2139 = vpop.f32.mrb[0].mxu0
  %v2140 = vadd.f32 %v1851, %v2139
  %v2141 = vpop.f32.mrb[0].mxu0
  %v2142 = vpop.f32.mrb[0].mxu0
  %v2143 = vadd.f32 %v1854, %v2142
  %v2144 = vpop.f32.mrb[0].mxu0
  %2145 = vmatprep.mubr.bf16.mxu0 0
  %2146 = vmatmul.mubr.bf16.gmra.mrb[0].mxu0 %v1355
  %v2147 = vpop.f32.mrb[0].mxu0
  %v2148 = vadd.f32 %v1859, %v2147
  %v2149 = vpop.f32.mrb[0].mxu0
  %v2150 = vpop.f32.mrb[0].mxu0
  %v2151 = vadd.f32 %v1862, %v2150
  %v2152 = vpop.f32.mrb[0].mxu0
  %2153 = vmatprep.mubr.bf16.mxu0 0
  %2154 = vmatmul.mubr.bf16.gmra.mrb[0].mxu0 %v1358
  %v2155 = vpop.f32.mrb[0].mxu0
  %v2156 = vadd.f32 %v1867, %v2155
  %v2157 = vpop.f32.mrb[0].mxu0
  %v2158 = vpop.f32.mrb[0].mxu0
  %v2159 = vadd.f32 %v1870, %v2158
  %v2160 = vpop.f32.mrb[0].mxu0
  %2161 = vmatprep.mubr.bf16.mxu0 0
  %2162 = vmatmul.mubr.bf16.gmra.mrb[0].mxu0 %v1361
  %v2163 = vpop.f32.mrb[0].mxu0
  %v2164 = vadd.f32 %v1875, %v2163
  %v2165 = vpop.f32.mrb[0].mxu0
  %v2166 = vpop.f32.mrb[0].mxu0
  %v2167 = vadd.f32 %v1878, %v2166
  %v2168 = vpop.f32.mrb[0].mxu0
  %2169 = vmatprep.mubr.bf16.mxu0 0
  %2170 = vmatmul.mubr.bf16.gmra.mrb[0].mxu0 %v1364
  %v2171 = vpop.f32.mrb[0].mxu0
  %v2172 = vadd.f32 %v1883, %v2171
  %v2173 = vpop.f32.mrb[0].mxu0
  %v2174 = vpop.f32.mrb[0].mxu0
  %v2175 = vadd.f32 %v1886, %v2174
  %v2176 = vpop.f32.mrb[0].mxu0
  %2177 = vmatprep.mubr.bf16.mxu0 0
  %2178 = vmatmul.mubr.bf16.gmra.mrb[0].mxu0 %v1367
  %v2179 = vpop.f32.mrb[0].mxu0
  %v2180 = vadd.f32 %v1891, %v2179
  %v2181 = vpop.f32.mrb[0].mxu0
  %v2182 = vpop.f32.mrb[0].mxu0
  %v2183 = vadd.f32 %v1894, %v2182
  %v2184 = vpop.f32.mrb[0].mxu0
  %2185 = vmatprep.mubr.bf16.mxu0 0
  %2186 = vmatmul.mubr.bf16.gmra.mrb[0].mxu0 %v1370
  %v2187 = vpop.f32.mrb[0].mxu0
  %v2188 = vadd.f32 %v1899, %v2187
  %v2189 = vpop.f32.mrb[0].mxu0
  %v2190 = vpop.f32.mrb[0].mxu0
  %v2191 = vadd.f32 %v1902, %v2190
  %v2192 = vpop.f32.mrb[0].mxu0
  %2193 = vmatprep.mubr.bf16.mxu0 0
  %2194 = vmatmul.mubr.bf16.gmra.mrb[0].mxu0 %v1373
  %v2195 = vpop.f32.mrb[0].mxu0
  %v2196 = vadd.f32 %v1907, %v2195
  %v2197 = vpop.f32.mrb[0].mxu0
  %v2198 = vpop.f32.mrb[0].mxu0
  %v2199 = vadd.f32 %v1910, %v2198
  %v2200 = vpop.f32.mrb[0].mxu0
  %2201 = vmatprep.mubr.bf16.mxu0 0
  %2202 = vmatmul.mubr.bf16.gmra.mrb[0].mxu0 %v1376
  %v2203 = vpop.f32.mrb[0].mxu0
  %v2204 = vadd.f32 %v1915, %v2203
  %v2205 = vpop.f32.mrb[0].mxu0
  %v2206 = vpop.f32.mrb[0].mxu0
  %v2207 = vadd.f32 %v1918, %v2206
  %v2208 = vpop.f32.mrb[0].mxu0
  %2209 = vmatprep.mubr.bf16.mxu0 0
  %2210 = vmatmul.mubr.bf16.gmra.mrb[0].mxu0 %v1379
  %v2211 = vpop.f32.mrb[0].mxu0
  %v2212 = vadd.f32 %v1923, %v2211
  %v2213 = vpop.f32.mrb[0].mxu0
  %v2214 = vpop.f32.mrb[0].mxu0
  %v2215 = vadd.f32 %v1926, %v2214
  %v2216 = vpop.f32.mrb[0].mxu0
  %2217 = vmatprep.mubr.bf16.mxu0 0
  %2218 = vmatmul.mubr.bf16.gmra.mrb[0].mxu0 %v1382
  %v2219 = vpop.f32.mrb[0].mxu0
  %v2220 = vadd.f32 %v1931, %v2219
  %v2221 = vpop.f32.mrb[0].mxu0
  %v2222 = vpop.f32.mrb[0].mxu0
  %v2223 = vadd.f32 %v1934, %v2222
  %v2224 = vpop.f32.mrb[0].mxu0
  %2225 = vmatprep.mubr.bf16.mxu0 0
  %2226 = vmatmul.mubr.bf16.gmra.mrb[0].mxu0 %v1385
  %v2227 = vpop.f32.mrb[0].mxu0
  %v2228 = vadd.f32 %v1939, %v2227
  %v2229 = vpop.f32.mrb[0].mxu0
  %v2230 = vpop.f32.mrb[0].mxu0
  %v2231 = vadd.f32 %v1942, %v2230
  %v2232 = vpop.f32.mrb[0].mxu0
  %2233 = vmatprep.mubr.bf16.mxu0 0
  %2234 = vmatmul.mubr.bf16.gmra.mrb[0].mxu0 %v1388
  %v2235 = vpop.f32.mrb[0].mxu0
  %v2236 = vadd.f32 %v1947, %v2235
  %v2237 = vpop.f32.mrb[0].mxu0
  %v2238 = vpop.f32.mrb[0].mxu0
  %v2239 = vadd.f32 %v1950, %v2238
  %v2240 = vpop.f32.mrb[0].mxu0
  %2241 = vmatprep.mubr.bf16.mxu0 0
  %2242 = vmatmul.mubr.bf16.gmra.mrb[0].mxu0 %v1391
  %v2243 = vpop.f32.mrb[0].mxu0
  %v2244 = vadd.f32 %v1955, %v2243
  %v2245 = vpop.f32.mrb[0].mxu0
  %v2246 = vpop.f32.mrb[0].mxu0
  %v2247 = vadd.f32 %v1958, %v2246
  %v2248 = vpop.f32.mrb[0].mxu0
  %2249 = vmatprep.mubr.bf16.mxu0 0
  %2250 = vmatmul.mubr.bf16.gmra.mrb[0].mxu0 %v1394
  %v2251 = vpop.f32.mrb[0].mxu0
  %v2252 = vadd.f32 %v1963, %v2251
  %v2253 = vpop.f32.mrb[0].mxu0
  %v2254 = vpop.f32.mrb[0].mxu0
  %v2255 = vadd.f32 %v1966, %v2254
  %v2256 = vpop.f32.mrb[0].mxu0
  %2257 = vmatprep.mubr.bf16.mxu0 0
  %2258 = vmatmul.mubr.bf16.gmra.mrb[0].mxu0 %v1397
  %v2259 = vpop.f32.mrb[0].mxu0
  %v2260 = vadd.f32 %v1971, %v2259
  %v2261 = vpop.f32.mrb[0].mxu0
  %v2262 = vpop.f32.mrb[0].mxu0
  %v2263 = vadd.f32 %v1974, %v2262
  %v2264 = vpop.f32.mrb[0].mxu0
  %2265 = vdwg.mxu0
  %v2266 = vmax.f32 %v2012, 0.0
  %v2267 = vmax.f32 %v2015, 0.0
  %v2268 = vmax.f32 %v2020, 0.0
  %v2269 = vmax.f32 %v2023, 0.0
  %v2270 = vmax.f32 %v2028, 0.0
  %v2271 = vmax.f32 %v2031, 0.0
  %v2272 = vmax.f32 %v2036, 0.0
  %v2273 = vmax.f32 %v2039, 0.0
  %v2274 = vmax.f32 %v2044, 0.0
  %v2275 = vmax.f32 %v2047, 0.0
  %v2276 = vmax.f32 %v2052, 0.0
  %v2277 = vmax.f32 %v2055, 0.0
  %v2278 = vmax.f32 %v2060, 0.0
  %v2279 = vmax.f32 %v2063, 0.0
  %v2280 = vmax.f32 %v2068, 0.0
  %v2281 = vmax.f32 %v2071, 0.0
  %v2282 = vmax.f32 %v2076, 0.0
  %v2283 = vmax.f32 %v2079, 0.0
  %v2284 = vmax.f32 %v2084, 0.0
  %v2285 = vmax.f32 %v2087, 0.0
  %v2286 = vmax.f32 %v2092, 0.0
  %v2287 = vmax.f32 %v2095, 0.0
  %v2288 = vmax.f32 %v2100, 0.0
  %v2289 = vmax.f32 %v2103, 0.0
  %v2290 = vmax.f32 %v2108, 0.0
  %v2291 = vmax.f32 %v2111, 0.0
  %v2292 = vmax.f32 %v2116, 0.0
  %v2293 = vmax.f32 %v2119, 0.0
  %v2294 = vmax.f32 %v2124, 0.0
  %v2295 = vmax.f32 %v2127, 0.0
  %v2296 = vmax.f32 %v2132, 0.0
  %v2297 = vmax.f32 %v2135, 0.0
  %v2298 = vmax.f32 %v2140, 0.0
  %v2299 = vmax.f32 %v2143, 0.0
  %v2300 = vmax.f32 %v2148, 0.0
  %v2301 = vmax.f32 %v2151, 0.0
  %v2302 = vmax.f32 %v2156, 0.0
  %v2303 = vmax.f32 %v2159, 0.0
  %v2304 = vmax.f32 %v2164, 0.0
  %v2305 = vmax.f32 %v2167, 0.0
  %v2306 = vmax.f32 %v2172, 0.0
  %v2307 = vmax.f32 %v2175, 0.0
  %v2308 = vmax.f32 %v2180, 0.0
  %v2309 = vmax.f32 %v2183, 0.0
  %v2310 = vmax.f32 %v2188, 0.0
  %v2311 = vmax.f32 %v2191, 0.0
  %v2312 = vmax.f32 %v2196, 0.0
  %v2313 = vmax.f32 %v2199, 0.0
  %v2314 = vmax.f32 %v2204, 0.0
  %v2315 = vmax.f32 %v2207, 0.0
  %v2316 = vmax.f32 %v2212, 0.0
  %v2317 = vmax.f32 %v2215, 0.0
  %v2318 = vmax.f32 %v2220, 0.0
  %v2319 = vmax.f32 %v2223, 0.0
  %v2320 = vmax.f32 %v2228, 0.0
  %v2321 = vmax.f32 %v2231, 0.0
  %v2322 = vmax.f32 %v2236, 0.0
  %v2323 = vmax.f32 %v2239, 0.0
  %v2324 = vmax.f32 %v2244, 0.0
  %v2325 = vmax.f32 %v2247, 0.0
  %v2326 = vmax.f32 %v2252, 0.0
  %v2327 = vmax.f32 %v2255, 0.0
  %v2328 = vmax.f32 %v2260, 0.0
  %v2329 = vmax.f32 %v2263, 0.0
  %v2330 = vpack.c.bf16 %v2267, %v2266
  %v2331 = vpack.c.bf16 %v2269, %v2268
  %v2332 = vpack.c.bf16 %v2271, %v2270
  %v2333 = vpack.c.bf16 %v2273, %v2272
  %v2334 = vpack.c.bf16 %v2275, %v2274
  %v2335 = vpack.c.bf16 %v2277, %v2276
  %v2336 = vpack.c.bf16 %v2279, %v2278
  %v2337 = vpack.c.bf16 %v2281, %v2280
  %v2338 = vpack.c.bf16 %v2283, %v2282
  %v2339 = vpack.c.bf16 %v2285, %v2284
  %v2340 = vpack.c.bf16 %v2287, %v2286
  %v2341 = vpack.c.bf16 %v2289, %v2288
  %v2342 = vpack.c.bf16 %v2291, %v2290
  %v2343 = vpack.c.bf16 %v2293, %v2292
  %v2344 = vpack.c.bf16 %v2295, %v2294
  %v2345 = vpack.c.bf16 %v2297, %v2296
  %v2346 = vpack.c.bf16 %v2299, %v2298
  %v2347 = vpack.c.bf16 %v2301, %v2300
  %v2348 = vpack.c.bf16 %v2303, %v2302
  %v2349 = vpack.c.bf16 %v2305, %v2304
  %v2350 = vpack.c.bf16 %v2307, %v2306
  %v2351 = vpack.c.bf16 %v2309, %v2308
  %v2352 = vpack.c.bf16 %v2311, %v2310
  %v2353 = vpack.c.bf16 %v2313, %v2312
  %v2354 = vpack.c.bf16 %v2315, %v2314
  %v2355 = vpack.c.bf16 %v2317, %v2316
  %v2356 = vpack.c.bf16 %v2319, %v2318
  %v2357 = vpack.c.bf16 %v2321, %v2320
  %v2358 = vpack.c.bf16 %v2323, %v2322
  %v2359 = vpack.c.bf16 %v2325, %v2324
  %v2360 = vpack.c.bf16 %v2327, %v2326
  %v2361 = vpack.c.bf16 %v2329, %v2328
  %v2394 = vunpack.c.l.b16 %v2330
  %v2395 = vunpack.c.h.b16 %v2330
  %v2396 = vunpack.c.l.b16 %v2331
  %v2397 = vunpack.c.h.b16 %v2331
  %v2398 = vunpack.c.l.b16 %v2332
  %v2399 = vunpack.c.h.b16 %v2332
  %v2400 = vunpack.c.l.b16 %v2333
  %v2401 = vunpack.c.h.b16 %v2333
  %v2402 = vunpack.c.l.b16 %v2334
  %v2403 = vunpack.c.h.b16 %v2334
  %v2404 = vunpack.c.l.b16 %v2335
  %v2405 = vunpack.c.h.b16 %v2335
  %v2406 = vunpack.c.l.b16 %v2336
  %v2407 = vunpack.c.h.b16 %v2336
  %v2408 = vunpack.c.l.b16 %v2337
  %v2409 = vunpack.c.h.b16 %v2337
  %v2410 = vunpack.c.l.b16 %v2338
  %v2411 = vunpack.c.h.b16 %v2338
  %v2412 = vunpack.c.l.b16 %v2339
  %v2413 = vunpack.c.h.b16 %v2339
  %v2414 = vunpack.c.l.b16 %v2340
  %v2415 = vunpack.c.h.b16 %v2340
  %v2416 = vunpack.c.l.b16 %v2341
  %v2417 = vunpack.c.h.b16 %v2341
  %v2418 = vunpack.c.l.b16 %v2342
  %v2419 = vunpack.c.h.b16 %v2342
  %v2420 = vunpack.c.l.b16 %v2343
  %v2421 = vunpack.c.h.b16 %v2343
  %v2422 = vunpack.c.l.b16 %v2344
  %v2423 = vunpack.c.h.b16 %v2344
  %v2424 = vunpack.c.l.b16 %v2345
  %v2425 = vunpack.c.h.b16 %v2345
  %v2426 = vunpack.c.l.b16 %v2346
  %v2427 = vunpack.c.h.b16 %v2346
  %v2428 = vunpack.c.l.b16 %v2347
  %v2429 = vunpack.c.h.b16 %v2347
  %v2430 = vunpack.c.l.b16 %v2348
  %v2431 = vunpack.c.h.b16 %v2348
  %v2432 = vunpack.c.l.b16 %v2349
  %v2433 = vunpack.c.h.b16 %v2349
  %v2434 = vunpack.c.l.b16 %v2350
  %v2435 = vunpack.c.h.b16 %v2350
  %v2436 = vunpack.c.l.b16 %v2351
  %v2437 = vunpack.c.h.b16 %v2351
  %v2438 = vunpack.c.l.b16 %v2352
  %v2439 = vunpack.c.h.b16 %v2352
  %v2440 = vunpack.c.l.b16 %v2353
  %v2441 = vunpack.c.h.b16 %v2353
  %v2442 = vunpack.c.l.b16 %v2354
  %v2443 = vunpack.c.h.b16 %v2354
  %v2444 = vunpack.c.l.b16 %v2355
  %v2445 = vunpack.c.h.b16 %v2355
  %v2446 = vunpack.c.l.b16 %v2356
  %v2447 = vunpack.c.h.b16 %v2356
  %v2448 = vunpack.c.l.b16 %v2357
  %v2449 = vunpack.c.h.b16 %v2357
  %v2450 = vunpack.c.l.b16 %v2358
  %v2451 = vunpack.c.h.b16 %v2358
  %v2452 = vunpack.c.l.b16 %v2359
  %v2453 = vunpack.c.h.b16 %v2359
  %v2454 = vunpack.c.l.b16 %v2360
  %v2455 = vunpack.c.h.b16 %v2360
  %v2456 = vunpack.c.l.b16 %v2361
  %v2457 = vunpack.c.h.b16 %v2361
  %v2458 = vpack.c.b16 %v2394, %v2394
  %v2459 = vpack.c.b16 %v2395, %v2395
  %v2460 = vpack.c.b16 %v2396, %v2396
  %v2461 = vpack.c.b16 %v2397, %v2397
  %v2462 = vpack.c.b16 %v2398, %v2398
  %v2463 = vpack.c.b16 %v2399, %v2399
  %v2464 = vpack.c.b16 %v2400, %v2400
  %v2465 = vpack.c.b16 %v2401, %v2401
  %v2466 = vpack.c.b16 %v2402, %v2402
  %v2467 = vpack.c.b16 %v2403, %v2403
  %v2468 = vpack.c.b16 %v2404, %v2404
  %v2469 = vpack.c.b16 %v2405, %v2405
  %v2470 = vpack.c.b16 %v2406, %v2406
  %v2471 = vpack.c.b16 %v2407, %v2407
  %v2472 = vpack.c.b16 %v2408, %v2408
  %v2473 = vpack.c.b16 %v2409, %v2409
  %v2474 = vpack.c.b16 %v2410, %v2410
  %v2475 = vpack.c.b16 %v2411, %v2411
  %v2476 = vpack.c.b16 %v2412, %v2412
  %v2477 = vpack.c.b16 %v2413, %v2413
  %v2478 = vpack.c.b16 %v2414, %v2414
  %v2479 = vpack.c.b16 %v2415, %v2415
  %v2480 = vpack.c.b16 %v2416, %v2416
  %v2481 = vpack.c.b16 %v2417, %v2417
  %v2482 = vpack.c.b16 %v2418, %v2418
  %v2483 = vpack.c.b16 %v2419, %v2419
  %v2484 = vpack.c.b16 %v2420, %v2420
  %v2485 = vpack.c.b16 %v2421, %v2421
  %v2486 = vpack.c.b16 %v2422, %v2422
  %v2487 = vpack.c.b16 %v2423, %v2423
  %v2488 = vpack.c.b16 %v2424, %v2424
  %v2489 = vpack.c.b16 %v2425, %v2425
  %v2490 = vpack.c.b16 %v2426, %v2426
  %v2491 = vpack.c.b16 %v2427, %v2427
  %v2492 = vpack.c.b16 %v2428, %v2428
  %v2493 = vpack.c.b16 %v2429, %v2429
  %v2494 = vpack.c.b16 %v2430, %v2430
  %v2495 = vpack.c.b16 %v2431, %v2431
  %v2496 = vpack.c.b16 %v2432, %v2432
  %v2497 = vpack.c.b16 %v2433, %v2433
  %v2498 = vpack.c.b16 %v2434, %v2434
  %v2499 = vpack.c.b16 %v2435, %v2435
  %v2500 = vpack.c.b16 %v2436, %v2436
  %v2501 = vpack.c.b16 %v2437, %v2437
  %v2502 = vpack.c.b16 %v2438, %v2438
  %v2503 = vpack.c.b16 %v2439, %v2439
  %v2504 = vpack.c.b16 %v2440, %v2440
  %v2505 = vpack.c.b16 %v2441, %v2441
  %v2506 = vpack.c.b16 %v2442, %v2442
  %v2507 = vpack.c.b16 %v2443, %v2443
  %v2508 = vpack.c.b16 %v2444, %v2444
  %v2509 = vpack.c.b16 %v2445, %v2445
  %v2510 = vpack.c.b16 %v2446, %v2446
  %v2511 = vpack.c.b16 %v2447, %v2447
  %v2512 = vpack.c.b16 %v2448, %v2448
  %v2513 = vpack.c.b16 %v2449, %v2449
  %v2514 = vpack.c.b16 %v2450, %v2450
  %v2515 = vpack.c.b16 %v2451, %v2451
  %v2516 = vpack.c.b16 %v2452, %v2452
  %v2517 = vpack.c.b16 %v2453, %v2453
  %v2518 = vpack.c.b16 %v2454, %v2454
  %v2519 = vpack.c.b16 %v2455, %v2455
  %v2520 = vpack.c.b16 %v2456, %v2456
  %v2521 = vpack.c.b16 %v2457, %v2457
  %vm2586 = vcmask 519168
  %2587 = vst.msk [vmem:[%s3] sm:$0xf] %vm2586, %v2458
  %2588 = vst.msk [vmem:[%s3 + $0x4] sm:$0xf] %vm2586, %v2459
  %2589 = vst.msk [vmem:[%s3 + $0x8] sm:$0xf] %vm2586, %v2460
  %2590 = vst.msk [vmem:[%s3 + $0xc] sm:$0xf] %vm2586, %v2461
  %2591 = vst.msk [vmem:[%s3 + $0x10] sm:$0xf] %vm2586, %v2462
  %2592 = vst.msk [vmem:[%s3 + $0x14] sm:$0xf] %vm2586, %v2463
  %2593 = vst.msk [vmem:[%s3 + $0x18] sm:$0xf] %vm2586, %v2464
  %2594 = vst.msk [vmem:[%s3 + $0x1c] sm:$0xf] %vm2586, %v2465
  %2595 = vst.msk [vmem:[%s3 + $0x20] sm:$0xf] %vm2586, %v2466
  %2596 = vst.msk [vmem:[%s3 + $0x24] sm:$0xf] %vm2586, %v2467
  %2597 = vst.msk [vmem:[%s3 + $0x28] sm:$0xf] %vm2586, %v2468
  %2598 = vst.msk [vmem:[%s3 + $0x2c] sm:$0xf] %vm2586, %v2469
  %2599 = vst.msk [vmem:[%s3 + $0x30] sm:$0xf] %vm2586, %v2470
  %2600 = vst.msk [vmem:[%s3 + $0x34] sm:$0xf] %vm2586, %v2471
  %2601 = vst.msk [vmem:[%s3 + $0x38] sm:$0xf] %vm2586, %v2472
  %2602 = vst.msk [vmem:[%s3 + $0x3c] sm:$0xf] %vm2586, %v2473
  %2603 = vst.msk [vmem:[%s3 + $0x40] sm:$0xf] %vm2586, %v2474
  %2604 = vst.msk [vmem:[%s3 + $0x44] sm:$0xf] %vm2586, %v2475
  %2605 = vst.msk [vmem:[%s3 + $0x48] sm:$0xf] %vm2586, %v2476
  %2606 = vst.msk [vmem:[%s3 + $0x4c] sm:$0xf] %vm2586, %v2477
  %2607 = vst.msk [vmem:[%s3 + $0x50] sm:$0xf] %vm2586, %v2478
  %2608 = vst.msk [vmem:[%s3 + $0x54] sm:$0xf] %vm2586, %v2479
  %2609 = vst.msk [vmem:[%s3 + $0x58] sm:$0xf] %vm2586, %v2480
  %2610 = vst.msk [vmem:[%s3 + $0x5c] sm:$0xf] %vm2586, %v2481
  %2611 = vst.msk [vmem:[%s3 + $0x60] sm:$0xf] %vm2586, %v2482
  %2612 = vst.msk [vmem:[%s3 + $0x64] sm:$0xf] %vm2586, %v2483
  %2613 = vst.msk [vmem:[%s3 + $0x68] sm:$0xf] %vm2586, %v2484
  %2614 = vst.msk [vmem:[%s3 + $0x6c] sm:$0xf] %vm2586, %v2485
  %2615 = vst.msk [vmem:[%s3 + $0x70] sm:$0xf] %vm2586, %v2486
  %2616 = vst.msk [vmem:[%s3 + $0x74] sm:$0xf] %vm2586, %v2487
  %2617 = vst.msk [vmem:[%s3 + $0x78] sm:$0xf] %vm2586, %v2488
  %2618 = vst.msk [vmem:[%s3 + $0x7c] sm:$0xf] %vm2586, %v2489
  %2619 = vst.msk [vmem:[%s3 + $0x80] sm:$0xf] %vm2586, %v2490
  %2620 = vst.msk [vmem:[%s3 + $0x84] sm:$0xf] %vm2586, %v2491
  %2621 = vst.msk [vmem:[%s3 + $0x88] sm:$0xf] %vm2586, %v2492
  %2622 = vst.msk [vmem:[%s3 + $0x8c] sm:$0xf] %vm2586, %v2493
  %2623 = vst.msk [vmem:[%s3 + $0x90] sm:$0xf] %vm2586, %v2494
  %2624 = vst.msk [vmem:[%s3 + $0x94] sm:$0xf] %vm2586, %v2495
  %2625 = vst.msk [vmem:[%s3 + $0x98] sm:$0xf] %vm2586, %v2496
  %2626 = vst.msk [vmem:[%s3 + $0x9c] sm:$0xf] %vm2586, %v2497
  %2627 = vst.msk [vmem:[%s3 + $0xa0] sm:$0xf] %vm2586, %v2498
  %2628 = vst.msk [vmem:[%s3 + $0xa4] sm:$0xf] %vm2586, %v2499
  %2629 = vst.msk [vmem:[%s3 + $0xa8] sm:$0xf] %vm2586, %v2500
  %2630 = vst.msk [vmem:[%s3 + $0xac] sm:$0xf] %vm2586, %v2501
  %2631 = vst.msk [vmem:[%s3 + $0xb0] sm:$0xf] %vm2586, %v2502
  %2632 = vst.msk [vmem:[%s3 + $0xb4] sm:$0xf] %vm2586, %v2503
  %2633 = vst.msk [vmem:[%s3 + $0xb8] sm:$0xf] %vm2586, %v2504
  %2634 = vst.msk [vmem:[%s3 + $0xbc] sm:$0xf] %vm2586, %v2505
  %2635 = vst.msk [vmem:[%s3 + $0xc0] sm:$0xf] %vm2586, %v2506
  %2636 = vst.msk [vmem:[%s3 + $0xc4] sm:$0xf] %vm2586, %v2507
  %2637 = vst.msk [vmem:[%s3 + $0xc8] sm:$0xf] %vm2586, %v2508
  %2638 = vst.msk [vmem:[%s3 + $0xcc] sm:$0xf] %vm2586, %v2509
  %2639 = vst.msk [vmem:[%s3 + $0xd0] sm:$0xf] %vm2586, %v2510
  %2640 = vst.msk [vmem:[%s3 + $0xd4] sm:$0xf] %vm2586, %v2511
  %2641 = vst.msk [vmem:[%s3 + $0xd8] sm:$0xf] %vm2586, %v2512
  %2642 = vst.msk [vmem:[%s3 + $0xdc] sm:$0xf] %vm2586, %v2513
  %2643 = vst.msk [vmem:[%s3 + $0xe0] sm:$0xf] %vm2586, %v2514
  %2644 = vst.msk [vmem:[%s3 + $0xe4] sm:$0xf] %vm2586, %v2515
  %2645 = vst.msk [vmem:[%s3 + $0xe8] sm:$0xf] %vm2586, %v2516
  %2646 = vst.msk [vmem:[%s3 + $0xec] sm:$0xf] %vm2586, %v2517
  %2647 = vst.msk [vmem:[%s3 + $0xf0] sm:$0xf] %vm2586, %v2518
  %2648 = vst.msk [vmem:[%s3 + $0xf4] sm:$0xf] %vm2586, %v2519
  %2649 = vst.msk [vmem:[%s3 + $0xf8] sm:$0xf] %vm2586, %v2520
  %2650 = vst.msk [vmem:[%s3 + $0xfc] sm:$0xf] %vm2586, %v2521
  // Predicated region
  $region14: #{lst_encoder4_forward.13} parent=0 // pred_check
    _
  $region15: #{lst_encoder4_forward.13} parent=0 // pred_check_branch
    %2652 = sbr.rel (0) target = $region17
  $region16: #{lst_encoder4_forward.13} parent=0 // pred_region
    _
  $region17: #{lst_encoder4_forward.13} parent=0 // pred_fallthru
    _
  // Predicated region
  $region18: #{lst_encoder4_forward.13} parent=0 // pred_check
    _
  $region19: #{lst_encoder4_forward.13} parent=0 // pred_check_branch
    %2654 = sbr.rel (0) target = $region21
  $region20: #{lst_encoder4_forward.13} parent=0 // pred_region
    _
  $region21: #{lst_encoder4_forward.13} parent=0 // pred_fallthru
    _

// kernel: lst_encoder4_forward.15
$region0: #{lst_encoder4_forward.15}
  #allocation0 [shape = 'u32[]', space=smem, size = 0x4, offset = 0x4, fixed_abs, tag = 'smem constant byte address 0x4 - core index']
  #allocation1 [shape = 'u32[144,128]{1,0:T(1,128)}', space=vmem, size = 0x12000, scoped, tag = 'internal scratch']
  %s0 = inlined_call_operand.vmem [shape: bf16[128,576], index: 0, kind: input, shape index: {}]
  %s1 = inlined_call_operand.vmem [shape: bf16[576,128], index: 1, kind: input, shape index: {}]
  %s2 = inlined_call_operand.vmem [shape: f32[1,128], index: 2, kind: input, shape index: {}]
  %s3 = inlined_call_operand.vmem [shape: bf16[128,128], index: 3, kind: output, shape index: {}]
  %s4 = sld [smem:[#allocation0]]
  $region22: #{lst_encoder4_forward.15} parent=0
    _
  %s6 = ssub.s32 1, %s4
  %s7 = scalar_select 0, %s6, %s4
  // Predicated region
  $region2: #{lst_encoder4_forward.15} parent=0 // pred_check
    _
  $region3: #{lst_encoder4_forward.15} parent=0 // pred_check_branch
    %9 = sbr.rel (0) target = $region5
  $region4: #{lst_encoder4_forward.15} parent=0 // pred_region
    _
  $region5: #{lst_encoder4_forward.15} parent=0 // pred_fallthru
    _
  // Predicated region
  $region6: #{lst_encoder4_forward.15} parent=0 // pred_check
    _
  $region7: #{lst_encoder4_forward.15} parent=0 // pred_check_branch
    %11 = sbr.rel (0) target = $region9
  $region8: #{lst_encoder4_forward.15} parent=0 // pred_region
    _
  $region9: #{lst_encoder4_forward.15} parent=0 // pred_fallthru
    _
  // Predicated region
  $region10: #{lst_encoder4_forward.15} parent=0 // pred_check
    _
  $region11: #{lst_encoder4_forward.15} parent=0 // pred_check_branch
    %13 = sbr.rel (0) target = $region13
  $region12: #{lst_encoder4_forward.15} parent=0 // pred_region
    _
  $region13: #{lst_encoder4_forward.15} parent=0 // pred_fallthru
    _
  %v15 = vld [vmem:[%s0] sm:$0xff]
  %v16 = vld [vmem:[%s0 + $0x8] sm:$0xff]
  %v17 = vld [vmem:[%s0 + $0x10] sm:$0xf]
  %v18 = vld [vmem:[%s0 + $0x14] sm:$0xff]
  %v19 = vld [vmem:[%s0 + $0x1c] sm:$0xff]
  %v20 = vld [vmem:[%s0 + $0x24] sm:$0xf]
  %v21 = vld [vmem:[%s0 + $0x28] sm:$0xff]
  %v22 = vld [vmem:[%s0 + $0x30] sm:$0xff]
  %v23 = vld [vmem:[%s0 + $0x38] sm:$0xf]
  %v24 = vld [vmem:[%s0 + $0x3c] sm:$0xff]
  %v25 = vld [vmem:[%s0 + $0x44] sm:$0xff]
  %v26 = vld [vmem:[%s0 + $0x4c] sm:$0xf]
  %v27 = vld [vmem:[%s0 + $0x50] sm:$0xff]
  %v28 = vld [vmem:[%s0 + $0x58] sm:$0xff]
  %v29 = vld [vmem:[%s0 + $0x60] sm:$0xf]
  %v30 = vld [vmem:[%s0 + $0x64] sm:$0xff]
  %v31 = vld [vmem:[%s0 + $0x6c] sm:$0xff]
  %v32 = vld [vmem:[%s0 + $0x74] sm:$0xf]
  %v33 = vld [vmem:[%s0 + $0x78] sm:$0xff]
  %v34 = vld [vmem:[%s0 + $0x80] sm:$0xff]
  %v35 = vld [vmem:[%s0 + $0x88] sm:$0xf]
  %v36 = vld [vmem:[%s0 + $0x8c] sm:$0xff]
  %v37 = vld [vmem:[%s0 + $0x94] sm:$0xff]
  %v38 = vld [vmem:[%s0 + $0x9c] sm:$0xf]
  %v39 = vld [vmem:[%s0 + $0xa0] sm:$0xff]
  %v40 = vld [vmem:[%s0 + $0xa8] sm:$0xff]
  %v41 = vld [vmem:[%s0 + $0xb0] sm:$0xf]
  %v42 = vld [vmem:[%s0 + $0xb4] sm:$0xff]
  %v43 = vld [vmem:[%s0 + $0xbc] sm:$0xff]
  %v44 = vld [vmem:[%s0 + $0xc4] sm:$0xf]
  %v45 = vld [vmem:[%s0 + $0xc8] sm:$0xff]
  %v46 = vld [vmem:[%s0 + $0xd0] sm:$0xff]
  %v47 = vld [vmem:[%s0 + $0xd8] sm:$0xf]
  %v48 = vld [vmem:[%s0 + $0xdc] sm:$0xff]
  %v49 = vld [vmem:[%s0 + $0xe4] sm:$0xff]
  %v50 = vld [vmem:[%s0 + $0xec] sm:$0xf]
  %v51 = vld [vmem:[%s0 + $0xf0] sm:$0xff]
  %v52 = vld [vmem:[%s0 + $0xf8] sm:$0xff]
  %v53 = vld [vmem:[%s0 + $0x100] sm:$0xf]
  %v54 = vld [vmem:[%s0 + $0x104] sm:$0xff]
  %v55 = vld [vmem:[%s0 + $0x10c] sm:$0xff]
  %v56 = vld [vmem:[%s0 + $0x114] sm:$0xf]
  %v57 = vld [vmem:[%s0 + $0x118] sm:$0xff]
  %v58 = vld [vmem:[%s0 + $0x120] sm:$0xff]
  %v59 = vld [vmem:[%s0 + $0x128] sm:$0xf]
  %v60 = vld [vmem:[%s0 + $0x12c] sm:$0xff]
  %v61 = vld [vmem:[%s0 + $0x134] sm:$0xff]
  %v62 = vld [vmem:[%s0 + $0x13c] sm:$0xf]
  %v63 = vld [vmem:[%s1] sm:$0xf]
  %v64 = vld [vmem:[%s1 + $0x4] sm:$0xf]
  %v65 = vld [vmem:[%s1 + $0x8] sm:$0xf]
  %v66 = vld [vmem:[%s1 + $0xc] sm:$0xf]
  %v67 = vld [vmem:[%s1 + $0x10] sm:$0xf]
  %v68 = vld [vmem:[%s1 + $0x14] sm:$0xf]
  %v69 = vld [vmem:[%s1 + $0x18] sm:$0xf]
  %v70 = vld [vmem:[%s1 + $0x1c] sm:$0xf]
  %v71 = vld [vmem:[%s1 + $0x20] sm:$0xf]
  %v72 = vld [vmem:[%s1 + $0x24] sm:$0xf]
  %v73 = vld [vmem:[%s1 + $0x28] sm:$0xf]
  %v74 = vld [vmem:[%s1 + $0x2c] sm:$0xf]
  %v75 = vld [vmem:[%s1 + $0x30] sm:$0xf]
  %v76 = vld [vmem:[%s1 + $0x34] sm:$0xf]
  %v77 = vld [vmem:[%s1 + $0x38] sm:$0xf]
  %v78 = vld [vmem:[%s1 + $0x3c] sm:$0xf]
  %v79 = vld [vmem:[%s1 + $0x40] sm:$0xf]
  %v80 = vld [vmem:[%s1 + $0x44] sm:$0xf]
  %v81 = vld [vmem:[%s1 + $0x48] sm:$0xf]
  %v82 = vld [vmem:[%s1 + $0x4c] sm:$0xf]
  %v83 = vld [vmem:[%s1 + $0x50] sm:$0xf]
  %v84 = vld [vmem:[%s1 + $0x54] sm:$0xf]
  %v85 = vld [vmem:[%s1 + $0x58] sm:$0xf]
  %v86 = vld [vmem:[%s1 + $0x5c] sm:$0xf]
  %v87 = vld [vmem:[%s1 + $0x60] sm:$0xf]
  %v88 = vld [vmem:[%s1 + $0x64] sm:$0xf]
  %v89 = vld [vmem:[%s1 + $0x68] sm:$0xf]
  %v90 = vld [vmem:[%s1 + $0x6c] sm:$0xf]
  %v91 = vld [vmem:[%s1 + $0x70] sm:$0xf]
  %v92 = vld [vmem:[%s1 + $0x74] sm:$0xf]
  %v93 = vld [vmem:[%s1 + $0x78] sm:$0xf]
  %v94 = vld [vmem:[%s1 + $0x7c] sm:$0xf]
  %v95 = vld [vmem:[%s1 + $0x80] sm:$0xf]
  %v96 = vld [vmem:[%s1 + $0x84] sm:$0xf]
  %v97 = vld [vmem:[%s1 + $0x88] sm:$0xf]
  %v98 = vld [vmem:[%s1 + $0x8c] sm:$0xf]
  %v99 = vld [vmem:[%s1 + $0x90] sm:$0xf]
  %v100 = vld [vmem:[%s1 + $0x94] sm:$0xf]
  %v101 = vld [vmem:[%s1 + $0x98] sm:$0xf]
  %v102 = vld [vmem:[%s1 + $0x9c] sm:$0xf]
  %v103 = vld [vmem:[%s1 + $0xa0] sm:$0xf]
  %v104 = vld [vmem:[%s1 + $0xa4] sm:$0xf]
  %v105 = vld [vmem:[%s1 + $0xa8] sm:$0xf]
  %v106 = vld [vmem:[%s1 + $0xac] sm:$0xf]
  %v107 = vld [vmem:[%s1 + $0xb0] sm:$0xf]
  %v108 = vld [vmem:[%s1 + $0xb4] sm:$0xf]
  %v109 = vld [vmem:[%s1 + $0xb8] sm:$0xf]
  %v110 = vld [vmem:[%s1 + $0xbc] sm:$0xf]
  %v111 = vld [vmem:[%s1 + $0xc0] sm:$0xf]
  %v112 = vld [vmem:[%s1 + $0xc4] sm:$0xf]
  %v113 = vld [vmem:[%s1 + $0xc8] sm:$0xf]
  %v114 = vld [vmem:[%s1 + $0xcc] sm:$0xf]
  %v115 = vld [vmem:[%s1 + $0xd0] sm:$0xf]
  %v116 = vld [vmem:[%s1 + $0xd4] sm:$0xf]
  %v117 = vld [vmem:[%s1 + $0xd8] sm:$0xf]
  %v118 = vld [vmem:[%s1 + $0xdc] sm:$0xf]
  %v119 = vld [vmem:[%s1 + $0xe0] sm:$0xf]
  %v120 = vld [vmem:[%s1 + $0xe4] sm:$0xf]
  %v121 = vld [vmem:[%s1 + $0xe8] sm:$0xf]
  %v122 = vld [vmem:[%s1 + $0xec] sm:$0xf]
  %v123 = vld [vmem:[%s1 + $0xf0] sm:$0xf]
  %v124 = vld [vmem:[%s1 + $0xf4] sm:$0xf]
  %v125 = vld [vmem:[%s1 + $0xf8] sm:$0xf]
  %v126 = vld [vmem:[%s1 + $0xfc] sm:$0xf]
  %v127 = vld [vmem:[%s1 + $0x100] sm:$0xf]
  %v128 = vld [vmem:[%s1 + $0x104] sm:$0xf]
  %v129 = vld [vmem:[%s1 + $0x108] sm:$0xf]
  %v130 = vld [vmem:[%s1 + $0x10c] sm:$0xf]
  %v131 = vld [vmem:[%s1 + $0x110] sm:$0xf]
  %v132 = vld [vmem:[%s1 + $0x114] sm:$0xf]
  %v133 = vld [vmem:[%s1 + $0x118] sm:$0xf]
  %v134 = vld [vmem:[%s1 + $0x11c] sm:$0xf]
  %v135 = vld [vmem:[%s2] sm:$0x1]
  %v137 = vlaneseq
  %v138 = vshrl.u32 %v137, 7
  %v139 = vsub.s32 0, %v138
  %v140 = vrot.slane %v135, %v139
  %v190 = vunpack.c.l.b16 %v15
  %v191 = vunpack.c.h.b16 %v15
  %v192 = vunpack.c.l.b16 %v16
  %v193 = vunpack.c.h.b16 %v16
  %v194 = vunpack.c.l.b16 %v17
  %v195 = vunpack.c.l.b16 %v18
  %v196 = vunpack.c.h.b16 %v18
  %v197 = vunpack.c.l.b16 %v19
  %v198 = vunpack.c.h.b16 %v19
  %v199 = vunpack.c.l.b16 %v20
  %v200 = vunpack.c.l.b16 %v21
  %v201 = vunpack.c.h.b16 %v21
  %v202 = vunpack.c.l.b16 %v22
  %v203 = vunpack.c.h.b16 %v22
  %v204 = vunpack.c.l.b16 %v23
  %v205 = vunpack.c.l.b16 %v24
  %v206 = vunpack.c.h.b16 %v24
  %v207 = vunpack.c.l.b16 %v25
  %v208 = vunpack.c.h.b16 %v25
  %v209 = vunpack.c.l.b16 %v26
  %v210 = vunpack.c.l.b16 %v27
  %v211 = vunpack.c.h.b16 %v27
  %v212 = vunpack.c.l.b16 %v28
  %v213 = vunpack.c.h.b16 %v28
  %v214 = vunpack.c.l.b16 %v29
  %v215 = vunpack.c.l.b16 %v30
  %v216 = vunpack.c.h.b16 %v30
  %v217 = vunpack.c.l.b16 %v31
  %v218 = vunpack.c.h.b16 %v31
  %v219 = vunpack.c.l.b16 %v32
  %v220 = vunpack.c.l.b16 %v33
  %v221 = vunpack.c.h.b16 %v33
  %v222 = vunpack.c.l.b16 %v34
  %v223 = vunpack.c.h.b16 %v34
  %v224 = vunpack.c.l.b16 %v35
  %v225 = vunpack.c.l.b16 %v36
  %v226 = vunpack.c.h.b16 %v36
  %v227 = vunpack.c.l.b16 %v37
  %v228 = vunpack.c.h.b16 %v37
  %v229 = vunpack.c.l.b16 %v38
  %v230 = vunpack.c.l.b16 %v39
  %v231 = vunpack.c.h.b16 %v39
  %v232 = vunpack.c.l.b16 %v40
  %v233 = vunpack.c.h.b16 %v40
  %v234 = vunpack.c.l.b16 %v41
  %v235 = vunpack.c.l.b16 %v42
  %v236 = vunpack.c.h.b16 %v42
  %v237 = vunpack.c.l.b16 %v43
  %v238 = vunpack.c.h.b16 %v43
  %v239 = vunpack.c.l.b16 %v44
  %v240 = vunpack.c.l.b16 %v45
  %v241 = vunpack.c.h.b16 %v45
  %v242 = vunpack.c.l.b16 %v46
  %v243 = vunpack.c.h.b16 %v46
  %v244 = vunpack.c.l.b16 %v47
  %v245 = vunpack.c.l.b16 %v48
  %v246 = vunpack.c.h.b16 %v48
  %v247 = vunpack.c.l.b16 %v49
  %v248 = vunpack.c.h.b16 %v49
  %v249 = vunpack.c.l.b16 %v50
  %v250 = vunpack.c.l.b16 %v51
  %v251 = vunpack.c.h.b16 %v51
  %v252 = vunpack.c.l.b16 %v52
  %v253 = vunpack.c.h.b16 %v52
  %v254 = vunpack.c.l.b16 %v53
  %v255 = vunpack.c.l.b16 %v54
  %v256 = vunpack.c.h.b16 %v54
  %v257 = vunpack.c.l.b16 %v55
  %v258 = vunpack.c.h.b16 %v55
  %v259 = vunpack.c.l.b16 %v56
  %v260 = vunpack.c.l.b16 %v57
  %v261 = vunpack.c.h.b16 %v57
  %v262 = vunpack.c.l.b16 %v58
  %v263 = vunpack.c.h.b16 %v58
  %v264 = vunpack.c.l.b16 %v59
  %v265 = vunpack.c.l.b16 %v60
  %v266 = vunpack.c.h.b16 %v60
  %v267 = vunpack.c.l.b16 %v61
  %v268 = vunpack.c.h.b16 %v61
  %v269 = vunpack.c.l.b16 %v62
  %v270 = vpack.c.b16 %v195, %v190
  %v271 = vpack.c.b16 %v196, %v191
  %v272 = vpack.c.b16 %v197, %v192
  %v273 = vpack.c.b16 %v198, %v193
  %v274 = vpack.c.b16 %v199, %v194
  %v275 = vpack.c.b16 %v205, %v200
  %v276 = vpack.c.b16 %v206, %v201
  %v277 = vpack.c.b16 %v207, %v202
  %v278 = vpack.c.b16 %v208, %v203
  %v279 = vpack.c.b16 %v209, %v204
  %v280 = vpack.c.b16 %v215, %v210
  %v281 = vpack.c.b16 %v216, %v211
  %v282 = vpack.c.b16 %v217, %v212
  %v283 = vpack.c.b16 %v218, %v213
  %v284 = vpack.c.b16 %v219, %v214
  %v285 = vpack.c.b16 %v225, %v220
  %v286 = vpack.c.b16 %v226, %v221
  %v287 = vpack.c.b16 %v227, %v222
  %v288 = vpack.c.b16 %v228, %v223
  %v289 = vpack.c.b16 %v229, %v224
  %v290 = vpack.c.b16 %v235, %v230
  %v291 = vpack.c.b16 %v236, %v231
  %v292 = vpack.c.b16 %v237, %v232
  %v293 = vpack.c.b16 %v238, %v233
  %v294 = vpack.c.b16 %v239, %v234
  %v295 = vpack.c.b16 %v245, %v240
  %v296 = vpack.c.b16 %v246, %v241
  %v297 = vpack.c.b16 %v247, %v242
  %v298 = vpack.c.b16 %v248, %v243
  %v299 = vpack.c.b16 %v249, %v244
  %v300 = vpack.c.b16 %v255, %v250
  %v301 = vpack.c.b16 %v256, %v251
  %v302 = vpack.c.b16 %v257, %v252
  %v303 = vpack.c.b16 %v258, %v253
  %v304 = vpack.c.b16 %v259, %v254
  %v305 = vpack.c.b16 %v265, %v260
  %v306 = vpack.c.b16 %v266, %v261
  %v307 = vpack.c.b16 %v267, %v262
  %v308 = vpack.c.b16 %v268, %v263
  %v309 = vpack.c.b16 %v269, %v264
  %v414 = vunpack.c.l.b16 %v63
  %v415 = vunpack.c.l.b16 %v64
  %v416 = vunpack.c.l.b16 %v65
  %v417 = vunpack.c.l.b16 %v66
  %v418 = vunpack.c.l.b16 %v67
  %v419 = vunpack.c.l.b16 %v68
  %v420 = vunpack.c.l.b16 %v69
  %v421 = vunpack.c.l.b16 %v70
  %v422 = vunpack.c.l.b16 %v71
  %v423 = vunpack.c.l.b16 %v72
  %v424 = vunpack.c.l.b16 %v73
  %v425 = vunpack.c.l.b16 %v74
  %v426 = vunpack.c.l.b16 %v75
  %v427 = vunpack.c.l.b16 %v76
  %v428 = vunpack.c.l.b16 %v77
  %v429 = vunpack.c.l.b16 %v78
  %v430 = vunpack.c.l.b16 %v79
  %v431 = vunpack.c.l.b16 %v80
  %v432 = vunpack.c.l.b16 %v81
  %v433 = vunpack.c.l.b16 %v82
  %v434 = vunpack.c.l.b16 %v83
  %v435 = vunpack.c.l.b16 %v84
  %v436 = vunpack.c.l.b16 %v85
  %v437 = vunpack.c.l.b16 %v86
  %v438 = vunpack.c.l.b16 %v87
  %v439 = vunpack.c.l.b16 %v88
  %v440 = vunpack.c.l.b16 %v89
  %v441 = vunpack.c.l.b16 %v90
  %v442 = vunpack.c.l.b16 %v91
  %v443 = vunpack.c.l.b16 %v92
  %v444 = vunpack.c.l.b16 %v93
  %v445 = vunpack.c.l.b16 %v94
  %v446 = vunpack.c.l.b16 %v95
  %v447 = vunpack.c.l.b16 %v96
  %v448 = vunpack.c.l.b16 %v97
  %v449 = vunpack.c.l.b16 %v98
  %v450 = vunpack.c.l.b16 %v99
  %v451 = vunpack.c.l.b16 %v100
  %v452 = vunpack.c.l.b16 %v101
  %v453 = vunpack.c.l.b16 %v102
  %v454 = vunpack.c.l.b16 %v103
  %v455 = vunpack.c.l.b16 %v104
  %v456 = vunpack.c.l.b16 %v105
  %v457 = vunpack.c.l.b16 %v106
  %v458 = vunpack.c.l.b16 %v107
  %v459 = vunpack.c.l.b16 %v108
  %v460 = vunpack.c.l.b16 %v109
  %v461 = vunpack.c.l.b16 %v110
  %v462 = vunpack.c.l.b16 %v111
  %v463 = vunpack.c.l.b16 %v112
  %v464 = vunpack.c.l.b16 %v113
  %v465 = vunpack.c.l.b16 %v114
  %v466 = vunpack.c.l.b16 %v115
  %v467 = vunpack.c.l.b16 %v116
  %v468 = vunpack.c.l.b16 %v117
  %v469 = vunpack.c.l.b16 %v118
  %v470 = vunpack.c.l.b16 %v119
  %v471 = vunpack.c.l.b16 %v120
  %v472 = vunpack.c.l.b16 %v121
  %v473 = vunpack.c.l.b16 %v122
  %v474 = vunpack.c.l.b16 %v123
  %v475 = vunpack.c.l.b16 %v124
  %v476 = vunpack.c.l.b16 %v125
  %v477 = vunpack.c.l.b16 %v126
  %v478 = vunpack.c.l.b16 %v127
  %v479 = vunpack.c.l.b16 %v128
  %v480 = vunpack.c.l.b16 %v129
  %v481 = vunpack.c.l.b16 %v130
  %v482 = vunpack.c.l.b16 %v131
  %v483 = vunpack.c.l.b16 %v132
  %v484 = vunpack.c.l.b16 %v133
  %v485 = vunpack.c.l.b16 %v134
  %v486 = vpack.c.b16 %v415, %v414
  %v487 = vpack.c.b16 %v417, %v416
  %v488 = vpack.c.b16 %v419, %v418
  %v489 = vpack.c.b16 %v421, %v420
  %v490 = vpack.c.b16 %v423, %v422
  %v491 = vpack.c.b16 %v425, %v424
  %v492 = vpack.c.b16 %v427, %v426
  %v493 = vpack.c.b16 %v429, %v428
  %v494 = vpack.c.b16 %v431, %v430
  %v495 = vpack.c.b16 %v433, %v432
  %v496 = vpack.c.b16 %v435, %v434
  %v497 = vpack.c.b16 %v437, %v436
  %v498 = vpack.c.b16 %v439, %v438
  %v499 = vpack.c.b16 %v441, %v440
  %v500 = vpack.c.b16 %v443, %v442
  %v501 = vpack.c.b16 %v445, %v444
  %v502 = vpack.c.b16 %v447, %v446
  %v503 = vpack.c.b16 %v449, %v448
  %v504 = vpack.c.b16 %v451, %v450
  %v505 = vpack.c.b16 %v453, %v452
  %v506 = vpack.c.b16 %v455, %v454
  %v507 = vpack.c.b16 %v457, %v456
  %v508 = vpack.c.b16 %v459, %v458
  %v509 = vpack.c.b16 %v461, %v460
  %v510 = vpack.c.b16 %v463, %v462
  %v511 = vpack.c.b16 %v465, %v464
  %v512 = vpack.c.b16 %v467, %v466
  %v513 = vpack.c.b16 %v469, %v468
  %v514 = vpack.c.b16 %v471, %v470
  %v515 = vpack.c.b16 %v473, %v472
  %v516 = vpack.c.b16 %v475, %v474
  %v517 = vpack.c.b16 %v477, %v476
  %v518 = vpack.c.b16 %v479, %v478
  %v519 = vpack.c.b16 %v481, %v480
  %v520 = vpack.c.b16 %v483, %v482
  %v521 = vpack.c.b16 %v485, %v484
  %vm558 = vcmask 523264
  %v560 = vsel %vm558, %v274, 0
  %v563 = vsel %vm558, %v279, 0
  %v566 = vsel %vm558, %v284, 0
  %v569 = vsel %vm558, %v289, 0
  %v572 = vsel %vm558, %v294, 0
  %v575 = vsel %vm558, %v299, 0
  %v578 = vsel %vm558, %v304, 0
  %v581 = vsel %vm558, %v309, 0
  %583 = vmatprep.subr.bf16.mxu0 0
  %584 = vmatpush1.bf16.msra.mxu0 %v486
  %585 = vmatprep.subr.bf16.mxu0 0
  %586 = vmatpush1.bf16.msra.mxu0 %v487
  %587 = vmatprep.subr.bf16.mxu0 0
  %588 = vmatpush1.bf16.msra.mxu0 %v488
  %589 = vmatprep.subr.bf16.mxu0 0
  %590 = vmatpush1.bf16.msra.mxu0 %v489
  %591 = vmatprep.subr.bf16.mxu0 0
  %592 = vmatpush1.bf16.msra.mxu0 %v490
  %593 = vmatprep.subr.bf16.mxu0 0
  %594 = vmatpush1.bf16.msra.mxu0 %v491
  %595 = vmatprep.subr.bf16.mxu0 0
  %596 = vmatpush1.bf16.msra.mxu0 %v492
  %597 = vmatprep.subr.bf16.mxu0 0
  %598 = vmatpush1.bf16.msra.mxu0 %v493
  %599 = vmatprep.subr.bf16.mxu0 0
  %600 = vmatpush1.bf16.msra.mxu0 %v494
  %601 = vmatprep.subr.bf16.mxu0 0
  %602 = vmatpush1.bf16.msra.mxu0 %v495
  %603 = vmatprep.subr.bf16.mxu0 0
  %604 = vmatpush1.bf16.msra.mxu0 %v496
  %605 = vmatprep.subr.bf16.mxu0 0
  %606 = vmatpush1.bf16.msra.mxu0 %v497
  %607 = vmatprep.subr.bf16.mxu0 0
  %608 = vmatpush1.bf16.msra.mxu0 %v498
  %609 = vmatprep.subr.bf16.mxu0 0
  %610 = vmatpush1.bf16.msra.mxu0 %v499
  %611 = vmatprep.subr.bf16.mxu0 0
  %612 = vmatpush1.bf16.msra.mxu0 %v500
  %613 = vmatprep.subr.bf16.mxu0 0
  %614 = vmatpush1.bf16.msra.mxu0 %v501
  %615 = vmatprep.mubr.bf16.mxu0 %v271
  %616 = vmatmul.mubr.bf16.gmra.mrb[0].mxu0 %v270
  %v617 = vpop.f32.mrb[0].mxu0
  %v618 = vadd.f32 %v140, %v617
  %v619 = vpop.f32.mrb[0].mxu0
  %v620 = vpop.f32.mrb[0].mxu0
  %v621 = vadd.f32 %v140, %v620
  %v622 = vpop.f32.mrb[0].mxu0
  %623 = vmatprep.mubr.bf16.mxu0 %v276
  %624 = vmatmul.mubr.bf16.gmra.mrb[0].mxu0 %v275
  %v625 = vpop.f32.mrb[0].mxu0
  %v626 = vadd.f32 %v140, %v625
  %v627 = vpop.f32.mrb[0].mxu0
  %v628 = vpop.f32.mrb[0].mxu0
  %v629 = vadd.f32 %v140, %v628
  %v630 = vpop.f32.mrb[0].mxu0
  %631 = vmatprep.mubr.bf16.mxu0 %v281
  %632 = vmatmul.mubr.bf16.gmra.mrb[0].mxu0 %v280
  %v633 = vpop.f32.mrb[0].mxu0
  %v634 = vadd.f32 %v140, %v633
  %v635 = vpop.f32.mrb[0].mxu0
  %v636 = vpop.f32.mrb[0].mxu0
  %v637 = vadd.f32 %v140, %v636
  %v638 = vpop.f32.mrb[0].mxu0
  %639 = vmatprep.mubr.bf16.mxu0 %v286
  %640 = vmatmul.mubr.bf16.gmra.mrb[0].mxu0 %v285
  %v641 = vpop.f32.mrb[0].mxu0
  %v642 = vadd.f32 %v140, %v641
  %v643 = vpop.f32.mrb[0].mxu0
  %v644 = vpop.f32.mrb[0].mxu0
  %v645 = vadd.f32 %v140, %v644
  %v646 = vpop.f32.mrb[0].mxu0
  %647 = vmatprep.mubr.bf16.mxu0 %v291
  %648 = vmatmul.mubr.bf16.gmra.mrb[0].mxu0 %v290
  %v649 = vpop.f32.mrb[0].mxu0
  %v650 = vadd.f32 %v140, %v649
  %v651 = vpop.f32.mrb[0].mxu0
  %v652 = vpop.f32.mrb[0].mxu0
  %v653 = vadd.f32 %v140, %v652
  %v654 = vpop.f32.mrb[0].mxu0
  %655 = vmatprep.mubr.bf16.mxu0 %v296
  %656 = vmatmul.mubr.bf16.gmra.mrb[0].mxu0 %v295
  %v657 = vpop.f32.mrb[0].mxu0
  %v658 = vadd.f32 %v140, %v657
  %v659 = vpop.f32.mrb[0].mxu0
  %v660 = vpop.f32.mrb[0].mxu0
  %v661 = vadd.f32 %v140, %v660
  %v662 = vpop.f32.mrb[0].mxu0
  %663 = vmatprep.mubr.bf16.mxu0 %v301
  %664 = vmatmul.mubr.bf16.gmra.mrb[0].mxu0 %v300
  %v665 = vpop.f32.mrb[0].mxu0
  %v666 = vadd.f32 %v140, %v665
  %v667 = vpop.f32.mrb[0].mxu0
  %v668 = vpop.f32.mrb[0].mxu0
  %v669 = vadd.f32 %v140, %v668
  %v670 = vpop.f32.mrb[0].mxu0
  %671 = vmatprep.mubr.bf16.mxu0 %v306
  %672 = vmatmul.mubr.bf16.gmra.mrb[0].mxu0 %v305
  %v673 = vpop.f32.mrb[0].mxu0
  %v674 = vadd.f32 %v140, %v673
  %v675 = vpop.f32.mrb[0].mxu0
  %v676 = vpop.f32.mrb[0].mxu0
  %v677 = vadd.f32 %v140, %v676
  %v678 = vpop.f32.mrb[0].mxu0
  %679 = vdwg.mxu0
  %680 = vmatprep.subr.bf16.mxu0 0
  %681 = vmatpush1.bf16.msra.mxu0 %v502
  %682 = vmatprep.subr.bf16.mxu0 0
  %683 = vmatpush1.bf16.msra.mxu0 %v503
  %684 = vmatprep.subr.bf16.mxu0 0
  %685 = vmatpush1.bf16.msra.mxu0 %v504
  %686 = vmatprep.subr.bf16.mxu0 0
  %687 = vmatpush1.bf16.msra.mxu0 %v505
  %688 = vmatprep.subr.bf16.mxu0 0
  %689 = vmatpush1.bf16.msra.mxu0 %v506
  %690 = vmatprep.subr.bf16.mxu0 0
  %691 = vmatpush1.bf16.msra.mxu0 %v507
  %692 = vmatprep.subr.bf16.mxu0 0
  %693 = vmatpush1.bf16.msra.mxu0 %v508
  %694 = vmatprep.subr.bf16.mxu0 0
  %695 = vmatpush1.bf16.msra.mxu0 %v509
  %696 = vmatprep.subr.bf16.mxu0 0
  %697 = vmatpush1.bf16.msra.mxu0 %v510
  %698 = vmatprep.subr.bf16.mxu0 0
  %699 = vmatpush1.bf16.msra.mxu0 %v511
  %700 = vmatprep.subr.bf16.mxu0 0
  %701 = vmatpush1.bf16.msra.mxu0 %v512
  %702 = vmatprep.subr.bf16.mxu0 0
  %703 = vmatpush1.bf16.msra.mxu0 %v513
  %704 = vmatprep.subr.bf16.mxu0 0
  %705 = vmatpush1.bf16.msra.mxu0 %v514
  %706 = vmatprep.subr.bf16.mxu0 0
  %707 = vmatpush1.bf16.msra.mxu0 %v515
  %708 = vmatprep.subr.bf16.mxu0 0
  %709 = vmatpush1.bf16.msra.mxu0 %v516
  %710 = vmatprep.subr.bf16.mxu0 0
  %711 = vmatpush1.bf16.msra.mxu0 %v517
  %712 = vmatprep.mubr.bf16.mxu0 %v273
  %713 = vmatmul.mubr.bf16.gmra.mrb[0].mxu0 %v272
  %v714 = vpop.f32.mrb[0].mxu0
  %v715 = vadd.f32 %v618, %v714
  %v716 = vpop.f32.mrb[0].mxu0
  %v717 = vpop.f32.mrb[0].mxu0
  %v718 = vadd.f32 %v621, %v717
  %v719 = vpop.f32.mrb[0].mxu0
  %720 = vmatprep.mubr.bf16.mxu0 %v278
  %721 = vmatmul.mubr.bf16.gmra.mrb[0].mxu0 %v277
  %v722 = vpop.f32.mrb[0].mxu0
  %v723 = vadd.f32 %v626, %v722
  %v724 = vpop.f32.mrb[0].mxu0
  %v725 = vpop.f32.mrb[0].mxu0
  %v726 = vadd.f32 %v629, %v725
  %v727 = vpop.f32.mrb[0].mxu0
  %728 = vmatprep.mubr.bf16.mxu0 %v283
  %729 = vmatmul.mubr.bf16.gmra.mrb[0].mxu0 %v282
  %v730 = vpop.f32.mrb[0].mxu0
  %v731 = vadd.f32 %v634, %v730
  %v732 = vpop.f32.mrb[0].mxu0
  %v733 = vpop.f32.mrb[0].mxu0
  %v734 = vadd.f32 %v637, %v733
  %v735 = vpop.f32.mrb[0].mxu0
  %736 = vmatprep.mubr.bf16.mxu0 %v288
  %737 = vmatmul.mubr.bf16.gmra.mrb[0].mxu0 %v287
  %v738 = vpop.f32.mrb[0].mxu0
  %v739 = vadd.f32 %v642, %v738
  %v740 = vpop.f32.mrb[0].mxu0
  %v741 = vpop.f32.mrb[0].mxu0
  %v742 = vadd.f32 %v645, %v741
  %v743 = vpop.f32.mrb[0].mxu0
  %744 = vmatprep.mubr.bf16.mxu0 %v293
  %745 = vmatmul.mubr.bf16.gmra.mrb[0].mxu0 %v292
  %v746 = vpop.f32.mrb[0].mxu0
  %v747 = vadd.f32 %v650, %v746
  %v748 = vpop.f32.mrb[0].mxu0
  %v749 = vpop.f32.mrb[0].mxu0
  %v750 = vadd.f32 %v653, %v749
  %v751 = vpop.f32.mrb[0].mxu0
  %752 = vmatprep.mubr.bf16.mxu0 %v298
  %753 = vmatmul.mubr.bf16.gmra.mrb[0].mxu0 %v297
  %v754 = vpop.f32.mrb[0].mxu0
  %v755 = vadd.f32 %v658, %v754
  %v756 = vpop.f32.mrb[0].mxu0
  %v757 = vpop.f32.mrb[0].mxu0
  %v758 = vadd.f32 %v661, %v757
  %v759 = vpop.f32.mrb[0].mxu0
  %760 = vmatprep.mubr.bf16.mxu0 %v303
  %761 = vmatmul.mubr.bf16.gmra.mrb[0].mxu0 %v302
  %v762 = vpop.f32.mrb[0].mxu0
  %v763 = vadd.f32 %v666, %v762
  %v764 = vpop.f32.mrb[0].mxu0
  %v765 = vpop.f32.mrb[0].mxu0
  %v766 = vadd.f32 %v669, %v765
  %v767 = vpop.f32.mrb[0].mxu0
  %768 = vmatprep.mubr.bf16.mxu0 %v308
  %769 = vmatmul.mubr.bf16.gmra.mrb[0].mxu0 %v307
  %v770 = vpop.f32.mrb[0].mxu0
  %v771 = vadd.f32 %v674, %v770
  %v772 = vpop.f32.mrb[0].mxu0
  %v773 = vpop.f32.mrb[0].mxu0
  %v774 = vadd.f32 %v677, %v773
  %v775 = vpop.f32.mrb[0].mxu0
  %776 = vdwg.mxu0
  %777 = vmatprep.subr.bf16.mxu0 0
  %778 = vmatpush1.bf16.msra.mxu0 %v518
  %779 = vmatprep.subr.bf16.mxu0 0
  %780 = vmatpush1.bf16.msra.mxu0 %v519
  %781 = vmatprep.subr.bf16.mxu0 0
  %782 = vmatpush1.bf16.msra.mxu0 %v520
  %783 = vmatprep.subr.bf16.mxu0 0
  %784 = vmatpush1.bf16.msra.mxu0 %v521
  %785 = vmatprep.subr.bf16.mxu0 0
  %786 = vmatpush1.bf16.msra.mxu0 0
  %787 = vmatprep.subr.bf16.mxu0 0
  %788 = vmatpush1.bf16.msra.mxu0 0
  %789 = vmatprep.subr.bf16.mxu0 0
  %790 = vmatpush1.bf16.msra.mxu0 0
  %791 = vmatprep.subr.bf16.mxu0 0
  %792 = vmatpush1.bf16.msra.mxu0 0
  %793 = vmatprep.subr.bf16.mxu0 0
  %794 = vmatpush1.bf16.msra.mxu0 0
  %795 = vmatprep.subr.bf16.mxu0 0
  %796 = vmatpush1.bf16.msra.mxu0 0
  %797 = vmatprep.subr.bf16.mxu0 0
  %798 = vmatpush1.bf16.msra.mxu0 0
  %799 = vmatprep.subr.bf16.mxu0 0
  %800 = vmatpush1.bf16.msra.mxu0 0
  %801 = vmatprep.subr.bf16.mxu0 0
  %802 = vmatpush1.bf16.msra.mxu0 0
  %803 = vmatprep.subr.bf16.mxu0 0
  %804 = vmatpush1.bf16.msra.mxu0 0
  %805 = vmatprep.subr.bf16.mxu0 0
  %806 = vmatpush1.bf16.msra.mxu0 0
  %807 = vmatprep.subr.bf16.mxu0 0
  %808 = vmatpush1.bf16.msra.mxu0 0
  %809 = vmatprep.mubr.bf16.mxu0 0
  %810 = vmatmul.mubr.bf16.gmra.mrb[0].mxu0 %v560
  %v811 = vpop.f32.mrb[0].mxu0
  %v812 = vadd.f32 %v715, %v811
  %v813 = vpop.f32.mrb[0].mxu0
  %v814 = vpop.f32.mrb[0].mxu0
  %v815 = vadd.f32 %v718, %v814
  %v816 = vpop.f32.mrb[0].mxu0
  %817 = vmatprep.mubr.bf16.mxu0 0
  %818 = vmatmul.mubr.bf16.gmra.mrb[0].mxu0 %v563
  %v819 = vpop.f32.mrb[0].mxu0
  %v820 = vadd.f32 %v723, %v819
  %v821 = vpop.f32.mrb[0].mxu0
  %v822 = vpop.f32.mrb[0].mxu0
  %v823 = vadd.f32 %v726, %v822
  %v824 = vpop.f32.mrb[0].mxu0
  %825 = vmatprep.mubr.bf16.mxu0 0
  %826 = vmatmul.mubr.bf16.gmra.mrb[0].mxu0 %v566
  %v827 = vpop.f32.mrb[0].mxu0
  %v828 = vadd.f32 %v731, %v827
  %v829 = vpop.f32.mrb[0].mxu0
  %v830 = vpop.f32.mrb[0].mxu0
  %v831 = vadd.f32 %v734, %v830
  %v832 = vpop.f32.mrb[0].mxu0
  %833 = vmatprep.mubr.bf16.mxu0 0
  %834 = vmatmul.mubr.bf16.gmra.mrb[0].mxu0 %v569
  %v835 = vpop.f32.mrb[0].mxu0
  %v836 = vadd.f32 %v739, %v835
  %v837 = vpop.f32.mrb[0].mxu0
  %v838 = vpop.f32.mrb[0].mxu0
  %v839 = vadd.f32 %v742, %v838
  %v840 = vpop.f32.mrb[0].mxu0
  %841 = vmatprep.mubr.bf16.mxu0 0
  %842 = vmatmul.mubr.bf16.gmra.mrb[0].mxu0 %v572
  %v843 = vpop.f32.mrb[0].mxu0
  %v844 = vadd.f32 %v747, %v843
  %v845 = vpop.f32.mrb[0].mxu0
  %v846 = vpop.f32.mrb[0].mxu0
  %v847 = vadd.f32 %v750, %v846
  %v848 = vpop.f32.mrb[0].mxu0
  %849 = vmatprep.mubr.bf16.mxu0 0
  %850 = vmatmul.mubr.bf16.gmra.mrb[0].mxu0 %v575
  %v851 = vpop.f32.mrb[0].mxu0
  %v852 = vadd.f32 %v755, %v851
  %v853 = vpop.f32.mrb[0].mxu0
  %v854 = vpop.f32.mrb[0].mxu0
  %v855 = vadd.f32 %v758, %v854
  %v856 = vpop.f32.mrb[0].mxu0
  %857 = vmatprep.mubr.bf16.mxu0 0
  %858 = vmatmul.mubr.bf16.gmra.mrb[0].mxu0 %v578
  %v859 = vpop.f32.mrb[0].mxu0
  %v860 = vadd.f32 %v763, %v859
  %v861 = vpop.f32.mrb[0].mxu0
  %v862 = vpop.f32.mrb[0].mxu0
  %v863 = vadd.f32 %v766, %v862
  %v864 = vpop.f32.mrb[0].mxu0
  %865 = vmatprep.mubr.bf16.mxu0 0
  %866 = vmatmul.mubr.bf16.gmra.mrb[0].mxu0 %v581
  %v867 = vpop.f32.mrb[0].mxu0
  %v868 = vadd.f32 %v771, %v867
  %v869 = vpop.f32.mrb[0].mxu0
  %v870 = vpop.f32.mrb[0].mxu0
  %v871 = vadd.f32 %v774, %v870
  %v872 = vpop.f32.mrb[0].mxu0
  %873 = vdwg.mxu0
  %v874 = vmax.f32 %v812, 0.0
  %v875 = vmax.f32 %v815, 0.0
  %v876 = vmax.f32 %v820, 0.0
  %v877 = vmax.f32 %v823, 0.0
  %v878 = vmax.f32 %v828, 0.0
  %v879 = vmax.f32 %v831, 0.0
  %v880 = vmax.f32 %v836, 0.0
  %v881 = vmax.f32 %v839, 0.0
  %v882 = vmax.f32 %v844, 0.0
  %v883 = vmax.f32 %v847, 0.0
  %v884 = vmax.f32 %v852, 0.0
  %v885 = vmax.f32 %v855, 0.0
  %v886 = vmax.f32 %v860, 0.0
  %v887 = vmax.f32 %v863, 0.0
  %v888 = vmax.f32 %v868, 0.0
  %v889 = vmax.f32 %v871, 0.0
  %v890 = vpack.c.bf16 %v875, %v874
  %v891 = vpack.c.bf16 %v877, %v876
  %v892 = vpack.c.bf16 %v879, %v878
  %v893 = vpack.c.bf16 %v881, %v880
  %v894 = vpack.c.bf16 %v883, %v882
  %v895 = vpack.c.bf16 %v885, %v884
  %v896 = vpack.c.bf16 %v887, %v886
  %v897 = vpack.c.bf16 %v889, %v888
  %v906 = vunpack.c.l.b16 %v890
  %v907 = vunpack.c.h.b16 %v890
  %v908 = vunpack.c.l.b16 %v891
  %v909 = vunpack.c.h.b16 %v891
  %v910 = vunpack.c.l.b16 %v892
  %v911 = vunpack.c.h.b16 %v892
  %v912 = vunpack.c.l.b16 %v893
  %v913 = vunpack.c.h.b16 %v893
  %v914 = vunpack.c.l.b16 %v894
  %v915 = vunpack.c.h.b16 %v894
  %v916 = vunpack.c.l.b16 %v895
  %v917 = vunpack.c.h.b16 %v895
  %v918 = vunpack.c.l.b16 %v896
  %v919 = vunpack.c.h.b16 %v896
  %v920 = vunpack.c.l.b16 %v897
  %v921 = vunpack.c.h.b16 %v897
  %v922 = vpack.c.b16 %v906, %v906
  %v923 = vpack.c.b16 %v907, %v907
  %v924 = vpack.c.b16 %v908, %v908
  %v925 = vpack.c.b16 %v909, %v909
  %v926 = vpack.c.b16 %v910, %v910
  %v927 = vpack.c.b16 %v911, %v911
  %v928 = vpack.c.b16 %v912, %v912
  %v929 = vpack.c.b16 %v913, %v913
  %v930 = vpack.c.b16 %v914, %v914
  %v931 = vpack.c.b16 %v915, %v915
  %v932 = vpack.c.b16 %v916, %v916
  %v933 = vpack.c.b16 %v917, %v917
  %v934 = vpack.c.b16 %v918, %v918
  %v935 = vpack.c.b16 %v919, %v919
  %v936 = vpack.c.b16 %v920, %v920
  %v937 = vpack.c.b16 %v921, %v921
  %954 = vst [vmem:[%s3] sm:$0xf] %v922
  %955 = vst [vmem:[%s3 + $0x4] sm:$0xf] %v923
  %956 = vst [vmem:[%s3 + $0x8] sm:$0xf] %v924
  %957 = vst [vmem:[%s3 + $0xc] sm:$0xf] %v925
  %958 = vst [vmem:[%s3 + $0x10] sm:$0xf] %v926
  %959 = vst [vmem:[%s3 + $0x14] sm:$0xf] %v927
  %960 = vst [vmem:[%s3 + $0x18] sm:$0xf] %v928
  %961 = vst [vmem:[%s3 + $0x1c] sm:$0xf] %v929
  %962 = vst [vmem:[%s3 + $0x20] sm:$0xf] %v930
  %963 = vst [vmem:[%s3 + $0x24] sm:$0xf] %v931
  %964 = vst [vmem:[%s3 + $0x28] sm:$0xf] %v932
  %965 = vst [vmem:[%s3 + $0x2c] sm:$0xf] %v933
  %966 = vst [vmem:[%s3 + $0x30] sm:$0xf] %v934
  %967 = vst [vmem:[%s3 + $0x34] sm:$0xf] %v935
  %968 = vst [vmem:[%s3 + $0x38] sm:$0xf] %v936
  %969 = vst [vmem:[%s3 + $0x3c] sm:$0xf] %v937
  // Predicated region
  $region14: #{lst_encoder4_forward.15} parent=0 // pred_check
    _
  $region15: #{lst_encoder4_forward.15} parent=0 // pred_check_branch
    %971 = sbr.rel (0) target = $region17
  $region16: #{lst_encoder4_forward.15} parent=0 // pred_region
    _
  $region17: #{lst_encoder4_forward.15} parent=0 // pred_fallthru
    _
  // Predicated region
  $region18: #{lst_encoder4_forward.15} parent=0 // pred_check
    _
  $region19: #{lst_encoder4_forward.15} parent=0 // pred_check_branch
    %973 = sbr.rel (0) target = $region21
  $region20: #{lst_encoder4_forward.15} parent=0 // pred_region
    _
  $region21: #{lst_encoder4_forward.15} parent=0 // pred_fallthru
    _

// kernel: lst_encoder4_forward.17
$region0: #{lst_encoder4_forward.17}
  #allocation0 [shape = 'u32[]', space=smem, size = 0x4, offset = 0x4, fixed_abs, tag = 'smem constant byte address 0x4 - core index']
  #allocation1 [shape = 'u32[144,128]{1,0:T(1,128)}', space=vmem, size = 0x12000, scoped, tag = 'internal scratch']
  %s0 = inlined_call_operand.vmem [shape: bf16[8,2,4,256], index: 0, kind: input, shape index: {}]
  %s1 = inlined_call_operand.vmem [shape: bf16[8,4,128], index: 1, kind: output, shape index: {}]
  %s2 = sld [smem:[#allocation0]]
  $region14: #{lst_encoder4_forward.17} parent=0
    _
  %s4 = ssub.s32 1, %s2
  %s5 = scalar_select 0, %s4, %s2
  // Predicated region
  $region2: #{lst_encoder4_forward.17} parent=0 // pred_check
    _
  $region3: #{lst_encoder4_forward.17} parent=0 // pred_check_branch
    %7 = sbr.rel (0) target = $region5
  $region4: #{lst_encoder4_forward.17} parent=0 // pred_region
    _
  $region5: #{lst_encoder4_forward.17} parent=0 // pred_fallthru
    _
  %v8 = vld [vmem:[%s0] sm:$0xf]
  %v9 = vld [vmem:[%s0 + $0x4] sm:$0xf]
  %v10 = vld [vmem:[%s0 + $0x8] sm:$0xf]
  %v11 = vld [vmem:[%s0 + $0xc] sm:$0xf]
  %v12 = vld [vmem:[%s0 + $0x10] sm:$0xf]
  %v13 = vld [vmem:[%s0 + $0x14] sm:$0xf]
  %v14 = vld [vmem:[%s0 + $0x18] sm:$0xf]
  %v15 = vld [vmem:[%s0 + $0x1c] sm:$0xf]
  %v16 = vld [vmem:[%s0 + $0x20] sm:$0xf]
  %v17 = vld [vmem:[%s0 + $0x24] sm:$0xf]
  %v18 = vld [vmem:[%s0 + $0x28] sm:$0xf]
  %v19 = vld [vmem:[%s0 + $0x2c] sm:$0xf]
  %v20 = vld [vmem:[%s0 + $0x30] sm:$0xf]
  %v21 = vld [vmem:[%s0 + $0x34] sm:$0xf]
  %v22 = vld [vmem:[%s0 + $0x38] sm:$0xf]
  %v23 = vld [vmem:[%s0 + $0x3c] sm:$0xf]
  %v24 = vmax.bf16 %v8, %v9
  %v25 = vmax.bf16 %v10, %v11
  %v26 = vmax.bf16 %v12, %v13
  %v27 = vmax.bf16 %v14, %v15
  %v28 = vmax.bf16 %v16, %v17
  %v29 = vmax.bf16 %v18, %v19
  %v30 = vmax.bf16 %v20, %v21
  %v31 = vmax.bf16 %v22, %v23
  %v40 = vrot.slane %v24, 2
  %v41 = vrot.slane %v25, 2
  %v42 = vrot.slane %v26, 2
  %v43 = vrot.slane %v27, 2
  %v44 = vrot.slane %v28, 2
  %v45 = vrot.slane %v29, 2
  %v46 = vrot.slane %v30, 2
  %v47 = vrot.slane %v31, 2
  %v56 = vmax.bf16 %v24, %v40
  %v57 = vmax.bf16 %v25, %v41
  %v58 = vmax.bf16 %v26, %v42
  %v59 = vmax.bf16 %v27, %v43
  %v60 = vmax.bf16 %v28, %v44
  %v61 = vmax.bf16 %v29, %v45
  %v62 = vmax.bf16 %v30, %v46
  %v63 = vmax.bf16 %v31, %v47
  %64 = vst [vmem:[%s1] sm:$0x3] %v56
  %65 = vst [vmem:[%s1 + $0x2] sm:$0x3] %v57
  %66 = vst [vmem:[%s1 + $0x4] sm:$0x3] %v58
  %67 = vst [vmem:[%s1 + $0x6] sm:$0x3] %v59
  %68 = vst [vmem:[%s1 + $0x8] sm:$0x3] %v60
  %69 = vst [vmem:[%s1 + $0xa] sm:$0x3] %v61
  %70 = vst [vmem:[%s1 + $0xc] sm:$0x3] %v62
  %71 = vst [vmem:[%s1 + $0xe] sm:$0x3] %v63
  // Predicated region
  $region6: #{lst_encoder4_forward.17} parent=0 // pred_check
    _
  $region7: #{lst_encoder4_forward.17} parent=0 // pred_check_branch
    %73 = sbr.rel (0) target = $region9
  $region8: #{lst_encoder4_forward.17} parent=0 // pred_region
    _
  $region9: #{lst_encoder4_forward.17} parent=0 // pred_fallthru
    _
  // Predicated region
  $region10: #{lst_encoder4_forward.17} parent=0 // pred_check
    _
  $region11: #{lst_encoder4_forward.17} parent=0 // pred_check_branch
    %75 = sbr.rel (0) target = $region13
  $region12: #{lst_encoder4_forward.17} parent=0 // pred_region
    _
  $region13: #{lst_encoder4_forward.17} parent=0 // pred_fallthru
    _

// kernel: lst_encoder4_forward.16
$region0: #{lst_encoder4_forward.16}
  #allocation0 [shape = 'u32[]', space=smem, size = 0x4, offset = 0x4, fixed_abs, tag = 'smem constant byte address 0x4 - core index']
  #allocation1 [shape = 'u32[144,128]{1,0:T(1,128)}', space=vmem, size = 0x12000, scoped, tag = 'internal scratch']
  %s0 = inlined_call_operand.vmem [shape: bf16[128,1152], index: 0, kind: input, shape index: {}]
  %s1 = inlined_call_operand.vmem [shape: bf16[1152,128], index: 1, kind: input, shape index: {}]
  %s2 = inlined_call_operand.vmem [shape: f32[1,128], index: 2, kind: input, shape index: {}]
  %s3 = inlined_call_operand.vmem [shape: bf16[128,128], index: 3, kind: output, shape index: {}]
  %s4 = sld [smem:[#allocation0]]
  $region22: #{lst_encoder4_forward.16} parent=0
    _
  %s6 = ssub.s32 1, %s4
  %s7 = scalar_select 0, %s6, %s4
  // Predicated region
  $region2: #{lst_encoder4_forward.16} parent=0 // pred_check
    _
  $region3: #{lst_encoder4_forward.16} parent=0 // pred_check_branch
    %9 = sbr.rel (0) target = $region5
  $region4: #{lst_encoder4_forward.16} parent=0 // pred_region
    _
  $region5: #{lst_encoder4_forward.16} parent=0 // pred_fallthru
    _
  // Predicated region
  $region6: #{lst_encoder4_forward.16} parent=0 // pred_check
    _
  $region7: #{lst_encoder4_forward.16} parent=0 // pred_check_branch
    %11 = sbr.rel (0) target = $region9
  $region8: #{lst_encoder4_forward.16} parent=0 // pred_region
    _
  $region9: #{lst_encoder4_forward.16} parent=0 // pred_fallthru
    _
  // Predicated region
  $region10: #{lst_encoder4_forward.16} parent=0 // pred_check
    _
  $region11: #{lst_encoder4_forward.16} parent=0 // pred_check_branch
    %13 = sbr.rel (0) target = $region13
  $region12: #{lst_encoder4_forward.16} parent=0 // pred_region
    _
  $region13: #{lst_encoder4_forward.16} parent=0 // pred_fallthru
    _
  %v15 = vld [vmem:[%s0] sm:$0xff]
  %v16 = vld [vmem:[%s0 + $0x8] sm:$0xff]
  %v17 = vld [vmem:[%s0 + $0x10] sm:$0xff]
  %v18 = vld [vmem:[%s0 + $0x18] sm:$0xff]
  %v19 = vld [vmem:[%s0 + $0x20] sm:$0xf]
  %v20 = vld [vmem:[%s0 + $0x24] sm:$0xff]
  %v21 = vld [vmem:[%s0 + $0x2c] sm:$0xff]
  %v22 = vld [vmem:[%s0 + $0x34] sm:$0xff]
  %v23 = vld [vmem:[%s0 + $0x3c] sm:$0xff]
  %v24 = vld [vmem:[%s0 + $0x44] sm:$0xf]
  %v25 = vld [vmem:[%s0 + $0x48] sm:$0xff]
  %v26 = vld [vmem:[%s0 + $0x50] sm:$0xff]
  %v27 = vld [vmem:[%s0 + $0x58] sm:$0xff]
  %v28 = vld [vmem:[%s0 + $0x60] sm:$0xff]
  %v29 = vld [vmem:[%s0 + $0x68] sm:$0xf]
  %v30 = vld [vmem:[%s0 + $0x6c] sm:$0xff]
  %v31 = vld [vmem:[%s0 + $0x74] sm:$0xff]
  %v32 = vld [vmem:[%s0 + $0x7c] sm:$0xff]
  %v33 = vld [vmem:[%s0 + $0x84] sm:$0xff]
  %v34 = vld [vmem:[%s0 + $0x8c] sm:$0xf]
  %v35 = vld [vmem:[%s0 + $0x90] sm:$0xff]
  %v36 = vld [vmem:[%s0 + $0x98] sm:$0xff]
  %v37 = vld [vmem:[%s0 + $0xa0] sm:$0xff]
  %v38 = vld [vmem:[%s0 + $0xa8] sm:$0xff]
  %v39 = vld [vmem:[%s0 + $0xb0] sm:$0xf]
  %v40 = vld [vmem:[%s0 + $0xb4] sm:$0xff]
  %v41 = vld [vmem:[%s0 + $0xbc] sm:$0xff]
  %v42 = vld [vmem:[%s0 + $0xc4] sm:$0xff]
  %v43 = vld [vmem:[%s0 + $0xcc] sm:$0xff]
  %v44 = vld [vmem:[%s0 + $0xd4] sm:$0xf]
  %v45 = vld [vmem:[%s0 + $0xd8] sm:$0xff]
  %v46 = vld [vmem:[%s0 + $0xe0] sm:$0xff]
  %v47 = vld [vmem:[%s0 + $0xe8] sm:$0xff]
  %v48 = vld [vmem:[%s0 + $0xf0] sm:$0xff]
  %v49 = vld [vmem:[%s0 + $0xf8] sm:$0xf]
  %v50 = vld [vmem:[%s0 + $0xfc] sm:$0xff]
  %v51 = vld [vmem:[%s0 + $0x104] sm:$0xff]
  %v52 = vld [vmem:[%s0 + $0x10c] sm:$0xff]
  %v53 = vld [vmem:[%s0 + $0x114] sm:$0xff]
  %v54 = vld [vmem:[%s0 + $0x11c] sm:$0xf]
  %v55 = vld [vmem:[%s0 + $0x120] sm:$0xff]
  %v56 = vld [vmem:[%s0 + $0x128] sm:$0xff]
  %v57 = vld [vmem:[%s0 + $0x130] sm:$0xff]
  %v58 = vld [vmem:[%s0 + $0x138] sm:$0xff]
  %v59 = vld [vmem:[%s0 + $0x140] sm:$0xf]
  %v60 = vld [vmem:[%s0 + $0x144] sm:$0xff]
  %v61 = vld [vmem:[%s0 + $0x14c] sm:$0xff]
  %v62 = vld [vmem:[%s0 + $0x154] sm:$0xff]
  %v63 = vld [vmem:[%s0 + $0x15c] sm:$0xff]
  %v64 = vld [vmem:[%s0 + $0x164] sm:$0xf]
  %v65 = vld [vmem:[%s0 + $0x168] sm:$0xff]
  %v66 = vld [vmem:[%s0 + $0x170] sm:$0xff]
  %v67 = vld [vmem:[%s0 + $0x178] sm:$0xff]
  %v68 = vld [vmem:[%s0 + $0x180] sm:$0xff]
  %v69 = vld [vmem:[%s0 + $0x188] sm:$0xf]
  %v70 = vld [vmem:[%s0 + $0x18c] sm:$0xff]
  %v71 = vld [vmem:[%s0 + $0x194] sm:$0xff]
  %v72 = vld [vmem:[%s0 + $0x19c] sm:$0xff]
  %v73 = vld [vmem:[%s0 + $0x1a4] sm:$0xff]
  %v74 = vld [vmem:[%s0 + $0x1ac] sm:$0xf]
  %v75 = vld [vmem:[%s0 + $0x1b0] sm:$0xff]
  %v76 = vld [vmem:[%s0 + $0x1b8] sm:$0xff]
  %v77 = vld [vmem:[%s0 + $0x1c0] sm:$0xff]
  %v78 = vld [vmem:[%s0 + $0x1c8] sm:$0xff]
  %v79 = vld [vmem:[%s0 + $0x1d0] sm:$0xf]
  %v80 = vld [vmem:[%s0 + $0x1d4] sm:$0xff]
  %v81 = vld [vmem:[%s0 + $0x1dc] sm:$0xff]
  %v82 = vld [vmem:[%s0 + $0x1e4] sm:$0xff]
  %v83 = vld [vmem:[%s0 + $0x1ec] sm:$0xff]
  %v84 = vld [vmem:[%s0 + $0x1f4] sm:$0xf]
  %v85 = vld [vmem:[%s0 + $0x1f8] sm:$0xff]
  %v86 = vld [vmem:[%s0 + $0x200] sm:$0xff]
  %v87 = vld [vmem:[%s0 + $0x208] sm:$0xff]
  %v88 = vld [vmem:[%s0 + $0x210] sm:$0xff]
  %v89 = vld [vmem:[%s0 + $0x218] sm:$0xf]
  %v90 = vld [vmem:[%s0 + $0x21c] sm:$0xff]
  %v91 = vld [vmem:[%s0 + $0x224] sm:$0xff]
  %v92 = vld [vmem:[%s0 + $0x22c] sm:$0xff]
  %v93 = vld [vmem:[%s0 + $0x234] sm:$0xff]
  %v94 = vld [vmem:[%s0 + $0x23c] sm:$0xf]
  %v95 = vld [vmem:[%s1] sm:$0xf]
  %v96 = vld [vmem:[%s1 + $0x4] sm:$0xf]
  %v97 = vld [vmem:[%s1 + $0x8] sm:$0xf]
  %v98 = vld [vmem:[%s1 + $0xc] sm:$0xf]
  %v99 = vld [vmem:[%s1 + $0x10] sm:$0xf]
  %v100 = vld [vmem:[%s1 + $0x14] sm:$0xf]
  %v101 = vld [vmem:[%s1 + $0x18] sm:$0xf]
  %v102 = vld [vmem:[%s1 + $0x1c] sm:$0xf]
  %v103 = vld [vmem:[%s1 + $0x20] sm:$0xf]
  %v104 = vld [vmem:[%s1 + $0x24] sm:$0xf]
  %v105 = vld [vmem:[%s1 + $0x28] sm:$0xf]
  %v106 = vld [vmem:[%s1 + $0x2c] sm:$0xf]
  %v107 = vld [vmem:[%s1 + $0x30] sm:$0xf]
  %v108 = vld [vmem:[%s1 + $0x34] sm:$0xf]
  %v109 = vld [vmem:[%s1 + $0x38] sm:$0xf]
  %v110 = vld [vmem:[%s1 + $0x3c] sm:$0xf]
  %v111 = vld [vmem:[%s1 + $0x40] sm:$0xf]
  %v112 = vld [vmem:[%s1 + $0x44] sm:$0xf]
  %v113 = vld [vmem:[%s1 + $0x48] sm:$0xf]
  %v114 = vld [vmem:[%s1 + $0x4c] sm:$0xf]
  %v115 = vld [vmem:[%s1 + $0x50] sm:$0xf]
  %v116 = vld [vmem:[%s1 + $0x54] sm:$0xf]
  %v117 = vld [vmem:[%s1 + $0x58] sm:$0xf]
  %v118 = vld [vmem:[%s1 + $0x5c] sm:$0xf]
  %v119 = vld [vmem:[%s1 + $0x60] sm:$0xf]
  %v120 = vld [vmem:[%s1 + $0x64] sm:$0xf]
  %v121 = vld [vmem:[%s1 + $0x68] sm:$0xf]
  %v122 = vld [vmem:[%s1 + $0x6c] sm:$0xf]
  %v123 = vld [vmem:[%s1 + $0x70] sm:$0xf]
  %v124 = vld [vmem:[%s1 + $0x74] sm:$0xf]
  %v125 = vld [vmem:[%s1 + $0x78] sm:$0xf]
  %v126 = vld [vmem:[%s1 + $0x7c] sm:$0xf]
  %v127 = vld [vmem:[%s1 + $0x80] sm:$0xf]
  %v128 = vld [vmem:[%s1 + $0x84] sm:$0xf]
  %v129 = vld [vmem:[%s1 + $0x88] sm:$0xf]
  %v130 = vld [vmem:[%s1 + $0x8c] sm:$0xf]
  %v131 = vld [vmem:[%s1 + $0x90] sm:$0xf]
  %v132 = vld [vmem:[%s1 + $0x94] sm:$0xf]
  %v133 = vld [vmem:[%s1 + $0x98] sm:$0xf]
  %v134 = vld [vmem:[%s1 + $0x9c] sm:$0xf]
  %v135 = vld [vmem:[%s1 + $0xa0] sm:$0xf]
  %v136 = vld [vmem:[%s1 + $0xa4] sm:$0xf]
  %v137 = vld [vmem:[%s1 + $0xa8] sm:$0xf]
  %v138 = vld [vmem:[%s1 + $0xac] sm:$0xf]
  %v139 = vld [vmem:[%s1 + $0xb0] sm:$0xf]
  %v140 = vld [vmem:[%s1 + $0xb4] sm:$0xf]
  %v141 = vld [vmem:[%s1 + $0xb8] sm:$0xf]
  %v142 = vld [vmem:[%s1 + $0xbc] sm:$0xf]
  %v143 = vld [vmem:[%s1 + $0xc0] sm:$0xf]
  %v144 = vld [vmem:[%s1 + $0xc4] sm:$0xf]
  %v145 = vld [vmem:[%s1 + $0xc8] sm:$0xf]
  %v146 = vld [vmem:[%s1 + $0xcc] sm:$0xf]
  %v147 = vld [vmem:[%s1 + $0xd0] sm:$0xf]
  %v148 = vld [vmem:[%s1 + $0xd4] sm:$0xf]
  %v149 = vld [vmem:[%s1 + $0xd8] sm:$0xf]
  %v150 = vld [vmem:[%s1 + $0xdc] sm:$0xf]
  %v151 = vld [vmem:[%s1 + $0xe0] sm:$0xf]
  %v152 = vld [vmem:[%s1 + $0xe4] sm:$0xf]
  %v153 = vld [vmem:[%s1 + $0xe8] sm:$0xf]
  %v154 = vld [vmem:[%s1 + $0xec] sm:$0xf]
  %v155 = vld [vmem:[%s1 + $0xf0] sm:$0xf]
  %v156 = vld [vmem:[%s1 + $0xf4] sm:$0xf]
  %v157 = vld [vmem:[%s1 + $0xf8] sm:$0xf]
  %v158 = vld [vmem:[%s1 + $0xfc] sm:$0xf]
  %v159 = vld [vmem:[%s1 + $0x100] sm:$0xf]
  %v160 = vld [vmem:[%s1 + $0x104] sm:$0xf]
  %v161 = vld [vmem:[%s1 + $0x108] sm:$0xf]
  %v162 = vld [vmem:[%s1 + $0x10c] sm:$0xf]
  %v163 = vld [vmem:[%s1 + $0x110] sm:$0xf]
  %v164 = vld [vmem:[%s1 + $0x114] sm:$0xf]
  %v165 = vld [vmem:[%s1 + $0x118] sm:$0xf]
  %v166 = vld [vmem:[%s1 + $0x11c] sm:$0xf]
  %v167 = vld [vmem:[%s1 + $0x120] sm:$0xf]
  %v168 = vld [vmem:[%s1 + $0x124] sm:$0xf]
  %v169 = vld [vmem:[%s1 + $0x128] sm:$0xf]
  %v170 = vld [vmem:[%s1 + $0x12c] sm:$0xf]
  %v171 = vld [vmem:[%s1 + $0x130] sm:$0xf]
  %v172 = vld [vmem:[%s1 + $0x134] sm:$0xf]
  %v173 = vld [vmem:[%s1 + $0x138] sm:$0xf]
  %v174 = vld [vmem:[%s1 + $0x13c] sm:$0xf]
  %v175 = vld [vmem:[%s1 + $0x140] sm:$0xf]
  %v176 = vld [vmem:[%s1 + $0x144] sm:$0xf]
  %v177 = vld [vmem:[%s1 + $0x148] sm:$0xf]
  %v178 = vld [vmem:[%s1 + $0x14c] sm:$0xf]
  %v179 = vld [vmem:[%s1 + $0x150] sm:$0xf]
  %v180 = vld [vmem:[%s1 + $0x154] sm:$0xf]
  %v181 = vld [vmem:[%s1 + $0x158] sm:$0xf]
  %v182 = vld [vmem:[%s1 + $0x15c] sm:$0xf]
  %v183 = vld [vmem:[%s1 + $0x160] sm:$0xf]
  %v184 = vld [vmem:[%s1 + $0x164] sm:$0xf]
  %v185 = vld [vmem:[%s1 + $0x168] sm:$0xf]
  %v186 = vld [vmem:[%s1 + $0x16c] sm:$0xf]
  %v187 = vld [vmem:[%s1 + $0x170] sm:$0xf]
  %v188 = vld [vmem:[%s1 + $0x174] sm:$0xf]
  %v189 = vld [vmem:[%s1 + $0x178] sm:$0xf]
  %v190 = vld [vmem:[%s1 + $0x17c] sm:$0xf]
  %v191 = vld [vmem:[%s1 + $0x180] sm:$0xf]
  %v192 = vld [vmem:[%s1 + $0x184] sm:$0xf]
  %v193 = vld [vmem:[%s1 + $0x188] sm:$0xf]
  %v194 = vld [vmem:[%s1 + $0x18c] sm:$0xf]
  %v195 = vld [vmem:[%s1 + $0x190] sm:$0xf]
  %v196 = vld [vmem:[%s1 + $0x194] sm:$0xf]
  %v197 = vld [vmem:[%s1 + $0x198] sm:$0xf]
  %v198 = vld [vmem:[%s1 + $0x19c] sm:$0xf]
  %v199 = vld [vmem:[%s1 + $0x1a0] sm:$0xf]
  %v200 = vld [vmem:[%s1 + $0x1a4] sm:$0xf]
  %v201 = vld [vmem:[%s1 + $0x1a8] sm:$0xf]
  %v202 = vld [vmem:[%s1 + $0x1ac] sm:$0xf]
  %v203 = vld [vmem:[%s1 + $0x1b0] sm:$0xf]
  %v204 = vld [vmem:[%s1 + $0x1b4] sm:$0xf]
  %v205 = vld [vmem:[%s1 + $0x1b8] sm:$0xf]
  %v206 = vld [vmem:[%s1 + $0x1bc] sm:$0xf]
  %v207 = vld [vmem:[%s1 + $0x1c0] sm:$0xf]
  %v208 = vld [vmem:[%s1 + $0x1c4] sm:$0xf]
  %v209 = vld [vmem:[%s1 + $0x1c8] sm:$0xf]
  %v210 = vld [vmem:[%s1 + $0x1cc] sm:$0xf]
  %v211 = vld [vmem:[%s1 + $0x1d0] sm:$0xf]
  %v212 = vld [vmem:[%s1 + $0x1d4] sm:$0xf]
  %v213 = vld [vmem:[%s1 + $0x1d8] sm:$0xf]
  %v214 = vld [vmem:[%s1 + $0x1dc] sm:$0xf]
  %v215 = vld [vmem:[%s1 + $0x1e0] sm:$0xf]
  %v216 = vld [vmem:[%s1 + $0x1e4] sm:$0xf]
  %v217 = vld [vmem:[%s1 + $0x1e8] sm:$0xf]
  %v218 = vld [vmem:[%s1 + $0x1ec] sm:$0xf]
  %v219 = vld [vmem:[%s1 + $0x1f0] sm:$0xf]
  %v220 = vld [vmem:[%s1 + $0x1f4] sm:$0xf]
  %v221 = vld [vmem:[%s1 + $0x1f8] sm:$0xf]
  %v222 = vld [vmem:[%s1 + $0x1fc] sm:$0xf]
  %v223 = vld [vmem:[%s1 + $0x200] sm:$0xf]
  %v224 = vld [vmem:[%s1 + $0x204] sm:$0xf]
  %v225 = vld [vmem:[%s1 + $0x208] sm:$0xf]
  %v226 = vld [vmem:[%s1 + $0x20c] sm:$0xf]
  %v227 = vld [vmem:[%s1 + $0x210] sm:$0xf]
  %v228 = vld [vmem:[%s1 + $0x214] sm:$0xf]
  %v229 = vld [vmem:[%s1 + $0x218] sm:$0xf]
  %v230 = vld [vmem:[%s1 + $0x21c] sm:$0xf]
  %v231 = vld [vmem:[%s1 + $0x220] sm:$0xf]
  %v232 = vld [vmem:[%s1 + $0x224] sm:$0xf]
  %v233 = vld [vmem:[%s1 + $0x228] sm:$0xf]
  %v234 = vld [vmem:[%s1 + $0x22c] sm:$0xf]
  %v235 = vld [vmem:[%s1 + $0x230] sm:$0xf]
  %v236 = vld [vmem:[%s1 + $0x234] sm:$0xf]
  %v237 = vld [vmem:[%s1 + $0x238] sm:$0xf]
  %v238 = vld [vmem:[%s1 + $0x23c] sm:$0xf]
  %v239 = vld [vmem:[%s2] sm:$0x1]
  %v241 = vlaneseq
  %v242 = vshrl.u32 %v241, 7
  %v243 = vsub.s32 0, %v242
  %v244 = vrot.slane %v239, %v243
  %v326 = vunpack.c.l.b16 %v15
  %v327 = vunpack.c.h.b16 %v15
  %v328 = vunpack.c.l.b16 %v16
  %v329 = vunpack.c.h.b16 %v16
  %v330 = vunpack.c.l.b16 %v17
  %v331 = vunpack.c.h.b16 %v17
  %v332 = vunpack.c.l.b16 %v18
  %v333 = vunpack.c.h.b16 %v18
  %v334 = vunpack.c.l.b16 %v19
  %v335 = vunpack.c.l.b16 %v20
  %v336 = vunpack.c.h.b16 %v20
  %v337 = vunpack.c.l.b16 %v21
  %v338 = vunpack.c.h.b16 %v21
  %v339 = vunpack.c.l.b16 %v22
  %v340 = vunpack.c.h.b16 %v22
  %v341 = vunpack.c.l.b16 %v23
  %v342 = vunpack.c.h.b16 %v23
  %v343 = vunpack.c.l.b16 %v24
  %v344 = vunpack.c.l.b16 %v25
  %v345 = vunpack.c.h.b16 %v25
  %v346 = vunpack.c.l.b16 %v26
  %v347 = vunpack.c.h.b16 %v26
  %v348 = vunpack.c.l.b16 %v27
  %v349 = vunpack.c.h.b16 %v27
  %v350 = vunpack.c.l.b16 %v28
  %v351 = vunpack.c.h.b16 %v28
  %v352 = vunpack.c.l.b16 %v29
  %v353 = vunpack.c.l.b16 %v30
  %v354 = vunpack.c.h.b16 %v30
  %v355 = vunpack.c.l.b16 %v31
  %v356 = vunpack.c.h.b16 %v31
  %v357 = vunpack.c.l.b16 %v32
  %v358 = vunpack.c.h.b16 %v32
  %v359 = vunpack.c.l.b16 %v33
  %v360 = vunpack.c.h.b16 %v33
  %v361 = vunpack.c.l.b16 %v34
  %v362 = vunpack.c.l.b16 %v35
  %v363 = vunpack.c.h.b16 %v35
  %v364 = vunpack.c.l.b16 %v36
  %v365 = vunpack.c.h.b16 %v36
  %v366 = vunpack.c.l.b16 %v37
  %v367 = vunpack.c.h.b16 %v37
  %v368 = vunpack.c.l.b16 %v38
  %v369 = vunpack.c.h.b16 %v38
  %v370 = vunpack.c.l.b16 %v39
  %v371 = vunpack.c.l.b16 %v40
  %v372 = vunpack.c.h.b16 %v40
  %v373 = vunpack.c.l.b16 %v41
  %v374 = vunpack.c.h.b16 %v41
  %v375 = vunpack.c.l.b16 %v42
  %v376 = vunpack.c.h.b16 %v42
  %v377 = vunpack.c.l.b16 %v43
  %v378 = vunpack.c.h.b16 %v43
  %v379 = vunpack.c.l.b16 %v44
  %v380 = vunpack.c.l.b16 %v45
  %v381 = vunpack.c.h.b16 %v45
  %v382 = vunpack.c.l.b16 %v46
  %v383 = vunpack.c.h.b16 %v46
  %v384 = vunpack.c.l.b16 %v47
  %v385 = vunpack.c.h.b16 %v47
  %v386 = vunpack.c.l.b16 %v48
  %v387 = vunpack.c.h.b16 %v48
  %v388 = vunpack.c.l.b16 %v49
  %v389 = vunpack.c.l.b16 %v50
  %v390 = vunpack.c.h.b16 %v50
  %v391 = vunpack.c.l.b16 %v51
  %v392 = vunpack.c.h.b16 %v51
  %v393 = vunpack.c.l.b16 %v52
  %v394 = vunpack.c.h.b16 %v52
  %v395 = vunpack.c.l.b16 %v53
  %v396 = vunpack.c.h.b16 %v53
  %v397 = vunpack.c.l.b16 %v54
  %v398 = vunpack.c.l.b16 %v55
  %v399 = vunpack.c.h.b16 %v55
  %v400 = vunpack.c.l.b16 %v56
  %v401 = vunpack.c.h.b16 %v56
  %v402 = vunpack.c.l.b16 %v57
  %v403 = vunpack.c.h.b16 %v57
  %v404 = vunpack.c.l.b16 %v58
  %v405 = vunpack.c.h.b16 %v58
  %v406 = vunpack.c.l.b16 %v59
  %v407 = vunpack.c.l.b16 %v60
  %v408 = vunpack.c.h.b16 %v60
  %v409 = vunpack.c.l.b16 %v61
  %v410 = vunpack.c.h.b16 %v61
  %v411 = vunpack.c.l.b16 %v62
  %v412 = vunpack.c.h.b16 %v62
  %v413 = vunpack.c.l.b16 %v63
  %v414 = vunpack.c.h.b16 %v63
  %v415 = vunpack.c.l.b16 %v64
  %v416 = vunpack.c.l.b16 %v65
  %v417 = vunpack.c.h.b16 %v65
  %v418 = vunpack.c.l.b16 %v66
  %v419 = vunpack.c.h.b16 %v66
  %v420 = vunpack.c.l.b16 %v67
  %v421 = vunpack.c.h.b16 %v67
  %v422 = vunpack.c.l.b16 %v68
  %v423 = vunpack.c.h.b16 %v68
  %v424 = vunpack.c.l.b16 %v69
  %v425 = vunpack.c.l.b16 %v70
  %v426 = vunpack.c.h.b16 %v70
  %v427 = vunpack.c.l.b16 %v71
  %v428 = vunpack.c.h.b16 %v71
  %v429 = vunpack.c.l.b16 %v72
  %v430 = vunpack.c.h.b16 %v72
  %v431 = vunpack.c.l.b16 %v73
  %v432 = vunpack.c.h.b16 %v73
  %v433 = vunpack.c.l.b16 %v74
  %v434 = vunpack.c.l.b16 %v75
  %v435 = vunpack.c.h.b16 %v75
  %v436 = vunpack.c.l.b16 %v76
  %v437 = vunpack.c.h.b16 %v76
  %v438 = vunpack.c.l.b16 %v77
  %v439 = vunpack.c.h.b16 %v77
  %v440 = vunpack.c.l.b16 %v78
  %v441 = vunpack.c.h.b16 %v78
  %v442 = vunpack.c.l.b16 %v79
  %v443 = vunpack.c.l.b16 %v80
  %v444 = vunpack.c.h.b16 %v80
  %v445 = vunpack.c.l.b16 %v81
  %v446 = vunpack.c.h.b16 %v81
  %v447 = vunpack.c.l.b16 %v82
  %v448 = vunpack.c.h.b16 %v82
  %v449 = vunpack.c.l.b16 %v83
  %v450 = vunpack.c.h.b16 %v83
  %v451 = vunpack.c.l.b16 %v84
  %v452 = vunpack.c.l.b16 %v85
  %v453 = vunpack.c.h.b16 %v85
  %v454 = vunpack.c.l.b16 %v86
  %v455 = vunpack.c.h.b16 %v86
  %v456 = vunpack.c.l.b16 %v87
  %v457 = vunpack.c.h.b16 %v87
  %v458 = vunpack.c.l.b16 %v88
  %v459 = vunpack.c.h.b16 %v88
  %v460 = vunpack.c.l.b16 %v89
  %v461 = vunpack.c.l.b16 %v90
  %v462 = vunpack.c.h.b16 %v90
  %v463 = vunpack.c.l.b16 %v91
  %v464 = vunpack.c.h.b16 %v91
  %v465 = vunpack.c.l.b16 %v92
  %v466 = vunpack.c.h.b16 %v92
  %v467 = vunpack.c.l.b16 %v93
  %v468 = vunpack.c.h.b16 %v93
  %v469 = vunpack.c.l.b16 %v94
  %v470 = vpack.c.b16 %v335, %v326
  %v471 = vpack.c.b16 %v336, %v327
  %v472 = vpack.c.b16 %v337, %v328
  %v473 = vpack.c.b16 %v338, %v329
  %v474 = vpack.c.b16 %v339, %v330
  %v475 = vpack.c.b16 %v340, %v331
  %v476 = vpack.c.b16 %v341, %v332
  %v477 = vpack.c.b16 %v342, %v333
  %v478 = vpack.c.b16 %v343, %v334
  %v479 = vpack.c.b16 %v353, %v344
  %v480 = vpack.c.b16 %v354, %v345
  %v481 = vpack.c.b16 %v355, %v346
  %v482 = vpack.c.b16 %v356, %v347
  %v483 = vpack.c.b16 %v357, %v348
  %v484 = vpack.c.b16 %v358, %v349
  %v485 = vpack.c.b16 %v359, %v350
  %v486 = vpack.c.b16 %v360, %v351
  %v487 = vpack.c.b16 %v361, %v352
  %v488 = vpack.c.b16 %v371, %v362
  %v489 = vpack.c.b16 %v372, %v363
  %v490 = vpack.c.b16 %v373, %v364
  %v491 = vpack.c.b16 %v374, %v365
  %v492 = vpack.c.b16 %v375, %v366
  %v493 = vpack.c.b16 %v376, %v367
  %v494 = vpack.c.b16 %v377, %v368
  %v495 = vpack.c.b16 %v378, %v369
  %v496 = vpack.c.b16 %v379, %v370
  %v497 = vpack.c.b16 %v389, %v380
  %v498 = vpack.c.b16 %v390, %v381
  %v499 = vpack.c.b16 %v391, %v382
  %v500 = vpack.c.b16 %v392, %v383
  %v501 = vpack.c.b16 %v393, %v384
  %v502 = vpack.c.b16 %v394, %v385
  %v503 = vpack.c.b16 %v395, %v386
  %v504 = vpack.c.b16 %v396, %v387
  %v505 = vpack.c.b16 %v397, %v388
  %v506 = vpack.c.b16 %v407, %v398
  %v507 = vpack.c.b16 %v408, %v399
  %v508 = vpack.c.b16 %v409, %v400
  %v509 = vpack.c.b16 %v410, %v401
  %v510 = vpack.c.b16 %v411, %v402
  %v511 = vpack.c.b16 %v412, %v403
  %v512 = vpack.c.b16 %v413, %v404
  %v513 = vpack.c.b16 %v414, %v405
  %v514 = vpack.c.b16 %v415, %v406
  %v515 = vpack.c.b16 %v425, %v416
  %v516 = vpack.c.b16 %v426, %v417
  %v517 = vpack.c.b16 %v427, %v418
  %v518 = vpack.c.b16 %v428, %v419
  %v519 = vpack.c.b16 %v429, %v420
  %v520 = vpack.c.b16 %v430, %v421
  %v521 = vpack.c.b16 %v431, %v422
  %v522 = vpack.c.b16 %v432, %v423
  %v523 = vpack.c.b16 %v433, %v424
  %v524 = vpack.c.b16 %v443, %v434
  %v525 = vpack.c.b16 %v444, %v435
  %v526 = vpack.c.b16 %v445, %v436
  %v527 = vpack.c.b16 %v446, %v437
  %v528 = vpack.c.b16 %v447, %v438
  %v529 = vpack.c.b16 %v448, %v439
  %v530 = vpack.c.b16 %v449, %v440
  %v531 = vpack.c.b16 %v450, %v441
  %v532 = vpack.c.b16 %v451, %v442
  %v533 = vpack.c.b16 %v461, %v452
  %v534 = vpack.c.b16 %v462, %v453
  %v535 = vpack.c.b16 %v463, %v454
  %v536 = vpack.c.b16 %v464, %v455
  %v537 = vpack.c.b16 %v465, %v456
  %v538 = vpack.c.b16 %v466, %v457
  %v539 = vpack.c.b16 %v467, %v458
  %v540 = vpack.c.b16 %v468, %v459
  %v541 = vpack.c.b16 %v469, %v460
  %v758 = vunpack.c.l.b16 %v95
  %v759 = vunpack.c.l.b16 %v96
  %v760 = vunpack.c.l.b16 %v97
  %v761 = vunpack.c.l.b16 %v98
  %v762 = vunpack.c.l.b16 %v99
  %v763 = vunpack.c.l.b16 %v100
  %v764 = vunpack.c.l.b16 %v101
  %v765 = vunpack.c.l.b16 %v102
  %v766 = vunpack.c.l.b16 %v103
  %v767 = vunpack.c.l.b16 %v104
  %v768 = vunpack.c.l.b16 %v105
  %v769 = vunpack.c.l.b16 %v106
  %v770 = vunpack.c.l.b16 %v107
  %v771 = vunpack.c.l.b16 %v108
  %v772 = vunpack.c.l.b16 %v109
  %v773 = vunpack.c.l.b16 %v110
  %v774 = vunpack.c.l.b16 %v111
  %v775 = vunpack.c.l.b16 %v112
  %v776 = vunpack.c.l.b16 %v113
  %v777 = vunpack.c.l.b16 %v114
  %v778 = vunpack.c.l.b16 %v115
  %v779 = vunpack.c.l.b16 %v116
  %v780 = vunpack.c.l.b16 %v117
  %v781 = vunpack.c.l.b16 %v118
  %v782 = vunpack.c.l.b16 %v119
  %v783 = vunpack.c.l.b16 %v120
  %v784 = vunpack.c.l.b16 %v121
  %v785 = vunpack.c.l.b16 %v122
  %v786 = vunpack.c.l.b16 %v123
  %v787 = vunpack.c.l.b16 %v124
  %v788 = vunpack.c.l.b16 %v125
  %v789 = vunpack.c.l.b16 %v126
  %v790 = vunpack.c.l.b16 %v127
  %v791 = vunpack.c.l.b16 %v128
  %v792 = vunpack.c.l.b16 %v129
  %v793 = vunpack.c.l.b16 %v130
  %v794 = vunpack.c.l.b16 %v131
  %v795 = vunpack.c.l.b16 %v132
  %v796 = vunpack.c.l.b16 %v133
  %v797 = vunpack.c.l.b16 %v134
  %v798 = vunpack.c.l.b16 %v135
  %v799 = vunpack.c.l.b16 %v136
  %v800 = vunpack.c.l.b16 %v137
  %v801 = vunpack.c.l.b16 %v138
  %v802 = vunpack.c.l.b16 %v139
  %v803 = vunpack.c.l.b16 %v140
  %v804 = vunpack.c.l.b16 %v141
  %v805 = vunpack.c.l.b16 %v142
  %v806 = vunpack.c.l.b16 %v143
  %v807 = vunpack.c.l.b16 %v144
  %v808 = vunpack.c.l.b16 %v145
  %v809 = vunpack.c.l.b16 %v146
  %v810 = vunpack.c.l.b16 %v147
  %v811 = vunpack.c.l.b16 %v148
  %v812 = vunpack.c.l.b16 %v149
  %v813 = vunpack.c.l.b16 %v150
  %v814 = vunpack.c.l.b16 %v151
  %v815 = vunpack.c.l.b16 %v152
  %v816 = vunpack.c.l.b16 %v153
  %v817 = vunpack.c.l.b16 %v154
  %v818 = vunpack.c.l.b16 %v155
  %v819 = vunpack.c.l.b16 %v156
  %v820 = vunpack.c.l.b16 %v157
  %v821 = vunpack.c.l.b16 %v158
  %v822 = vunpack.c.l.b16 %v159
  %v823 = vunpack.c.l.b16 %v160
  %v824 = vunpack.c.l.b16 %v161
  %v825 = vunpack.c.l.b16 %v162
  %v826 = vunpack.c.l.b16 %v163
  %v827 = vunpack.c.l.b16 %v164
  %v828 = vunpack.c.l.b16 %v165
  %v829 = vunpack.c.l.b16 %v166
  %v830 = vunpack.c.l.b16 %v167
  %v831 = vunpack.c.l.b16 %v168
  %v832 = vunpack.c.l.b16 %v169
  %v833 = vunpack.c.l.b16 %v170
  %v834 = vunpack.c.l.b16 %v171
  %v835 = vunpack.c.l.b16 %v172
  %v836 = vunpack.c.l.b16 %v173
  %v837 = vunpack.c.l.b16 %v174
  %v838 = vunpack.c.l.b16 %v175
  %v839 = vunpack.c.l.b16 %v176
  %v840 = vunpack.c.l.b16 %v177
  %v841 = vunpack.c.l.b16 %v178
  %v842 = vunpack.c.l.b16 %v179
  %v843 = vunpack.c.l.b16 %v180
  %v844 = vunpack.c.l.b16 %v181
  %v845 = vunpack.c.l.b16 %v182
  %v846 = vunpack.c.l.b16 %v183
  %v847 = vunpack.c.l.b16 %v184
  %v848 = vunpack.c.l.b16 %v185
  %v849 = vunpack.c.l.b16 %v186
  %v850 = vunpack.c.l.b16 %v187
  %v851 = vunpack.c.l.b16 %v188
  %v852 = vunpack.c.l.b16 %v189
  %v853 = vunpack.c.l.b16 %v190
  %v854 = vunpack.c.l.b16 %v191
  %v855 = vunpack.c.l.b16 %v192
  %v856 = vunpack.c.l.b16 %v193
  %v857 = vunpack.c.l.b16 %v194
  %v858 = vunpack.c.l.b16 %v195
  %v859 = vunpack.c.l.b16 %v196
  %v860 = vunpack.c.l.b16 %v197
  %v861 = vunpack.c.l.b16 %v198
  %v862 = vunpack.c.l.b16 %v199
  %v863 = vunpack.c.l.b16 %v200
  %v864 = vunpack.c.l.b16 %v201
  %v865 = vunpack.c.l.b16 %v202
  %v866 = vunpack.c.l.b16 %v203
  %v867 = vunpack.c.l.b16 %v204
  %v868 = vunpack.c.l.b16 %v205
  %v869 = vunpack.c.l.b16 %v206
  %v870 = vunpack.c.l.b16 %v207
  %v871 = vunpack.c.l.b16 %v208
  %v872 = vunpack.c.l.b16 %v209
  %v873 = vunpack.c.l.b16 %v210
  %v874 = vunpack.c.l.b16 %v211
  %v875 = vunpack.c.l.b16 %v212
  %v876 = vunpack.c.l.b16 %v213
  %v877 = vunpack.c.l.b16 %v214
  %v878 = vunpack.c.l.b16 %v215
  %v879 = vunpack.c.l.b16 %v216
  %v880 = vunpack.c.l.b16 %v217
  %v881 = vunpack.c.l.b16 %v218
  %v882 = vunpack.c.l.b16 %v219
  %v883 = vunpack.c.l.b16 %v220
  %v884 = vunpack.c.l.b16 %v221
  %v885 = vunpack.c.l.b16 %v222
  %v886 = vunpack.c.l.b16 %v223
  %v887 = vunpack.c.l.b16 %v224
  %v888 = vunpack.c.l.b16 %v225
  %v889 = vunpack.c.l.b16 %v226
  %v890 = vunpack.c.l.b16 %v227
  %v891 = vunpack.c.l.b16 %v228
  %v892 = vunpack.c.l.b16 %v229
  %v893 = vunpack.c.l.b16 %v230
  %v894 = vunpack.c.l.b16 %v231
  %v895 = vunpack.c.l.b16 %v232
  %v896 = vunpack.c.l.b16 %v233
  %v897 = vunpack.c.l.b16 %v234
  %v898 = vunpack.c.l.b16 %v235
  %v899 = vunpack.c.l.b16 %v236
  %v900 = vunpack.c.l.b16 %v237
  %v901 = vunpack.c.l.b16 %v238
  %v902 = vpack.c.b16 %v759, %v758
  %v903 = vpack.c.b16 %v761, %v760
  %v904 = vpack.c.b16 %v763, %v762
  %v905 = vpack.c.b16 %v765, %v764
  %v906 = vpack.c.b16 %v767, %v766
  %v907 = vpack.c.b16 %v769, %v768
  %v908 = vpack.c.b16 %v771, %v770
  %v909 = vpack.c.b16 %v773, %v772
  %v910 = vpack.c.b16 %v775, %v774
  %v911 = vpack.c.b16 %v777, %v776
  %v912 = vpack.c.b16 %v779, %v778
  %v913 = vpack.c.b16 %v781, %v780
  %v914 = vpack.c.b16 %v783, %v782
  %v915 = vpack.c.b16 %v785, %v784
  %v916 = vpack.c.b16 %v787, %v786
  %v917 = vpack.c.b16 %v789, %v788
  %v918 = vpack.c.b16 %v791, %v790
  %v919 = vpack.c.b16 %v793, %v792
  %v920 = vpack.c.b16 %v795, %v794
  %v921 = vpack.c.b16 %v797, %v796
  %v922 = vpack.c.b16 %v799, %v798
  %v923 = vpack.c.b16 %v801, %v800
  %v924 = vpack.c.b16 %v803, %v802
  %v925 = vpack.c.b16 %v805, %v804
  %v926 = vpack.c.b16 %v807, %v806
  %v927 = vpack.c.b16 %v809, %v808
  %v928 = vpack.c.b16 %v811, %v810
  %v929 = vpack.c.b16 %v813, %v812
  %v930 = vpack.c.b16 %v815, %v814
  %v931 = vpack.c.b16 %v817, %v816
  %v932 = vpack.c.b16 %v819, %v818
  %v933 = vpack.c.b16 %v821, %v820
  %v934 = vpack.c.b16 %v823, %v822
  %v935 = vpack.c.b16 %v825, %v824
  %v936 = vpack.c.b16 %v827, %v826
  %v937 = vpack.c.b16 %v829, %v828
  %v938 = vpack.c.b16 %v831, %v830
  %v939 = vpack.c.b16 %v833, %v832
  %v940 = vpack.c.b16 %v835, %v834
  %v941 = vpack.c.b16 %v837, %v836
  %v942 = vpack.c.b16 %v839, %v838
  %v943 = vpack.c.b16 %v841, %v840
  %v944 = vpack.c.b16 %v843, %v842
  %v945 = vpack.c.b16 %v845, %v844
  %v946 = vpack.c.b16 %v847, %v846
  %v947 = vpack.c.b16 %v849, %v848
  %v948 = vpack.c.b16 %v851, %v850
  %v949 = vpack.c.b16 %v853, %v852
  %v950 = vpack.c.b16 %v855, %v854
  %v951 = vpack.c.b16 %v857, %v856
  %v952 = vpack.c.b16 %v859, %v858
  %v953 = vpack.c.b16 %v861, %v860
  %v954 = vpack.c.b16 %v863, %v862
  %v955 = vpack.c.b16 %v865, %v864
  %v956 = vpack.c.b16 %v867, %v866
  %v957 = vpack.c.b16 %v869, %v868
  %v958 = vpack.c.b16 %v871, %v870
  %v959 = vpack.c.b16 %v873, %v872
  %v960 = vpack.c.b16 %v875, %v874
  %v961 = vpack.c.b16 %v877, %v876
  %v962 = vpack.c.b16 %v879, %v878
  %v963 = vpack.c.b16 %v881, %v880
  %v964 = vpack.c.b16 %v883, %v882
  %v965 = vpack.c.b16 %v885, %v884
  %v966 = vpack.c.b16 %v887, %v886
  %v967 = vpack.c.b16 %v889, %v888
  %v968 = vpack.c.b16 %v891, %v890
  %v969 = vpack.c.b16 %v893, %v892
  %v970 = vpack.c.b16 %v895, %v894
  %v971 = vpack.c.b16 %v897, %v896
  %v972 = vpack.c.b16 %v899, %v898
  %v973 = vpack.c.b16 %v901, %v900
  %1046 = vmatprep.subr.bf16.mxu0 0
  %1047 = vmatpush1.bf16.msra.mxu0 %v902
  %1048 = vmatprep.subr.bf16.mxu0 0
  %1049 = vmatpush1.bf16.msra.mxu0 %v903
  %1050 = vmatprep.subr.bf16.mxu0 0
  %1051 = vmatpush1.bf16.msra.mxu0 %v904
  %1052 = vmatprep.subr.bf16.mxu0 0
  %1053 = vmatpush1.bf16.msra.mxu0 %v905
  %1054 = vmatprep.subr.bf16.mxu0 0
  %1055 = vmatpush1.bf16.msra.mxu0 %v906
  %1056 = vmatprep.subr.bf16.mxu0 0
  %1057 = vmatpush1.bf16.msra.mxu0 %v907
  %1058 = vmatprep.subr.bf16.mxu0 0
  %1059 = vmatpush1.bf16.msra.mxu0 %v908
  %1060 = vmatprep.subr.bf16.mxu0 0
  %1061 = vmatpush1.bf16.msra.mxu0 %v909
  %1062 = vmatprep.subr.bf16.mxu0 0
  %1063 = vmatpush1.bf16.msra.mxu0 %v910
  %1064 = vmatprep.subr.bf16.mxu0 0
  %1065 = vmatpush1.bf16.msra.mxu0 %v911
  %1066 = vmatprep.subr.bf16.mxu0 0
  %1067 = vmatpush1.bf16.msra.mxu0 %v912
  %1068 = vmatprep.subr.bf16.mxu0 0
  %1069 = vmatpush1.bf16.msra.mxu0 %v913
  %1070 = vmatprep.subr.bf16.mxu0 0
  %1071 = vmatpush1.bf16.msra.mxu0 %v914
  %1072 = vmatprep.subr.bf16.mxu0 0
  %1073 = vmatpush1.bf16.msra.mxu0 %v915
  %1074 = vmatprep.subr.bf16.mxu0 0
  %1075 = vmatpush1.bf16.msra.mxu0 %v916
  %1076 = vmatprep.subr.bf16.mxu0 0
  %1077 = vmatpush1.bf16.msra.mxu0 %v917
  %1078 = vmatprep.mubr.bf16.mxu0 %v471
  %1079 = vmatmul.mubr.bf16.gmra.mrb[0].mxu0 %v470
  %v1080 = vpop.f32.mrb[0].mxu0
  %v1081 = vadd.f32 %v244, %v1080
  %v1082 = vpop.f32.mrb[0].mxu0
  %v1083 = vpop.f32.mrb[0].mxu0
  %v1084 = vadd.f32 %v244, %v1083
  %v1085 = vpop.f32.mrb[0].mxu0
  %1086 = vmatprep.mubr.bf16.mxu0 %v480
  %1087 = vmatmul.mubr.bf16.gmra.mrb[0].mxu0 %v479
  %v1088 = vpop.f32.mrb[0].mxu0
  %v1089 = vadd.f32 %v244, %v1088
  %v1090 = vpop.f32.mrb[0].mxu0
  %v1091 = vpop.f32.mrb[0].mxu0
  %v1092 = vadd.f32 %v244, %v1091
  %v1093 = vpop.f32.mrb[0].mxu0
  %1094 = vmatprep.mubr.bf16.mxu0 %v489
  %1095 = vmatmul.mubr.bf16.gmra.mrb[0].mxu0 %v488
  %v1096 = vpop.f32.mrb[0].mxu0
  %v1097 = vadd.f32 %v244, %v1096
  %v1098 = vpop.f32.mrb[0].mxu0
  %v1099 = vpop.f32.mrb[0].mxu0
  %v1100 = vadd.f32 %v244, %v1099
  %v1101 = vpop.f32.mrb[0].mxu0
  %1102 = vmatprep.mubr.bf16.mxu0 %v498
  %1103 = vmatmul.mubr.bf16.gmra.mrb[0].mxu0 %v497
  %v1104 = vpop.f32.mrb[0].mxu0
  %v1105 = vadd.f32 %v244, %v1104
  %v1106 = vpop.f32.mrb[0].mxu0
  %v1107 = vpop.f32.mrb[0].mxu0
  %v1108 = vadd.f32 %v244, %v1107
  %v1109 = vpop.f32.mrb[0].mxu0
  %1110 = vmatprep.mubr.bf16.mxu0 %v507
  %1111 = vmatmul.mubr.bf16.gmra.mrb[0].mxu0 %v506
  %v1112 = vpop.f32.mrb[0].mxu0
  %v1113 = vadd.f32 %v244, %v1112
  %v1114 = vpop.f32.mrb[0].mxu0
  %v1115 = vpop.f32.mrb[0].mxu0
  %v1116 = vadd.f32 %v244, %v1115
  %v1117 = vpop.f32.mrb[0].mxu0
  %1118 = vmatprep.mubr.bf16.mxu0 %v516
  %1119 = vmatmul.mubr.bf16.gmra.mrb[0].mxu0 %v515
  %v1120 = vpop.f32.mrb[0].mxu0
  %v1121 = vadd.f32 %v244, %v1120
  %v1122 = vpop.f32.mrb[0].mxu0
  %v1123 = vpop.f32.mrb[0].mxu0
  %v1124 = vadd.f32 %v244, %v1123
  %v1125 = vpop.f32.mrb[0].mxu0
  %1126 = vmatprep.mubr.bf16.mxu0 %v525
  %1127 = vmatmul.mubr.bf16.gmra.mrb[0].mxu0 %v524
  %v1128 = vpop.f32.mrb[0].mxu0
  %v1129 = vadd.f32 %v244, %v1128
  %v1130 = vpop.f32.mrb[0].mxu0
  %v1131 = vpop.f32.mrb[0].mxu0
  %v1132 = vadd.f32 %v244, %v1131
  %v1133 = vpop.f32.mrb[0].mxu0
  %1134 = vmatprep.mubr.bf16.mxu0 %v534
  %1135 = vmatmul.mubr.bf16.gmra.mrb[0].mxu0 %v533
  %v1136 = vpop.f32.mrb[0].mxu0
  %v1137 = vadd.f32 %v244, %v1136
  %v1138 = vpop.f32.mrb[0].mxu0
  %v1139 = vpop.f32.mrb[0].mxu0
  %v1140 = vadd.f32 %v244, %v1139
  %v1141 = vpop.f32.mrb[0].mxu0
  %1142 = vdwg.mxu0
  %1143 = vmatprep.subr.bf16.mxu0 0
  %1144 = vmatpush1.bf16.msra.mxu0 %v918
  %1145 = vmatprep.subr.bf16.mxu0 0
  %1146 = vmatpush1.bf16.msra.mxu0 %v919
  %1147 = vmatprep.subr.bf16.mxu0 0
  %1148 = vmatpush1.bf16.msra.mxu0 %v920
  %1149 = vmatprep.subr.bf16.mxu0 0
  %1150 = vmatpush1.bf16.msra.mxu0 %v921
  %1151 = vmatprep.subr.bf16.mxu0 0
  %1152 = vmatpush1.bf16.msra.mxu0 %v922
  %1153 = vmatprep.subr.bf16.mxu0 0
  %1154 = vmatpush1.bf16.msra.mxu0 %v923
  %1155 = vmatprep.subr.bf16.mxu0 0
  %1156 = vmatpush1.bf16.msra.mxu0 %v924
  %1157 = vmatprep.subr.bf16.mxu0 0
  %1158 = vmatpush1.bf16.msra.mxu0 %v925
  %1159 = vmatprep.subr.bf16.mxu0 0
  %1160 = vmatpush1.bf16.msra.mxu0 %v926
  %1161 = vmatprep.subr.bf16.mxu0 0
  %1162 = vmatpush1.bf16.msra.mxu0 %v927
  %1163 = vmatprep.subr.bf16.mxu0 0
  %1164 = vmatpush1.bf16.msra.mxu0 %v928
  %1165 = vmatprep.subr.bf16.mxu0 0
  %1166 = vmatpush1.bf16.msra.mxu0 %v929
  %1167 = vmatprep.subr.bf16.mxu0 0
  %1168 = vmatpush1.bf16.msra.mxu0 %v930
  %1169 = vmatprep.subr.bf16.mxu0 0
  %1170 = vmatpush1.bf16.msra.mxu0 %v931
  %1171 = vmatprep.subr.bf16.mxu0 0
  %1172 = vmatpush1.bf16.msra.mxu0 %v932
  %1173 = vmatprep.subr.bf16.mxu0 0
  %1174 = vmatpush1.bf16.msra.mxu0 %v933
  %1175 = vmatprep.mubr.bf16.mxu0 %v473
  %1176 = vmatmul.mubr.bf16.gmra.mrb[0].mxu0 %v472
  %v1177 = vpop.f32.mrb[0].mxu0
  %v1178 = vadd.f32 %v1081, %v1177
  %v1179 = vpop.f32.mrb[0].mxu0
  %v1180 = vpop.f32.mrb[0].mxu0
  %v1181 = vadd.f32 %v1084, %v1180
  %v1182 = vpop.f32.mrb[0].mxu0
  %1183 = vmatprep.mubr.bf16.mxu0 %v482
  %1184 = vmatmul.mubr.bf16.gmra.mrb[0].mxu0 %v481
  %v1185 = vpop.f32.mrb[0].mxu0
  %v1186 = vadd.f32 %v1089, %v1185
  %v1187 = vpop.f32.mrb[0].mxu0
  %v1188 = vpop.f32.mrb[0].mxu0
  %v1189 = vadd.f32 %v1092, %v1188
  %v1190 = vpop.f32.mrb[0].mxu0
  %1191 = vmatprep.mubr.bf16.mxu0 %v491
  %1192 = vmatmul.mubr.bf16.gmra.mrb[0].mxu0 %v490
  %v1193 = vpop.f32.mrb[0].mxu0
  %v1194 = vadd.f32 %v1097, %v1193
  %v1195 = vpop.f32.mrb[0].mxu0
  %v1196 = vpop.f32.mrb[0].mxu0
  %v1197 = vadd.f32 %v1100, %v1196
  %v1198 = vpop.f32.mrb[0].mxu0
  %1199 = vmatprep.mubr.bf16.mxu0 %v500
  %1200 = vmatmul.mubr.bf16.gmra.mrb[0].mxu0 %v499
  %v1201 = vpop.f32.mrb[0].mxu0
  %v1202 = vadd.f32 %v1105, %v1201
  %v1203 = vpop.f32.mrb[0].mxu0
  %v1204 = vpop.f32.mrb[0].mxu0
  %v1205 = vadd.f32 %v1108, %v1204
  %v1206 = vpop.f32.mrb[0].mxu0
  %1207 = vmatprep.mubr.bf16.mxu0 %v509
  %1208 = vmatmul.mubr.bf16.gmra.mrb[0].mxu0 %v508
  %v1209 = vpop.f32.mrb[0].mxu0
  %v1210 = vadd.f32 %v1113, %v1209
  %v1211 = vpop.f32.mrb[0].mxu0
  %v1212 = vpop.f32.mrb[0].mxu0
  %v1213 = vadd.f32 %v1116, %v1212
  %v1214 = vpop.f32.mrb[0].mxu0
  %1215 = vmatprep.mubr.bf16.mxu0 %v518
  %1216 = vmatmul.mubr.bf16.gmra.mrb[0].mxu0 %v517
  %v1217 = vpop.f32.mrb[0].mxu0
  %v1218 = vadd.f32 %v1121, %v1217
  %v1219 = vpop.f32.mrb[0].mxu0
  %v1220 = vpop.f32.mrb[0].mxu0
  %v1221 = vadd.f32 %v1124, %v1220
  %v1222 = vpop.f32.mrb[0].mxu0
  %1223 = vmatprep.mubr.bf16.mxu0 %v527
  %1224 = vmatmul.mubr.bf16.gmra.mrb[0].mxu0 %v526
  %v1225 = vpop.f32.mrb[0].mxu0
  %v1226 = vadd.f32 %v1129, %v1225
  %v1227 = vpop.f32.mrb[0].mxu0
  %v1228 = vpop.f32.mrb[0].mxu0
  %v1229 = vadd.f32 %v1132, %v1228
  %v1230 = vpop.f32.mrb[0].mxu0
  %1231 = vmatprep.mubr.bf16.mxu0 %v536
  %1232 = vmatmul.mubr.bf16.gmra.mrb[0].mxu0 %v535
  %v1233 = vpop.f32.mrb[0].mxu0
  %v1234 = vadd.f32 %v1137, %v1233
  %v1235 = vpop.f32.mrb[0].mxu0
  %v1236 = vpop.f32.mrb[0].mxu0
  %v1237 = vadd.f32 %v1140, %v1236
  %v1238 = vpop.f32.mrb[0].mxu0
  %1239 = vdwg.mxu0
  %1240 = vmatprep.subr.bf16.mxu0 0
  %1241 = vmatpush1.bf16.msra.mxu0 %v934
  %1242 = vmatprep.subr.bf16.mxu0 0
  %1243 = vmatpush1.bf16.msra.mxu0 %v935
  %1244 = vmatprep.subr.bf16.mxu0 0
  %1245 = vmatpush1.bf16.msra.mxu0 %v936
  %1246 = vmatprep.subr.bf16.mxu0 0
  %1247 = vmatpush1.bf16.msra.mxu0 %v937
  %1248 = vmatprep.subr.bf16.mxu0 0
  %1249 = vmatpush1.bf16.msra.mxu0 %v938
  %1250 = vmatprep.subr.bf16.mxu0 0
  %1251 = vmatpush1.bf16.msra.mxu0 %v939
  %1252 = vmatprep.subr.bf16.mxu0 0
  %1253 = vmatpush1.bf16.msra.mxu0 %v940
  %1254 = vmatprep.subr.bf16.mxu0 0
  %1255 = vmatpush1.bf16.msra.mxu0 %v941
  %1256 = vmatprep.subr.bf16.mxu0 0
  %1257 = vmatpush1.bf16.msra.mxu0 %v942
  %1258 = vmatprep.subr.bf16.mxu0 0
  %1259 = vmatpush1.bf16.msra.mxu0 %v943
  %1260 = vmatprep.subr.bf16.mxu0 0
  %1261 = vmatpush1.bf16.msra.mxu0 %v944
  %1262 = vmatprep.subr.bf16.mxu0 0
  %1263 = vmatpush1.bf16.msra.mxu0 %v945
  %1264 = vmatprep.subr.bf16.mxu0 0
  %1265 = vmatpush1.bf16.msra.mxu0 %v946
  %1266 = vmatprep.subr.bf16.mxu0 0
  %1267 = vmatpush1.bf16.msra.mxu0 %v947
  %1268 = vmatprep.subr.bf16.mxu0 0
  %1269 = vmatpush1.bf16.msra.mxu0 %v948
  %1270 = vmatprep.subr.bf16.mxu0 0
  %1271 = vmatpush1.bf16.msra.mxu0 %v949
  %1272 = vmatprep.mubr.bf16.mxu0 %v475
  %1273 = vmatmul.mubr.bf16.gmra.mrb[0].mxu0 %v474
  %v1274 = vpop.f32.mrb[0].mxu0
  %v1275 = vadd.f32 %v1178, %v1274
  %v1276 = vpop.f32.mrb[0].mxu0
  %v1277 = vpop.f32.mrb[0].mxu0
  %v1278 = vadd.f32 %v1181, %v1277
  %v1279 = vpop.f32.mrb[0].mxu0
  %1280 = vmatprep.mubr.bf16.mxu0 %v484
  %1281 = vmatmul.mubr.bf16.gmra.mrb[0].mxu0 %v483
  %v1282 = vpop.f32.mrb[0].mxu0
  %v1283 = vadd.f32 %v1186, %v1282
  %v1284 = vpop.f32.mrb[0].mxu0
  %v1285 = vpop.f32.mrb[0].mxu0
  %v1286 = vadd.f32 %v1189, %v1285
  %v1287 = vpop.f32.mrb[0].mxu0
  %1288 = vmatprep.mubr.bf16.mxu0 %v493
  %1289 = vmatmul.mubr.bf16.gmra.mrb[0].mxu0 %v492
  %v1290 = vpop.f32.mrb[0].mxu0
  %v1291 = vadd.f32 %v1194, %v1290
  %v1292 = vpop.f32.mrb[0].mxu0
  %v1293 = vpop.f32.mrb[0].mxu0
  %v1294 = vadd.f32 %v1197, %v1293
  %v1295 = vpop.f32.mrb[0].mxu0
  %1296 = vmatprep.mubr.bf16.mxu0 %v502
  %1297 = vmatmul.mubr.bf16.gmra.mrb[0].mxu0 %v501
  %v1298 = vpop.f32.mrb[0].mxu0
  %v1299 = vadd.f32 %v1202, %v1298
  %v1300 = vpop.f32.mrb[0].mxu0
  %v1301 = vpop.f32.mrb[0].mxu0
  %v1302 = vadd.f32 %v1205, %v1301
  %v1303 = vpop.f32.mrb[0].mxu0
  %1304 = vmatprep.mubr.bf16.mxu0 %v511
  %1305 = vmatmul.mubr.bf16.gmra.mrb[0].mxu0 %v510
  %v1306 = vpop.f32.mrb[0].mxu0
  %v1307 = vadd.f32 %v1210, %v1306
  %v1308 = vpop.f32.mrb[0].mxu0
  %v1309 = vpop.f32.mrb[0].mxu0
  %v1310 = vadd.f32 %v1213, %v1309
  %v1311 = vpop.f32.mrb[0].mxu0
  %1312 = vmatprep.mubr.bf16.mxu0 %v520
  %1313 = vmatmul.mubr.bf16.gmra.mrb[0].mxu0 %v519
  %v1314 = vpop.f32.mrb[0].mxu0
  %v1315 = vadd.f32 %v1218, %v1314
  %v1316 = vpop.f32.mrb[0].mxu0
  %v1317 = vpop.f32.mrb[0].mxu0
  %v1318 = vadd.f32 %v1221, %v1317
  %v1319 = vpop.f32.mrb[0].mxu0
  %1320 = vmatprep.mubr.bf16.mxu0 %v529
  %1321 = vmatmul.mubr.bf16.gmra.mrb[0].mxu0 %v528
  %v1322 = vpop.f32.mrb[0].mxu0
  %v1323 = vadd.f32 %v1226, %v1322
  %v1324 = vpop.f32.mrb[0].mxu0
  %v1325 = vpop.f32.mrb[0].mxu0
  %v1326 = vadd.f32 %v1229, %v1325
  %v1327 = vpop.f32.mrb[0].mxu0
  %1328 = vmatprep.mubr.bf16.mxu0 %v538
  %1329 = vmatmul.mubr.bf16.gmra.mrb[0].mxu0 %v537
  %v1330 = vpop.f32.mrb[0].mxu0
  %v1331 = vadd.f32 %v1234, %v1330
  %v1332 = vpop.f32.mrb[0].mxu0
  %v1333 = vpop.f32.mrb[0].mxu0
  %v1334 = vadd.f32 %v1237, %v1333
  %v1335 = vpop.f32.mrb[0].mxu0
  %1336 = vdwg.mxu0
  %1337 = vmatprep.subr.bf16.mxu0 0
  %1338 = vmatpush1.bf16.msra.mxu0 %v950
  %1339 = vmatprep.subr.bf16.mxu0 0
  %1340 = vmatpush1.bf16.msra.mxu0 %v951
  %1341 = vmatprep.subr.bf16.mxu0 0
  %1342 = vmatpush1.bf16.msra.mxu0 %v952
  %1343 = vmatprep.subr.bf16.mxu0 0
  %1344 = vmatpush1.bf16.msra.mxu0 %v953
  %1345 = vmatprep.subr.bf16.mxu0 0
  %1346 = vmatpush1.bf16.msra.mxu0 %v954
  %1347 = vmatprep.subr.bf16.mxu0 0
  %1348 = vmatpush1.bf16.msra.mxu0 %v955
  %1349 = vmatprep.subr.bf16.mxu0 0
  %1350 = vmatpush1.bf16.msra.mxu0 %v956
  %1351 = vmatprep.subr.bf16.mxu0 0
  %1352 = vmatpush1.bf16.msra.mxu0 %v957
  %1353 = vmatprep.subr.bf16.mxu0 0
  %1354 = vmatpush1.bf16.msra.mxu0 %v958
  %1355 = vmatprep.subr.bf16.mxu0 0
  %1356 = vmatpush1.bf16.msra.mxu0 %v959
  %1357 = vmatprep.subr.bf16.mxu0 0
  %1358 = vmatpush1.bf16.msra.mxu0 %v960
  %1359 = vmatprep.subr.bf16.mxu0 0
  %1360 = vmatpush1.bf16.msra.mxu0 %v961
  %1361 = vmatprep.subr.bf16.mxu0 0
  %1362 = vmatpush1.bf16.msra.mxu0 %v962
  %1363 = vmatprep.subr.bf16.mxu0 0
  %1364 = vmatpush1.bf16.msra.mxu0 %v963
  %1365 = vmatprep.subr.bf16.mxu0 0
  %1366 = vmatpush1.bf16.msra.mxu0 %v964
  %1367 = vmatprep.subr.bf16.mxu0 0
  %1368 = vmatpush1.bf16.msra.mxu0 %v965
  %1369 = vmatprep.mubr.bf16.mxu0 %v477
  %1370 = vmatmul.mubr.bf16.gmra.mrb[0].mxu0 %v476
  %v1371 = vpop.f32.mrb[0].mxu0
  %v1372 = vadd.f32 %v1275, %v1371
  %v1373 = vpop.f32.mrb[0].mxu0
  %v1374 = vpop.f32.mrb[0].mxu0
  %v1375 = vadd.f32 %v1278, %v1374
  %v1376 = vpop.f32.mrb[0].mxu0
  %1377 = vmatprep.mubr.bf16.mxu0 %v486
  %1378 = vmatmul.mubr.bf16.gmra.mrb[0].mxu0 %v485
  %v1379 = vpop.f32.mrb[0].mxu0
  %v1380 = vadd.f32 %v1283, %v1379
  %v1381 = vpop.f32.mrb[0].mxu0
  %v1382 = vpop.f32.mrb[0].mxu0
  %v1383 = vadd.f32 %v1286, %v1382
  %v1384 = vpop.f32.mrb[0].mxu0
  %1385 = vmatprep.mubr.bf16.mxu0 %v495
  %1386 = vmatmul.mubr.bf16.gmra.mrb[0].mxu0 %v494
  %v1387 = vpop.f32.mrb[0].mxu0
  %v1388 = vadd.f32 %v1291, %v1387
  %v1389 = vpop.f32.mrb[0].mxu0
  %v1390 = vpop.f32.mrb[0].mxu0
  %v1391 = vadd.f32 %v1294, %v1390
  %v1392 = vpop.f32.mrb[0].mxu0
  %1393 = vmatprep.mubr.bf16.mxu0 %v504
  %1394 = vmatmul.mubr.bf16.gmra.mrb[0].mxu0 %v503
  %v1395 = vpop.f32.mrb[0].mxu0
  %v1396 = vadd.f32 %v1299, %v1395
  %v1397 = vpop.f32.mrb[0].mxu0
  %v1398 = vpop.f32.mrb[0].mxu0
  %v1399 = vadd.f32 %v1302, %v1398
  %v1400 = vpop.f32.mrb[0].mxu0
  %1401 = vmatprep.mubr.bf16.mxu0 %v513
  %1402 = vmatmul.mubr.bf16.gmra.mrb[0].mxu0 %v512
  %v1403 = vpop.f32.mrb[0].mxu0
  %v1404 = vadd.f32 %v1307, %v1403
  %v1405 = vpop.f32.mrb[0].mxu0
  %v1406 = vpop.f32.mrb[0].mxu0
  %v1407 = vadd.f32 %v1310, %v1406
  %v1408 = vpop.f32.mrb[0].mxu0
  %1409 = vmatprep.mubr.bf16.mxu0 %v522
  %1410 = vmatmul.mubr.bf16.gmra.mrb[0].mxu0 %v521
  %v1411 = vpop.f32.mrb[0].mxu0
  %v1412 = vadd.f32 %v1315, %v1411
  %v1413 = vpop.f32.mrb[0].mxu0
  %v1414 = vpop.f32.mrb[0].mxu0
  %v1415 = vadd.f32 %v1318, %v1414
  %v1416 = vpop.f32.mrb[0].mxu0
  %1417 = vmatprep.mubr.bf16.mxu0 %v531
  %1418 = vmatmul.mubr.bf16.gmra.mrb[0].mxu0 %v530
  %v1419 = vpop.f32.mrb[0].mxu0
  %v1420 = vadd.f32 %v1323, %v1419
  %v1421 = vpop.f32.mrb[0].mxu0
  %v1422 = vpop.f32.mrb[0].mxu0
  %v1423 = vadd.f32 %v1326, %v1422
  %v1424 = vpop.f32.mrb[0].mxu0
  %1425 = vmatprep.mubr.bf16.mxu0 %v540
  %1426 = vmatmul.mubr.bf16.gmra.mrb[0].mxu0 %v539
  %v1427 = vpop.f32.mrb[0].mxu0
  %v1428 = vadd.f32 %v1331, %v1427
  %v1429 = vpop.f32.mrb[0].mxu0
  %v1430 = vpop.f32.mrb[0].mxu0
  %v1431 = vadd.f32 %v1334, %v1430
  %v1432 = vpop.f32.mrb[0].mxu0
  %1433 = vdwg.mxu0
  %1434 = vmatprep.subr.bf16.mxu0 0
  %1435 = vmatpush1.bf16.msra.mxu0 %v966
  %1436 = vmatprep.subr.bf16.mxu0 0
  %1437 = vmatpush1.bf16.msra.mxu0 %v967
  %1438 = vmatprep.subr.bf16.mxu0 0
  %1439 = vmatpush1.bf16.msra.mxu0 %v968
  %1440 = vmatprep.subr.bf16.mxu0 0
  %1441 = vmatpush1.bf16.msra.mxu0 %v969
  %1442 = vmatprep.subr.bf16.mxu0 0
  %1443 = vmatpush1.bf16.msra.mxu0 %v970
  %1444 = vmatprep.subr.bf16.mxu0 0
  %1445 = vmatpush1.bf16.msra.mxu0 %v971
  %1446 = vmatprep.subr.bf16.mxu0 0
  %1447 = vmatpush1.bf16.msra.mxu0 %v972
  %1448 = vmatprep.subr.bf16.mxu0 0
  %1449 = vmatpush1.bf16.msra.mxu0 %v973
  %1450 = vmatprep.subr.bf16.mxu0 0
  %1451 = vmatpush1.bf16.msra.mxu0 0
  %1452 = vmatprep.subr.bf16.mxu0 0
  %1453 = vmatpush1.bf16.msra.mxu0 0
  %1454 = vmatprep.subr.bf16.mxu0 0
  %1455 = vmatpush1.bf16.msra.mxu0 0
  %1456 = vmatprep.subr.bf16.mxu0 0
  %1457 = vmatpush1.bf16.msra.mxu0 0
  %1458 = vmatprep.subr.bf16.mxu0 0
  %1459 = vmatpush1.bf16.msra.mxu0 0
  %1460 = vmatprep.subr.bf16.mxu0 0
  %1461 = vmatpush1.bf16.msra.mxu0 0
  %1462 = vmatprep.subr.bf16.mxu0 0
  %1463 = vmatpush1.bf16.msra.mxu0 0
  %1464 = vmatprep.subr.bf16.mxu0 0
  %1465 = vmatpush1.bf16.msra.mxu0 0
  %1466 = vmatprep.mubr.bf16.mxu0 0
  %1467 = vmatmul.mubr.bf16.gmra.mrb[0].mxu0 %v478
  %v1468 = vpop.f32.mrb[0].mxu0
  %v1469 = vadd.f32 %v1372, %v1468
  %v1470 = vpop.f32.mrb[0].mxu0
  %v1471 = vpop.f32.mrb[0].mxu0
  %v1472 = vadd.f32 %v1375, %v1471
  %v1473 = vpop.f32.mrb[0].mxu0
  %1474 = vmatprep.mubr.bf16.mxu0 0
  %1475 = vmatmul.mubr.bf16.gmra.mrb[0].mxu0 %v487
  %v1476 = vpop.f32.mrb[0].mxu0
  %v1477 = vadd.f32 %v1380, %v1476
  %v1478 = vpop.f32.mrb[0].mxu0
  %v1479 = vpop.f32.mrb[0].mxu0
  %v1480 = vadd.f32 %v1383, %v1479
  %v1481 = vpop.f32.mrb[0].mxu0
  %1482 = vmatprep.mubr.bf16.mxu0 0
  %1483 = vmatmul.mubr.bf16.gmra.mrb[0].mxu0 %v496
  %v1484 = vpop.f32.mrb[0].mxu0
  %v1485 = vadd.f32 %v1388, %v1484
  %v1486 = vpop.f32.mrb[0].mxu0
  %v1487 = vpop.f32.mrb[0].mxu0
  %v1488 = vadd.f32 %v1391, %v1487
  %v1489 = vpop.f32.mrb[0].mxu0
  %1490 = vmatprep.mubr.bf16.mxu0 0
  %1491 = vmatmul.mubr.bf16.gmra.mrb[0].mxu0 %v505
  %v1492 = vpop.f32.mrb[0].mxu0
  %v1493 = vadd.f32 %v1396, %v1492
  %v1494 = vpop.f32.mrb[0].mxu0
  %v1495 = vpop.f32.mrb[0].mxu0
  %v1496 = vadd.f32 %v1399, %v1495
  %v1497 = vpop.f32.mrb[0].mxu0
  %1498 = vmatprep.mubr.bf16.mxu0 0
  %1499 = vmatmul.mubr.bf16.gmra.mrb[0].mxu0 %v514
  %v1500 = vpop.f32.mrb[0].mxu0
  %v1501 = vadd.f32 %v1404, %v1500
  %v1502 = vpop.f32.mrb[0].mxu0
  %v1503 = vpop.f32.mrb[0].mxu0
  %v1504 = vadd.f32 %v1407, %v1503
  %v1505 = vpop.f32.mrb[0].mxu0
  %1506 = vmatprep.mubr.bf16.mxu0 0
  %1507 = vmatmul.mubr.bf16.gmra.mrb[0].mxu0 %v523
  %v1508 = vpop.f32.mrb[0].mxu0
  %v1509 = vadd.f32 %v1412, %v1508
  %v1510 = vpop.f32.mrb[0].mxu0
  %v1511 = vpop.f32.mrb[0].mxu0
  %v1512 = vadd.f32 %v1415, %v1511
  %v1513 = vpop.f32.mrb[0].mxu0
  %1514 = vmatprep.mubr.bf16.mxu0 0
  %1515 = vmatmul.mubr.bf16.gmra.mrb[0].mxu0 %v532
  %v1516 = vpop.f32.mrb[0].mxu0
  %v1517 = vadd.f32 %v1420, %v1516
  %v1518 = vpop.f32.mrb[0].mxu0
  %v1519 = vpop.f32.mrb[0].mxu0
  %v1520 = vadd.f32 %v1423, %v1519
  %v1521 = vpop.f32.mrb[0].mxu0
  %1522 = vmatprep.mubr.bf16.mxu0 0
  %1523 = vmatmul.mubr.bf16.gmra.mrb[0].mxu0 %v541
  %v1524 = vpop.f32.mrb[0].mxu0
  %v1525 = vadd.f32 %v1428, %v1524
  %v1526 = vpop.f32.mrb[0].mxu0
  %v1527 = vpop.f32.mrb[0].mxu0
  %v1528 = vadd.f32 %v1431, %v1527
  %v1529 = vpop.f32.mrb[0].mxu0
  %1530 = vdwg.mxu0
  %v1531 = vmax.f32 %v1469, 0.0
  %v1532 = vmax.f32 %v1472, 0.0
  %v1533 = vmax.f32 %v1477, 0.0
  %v1534 = vmax.f32 %v1480, 0.0
  %v1535 = vmax.f32 %v1485, 0.0
  %v1536 = vmax.f32 %v1488, 0.0
  %v1537 = vmax.f32 %v1493, 0.0
  %v1538 = vmax.f32 %v1496, 0.0
  %v1539 = vmax.f32 %v1501, 0.0
  %v1540 = vmax.f32 %v1504, 0.0
  %v1541 = vmax.f32 %v1509, 0.0
  %v1542 = vmax.f32 %v1512, 0.0
  %v1543 = vmax.f32 %v1517, 0.0
  %v1544 = vmax.f32 %v1520, 0.0
  %v1545 = vmax.f32 %v1525, 0.0
  %v1546 = vmax.f32 %v1528, 0.0
  %v1547 = vpack.c.bf16 %v1532, %v1531
  %v1548 = vpack.c.bf16 %v1534, %v1533
  %v1549 = vpack.c.bf16 %v1536, %v1535
  %v1550 = vpack.c.bf16 %v1538, %v1537
  %v1551 = vpack.c.bf16 %v1540, %v1539
  %v1552 = vpack.c.bf16 %v1542, %v1541
  %v1553 = vpack.c.bf16 %v1544, %v1543
  %v1554 = vpack.c.bf16 %v1546, %v1545
  %v1563 = vunpack.c.l.b16 %v1547
  %v1564 = vunpack.c.h.b16 %v1547
  %v1565 = vunpack.c.l.b16 %v1548
  %v1566 = vunpack.c.h.b16 %v1548
  %v1567 = vunpack.c.l.b16 %v1549
  %v1568 = vunpack.c.h.b16 %v1549
  %v1569 = vunpack.c.l.b16 %v1550
  %v1570 = vunpack.c.h.b16 %v1550
  %v1571 = vunpack.c.l.b16 %v1551
  %v1572 = vunpack.c.h.b16 %v1551
  %v1573 = vunpack.c.l.b16 %v1552
  %v1574 = vunpack.c.h.b16 %v1552
  %v1575 = vunpack.c.l.b16 %v1553
  %v1576 = vunpack.c.h.b16 %v1553
  %v1577 = vunpack.c.l.b16 %v1554
  %v1578 = vunpack.c.h.b16 %v1554
  %v1579 = vpack.c.b16 %v1563, %v1563
  %v1580 = vpack.c.b16 %v1564, %v1564
  %v1581 = vpack.c.b16 %v1565, %v1565
  %v1582 = vpack.c.b16 %v1566, %v1566
  %v1583 = vpack.c.b16 %v1567, %v1567
  %v1584 = vpack.c.b16 %v1568, %v1568
  %v1585 = vpack.c.b16 %v1569, %v1569
  %v1586 = vpack.c.b16 %v1570, %v1570
  %v1587 = vpack.c.b16 %v1571, %v1571
  %v1588 = vpack.c.b16 %v1572, %v1572
  %v1589 = vpack.c.b16 %v1573, %v1573
  %v1590 = vpack.c.b16 %v1574, %v1574
  %v1591 = vpack.c.b16 %v1575, %v1575
  %v1592 = vpack.c.b16 %v1576, %v1576
  %v1593 = vpack.c.b16 %v1577, %v1577
  %v1594 = vpack.c.b16 %v1578, %v1578
  %1611 = vst [vmem:[%s3] sm:$0xf] %v1579
  %1612 = vst [vmem:[%s3 + $0x4] sm:$0xf] %v1580
  %1613 = vst [vmem:[%s3 + $0x8] sm:$0xf] %v1581
  %1614 = vst [vmem:[%s3 + $0xc] sm:$0xf] %v1582
  %1615 = vst [vmem:[%s3 + $0x10] sm:$0xf] %v1583
  %1616 = vst [vmem:[%s3 + $0x14] sm:$0xf] %v1584
  %1617 = vst [vmem:[%s3 + $0x18] sm:$0xf] %v1585
  %1618 = vst [vmem:[%s3 + $0x1c] sm:$0xf] %v1586
  %1619 = vst [vmem:[%s3 + $0x20] sm:$0xf] %v1587
  %1620 = vst [vmem:[%s3 + $0x24] sm:$0xf] %v1588
  %1621 = vst [vmem:[%s3 + $0x28] sm:$0xf] %v1589
  %1622 = vst [vmem:[%s3 + $0x2c] sm:$0xf] %v1590
  %1623 = vst [vmem:[%s3 + $0x30] sm:$0xf] %v1591
  %1624 = vst [vmem:[%s3 + $0x34] sm:$0xf] %v1592
  %1625 = vst [vmem:[%s3 + $0x38] sm:$0xf] %v1593
  %1626 = vst [vmem:[%s3 + $0x3c] sm:$0xf] %v1594
  // Predicated region
  $region14: #{lst_encoder4_forward.16} parent=0 // pred_check
    _
  $region15: #{lst_encoder4_forward.16} parent=0 // pred_check_branch
    %1628 = sbr.rel (0) target = $region17
  $region16: #{lst_encoder4_forward.16} parent=0 // pred_region
    _
  $region17: #{lst_encoder4_forward.16} parent=0 // pred_fallthru
    _
  // Predicated region
  $region18: #{lst_encoder4_forward.16} parent=0 // pred_check
    _
  $region19: #{lst_encoder4_forward.16} parent=0 // pred_check_branch
    %1630 = sbr.rel (0) target = $region21
  $region20: #{lst_encoder4_forward.16} parent=0 // pred_region
    _
  $region21: #{lst_encoder4_forward.16} parent=0 // pred_fallthru
    _

// kernel: lst_encoder4_forward.18
$region0: #{lst_encoder4_forward.18}
  #allocation0 [shape = 'u32[]', space=smem, size = 0x4, offset = 0x4, fixed_abs, tag = 'smem constant byte address 0x4 - core index']
  #allocation1 [shape = 'u32[144,128]{1,0:T(1,128)}', space=vmem, size = 0x12000, scoped, tag = 'internal scratch']
  %s0 = inlined_call_operand.vmem [shape: bf16[32,1152], index: 0, kind: input, shape index: {}]
  %s1 = inlined_call_operand.vmem [shape: bf16[1152,256], index: 1, kind: input, shape index: {}]
  %s2 = inlined_call_operand.vmem [shape: f32[1,256], index: 2, kind: input, shape index: {}]
  %s3 = inlined_call_operand.vmem [shape: bf16[32,256], index: 3, kind: output, shape index: {}]
  %s4 = sld [smem:[#allocation0]]
  $region22: #{lst_encoder4_forward.18} parent=0
    _
  %s6 = ssub.s32 1, %s4
  %s7 = scalar_select 0, %s6, %s4
  // Predicated region
  $region2: #{lst_encoder4_forward.18} parent=0 // pred_check
    _
  $region3: #{lst_encoder4_forward.18} parent=0 // pred_check_branch
    %9 = sbr.rel (0) target = $region5
  $region4: #{lst_encoder4_forward.18} parent=0 // pred_region
    _
  $region5: #{lst_encoder4_forward.18} parent=0 // pred_fallthru
    _
  // Predicated region
  $region6: #{lst_encoder4_forward.18} parent=0 // pred_check
    _
  $region7: #{lst_encoder4_forward.18} parent=0 // pred_check_branch
    %11 = sbr.rel (0) target = $region9
  $region8: #{lst_encoder4_forward.18} parent=0 // pred_region
    _
  $region9: #{lst_encoder4_forward.18} parent=0 // pred_fallthru
    _
  // Predicated region
  $region10: #{lst_encoder4_forward.18} parent=0 // pred_check
    _
  $region11: #{lst_encoder4_forward.18} parent=0 // pred_check_branch
    %13 = sbr.rel (0) target = $region13
  $region12: #{lst_encoder4_forward.18} parent=0 // pred_region
    _
  $region13: #{lst_encoder4_forward.18} parent=0 // pred_fallthru
    _
  %v15 = vld [vmem:[%s0] sm:$0xff]
  %v16 = vld [vmem:[%s0 + $0x8] sm:$0xff]
  %v17 = vld [vmem:[%s0 + $0x10] sm:$0xff]
  %v18 = vld [vmem:[%s0 + $0x18] sm:$0xff]
  %v19 = vld [vmem:[%s0 + $0x20] sm:$0xf]
  %v20 = vld [vmem:[%s0 + $0x24] sm:$0xff]
  %v21 = vld [vmem:[%s0 + $0x2c] sm:$0xff]
  %v22 = vld [vmem:[%s0 + $0x34] sm:$0xff]
  %v23 = vld [vmem:[%s0 + $0x3c] sm:$0xff]
  %v24 = vld [vmem:[%s0 + $0x44] sm:$0xf]
  %v25 = vld [vmem:[%s0 + $0x48] sm:$0xff]
  %v26 = vld [vmem:[%s0 + $0x50] sm:$0xff]
  %v27 = vld [vmem:[%s0 + $0x58] sm:$0xff]
  %v28 = vld [vmem:[%s0 + $0x60] sm:$0xff]
  %v29 = vld [vmem:[%s0 + $0x68] sm:$0xf]
  %v30 = vld [vmem:[%s0 + $0x6c] sm:$0xff]
  %v31 = vld [vmem:[%s0 + $0x74] sm:$0xff]
  %v32 = vld [vmem:[%s0 + $0x7c] sm:$0xff]
  %v33 = vld [vmem:[%s0 + $0x84] sm:$0xff]
  %v34 = vld [vmem:[%s0 + $0x8c] sm:$0xf]
  %v35 = vld [vmem:[%s1] sm:$0xff]
  %v36 = vld [vmem:[%s1 + $0x8] sm:$0xff]
  %v37 = vld [vmem:[%s1 + $0x10] sm:$0xff]
  %v38 = vld [vmem:[%s1 + $0x18] sm:$0xff]
  %v39 = vld [vmem:[%s1 + $0x20] sm:$0xff]
  %v40 = vld [vmem:[%s1 + $0x28] sm:$0xff]
  %v41 = vld [vmem:[%s1 + $0x30] sm:$0xff]
  %v42 = vld [vmem:[%s1 + $0x38] sm:$0xff]
  %v43 = vld [vmem:[%s1 + $0x40] sm:$0xff]
  %v44 = vld [vmem:[%s1 + $0x48] sm:$0xff]
  %v45 = vld [vmem:[%s1 + $0x50] sm:$0xff]
  %v46 = vld [vmem:[%s1 + $0x58] sm:$0xff]
  %v47 = vld [vmem:[%s1 + $0x60] sm:$0xff]
  %v48 = vld [vmem:[%s1 + $0x68] sm:$0xff]
  %v49 = vld [vmem:[%s1 + $0x70] sm:$0xff]
  %v50 = vld [vmem:[%s1 + $0x78] sm:$0xff]
  %v51 = vld [vmem:[%s1 + $0x80] sm:$0xff]
  %v52 = vld [vmem:[%s1 + $0x88] sm:$0xff]
  %v53 = vld [vmem:[%s1 + $0x90] sm:$0xff]
  %v54 = vld [vmem:[%s1 + $0x98] sm:$0xff]
  %v55 = vld [vmem:[%s1 + $0xa0] sm:$0xff]
  %v56 = vld [vmem:[%s1 + $0xa8] sm:$0xff]
  %v57 = vld [vmem:[%s1 + $0xb0] sm:$0xff]
  %v58 = vld [vmem:[%s1 + $0xb8] sm:$0xff]
  %v59 = vld [vmem:[%s1 + $0xc0] sm:$0xff]
  %v60 = vld [vmem:[%s1 + $0xc8] sm:$0xff]
  %v61 = vld [vmem:[%s1 + $0xd0] sm:$0xff]
  %v62 = vld [vmem:[%s1 + $0xd8] sm:$0xff]
  %v63 = vld [vmem:[%s1 + $0xe0] sm:$0xff]
  %v64 = vld [vmem:[%s1 + $0xe8] sm:$0xff]
  %v65 = vld [vmem:[%s1 + $0xf0] sm:$0xff]
  %v66 = vld [vmem:[%s1 + $0xf8] sm:$0xff]
  %v67 = vld [vmem:[%s1 + $0x100] sm:$0xff]
  %v68 = vld [vmem:[%s1 + $0x108] sm:$0xff]
  %v69 = vld [vmem:[%s1 + $0x110] sm:$0xff]
  %v70 = vld [vmem:[%s1 + $0x118] sm:$0xff]
  %v71 = vld [vmem:[%s1 + $0x120] sm:$0xff]
  %v72 = vld [vmem:[%s1 + $0x128] sm:$0xff]
  %v73 = vld [vmem:[%s1 + $0x130] sm:$0xff]
  %v74 = vld [vmem:[%s1 + $0x138] sm:$0xff]
  %v75 = vld [vmem:[%s1 + $0x140] sm:$0xff]
  %v76 = vld [vmem:[%s1 + $0x148] sm:$0xff]
  %v77 = vld [vmem:[%s1 + $0x150] sm:$0xff]
  %v78 = vld [vmem:[%s1 + $0x158] sm:$0xff]
  %v79 = vld [vmem:[%s1 + $0x160] sm:$0xff]
  %v80 = vld [vmem:[%s1 + $0x168] sm:$0xff]
  %v81 = vld [vmem:[%s1 + $0x170] sm:$0xff]
  %v82 = vld [vmem:[%s1 + $0x178] sm:$0xff]
  %v83 = vld [vmem:[%s1 + $0x180] sm:$0xff]
  %v84 = vld [vmem:[%s1 + $0x188] sm:$0xff]
  %v85 = vld [vmem:[%s1 + $0x190] sm:$0xff]
  %v86 = vld [vmem:[%s1 + $0x198] sm:$0xff]
  %v87 = vld [vmem:[%s1 + $0x1a0] sm:$0xff]
  %v88 = vld [vmem:[%s1 + $0x1a8] sm:$0xff]
  %v89 = vld [vmem:[%s1 + $0x1b0] sm:$0xff]
  %v90 = vld [vmem:[%s1 + $0x1b8] sm:$0xff]
  %v91 = vld [vmem:[%s1 + $0x1c0] sm:$0xff]
  %v92 = vld [vmem:[%s1 + $0x1c8] sm:$0xff]
  %v93 = vld [vmem:[%s1 + $0x1d0] sm:$0xff]
  %v94 = vld [vmem:[%s1 + $0x1d8] sm:$0xff]
  %v95 = vld [vmem:[%s1 + $0x1e0] sm:$0xff]
  %v96 = vld [vmem:[%s1 + $0x1e8] sm:$0xff]
  %v97 = vld [vmem:[%s1 + $0x1f0] sm:$0xff]
  %v98 = vld [vmem:[%s1 + $0x1f8] sm:$0xff]
  %v99 = vld [vmem:[%s1 + $0x200] sm:$0xff]
  %v100 = vld [vmem:[%s1 + $0x208] sm:$0xff]
  %v101 = vld [vmem:[%s1 + $0x210] sm:$0xff]
  %v102 = vld [vmem:[%s1 + $0x218] sm:$0xff]
  %v103 = vld [vmem:[%s1 + $0x220] sm:$0xff]
  %v104 = vld [vmem:[%s1 + $0x228] sm:$0xff]
  %v105 = vld [vmem:[%s1 + $0x230] sm:$0xff]
  %v106 = vld [vmem:[%s1 + $0x238] sm:$0xff]
  %v107 = vld [vmem:[%s1 + $0x240] sm:$0xff]
  %v108 = vld [vmem:[%s1 + $0x248] sm:$0xff]
  %v109 = vld [vmem:[%s1 + $0x250] sm:$0xff]
  %v110 = vld [vmem:[%s1 + $0x258] sm:$0xff]
  %v111 = vld [vmem:[%s1 + $0x260] sm:$0xff]
  %v112 = vld [vmem:[%s1 + $0x268] sm:$0xff]
  %v113 = vld [vmem:[%s1 + $0x270] sm:$0xff]
  %v114 = vld [vmem:[%s1 + $0x278] sm:$0xff]
  %v115 = vld [vmem:[%s1 + $0x280] sm:$0xff]
  %v116 = vld [vmem:[%s1 + $0x288] sm:$0xff]
  %v117 = vld [vmem:[%s1 + $0x290] sm:$0xff]
  %v118 = vld [vmem:[%s1 + $0x298] sm:$0xff]
  %v119 = vld [vmem:[%s1 + $0x2a0] sm:$0xff]
  %v120 = vld [vmem:[%s1 + $0x2a8] sm:$0xff]
  %v121 = vld [vmem:[%s1 + $0x2b0] sm:$0xff]
  %v122 = vld [vmem:[%s1 + $0x2b8] sm:$0xff]
  %v123 = vld [vmem:[%s1 + $0x2c0] sm:$0xff]
  %v124 = vld [vmem:[%s1 + $0x2c8] sm:$0xff]
  %v125 = vld [vmem:[%s1 + $0x2d0] sm:$0xff]
  %v126 = vld [vmem:[%s1 + $0x2d8] sm:$0xff]
  %v127 = vld [vmem:[%s1 + $0x2e0] sm:$0xff]
  %v128 = vld [vmem:[%s1 + $0x2e8] sm:$0xff]
  %v129 = vld [vmem:[%s1 + $0x2f0] sm:$0xff]
  %v130 = vld [vmem:[%s1 + $0x2f8] sm:$0xff]
  %v131 = vld [vmem:[%s1 + $0x300] sm:$0xff]
  %v132 = vld [vmem:[%s1 + $0x308] sm:$0xff]
  %v133 = vld [vmem:[%s1 + $0x310] sm:$0xff]
  %v134 = vld [vmem:[%s1 + $0x318] sm:$0xff]
  %v135 = vld [vmem:[%s1 + $0x320] sm:$0xff]
  %v136 = vld [vmem:[%s1 + $0x328] sm:$0xff]
  %v137 = vld [vmem:[%s1 + $0x330] sm:$0xff]
  %v138 = vld [vmem:[%s1 + $0x338] sm:$0xff]
  %v139 = vld [vmem:[%s1 + $0x340] sm:$0xff]
  %v140 = vld [vmem:[%s1 + $0x348] sm:$0xff]
  %v141 = vld [vmem:[%s1 + $0x350] sm:$0xff]
  %v142 = vld [vmem:[%s1 + $0x358] sm:$0xff]
  %v143 = vld [vmem:[%s1 + $0x360] sm:$0xff]
  %v144 = vld [vmem:[%s1 + $0x368] sm:$0xff]
  %v145 = vld [vmem:[%s1 + $0x370] sm:$0xff]
  %v146 = vld [vmem:[%s1 + $0x378] sm:$0xff]
  %v147 = vld [vmem:[%s1 + $0x380] sm:$0xff]
  %v148 = vld [vmem:[%s1 + $0x388] sm:$0xff]
  %v149 = vld [vmem:[%s1 + $0x390] sm:$0xff]
  %v150 = vld [vmem:[%s1 + $0x398] sm:$0xff]
  %v151 = vld [vmem:[%s1 + $0x3a0] sm:$0xff]
  %v152 = vld [vmem:[%s1 + $0x3a8] sm:$0xff]
  %v153 = vld [vmem:[%s1 + $0x3b0] sm:$0xff]
  %v154 = vld [vmem:[%s1 + $0x3b8] sm:$0xff]
  %v155 = vld [vmem:[%s1 + $0x3c0] sm:$0xff]
  %v156 = vld [vmem:[%s1 + $0x3c8] sm:$0xff]
  %v157 = vld [vmem:[%s1 + $0x3d0] sm:$0xff]
  %v158 = vld [vmem:[%s1 + $0x3d8] sm:$0xff]
  %v159 = vld [vmem:[%s1 + $0x3e0] sm:$0xff]
  %v160 = vld [vmem:[%s1 + $0x3e8] sm:$0xff]
  %v161 = vld [vmem:[%s1 + $0x3f0] sm:$0xff]
  %v162 = vld [vmem:[%s1 + $0x3f8] sm:$0xff]
  %v163 = vld [vmem:[%s1 + $0x400] sm:$0xff]
  %v164 = vld [vmem:[%s1 + $0x408] sm:$0xff]
  %v165 = vld [vmem:[%s1 + $0x410] sm:$0xff]
  %v166 = vld [vmem:[%s1 + $0x418] sm:$0xff]
  %v167 = vld [vmem:[%s1 + $0x420] sm:$0xff]
  %v168 = vld [vmem:[%s1 + $0x428] sm:$0xff]
  %v169 = vld [vmem:[%s1 + $0x430] sm:$0xff]
  %v170 = vld [vmem:[%s1 + $0x438] sm:$0xff]
  %v171 = vld [vmem:[%s1 + $0x440] sm:$0xff]
  %v172 = vld [vmem:[%s1 + $0x448] sm:$0xff]
  %v173 = vld [vmem:[%s1 + $0x450] sm:$0xff]
  %v174 = vld [vmem:[%s1 + $0x458] sm:$0xff]
  %v175 = vld [vmem:[%s1 + $0x460] sm:$0xff]
  %v176 = vld [vmem:[%s1 + $0x468] sm:$0xff]
  %v177 = vld [vmem:[%s1 + $0x470] sm:$0xff]
  %v178 = vld [vmem:[%s1 + $0x478] sm:$0xff]
  %v179 = vld [vmem:[%s2] sm:$0x3]
  %v181 = vlaneseq
  %v182 = vshrl.u32 %v181, 7
  %v183 = vsub.s32 0, %v182
  %v184 = vrot.slane %v179, %v183
  %v185 = vlaneseq
  %v186 = vshrl.u32 %v185, 7
  %v187 = vsub.s32 1, %v186
  %v188 = vrot.slane %v179, %v187
  %v211 = vunpack.c.l.b16 %v15
  %v212 = vunpack.c.h.b16 %v15
  %v213 = vunpack.c.l.b16 %v16
  %v214 = vunpack.c.h.b16 %v16
  %v215 = vunpack.c.l.b16 %v17
  %v216 = vunpack.c.h.b16 %v17
  %v217 = vunpack.c.l.b16 %v18
  %v218 = vunpack.c.h.b16 %v18
  %v219 = vunpack.c.l.b16 %v19
  %v220 = vunpack.c.l.b16 %v20
  %v221 = vunpack.c.h.b16 %v20
  %v222 = vunpack.c.l.b16 %v21
  %v223 = vunpack.c.h.b16 %v21
  %v224 = vunpack.c.l.b16 %v22
  %v225 = vunpack.c.h.b16 %v22
  %v226 = vunpack.c.l.b16 %v23
  %v227 = vunpack.c.h.b16 %v23
  %v228 = vunpack.c.l.b16 %v24
  %v229 = vunpack.c.l.b16 %v25
  %v230 = vunpack.c.h.b16 %v25
  %v231 = vunpack.c.l.b16 %v26
  %v232 = vunpack.c.h.b16 %v26
  %v233 = vunpack.c.l.b16 %v27
  %v234 = vunpack.c.h.b16 %v27
  %v235 = vunpack.c.l.b16 %v28
  %v236 = vunpack.c.h.b16 %v28
  %v237 = vunpack.c.l.b16 %v29
  %v238 = vunpack.c.l.b16 %v30
  %v239 = vunpack.c.h.b16 %v30
  %v240 = vunpack.c.l.b16 %v31
  %v241 = vunpack.c.h.b16 %v31
  %v242 = vunpack.c.l.b16 %v32
  %v243 = vunpack.c.h.b16 %v32
  %v244 = vunpack.c.l.b16 %v33
  %v245 = vunpack.c.h.b16 %v33
  %v246 = vunpack.c.l.b16 %v34
  %v247 = vpack.c.b16 %v220, %v211
  %v248 = vpack.c.b16 %v221, %v212
  %v249 = vpack.c.b16 %v222, %v213
  %v250 = vpack.c.b16 %v223, %v214
  %v251 = vpack.c.b16 %v224, %v215
  %v252 = vpack.c.b16 %v225, %v216
  %v253 = vpack.c.b16 %v226, %v217
  %v254 = vpack.c.b16 %v227, %v218
  %v255 = vpack.c.b16 %v228, %v219
  %v256 = vpack.c.b16 %v238, %v229
  %v257 = vpack.c.b16 %v239, %v230
  %v258 = vpack.c.b16 %v240, %v231
  %v259 = vpack.c.b16 %v241, %v232
  %v260 = vpack.c.b16 %v242, %v233
  %v261 = vpack.c.b16 %v243, %v234
  %v262 = vpack.c.b16 %v244, %v235
  %v263 = vpack.c.b16 %v245, %v236
  %v264 = vpack.c.b16 %v246, %v237
  %v427 = vunpack.c.l.b16 %v35
  %v428 = vunpack.c.h.b16 %v35
  %v429 = vunpack.c.l.b16 %v36
  %v430 = vunpack.c.h.b16 %v36
  %v431 = vunpack.c.l.b16 %v37
  %v432 = vunpack.c.h.b16 %v37
  %v433 = vunpack.c.l.b16 %v38
  %v434 = vunpack.c.h.b16 %v38
  %v435 = vunpack.c.l.b16 %v39
  %v436 = vunpack.c.h.b16 %v39
  %v437 = vunpack.c.l.b16 %v40
  %v438 = vunpack.c.h.b16 %v40
  %v439 = vunpack.c.l.b16 %v41
  %v440 = vunpack.c.h.b16 %v41
  %v441 = vunpack.c.l.b16 %v42
  %v442 = vunpack.c.h.b16 %v42
  %v443 = vunpack.c.l.b16 %v43
  %v444 = vunpack.c.h.b16 %v43
  %v445 = vunpack.c.l.b16 %v44
  %v446 = vunpack.c.h.b16 %v44
  %v447 = vunpack.c.l.b16 %v45
  %v448 = vunpack.c.h.b16 %v45
  %v449 = vunpack.c.l.b16 %v46
  %v450 = vunpack.c.h.b16 %v46
  %v451 = vunpack.c.l.b16 %v47
  %v452 = vunpack.c.h.b16 %v47
  %v453 = vunpack.c.l.b16 %v48
  %v454 = vunpack.c.h.b16 %v48
  %v455 = vunpack.c.l.b16 %v49
  %v456 = vunpack.c.h.b16 %v49
  %v457 = vunpack.c.l.b16 %v50
  %v458 = vunpack.c.h.b16 %v50
  %v459 = vunpack.c.l.b16 %v51
  %v460 = vunpack.c.h.b16 %v51
  %v461 = vunpack.c.l.b16 %v52
  %v462 = vunpack.c.h.b16 %v52
  %v463 = vunpack.c.l.b16 %v53
  %v464 = vunpack.c.h.b16 %v53
  %v465 = vunpack.c.l.b16 %v54
  %v466 = vunpack.c.h.b16 %v54
  %v467 = vunpack.c.l.b16 %v55
  %v468 = vunpack.c.h.b16 %v55
  %v469 = vunpack.c.l.b16 %v56
  %v470 = vunpack.c.h.b16 %v56
  %v471 = vunpack.c.l.b16 %v57
  %v472 = vunpack.c.h.b16 %v57
  %v473 = vunpack.c.l.b16 %v58
  %v474 = vunpack.c.h.b16 %v58
  %v475 = vunpack.c.l.b16 %v59
  %v476 = vunpack.c.h.b16 %v59
  %v477 = vunpack.c.l.b16 %v60
  %v478 = vunpack.c.h.b16 %v60
  %v479 = vunpack.c.l.b16 %v61
  %v480 = vunpack.c.h.b16 %v61
  %v481 = vunpack.c.l.b16 %v62
  %v482 = vunpack.c.h.b16 %v62
  %v483 = vunpack.c.l.b16 %v63
  %v484 = vunpack.c.h.b16 %v63
  %v485 = vunpack.c.l.b16 %v64
  %v486 = vunpack.c.h.b16 %v64
  %v487 = vunpack.c.l.b16 %v65
  %v488 = vunpack.c.h.b16 %v65
  %v489 = vunpack.c.l.b16 %v66
  %v490 = vunpack.c.h.b16 %v66
  %v491 = vunpack.c.l.b16 %v67
  %v492 = vunpack.c.h.b16 %v67
  %v493 = vunpack.c.l.b16 %v68
  %v494 = vunpack.c.h.b16 %v68
  %v495 = vunpack.c.l.b16 %v69
  %v496 = vunpack.c.h.b16 %v69
  %v497 = vunpack.c.l.b16 %v70
  %v498 = vunpack.c.h.b16 %v70
  %v499 = vunpack.c.l.b16 %v71
  %v500 = vunpack.c.h.b16 %v71
  %v501 = vunpack.c.l.b16 %v72
  %v502 = vunpack.c.h.b16 %v72
  %v503 = vunpack.c.l.b16 %v73
  %v504 = vunpack.c.h.b16 %v73
  %v505 = vunpack.c.l.b16 %v74
  %v506 = vunpack.c.h.b16 %v74
  %v507 = vunpack.c.l.b16 %v75
  %v508 = vunpack.c.h.b16 %v75
  %v509 = vunpack.c.l.b16 %v76
  %v510 = vunpack.c.h.b16 %v76
  %v511 = vunpack.c.l.b16 %v77
  %v512 = vunpack.c.h.b16 %v77
  %v513 = vunpack.c.l.b16 %v78
  %v514 = vunpack.c.h.b16 %v78
  %v515 = vunpack.c.l.b16 %v79
  %v516 = vunpack.c.h.b16 %v79
  %v517 = vunpack.c.l.b16 %v80
  %v518 = vunpack.c.h.b16 %v80
  %v519 = vunpack.c.l.b16 %v81
  %v520 = vunpack.c.h.b16 %v81
  %v521 = vunpack.c.l.b16 %v82
  %v522 = vunpack.c.h.b16 %v82
  %v523 = vunpack.c.l.b16 %v83
  %v524 = vunpack.c.h.b16 %v83
  %v525 = vunpack.c.l.b16 %v84
  %v526 = vunpack.c.h.b16 %v84
  %v527 = vunpack.c.l.b16 %v85
  %v528 = vunpack.c.h.b16 %v85
  %v529 = vunpack.c.l.b16 %v86
  %v530 = vunpack.c.h.b16 %v86
  %v531 = vunpack.c.l.b16 %v87
  %v532 = vunpack.c.h.b16 %v87
  %v533 = vunpack.c.l.b16 %v88
  %v534 = vunpack.c.h.b16 %v88
  %v535 = vunpack.c.l.b16 %v89
  %v536 = vunpack.c.h.b16 %v89
  %v537 = vunpack.c.l.b16 %v90
  %v538 = vunpack.c.h.b16 %v90
  %v539 = vunpack.c.l.b16 %v91
  %v540 = vunpack.c.h.b16 %v91
  %v541 = vunpack.c.l.b16 %v92
  %v542 = vunpack.c.h.b16 %v92
  %v543 = vunpack.c.l.b16 %v93
  %v544 = vunpack.c.h.b16 %v93
  %v545 = vunpack.c.l.b16 %v94
  %v546 = vunpack.c.h.b16 %v94
  %v547 = vunpack.c.l.b16 %v95
  %v548 = vunpack.c.h.b16 %v95
  %v549 = vunpack.c.l.b16 %v96
  %v550 = vunpack.c.h.b16 %v96
  %v551 = vunpack.c.l.b16 %v97
  %v552 = vunpack.c.h.b16 %v97
  %v553 = vunpack.c.l.b16 %v98
  %v554 = vunpack.c.h.b16 %v98
  %v555 = vunpack.c.l.b16 %v99
  %v556 = vunpack.c.h.b16 %v99
  %v557 = vunpack.c.l.b16 %v100
  %v558 = vunpack.c.h.b16 %v100
  %v559 = vunpack.c.l.b16 %v101
  %v560 = vunpack.c.h.b16 %v101
  %v561 = vunpack.c.l.b16 %v102
  %v562 = vunpack.c.h.b16 %v102
  %v563 = vunpack.c.l.b16 %v103
  %v564 = vunpack.c.h.b16 %v103
  %v565 = vunpack.c.l.b16 %v104
  %v566 = vunpack.c.h.b16 %v104
  %v567 = vunpack.c.l.b16 %v105
  %v568 = vunpack.c.h.b16 %v105
  %v569 = vunpack.c.l.b16 %v106
  %v570 = vunpack.c.h.b16 %v106
  %v571 = vunpack.c.l.b16 %v107
  %v572 = vunpack.c.h.b16 %v107
  %v573 = vunpack.c.l.b16 %v108
  %v574 = vunpack.c.h.b16 %v108
  %v575 = vunpack.c.l.b16 %v109
  %v576 = vunpack.c.h.b16 %v109
  %v577 = vunpack.c.l.b16 %v110
  %v578 = vunpack.c.h.b16 %v110
  %v579 = vunpack.c.l.b16 %v111
  %v580 = vunpack.c.h.b16 %v111
  %v581 = vunpack.c.l.b16 %v112
  %v582 = vunpack.c.h.b16 %v112
  %v583 = vunpack.c.l.b16 %v113
  %v584 = vunpack.c.h.b16 %v113
  %v585 = vunpack.c.l.b16 %v114
  %v586 = vunpack.c.h.b16 %v114
  %v587 = vunpack.c.l.b16 %v115
  %v588 = vunpack.c.h.b16 %v115
  %v589 = vunpack.c.l.b16 %v116
  %v590 = vunpack.c.h.b16 %v116
  %v591 = vunpack.c.l.b16 %v117
  %v592 = vunpack.c.h.b16 %v117
  %v593 = vunpack.c.l.b16 %v118
  %v594 = vunpack.c.h.b16 %v118
  %v595 = vunpack.c.l.b16 %v119
  %v596 = vunpack.c.h.b16 %v119
  %v597 = vunpack.c.l.b16 %v120
  %v598 = vunpack.c.h.b16 %v120
  %v599 = vunpack.c.l.b16 %v121
  %v600 = vunpack.c.h.b16 %v121
  %v601 = vunpack.c.l.b16 %v122
  %v602 = vunpack.c.h.b16 %v122
  %v603 = vunpack.c.l.b16 %v123
  %v604 = vunpack.c.h.b16 %v123
  %v605 = vunpack.c.l.b16 %v124
  %v606 = vunpack.c.h.b16 %v124
  %v607 = vunpack.c.l.b16 %v125
  %v608 = vunpack.c.h.b16 %v125
  %v609 = vunpack.c.l.b16 %v126
  %v610 = vunpack.c.h.b16 %v126
  %v611 = vunpack.c.l.b16 %v127
  %v612 = vunpack.c.h.b16 %v127
  %v613 = vunpack.c.l.b16 %v128
  %v614 = vunpack.c.h.b16 %v128
  %v615 = vunpack.c.l.b16 %v129
  %v616 = vunpack.c.h.b16 %v129
  %v617 = vunpack.c.l.b16 %v130
  %v618 = vunpack.c.h.b16 %v130
  %v619 = vunpack.c.l.b16 %v131
  %v620 = vunpack.c.h.b16 %v131
  %v621 = vunpack.c.l.b16 %v132
  %v622 = vunpack.c.h.b16 %v132
  %v623 = vunpack.c.l.b16 %v133
  %v624 = vunpack.c.h.b16 %v133
  %v625 = vunpack.c.l.b16 %v134
  %v626 = vunpack.c.h.b16 %v134
  %v627 = vunpack.c.l.b16 %v135
  %v628 = vunpack.c.h.b16 %v135
  %v629 = vunpack.c.l.b16 %v136
  %v630 = vunpack.c.h.b16 %v136
  %v631 = vunpack.c.l.b16 %v137
  %v632 = vunpack.c.h.b16 %v137
  %v633 = vunpack.c.l.b16 %v138
  %v634 = vunpack.c.h.b16 %v138
  %v635 = vunpack.c.l.b16 %v139
  %v636 = vunpack.c.h.b16 %v139
  %v637 = vunpack.c.l.b16 %v140
  %v638 = vunpack.c.h.b16 %v140
  %v639 = vunpack.c.l.b16 %v141
  %v640 = vunpack.c.h.b16 %v141
  %v641 = vunpack.c.l.b16 %v142
  %v642 = vunpack.c.h.b16 %v142
  %v643 = vunpack.c.l.b16 %v143
  %v644 = vunpack.c.h.b16 %v143
  %v645 = vunpack.c.l.b16 %v144
  %v646 = vunpack.c.h.b16 %v144
  %v647 = vunpack.c.l.b16 %v145
  %v648 = vunpack.c.h.b16 %v145
  %v649 = vunpack.c.l.b16 %v146
  %v650 = vunpack.c.h.b16 %v146
  %v651 = vunpack.c.l.b16 %v147
  %v652 = vunpack.c.h.b16 %v147
  %v653 = vunpack.c.l.b16 %v148
  %v654 = vunpack.c.h.b16 %v148
  %v655 = vunpack.c.l.b16 %v149
  %v656 = vunpack.c.h.b16 %v149
  %v657 = vunpack.c.l.b16 %v150
  %v658 = vunpack.c.h.b16 %v150
  %v659 = vunpack.c.l.b16 %v151
  %v660 = vunpack.c.h.b16 %v151
  %v661 = vunpack.c.l.b16 %v152
  %v662 = vunpack.c.h.b16 %v152
  %v663 = vunpack.c.l.b16 %v153
  %v664 = vunpack.c.h.b16 %v153
  %v665 = vunpack.c.l.b16 %v154
  %v666 = vunpack.c.h.b16 %v154
  %v667 = vunpack.c.l.b16 %v155
  %v668 = vunpack.c.h.b16 %v155
  %v669 = vunpack.c.l.b16 %v156
  %v670 = vunpack.c.h.b16 %v156
  %v671 = vunpack.c.l.b16 %v157
  %v672 = vunpack.c.h.b16 %v157
  %v673 = vunpack.c.l.b16 %v158
  %v674 = vunpack.c.h.b16 %v158
  %v675 = vunpack.c.l.b16 %v159
  %v676 = vunpack.c.h.b16 %v159
  %v677 = vunpack.c.l.b16 %v160
  %v678 = vunpack.c.h.b16 %v160
  %v679 = vunpack.c.l.b16 %v161
  %v680 = vunpack.c.h.b16 %v161
  %v681 = vunpack.c.l.b16 %v162
  %v682 = vunpack.c.h.b16 %v162
  %v683 = vunpack.c.l.b16 %v163
  %v684 = vunpack.c.h.b16 %v163
  %v685 = vunpack.c.l.b16 %v164
  %v686 = vunpack.c.h.b16 %v164
  %v687 = vunpack.c.l.b16 %v165
  %v688 = vunpack.c.h.b16 %v165
  %v689 = vunpack.c.l.b16 %v166
  %v690 = vunpack.c.h.b16 %v166
  %v691 = vunpack.c.l.b16 %v167
  %v692 = vunpack.c.h.b16 %v167
  %v693 = vunpack.c.l.b16 %v168
  %v694 = vunpack.c.h.b16 %v168
  %v695 = vunpack.c.l.b16 %v169
  %v696 = vunpack.c.h.b16 %v169
  %v697 = vunpack.c.l.b16 %v170
  %v698 = vunpack.c.h.b16 %v170
  %v699 = vunpack.c.l.b16 %v171
  %v700 = vunpack.c.h.b16 %v171
  %v701 = vunpack.c.l.b16 %v172
  %v702 = vunpack.c.h.b16 %v172
  %v703 = vunpack.c.l.b16 %v173
  %v704 = vunpack.c.h.b16 %v173
  %v705 = vunpack.c.l.b16 %v174
  %v706 = vunpack.c.h.b16 %v174
  %v707 = vunpack.c.l.b16 %v175
  %v708 = vunpack.c.h.b16 %v175
  %v709 = vunpack.c.l.b16 %v176
  %v710 = vunpack.c.h.b16 %v176
  %v711 = vunpack.c.l.b16 %v177
  %v712 = vunpack.c.h.b16 %v177
  %v713 = vunpack.c.l.b16 %v178
  %v714 = vunpack.c.h.b16 %v178
  %v715 = vpack.c.b16 %v429, %v427
  %v716 = vpack.c.b16 %v430, %v428
  %v717 = vpack.c.b16 %v433, %v431
  %v718 = vpack.c.b16 %v434, %v432
  %v719 = vpack.c.b16 %v437, %v435
  %v720 = vpack.c.b16 %v438, %v436
  %v721 = vpack.c.b16 %v441, %v439
  %v722 = vpack.c.b16 %v442, %v440
  %v723 = vpack.c.b16 %v445, %v443
  %v724 = vpack.c.b16 %v446, %v444
  %v725 = vpack.c.b16 %v449, %v447
  %v726 = vpack.c.b16 %v450, %v448
  %v727 = vpack.c.b16 %v453, %v451
  %v728 = vpack.c.b16 %v454, %v452
  %v729 = vpack.c.b16 %v457, %v455
  %v730 = vpack.c.b16 %v458, %v456
  %v731 = vpack.c.b16 %v461, %v459
  %v732 = vpack.c.b16 %v462, %v460
  %v733 = vpack.c.b16 %v465, %v463
  %v734 = vpack.c.b16 %v466, %v464
  %v735 = vpack.c.b16 %v469, %v467
  %v736 = vpack.c.b16 %v470, %v468
  %v737 = vpack.c.b16 %v473, %v471
  %v738 = vpack.c.b16 %v474, %v472
  %v739 = vpack.c.b16 %v477, %v475
  %v740 = vpack.c.b16 %v478, %v476
  %v741 = vpack.c.b16 %v481, %v479
  %v742 = vpack.c.b16 %v482, %v480
  %v743 = vpack.c.b16 %v485, %v483
  %v744 = vpack.c.b16 %v486, %v484
  %v745 = vpack.c.b16 %v489, %v487
  %v746 = vpack.c.b16 %v490, %v488
  %v747 = vpack.c.b16 %v493, %v491
  %v748 = vpack.c.b16 %v494, %v492
  %v749 = vpack.c.b16 %v497, %v495
  %v750 = vpack.c.b16 %v498, %v496
  %v751 = vpack.c.b16 %v501, %v499
  %v752 = vpack.c.b16 %v502, %v500
  %v753 = vpack.c.b16 %v505, %v503
  %v754 = vpack.c.b16 %v506, %v504
  %v755 = vpack.c.b16 %v509, %v507
  %v756 = vpack.c.b16 %v510, %v508
  %v757 = vpack.c.b16 %v513, %v511
  %v758 = vpack.c.b16 %v514, %v512
  %v759 = vpack.c.b16 %v517, %v515
  %v760 = vpack.c.b16 %v518, %v516
  %v761 = vpack.c.b16 %v521, %v519
  %v762 = vpack.c.b16 %v522, %v520
  %v763 = vpack.c.b16 %v525, %v523
  %v764 = vpack.c.b16 %v526, %v524
  %v765 = vpack.c.b16 %v529, %v527
  %v766 = vpack.c.b16 %v530, %v528
  %v767 = vpack.c.b16 %v533, %v531
  %v768 = vpack.c.b16 %v534, %v532
  %v769 = vpack.c.b16 %v537, %v535
  %v770 = vpack.c.b16 %v538, %v536
  %v771 = vpack.c.b16 %v541, %v539
  %v772 = vpack.c.b16 %v542, %v540
  %v773 = vpack.c.b16 %v545, %v543
  %v774 = vpack.c.b16 %v546, %v544
  %v775 = vpack.c.b16 %v549, %v547
  %v776 = vpack.c.b16 %v550, %v548
  %v777 = vpack.c.b16 %v553, %v551
  %v778 = vpack.c.b16 %v554, %v552
  %v779 = vpack.c.b16 %v557, %v555
  %v780 = vpack.c.b16 %v558, %v556
  %v781 = vpack.c.b16 %v561, %v559
  %v782 = vpack.c.b16 %v562, %v560
  %v783 = vpack.c.b16 %v565, %v563
  %v784 = vpack.c.b16 %v566, %v564
  %v785 = vpack.c.b16 %v569, %v567
  %v786 = vpack.c.b16 %v570, %v568
  %v787 = vpack.c.b16 %v573, %v571
  %v788 = vpack.c.b16 %v574, %v572
  %v789 = vpack.c.b16 %v577, %v575
  %v790 = vpack.c.b16 %v578, %v576
  %v791 = vpack.c.b16 %v581, %v579
  %v792 = vpack.c.b16 %v582, %v580
  %v793 = vpack.c.b16 %v585, %v583
  %v794 = vpack.c.b16 %v586, %v584
  %v795 = vpack.c.b16 %v589, %v587
  %v796 = vpack.c.b16 %v590, %v588
  %v797 = vpack.c.b16 %v593, %v591
  %v798 = vpack.c.b16 %v594, %v592
  %v799 = vpack.c.b16 %v597, %v595
  %v800 = vpack.c.b16 %v598, %v596
  %v801 = vpack.c.b16 %v601, %v599
  %v802 = vpack.c.b16 %v602, %v600
  %v803 = vpack.c.b16 %v605, %v603
  %v804 = vpack.c.b16 %v606, %v604
  %v805 = vpack.c.b16 %v609, %v607
  %v806 = vpack.c.b16 %v610, %v608
  %v807 = vpack.c.b16 %v613, %v611
  %v808 = vpack.c.b16 %v614, %v612
  %v809 = vpack.c.b16 %v617, %v615
  %v810 = vpack.c.b16 %v618, %v616
  %v811 = vpack.c.b16 %v621, %v619
  %v812 = vpack.c.b16 %v622, %v620
  %v813 = vpack.c.b16 %v625, %v623
  %v814 = vpack.c.b16 %v626, %v624
  %v815 = vpack.c.b16 %v629, %v627
  %v816 = vpack.c.b16 %v630, %v628
  %v817 = vpack.c.b16 %v633, %v631
  %v818 = vpack.c.b16 %v634, %v632
  %v819 = vpack.c.b16 %v637, %v635
  %v820 = vpack.c.b16 %v638, %v636
  %v821 = vpack.c.b16 %v641, %v639
  %v822 = vpack.c.b16 %v642, %v640
  %v823 = vpack.c.b16 %v645, %v643
  %v824 = vpack.c.b16 %v646, %v644
  %v825 = vpack.c.b16 %v649, %v647
  %v826 = vpack.c.b16 %v650, %v648
  %v827 = vpack.c.b16 %v653, %v651
  %v828 = vpack.c.b16 %v654, %v652
  %v829 = vpack.c.b16 %v657, %v655
  %v830 = vpack.c.b16 %v658, %v656
  %v831 = vpack.c.b16 %v661, %v659
  %v832 = vpack.c.b16 %v662, %v660
  %v833 = vpack.c.b16 %v665, %v663
  %v834 = vpack.c.b16 %v666, %v664
  %v835 = vpack.c.b16 %v669, %v667
  %v836 = vpack.c.b16 %v670, %v668
  %v837 = vpack.c.b16 %v673, %v671
  %v838 = vpack.c.b16 %v674, %v672
  %v839 = vpack.c.b16 %v677, %v675
  %v840 = vpack.c.b16 %v678, %v676
  %v841 = vpack.c.b16 %v681, %v679
  %v842 = vpack.c.b16 %v682, %v680
  %v843 = vpack.c.b16 %v685, %v683
  %v844 = vpack.c.b16 %v686, %v684
  %v845 = vpack.c.b16 %v689, %v687
  %v846 = vpack.c.b16 %v690, %v688
  %v847 = vpack.c.b16 %v693, %v691
  %v848 = vpack.c.b16 %v694, %v692
  %v849 = vpack.c.b16 %v697, %v695
  %v850 = vpack.c.b16 %v698, %v696
  %v851 = vpack.c.b16 %v701, %v699
  %v852 = vpack.c.b16 %v702, %v700
  %v853 = vpack.c.b16 %v705, %v703
  %v854 = vpack.c.b16 %v706, %v704
  %v855 = vpack.c.b16 %v709, %v707
  %v856 = vpack.c.b16 %v710, %v708
  %v857 = vpack.c.b16 %v713, %v711
  %v858 = vpack.c.b16 %v714, %v712
  %1003 = vmatprep.subr.bf16.mxu0 %v716
  %1004 = vmatpush1.bf16.msra.mxu0 %v715
  %1005 = vmatprep.subr.bf16.mxu0 %v718
  %1006 = vmatpush1.bf16.msra.mxu0 %v717
  %1007 = vmatprep.subr.bf16.mxu0 %v720
  %1008 = vmatpush1.bf16.msra.mxu0 %v719
  %1009 = vmatprep.subr.bf16.mxu0 %v722
  %1010 = vmatpush1.bf16.msra.mxu0 %v721
  %1011 = vmatprep.subr.bf16.mxu0 %v724
  %1012 = vmatpush1.bf16.msra.mxu0 %v723
  %1013 = vmatprep.subr.bf16.mxu0 %v726
  %1014 = vmatpush1.bf16.msra.mxu0 %v725
  %1015 = vmatprep.subr.bf16.mxu0 %v728
  %1016 = vmatpush1.bf16.msra.mxu0 %v727
  %1017 = vmatprep.subr.bf16.mxu0 %v730
  %1018 = vmatpush1.bf16.msra.mxu0 %v729
  %1019 = vmatprep.subr.bf16.mxu0 %v732
  %1020 = vmatpush1.bf16.msra.mxu0 %v731
  %1021 = vmatprep.subr.bf16.mxu0 %v734
  %1022 = vmatpush1.bf16.msra.mxu0 %v733
  %1023 = vmatprep.subr.bf16.mxu0 %v736
  %1024 = vmatpush1.bf16.msra.mxu0 %v735
  %1025 = vmatprep.subr.bf16.mxu0 %v738
  %1026 = vmatpush1.bf16.msra.mxu0 %v737
  %1027 = vmatprep.subr.bf16.mxu0 %v740
  %1028 = vmatpush1.bf16.msra.mxu0 %v739
  %1029 = vmatprep.subr.bf16.mxu0 %v742
  %1030 = vmatpush1.bf16.msra.mxu0 %v741
  %1031 = vmatprep.subr.bf16.mxu0 %v744
  %1032 = vmatpush1.bf16.msra.mxu0 %v743
  %1033 = vmatprep.subr.bf16.mxu0 %v746
  %1034 = vmatpush1.bf16.msra.mxu0 %v745
  %1035 = vmatprep.mubr.bf16.mxu0 %v248
  %1036 = vmatmul.mubr.bf16.gmra.mrb[0].mxu0 %v247
  %v1037 = vpop.f32.mrb[0].mxu0
  %v1038 = vadd.f32 %v184, %v1037
  %v1039 = vpop.f32.mrb[0].mxu0
  %v1040 = vadd.f32 %v188, %v1039
  %v1041 = vpop.f32.mrb[0].mxu0
  %v1042 = vadd.f32 %v184, %v1041
  %v1043 = vpop.f32.mrb[0].mxu0
  %v1044 = vadd.f32 %v188, %v1043
  %1045 = vmatprep.mubr.bf16.mxu0 %v257
  %1046 = vmatmul.mubr.bf16.gmra.mrb[0].mxu0 %v256
  %v1047 = vpop.f32.mrb[0].mxu0
  %v1048 = vadd.f32 %v184, %v1047
  %v1049 = vpop.f32.mrb[0].mxu0
  %v1050 = vadd.f32 %v188, %v1049
  %v1051 = vpop.f32.mrb[0].mxu0
  %v1052 = vadd.f32 %v184, %v1051
  %v1053 = vpop.f32.mrb[0].mxu0
  %v1054 = vadd.f32 %v188, %v1053
  %1055 = vdwg.mxu0
  %1056 = vmatprep.subr.bf16.mxu0 %v748
  %1057 = vmatpush1.bf16.msra.mxu0 %v747
  %1058 = vmatprep.subr.bf16.mxu0 %v750
  %1059 = vmatpush1.bf16.msra.mxu0 %v749
  %1060 = vmatprep.subr.bf16.mxu0 %v752
  %1061 = vmatpush1.bf16.msra.mxu0 %v751
  %1062 = vmatprep.subr.bf16.mxu0 %v754
  %1063 = vmatpush1.bf16.msra.mxu0 %v753
  %1064 = vmatprep.subr.bf16.mxu0 %v756
  %1065 = vmatpush1.bf16.msra.mxu0 %v755
  %1066 = vmatprep.subr.bf16.mxu0 %v758
  %1067 = vmatpush1.bf16.msra.mxu0 %v757
  %1068 = vmatprep.subr.bf16.mxu0 %v760
  %1069 = vmatpush1.bf16.msra.mxu0 %v759
  %1070 = vmatprep.subr.bf16.mxu0 %v762
  %1071 = vmatpush1.bf16.msra.mxu0 %v761
  %1072 = vmatprep.subr.bf16.mxu0 %v764
  %1073 = vmatpush1.bf16.msra.mxu0 %v763
  %1074 = vmatprep.subr.bf16.mxu0 %v766
  %1075 = vmatpush1.bf16.msra.mxu0 %v765
  %1076 = vmatprep.subr.bf16.mxu0 %v768
  %1077 = vmatpush1.bf16.msra.mxu0 %v767
  %1078 = vmatprep.subr.bf16.mxu0 %v770
  %1079 = vmatpush1.bf16.msra.mxu0 %v769
  %1080 = vmatprep.subr.bf16.mxu0 %v772
  %1081 = vmatpush1.bf16.msra.mxu0 %v771
  %1082 = vmatprep.subr.bf16.mxu0 %v774
  %1083 = vmatpush1.bf16.msra.mxu0 %v773
  %1084 = vmatprep.subr.bf16.mxu0 %v776
  %1085 = vmatpush1.bf16.msra.mxu0 %v775
  %1086 = vmatprep.subr.bf16.mxu0 %v778
  %1087 = vmatpush1.bf16.msra.mxu0 %v777
  %1088 = vmatprep.mubr.bf16.mxu0 %v250
  %1089 = vmatmul.mubr.bf16.gmra.mrb[0].mxu0 %v249
  %v1090 = vpop.f32.mrb[0].mxu0
  %v1091 = vadd.f32 %v1038, %v1090
  %v1092 = vpop.f32.mrb[0].mxu0
  %v1093 = vadd.f32 %v1040, %v1092
  %v1094 = vpop.f32.mrb[0].mxu0
  %v1095 = vadd.f32 %v1042, %v1094
  %v1096 = vpop.f32.mrb[0].mxu0
  %v1097 = vadd.f32 %v1044, %v1096
  %1098 = vmatprep.mubr.bf16.mxu0 %v259
  %1099 = vmatmul.mubr.bf16.gmra.mrb[0].mxu0 %v258
  %v1100 = vpop.f32.mrb[0].mxu0
  %v1101 = vadd.f32 %v1048, %v1100
  %v1102 = vpop.f32.mrb[0].mxu0
  %v1103 = vadd.f32 %v1050, %v1102
  %v1104 = vpop.f32.mrb[0].mxu0
  %v1105 = vadd.f32 %v1052, %v1104
  %v1106 = vpop.f32.mrb[0].mxu0
  %v1107 = vadd.f32 %v1054, %v1106
  %1108 = vdwg.mxu0
  %1109 = vmatprep.subr.bf16.mxu0 %v780
  %1110 = vmatpush1.bf16.msra.mxu0 %v779
  %1111 = vmatprep.subr.bf16.mxu0 %v782
  %1112 = vmatpush1.bf16.msra.mxu0 %v781
  %1113 = vmatprep.subr.bf16.mxu0 %v784
  %1114 = vmatpush1.bf16.msra.mxu0 %v783
  %1115 = vmatprep.subr.bf16.mxu0 %v786
  %1116 = vmatpush1.bf16.msra.mxu0 %v785
  %1117 = vmatprep.subr.bf16.mxu0 %v788
  %1118 = vmatpush1.bf16.msra.mxu0 %v787
  %1119 = vmatprep.subr.bf16.mxu0 %v790
  %1120 = vmatpush1.bf16.msra.mxu0 %v789
  %1121 = vmatprep.subr.bf16.mxu0 %v792
  %1122 = vmatpush1.bf16.msra.mxu0 %v791
  %1123 = vmatprep.subr.bf16.mxu0 %v794
  %1124 = vmatpush1.bf16.msra.mxu0 %v793
  %1125 = vmatprep.subr.bf16.mxu0 %v796
  %1126 = vmatpush1.bf16.msra.mxu0 %v795
  %1127 = vmatprep.subr.bf16.mxu0 %v798
  %1128 = vmatpush1.bf16.msra.mxu0 %v797
  %1129 = vmatprep.subr.bf16.mxu0 %v800
  %1130 = vmatpush1.bf16.msra.mxu0 %v799
  %1131 = vmatprep.subr.bf16.mxu0 %v802
  %1132 = vmatpush1.bf16.msra.mxu0 %v801
  %1133 = vmatprep.subr.bf16.mxu0 %v804
  %1134 = vmatpush1.bf16.msra.mxu0 %v803
  %1135 = vmatprep.subr.bf16.mxu0 %v806
  %1136 = vmatpush1.bf16.msra.mxu0 %v805
  %1137 = vmatprep.subr.bf16.mxu0 %v808
  %1138 = vmatpush1.bf16.msra.mxu0 %v807
  %1139 = vmatprep.subr.bf16.mxu0 %v810
  %1140 = vmatpush1.bf16.msra.mxu0 %v809
  %1141 = vmatprep.mubr.bf16.mxu0 %v252
  %1142 = vmatmul.mubr.bf16.gmra.mrb[0].mxu0 %v251
  %v1143 = vpop.f32.mrb[0].mxu0
  %v1144 = vadd.f32 %v1091, %v1143
  %v1145 = vpop.f32.mrb[0].mxu0
  %v1146 = vadd.f32 %v1093, %v1145
  %v1147 = vpop.f32.mrb[0].mxu0
  %v1148 = vadd.f32 %v1095, %v1147
  %v1149 = vpop.f32.mrb[0].mxu0
  %v1150 = vadd.f32 %v1097, %v1149
  %1151 = vmatprep.mubr.bf16.mxu0 %v261
  %1152 = vmatmul.mubr.bf16.gmra.mrb[0].mxu0 %v260
  %v1153 = vpop.f32.mrb[0].mxu0
  %v1154 = vadd.f32 %v1101, %v1153
  %v1155 = vpop.f32.mrb[0].mxu0
  %v1156 = vadd.f32 %v1103, %v1155
  %v1157 = vpop.f32.mrb[0].mxu0
  %v1158 = vadd.f32 %v1105, %v1157
  %v1159 = vpop.f32.mrb[0].mxu0
  %v1160 = vadd.f32 %v1107, %v1159
  %1161 = vdwg.mxu0
  %1162 = vmatprep.subr.bf16.mxu0 %v812
  %1163 = vmatpush1.bf16.msra.mxu0 %v811
  %1164 = vmatprep.subr.bf16.mxu0 %v814
  %1165 = vmatpush1.bf16.msra.mxu0 %v813
  %1166 = vmatprep.subr.bf16.mxu0 %v816
  %1167 = vmatpush1.bf16.msra.mxu0 %v815
  %1168 = vmatprep.subr.bf16.mxu0 %v818
  %1169 = vmatpush1.bf16.msra.mxu0 %v817
  %1170 = vmatprep.subr.bf16.mxu0 %v820
  %1171 = vmatpush1.bf16.msra.mxu0 %v819
  %1172 = vmatprep.subr.bf16.mxu0 %v822
  %1173 = vmatpush1.bf16.msra.mxu0 %v821
  %1174 = vmatprep.subr.bf16.mxu0 %v824
  %1175 = vmatpush1.bf16.msra.mxu0 %v823
  %1176 = vmatprep.subr.bf16.mxu0 %v826
  %1177 = vmatpush1.bf16.msra.mxu0 %v825
  %1178 = vmatprep.subr.bf16.mxu0 %v828
  %1179 = vmatpush1.bf16.msra.mxu0 %v827
  %1180 = vmatprep.subr.bf16.mxu0 %v830
  %1181 = vmatpush1.bf16.msra.mxu0 %v829
  %1182 = vmatprep.subr.bf16.mxu0 %v832
  %1183 = vmatpush1.bf16.msra.mxu0 %v831
  %1184 = vmatprep.subr.bf16.mxu0 %v834
  %1185 = vmatpush1.bf16.msra.mxu0 %v833
  %1186 = vmatprep.subr.bf16.mxu0 %v836
  %1187 = vmatpush1.bf16.msra.mxu0 %v835
  %1188 = vmatprep.subr.bf16.mxu0 %v838
  %1189 = vmatpush1.bf16.msra.mxu0 %v837
  %1190 = vmatprep.subr.bf16.mxu0 %v840
  %1191 = vmatpush1.bf16.msra.mxu0 %v839
  %1192 = vmatprep.subr.bf16.mxu0 %v842
  %1193 = vmatpush1.bf16.msra.mxu0 %v841
  %1194 = vmatprep.mubr.bf16.mxu0 %v254
  %1195 = vmatmul.mubr.bf16.gmra.mrb[0].mxu0 %v253
  %v1196 = vpop.f32.mrb[0].mxu0
  %v1197 = vadd.f32 %v1144, %v1196
  %v1198 = vpop.f32.mrb[0].mxu0
  %v1199 = vadd.f32 %v1146, %v1198
  %v1200 = vpop.f32.mrb[0].mxu0
  %v1201 = vadd.f32 %v1148, %v1200
  %v1202 = vpop.f32.mrb[0].mxu0
  %v1203 = vadd.f32 %v1150, %v1202
  %1204 = vmatprep.mubr.bf16.mxu0 %v263
  %1205 = vmatmul.mubr.bf16.gmra.mrb[0].mxu0 %v262
  %v1206 = vpop.f32.mrb[0].mxu0
  %v1207 = vadd.f32 %v1154, %v1206
  %v1208 = vpop.f32.mrb[0].mxu0
  %v1209 = vadd.f32 %v1156, %v1208
  %v1210 = vpop.f32.mrb[0].mxu0
  %v1211 = vadd.f32 %v1158, %v1210
  %v1212 = vpop.f32.mrb[0].mxu0
  %v1213 = vadd.f32 %v1160, %v1212
  %1214 = vdwg.mxu0
  %1215 = vmatprep.subr.bf16.mxu0 %v844
  %1216 = vmatpush1.bf16.msra.mxu0 %v843
  %1217 = vmatprep.subr.bf16.mxu0 %v846
  %1218 = vmatpush1.bf16.msra.mxu0 %v845
  %1219 = vmatprep.subr.bf16.mxu0 %v848
  %1220 = vmatpush1.bf16.msra.mxu0 %v847
  %1221 = vmatprep.subr.bf16.mxu0 %v850
  %1222 = vmatpush1.bf16.msra.mxu0 %v849
  %1223 = vmatprep.subr.bf16.mxu0 %v852
  %1224 = vmatpush1.bf16.msra.mxu0 %v851
  %1225 = vmatprep.subr.bf16.mxu0 %v854
  %1226 = vmatpush1.bf16.msra.mxu0 %v853
  %1227 = vmatprep.subr.bf16.mxu0 %v856
  %1228 = vmatpush1.bf16.msra.mxu0 %v855
  %1229 = vmatprep.subr.bf16.mxu0 %v858
  %1230 = vmatpush1.bf16.msra.mxu0 %v857
  %1231 = vmatprep.subr.bf16.mxu0 0
  %1232 = vmatpush1.bf16.msra.mxu0 0
  %1233 = vmatprep.subr.bf16.mxu0 0
  %1234 = vmatpush1.bf16.msra.mxu0 0
  %1235 = vmatprep.subr.bf16.mxu0 0
  %1236 = vmatpush1.bf16.msra.mxu0 0
  %1237 = vmatprep.subr.bf16.mxu0 0
  %1238 = vmatpush1.bf16.msra.mxu0 0
  %1239 = vmatprep.subr.bf16.mxu0 0
  %1240 = vmatpush1.bf16.msra.mxu0 0
  %1241 = vmatprep.subr.bf16.mxu0 0
  %1242 = vmatpush1.bf16.msra.mxu0 0
  %1243 = vmatprep.subr.bf16.mxu0 0
  %1244 = vmatpush1.bf16.msra.mxu0 0
  %1245 = vmatprep.subr.bf16.mxu0 0
  %1246 = vmatpush1.bf16.msra.mxu0 0
  %1247 = vmatprep.mubr.bf16.mxu0 0
  %1248 = vmatmul.mubr.bf16.gmra.mrb[0].mxu0 %v255
  %v1249 = vpop.f32.mrb[0].mxu0
  %v1250 = vadd.f32 %v1197, %v1249
  %v1251 = vpop.f32.mrb[0].mxu0
  %v1252 = vadd.f32 %v1199, %v1251
  %v1253 = vpop.f32.mrb[0].mxu0
  %v1254 = vadd.f32 %v1201, %v1253
  %v1255 = vpop.f32.mrb[0].mxu0
  %v1256 = vadd.f32 %v1203, %v1255
  %1257 = vmatprep.mubr.bf16.mxu0 0
  %1258 = vmatmul.mubr.bf16.gmra.mrb[0].mxu0 %v264
  %v1259 = vpop.f32.mrb[0].mxu0
  %v1260 = vadd.f32 %v1207, %v1259
  %v1261 = vpop.f32.mrb[0].mxu0
  %v1262 = vadd.f32 %v1209, %v1261
  %v1263 = vpop.f32.mrb[0].mxu0
  %v1264 = vadd.f32 %v1211, %v1263
  %v1265 = vpop.f32.mrb[0].mxu0
  %v1266 = vadd.f32 %v1213, %v1265
  %1267 = vdwg.mxu0
  %v1268 = vmax.f32 %v1250, 0.0
  %v1269 = vmax.f32 %v1252, 0.0
  %v1270 = vmax.f32 %v1254, 0.0
  %v1271 = vmax.f32 %v1256, 0.0
  %v1272 = vmax.f32 %v1260, 0.0
  %v1273 = vmax.f32 %v1262, 0.0
  %v1274 = vmax.f32 %v1264, 0.0
  %v1275 = vmax.f32 %v1266, 0.0
  %v1276 = vpack.c.bf16 %v1270, %v1268
  %v1277 = vpack.c.bf16 %v1271, %v1269
  %v1278 = vpack.c.bf16 %v1274, %v1272
  %v1279 = vpack.c.bf16 %v1275, %v1273
  %v1284 = vunpack.c.l.b16 %v1276
  %v1285 = vunpack.c.l.b16 %v1277
  %v1286 = vunpack.c.h.b16 %v1276
  %v1287 = vunpack.c.h.b16 %v1277
  %v1288 = vunpack.c.l.b16 %v1278
  %v1289 = vunpack.c.l.b16 %v1279
  %v1290 = vunpack.c.h.b16 %v1278
  %v1291 = vunpack.c.h.b16 %v1279
  %v1292 = vpack.c.b16 %v1285, %v1284
  %v1293 = vpack.c.b16 %v1287, %v1286
  %v1294 = vpack.c.b16 %v1289, %v1288
  %v1295 = vpack.c.b16 %v1291, %v1290
  %1300 = vst [vmem:[%s3] sm:$0xff] %v1292
  %1301 = vst [vmem:[%s3 + $0x8] sm:$0xff] %v1293
  %1302 = vst [vmem:[%s3 + $0x10] sm:$0xff] %v1294
  %1303 = vst [vmem:[%s3 + $0x18] sm:$0xff] %v1295
  // Predicated region
  $region14: #{lst_encoder4_forward.18} parent=0 // pred_check
    _
  $region15: #{lst_encoder4_forward.18} parent=0 // pred_check_branch
    %1305 = sbr.rel (0) target = $region17
  $region16: #{lst_encoder4_forward.18} parent=0 // pred_region
    _
  $region17: #{lst_encoder4_forward.18} parent=0 // pred_fallthru
    _
  // Predicated region
  $region18: #{lst_encoder4_forward.18} parent=0 // pred_check
    _
  $region19: #{lst_encoder4_forward.18} parent=0 // pred_check_branch
    %1307 = sbr.rel (0) target = $region21
  $region20: #{lst_encoder4_forward.18} parent=0 // pred_region
    _
  $region21: #{lst_encoder4_forward.18} parent=0 // pred_fallthru
    _

// kernel: lst_encoder4_forward.22
$region0: #{lst_encoder4_forward.22}
  #allocation0 [shape = 'u32[]', space=smem, size = 0x4, offset = 0x4, fixed_abs, tag = 'smem constant byte address 0x4 - core index']
  #allocation1 [shape = 'u32[144,128]{1,0:T(1,128)}', space=vmem, size = 0x12000, scoped, tag = 'internal scratch']
  %s0 = inlined_call_operand.vmem [shape: bf16[4,2,2,512], index: 0, kind: input, shape index: {}]
  %s1 = inlined_call_operand.vmem [shape: bf16[4,2,256], index: 1, kind: output, shape index: {}]
  %s2 = sld [smem:[#allocation0]]
  $region14: #{lst_encoder4_forward.22} parent=0
    _
  %s4 = ssub.s32 1, %s2
  %s5 = scalar_select 0, %s4, %s2
  // Predicated region
  $region2: #{lst_encoder4_forward.22} parent=0 // pred_check
    _
  $region3: #{lst_encoder4_forward.22} parent=0 // pred_check_branch
    %7 = sbr.rel (0) target = $region5
  $region4: #{lst_encoder4_forward.22} parent=0 // pred_region
    _
  $region5: #{lst_encoder4_forward.22} parent=0 // pred_fallthru
    _
  %v8 = vld [vmem:[%s0] sm:$0xf]
  %v9 = vld [vmem:[%s0 + $0x4] sm:$0xf]
  %v10 = vld [vmem:[%s0 + $0x8] sm:$0xf]
  %v11 = vld [vmem:[%s0 + $0xc] sm:$0xf]
  %v12 = vld [vmem:[%s0 + $0x10] sm:$0xf]
  %v13 = vld [vmem:[%s0 + $0x14] sm:$0xf]
  %v14 = vld [vmem:[%s0 + $0x18] sm:$0xf]
  %v15 = vld [vmem:[%s0 + $0x1c] sm:$0xf]
  %v16 = vmax.bf16 %v8, %v9
  %v17 = vmax.bf16 %v10, %v11
  %v18 = vmax.bf16 %v12, %v13
  %v19 = vmax.bf16 %v14, %v15
  %v24 = vrot.slane %v16, 2
  %v25 = vrot.slane %v17, 2
  %v26 = vrot.slane %v18, 2
  %v27 = vrot.slane %v19, 2
  %v32 = vmax.bf16 %v16, %v24
  %v33 = vmax.bf16 %v17, %v25
  %v34 = vmax.bf16 %v18, %v26
  %v35 = vmax.bf16 %v19, %v27
  %36 = vst [vmem:[%s1] sm:$0x3] %v32
  %37 = vst [vmem:[%s1 + $0x2] sm:$0x3] %v33
  %38 = vst [vmem:[%s1 + $0x4] sm:$0x3] %v34
  %39 = vst [vmem:[%s1 + $0x6] sm:$0x3] %v35
  // Predicated region
  $region6: #{lst_encoder4_forward.22} parent=0 // pred_check
    _
  $region7: #{lst_encoder4_forward.22} parent=0 // pred_check_branch
    %41 = sbr.rel (0) target = $region9
  $region8: #{lst_encoder4_forward.22} parent=0 // pred_region
    _
  $region9: #{lst_encoder4_forward.22} parent=0 // pred_fallthru
    _
  // Predicated region
  $region10: #{lst_encoder4_forward.22} parent=0 // pred_check
    _
  $region11: #{lst_encoder4_forward.22} parent=0 // pred_check_branch
    %43 = sbr.rel (0) target = $region13
  $region12: #{lst_encoder4_forward.22} parent=0 // pred_region
    _
  $region13: #{lst_encoder4_forward.22} parent=0 // pred_fallthru
    _

// kernel: lst_encoder4_forward.19
$region0: #{lst_encoder4_forward.19}
  #allocation0 [shape = 'u32[]', space=smem, size = 0x4, offset = 0x4, fixed_abs, tag = 'smem constant byte address 0x4 - core index']
  #allocation1 [shape = 'u32[144,128]{1,0:T(1,128)}', space=vmem, size = 0x12000, scoped, tag = 'internal scratch']
  %s0 = inlined_call_operand.vmem [shape: bf16[32,2304], index: 0, kind: input, shape index: {}]
  %s1 = inlined_call_operand.vmem [shape: bf16[2304,256], index: 1, kind: input, shape index: {}]
  %s2 = inlined_call_operand.vmem [shape: f32[1,256], index: 2, kind: input, shape index: {}]
  %s3 = inlined_call_operand.vmem [shape: bf16[32,256], index: 3, kind: output, shape index: {}]
  %s4 = sld [smem:[#allocation0]]
  $region22: #{lst_encoder4_forward.19} parent=0
    _
  %s6 = ssub.s32 1, %s4
  %s7 = scalar_select 0, %s6, %s4
  // Predicated region
  $region2: #{lst_encoder4_forward.19} parent=0 // pred_check
    _
  $region3: #{lst_encoder4_forward.19} parent=0 // pred_check_branch
    %9 = sbr.rel (0) target = $region5
  $region4: #{lst_encoder4_forward.19} parent=0 // pred_region
    _
  $region5: #{lst_encoder4_forward.19} parent=0 // pred_fallthru
    _
  // Predicated region
  $region6: #{lst_encoder4_forward.19} parent=0 // pred_check
    _
  $region7: #{lst_encoder4_forward.19} parent=0 // pred_check_branch
    %11 = sbr.rel (0) target = $region9
  $region8: #{lst_encoder4_forward.19} parent=0 // pred_region
    _
  $region9: #{lst_encoder4_forward.19} parent=0 // pred_fallthru
    _
  // Predicated region
  $region10: #{lst_encoder4_forward.19} parent=0 // pred_check
    _
  $region11: #{lst_encoder4_forward.19} parent=0 // pred_check_branch
    %13 = sbr.rel (0) target = $region13
  $region12: #{lst_encoder4_forward.19} parent=0 // pred_region
    _
  $region13: #{lst_encoder4_forward.19} parent=0 // pred_fallthru
    _
  %v14 = vld [vmem:[%s0] sm:$0xff]
  %v15 = vld [vmem:[%s0 + $0x8] sm:$0xff]
  %v16 = vld [vmem:[%s0 + $0x10] sm:$0xff]
  %v17 = vld [vmem:[%s0 + $0x18] sm:$0xff]
  %v18 = vld [vmem:[%s0 + $0x20] sm:$0xff]
  %v19 = vld [vmem:[%s0 + $0x28] sm:$0xff]
  %v20 = vld [vmem:[%s0 + $0x30] sm:$0xff]
  %v21 = vld [vmem:[%s0 + $0x38] sm:$0xff]
  %v22 = vld [vmem:[%s0 + $0x40] sm:$0xff]
  %v23 = vld [vmem:[%s0 + $0x48] sm:$0xff]
  %v24 = vld [vmem:[%s0 + $0x50] sm:$0xff]
  %v25 = vld [vmem:[%s0 + $0x58] sm:$0xff]
  %v26 = vld [vmem:[%s0 + $0x60] sm:$0xff]
  %v27 = vld [vmem:[%s0 + $0x68] sm:$0xff]
  %v28 = vld [vmem:[%s0 + $0x70] sm:$0xff]
  %v29 = vld [vmem:[%s0 + $0x78] sm:$0xff]
  %v30 = vld [vmem:[%s0 + $0x80] sm:$0xff]
  %v31 = vld [vmem:[%s0 + $0x88] sm:$0xff]
  %v32 = vld [vmem:[%s0 + $0x90] sm:$0xff]
  %v33 = vld [vmem:[%s0 + $0x98] sm:$0xff]
  %v34 = vld [vmem:[%s0 + $0xa0] sm:$0xff]
  %v35 = vld [vmem:[%s0 + $0xa8] sm:$0xff]
  %v36 = vld [vmem:[%s0 + $0xb0] sm:$0xff]
  %v37 = vld [vmem:[%s0 + $0xb8] sm:$0xff]
  %v38 = vld [vmem:[%s0 + $0xc0] sm:$0xff]
  %v39 = vld [vmem:[%s0 + $0xc8] sm:$0xff]
  %v40 = vld [vmem:[%s0 + $0xd0] sm:$0xff]
  %v41 = vld [vmem:[%s0 + $0xd8] sm:$0xff]
  %v42 = vld [vmem:[%s0 + $0xe0] sm:$0xff]
  %v43 = vld [vmem:[%s0 + $0xe8] sm:$0xff]
  %v44 = vld [vmem:[%s0 + $0xf0] sm:$0xff]
  %v45 = vld [vmem:[%s0 + $0xf8] sm:$0xff]
  %v46 = vld [vmem:[%s0 + $0x100] sm:$0xff]
  %v47 = vld [vmem:[%s0 + $0x108] sm:$0xff]
  %v48 = vld [vmem:[%s0 + $0x110] sm:$0xff]
  %v49 = vld [vmem:[%s0 + $0x118] sm:$0xff]
  %v50 = vld [vmem:[%s1] sm:$0xff]
  %v51 = vld [vmem:[%s1 + $0x8] sm:$0xff]
  %v52 = vld [vmem:[%s1 + $0x10] sm:$0xff]
  %v53 = vld [vmem:[%s1 + $0x18] sm:$0xff]
  %v54 = vld [vmem:[%s1 + $0x20] sm:$0xff]
  %v55 = vld [vmem:[%s1 + $0x28] sm:$0xff]
  %v56 = vld [vmem:[%s1 + $0x30] sm:$0xff]
  %v57 = vld [vmem:[%s1 + $0x38] sm:$0xff]
  %v58 = vld [vmem:[%s1 + $0x40] sm:$0xff]
  %v59 = vld [vmem:[%s1 + $0x48] sm:$0xff]
  %v60 = vld [vmem:[%s1 + $0x50] sm:$0xff]
  %v61 = vld [vmem:[%s1 + $0x58] sm:$0xff]
  %v62 = vld [vmem:[%s1 + $0x60] sm:$0xff]
  %v63 = vld [vmem:[%s1 + $0x68] sm:$0xff]
  %v64 = vld [vmem:[%s1 + $0x70] sm:$0xff]
  %v65 = vld [vmem:[%s1 + $0x78] sm:$0xff]
  %v66 = vld [vmem:[%s1 + $0x80] sm:$0xff]
  %v67 = vld [vmem:[%s1 + $0x88] sm:$0xff]
  %v68 = vld [vmem:[%s1 + $0x90] sm:$0xff]
  %v69 = vld [vmem:[%s1 + $0x98] sm:$0xff]
  %v70 = vld [vmem:[%s1 + $0xa0] sm:$0xff]
  %v71 = vld [vmem:[%s1 + $0xa8] sm:$0xff]
  %v72 = vld [vmem:[%s1 + $0xb0] sm:$0xff]
  %v73 = vld [vmem:[%s1 + $0xb8] sm:$0xff]
  %v74 = vld [vmem:[%s1 + $0xc0] sm:$0xff]
  %v75 = vld [vmem:[%s1 + $0xc8] sm:$0xff]
  %v76 = vld [vmem:[%s1 + $0xd0] sm:$0xff]
  %v77 = vld [vmem:[%s1 + $0xd8] sm:$0xff]
  %v78 = vld [vmem:[%s1 + $0xe0] sm:$0xff]
  %v79 = vld [vmem:[%s1 + $0xe8] sm:$0xff]
  %v80 = vld [vmem:[%s1 + $0xf0] sm:$0xff]
  %v81 = vld [vmem:[%s1 + $0xf8] sm:$0xff]
  %v82 = vld [vmem:[%s1 + $0x100] sm:$0xff]
  %v83 = vld [vmem:[%s1 + $0x108] sm:$0xff]
  %v84 = vld [vmem:[%s1 + $0x110] sm:$0xff]
  %v85 = vld [vmem:[%s1 + $0x118] sm:$0xff]
  %v86 = vld [vmem:[%s1 + $0x120] sm:$0xff]
  %v87 = vld [vmem:[%s1 + $0x128] sm:$0xff]
  %v88 = vld [vmem:[%s1 + $0x130] sm:$0xff]
  %v89 = vld [vmem:[%s1 + $0x138] sm:$0xff]
  %v90 = vld [vmem:[%s1 + $0x140] sm:$0xff]
  %v91 = vld [vmem:[%s1 + $0x148] sm:$0xff]
  %v92 = vld [vmem:[%s1 + $0x150] sm:$0xff]
  %v93 = vld [vmem:[%s1 + $0x158] sm:$0xff]
  %v94 = vld [vmem:[%s1 + $0x160] sm:$0xff]
  %v95 = vld [vmem:[%s1 + $0x168] sm:$0xff]
  %v96 = vld [vmem:[%s1 + $0x170] sm:$0xff]
  %v97 = vld [vmem:[%s1 + $0x178] sm:$0xff]
  %v98 = vld [vmem:[%s1 + $0x180] sm:$0xff]
  %v99 = vld [vmem:[%s1 + $0x188] sm:$0xff]
  %v100 = vld [vmem:[%s1 + $0x190] sm:$0xff]
  %v101 = vld [vmem:[%s1 + $0x198] sm:$0xff]
  %v102 = vld [vmem:[%s1 + $0x1a0] sm:$0xff]
  %v103 = vld [vmem:[%s1 + $0x1a8] sm:$0xff]
  %v104 = vld [vmem:[%s1 + $0x1b0] sm:$0xff]
  %v105 = vld [vmem:[%s1 + $0x1b8] sm:$0xff]
  %v106 = vld [vmem:[%s1 + $0x1c0] sm:$0xff]
  %v107 = vld [vmem:[%s1 + $0x1c8] sm:$0xff]
  %v108 = vld [vmem:[%s1 + $0x1d0] sm:$0xff]
  %v109 = vld [vmem:[%s1 + $0x1d8] sm:$0xff]
  %v110 = vld [vmem:[%s1 + $0x1e0] sm:$0xff]
  %v111 = vld [vmem:[%s1 + $0x1e8] sm:$0xff]
  %v112 = vld [vmem:[%s1 + $0x1f0] sm:$0xff]
  %v113 = vld [vmem:[%s1 + $0x1f8] sm:$0xff]
  %v114 = vld [vmem:[%s1 + $0x200] sm:$0xff]
  %v115 = vld [vmem:[%s1 + $0x208] sm:$0xff]
  %v116 = vld [vmem:[%s1 + $0x210] sm:$0xff]
  %v117 = vld [vmem:[%s1 + $0x218] sm:$0xff]
  %v118 = vld [vmem:[%s1 + $0x220] sm:$0xff]
  %v119 = vld [vmem:[%s1 + $0x228] sm:$0xff]
  %v120 = vld [vmem:[%s1 + $0x230] sm:$0xff]
  %v121 = vld [vmem:[%s1 + $0x238] sm:$0xff]
  %v122 = vld [vmem:[%s1 + $0x240] sm:$0xff]
  %v123 = vld [vmem:[%s1 + $0x248] sm:$0xff]
  %v124 = vld [vmem:[%s1 + $0x250] sm:$0xff]
  %v125 = vld [vmem:[%s1 + $0x258] sm:$0xff]
  %v126 = vld [vmem:[%s1 + $0x260] sm:$0xff]
  %v127 = vld [vmem:[%s1 + $0x268] sm:$0xff]
  %v128 = vld [vmem:[%s1 + $0x270] sm:$0xff]
  %v129 = vld [vmem:[%s1 + $0x278] sm:$0xff]
  %v130 = vld [vmem:[%s1 + $0x280] sm:$0xff]
  %v131 = vld [vmem:[%s1 + $0x288] sm:$0xff]
  %v132 = vld [vmem:[%s1 + $0x290] sm:$0xff]
  %v133 = vld [vmem:[%s1 + $0x298] sm:$0xff]
  %v134 = vld [vmem:[%s1 + $0x2a0] sm:$0xff]
  %v135 = vld [vmem:[%s1 + $0x2a8] sm:$0xff]
  %v136 = vld [vmem:[%s1 + $0x2b0] sm:$0xff]
  %v137 = vld [vmem:[%s1 + $0x2b8] sm:$0xff]
  %v138 = vld [vmem:[%s1 + $0x2c0] sm:$0xff]
  %v139 = vld [vmem:[%s1 + $0x2c8] sm:$0xff]
  %v140 = vld [vmem:[%s1 + $0x2d0] sm:$0xff]
  %v141 = vld [vmem:[%s1 + $0x2d8] sm:$0xff]
  %v142 = vld [vmem:[%s1 + $0x2e0] sm:$0xff]
  %v143 = vld [vmem:[%s1 + $0x2e8] sm:$0xff]
  %v144 = vld [vmem:[%s1 + $0x2f0] sm:$0xff]
  %v145 = vld [vmem:[%s1 + $0x2f8] sm:$0xff]
  %v146 = vld [vmem:[%s1 + $0x300] sm:$0xff]
  %v147 = vld [vmem:[%s1 + $0x308] sm:$0xff]
  %v148 = vld [vmem:[%s1 + $0x310] sm:$0xff]
  %v149 = vld [vmem:[%s1 + $0x318] sm:$0xff]
  %v150 = vld [vmem:[%s1 + $0x320] sm:$0xff]
  %v151 = vld [vmem:[%s1 + $0x328] sm:$0xff]
  %v152 = vld [vmem:[%s1 + $0x330] sm:$0xff]
  %v153 = vld [vmem:[%s1 + $0x338] sm:$0xff]
  %v154 = vld [vmem:[%s1 + $0x340] sm:$0xff]
  %v155 = vld [vmem:[%s1 + $0x348] sm:$0xff]
  %v156 = vld [vmem:[%s1 + $0x350] sm:$0xff]
  %v157 = vld [vmem:[%s1 + $0x358] sm:$0xff]
  %v158 = vld [vmem:[%s1 + $0x360] sm:$0xff]
  %v159 = vld [vmem:[%s1 + $0x368] sm:$0xff]
  %v160 = vld [vmem:[%s1 + $0x370] sm:$0xff]
  %v161 = vld [vmem:[%s1 + $0x378] sm:$0xff]
  %v162 = vld [vmem:[%s1 + $0x380] sm:$0xff]
  %v163 = vld [vmem:[%s1 + $0x388] sm:$0xff]
  %v164 = vld [vmem:[%s1 + $0x390] sm:$0xff]
  %v165 = vld [vmem:[%s1 + $0x398] sm:$0xff]
  %v166 = vld [vmem:[%s1 + $0x3a0] sm:$0xff]
  %v167 = vld [vmem:[%s1 + $0x3a8] sm:$0xff]
  %v168 = vld [vmem:[%s1 + $0x3b0] sm:$0xff]
  %v169 = vld [vmem:[%s1 + $0x3b8] sm:$0xff]
  %v170 = vld [vmem:[%s1 + $0x3c0] sm:$0xff]
  %v171 = vld [vmem:[%s1 + $0x3c8] sm:$0xff]
  %v172 = vld [vmem:[%s1 + $0x3d0] sm:$0xff]
  %v173 = vld [vmem:[%s1 + $0x3d8] sm:$0xff]
  %v174 = vld [vmem:[%s1 + $0x3e0] sm:$0xff]
  %v175 = vld [vmem:[%s1 + $0x3e8] sm:$0xff]
  %v176 = vld [vmem:[%s1 + $0x3f0] sm:$0xff]
  %v177 = vld [vmem:[%s1 + $0x3f8] sm:$0xff]
  %v178 = vld [vmem:[%s1 + $0x400] sm:$0xff]
  %v179 = vld [vmem:[%s1 + $0x408] sm:$0xff]
  %v180 = vld [vmem:[%s1 + $0x410] sm:$0xff]
  %v181 = vld [vmem:[%s1 + $0x418] sm:$0xff]
  %v182 = vld [vmem:[%s1 + $0x420] sm:$0xff]
  %v183 = vld [vmem:[%s1 + $0x428] sm:$0xff]
  %v184 = vld [vmem:[%s1 + $0x430] sm:$0xff]
  %v185 = vld [vmem:[%s1 + $0x438] sm:$0xff]
  %v186 = vld [vmem:[%s1 + $0x440] sm:$0xff]
  %v187 = vld [vmem:[%s1 + $0x448] sm:$0xff]
  %v188 = vld [vmem:[%s1 + $0x450] sm:$0xff]
  %v189 = vld [vmem:[%s1 + $0x458] sm:$0xff]
  %v190 = vld [vmem:[%s1 + $0x460] sm:$0xff]
  %v191 = vld [vmem:[%s1 + $0x468] sm:$0xff]
  %v192 = vld [vmem:[%s1 + $0x470] sm:$0xff]
  %v193 = vld [vmem:[%s1 + $0x478] sm:$0xff]
  %v194 = vld [vmem:[%s1 + $0x480] sm:$0xff]
  %v195 = vld [vmem:[%s1 + $0x488] sm:$0xff]
  %v196 = vld [vmem:[%s1 + $0x490] sm:$0xff]
  %v197 = vld [vmem:[%s1 + $0x498] sm:$0xff]
  %v198 = vld [vmem:[%s1 + $0x4a0] sm:$0xff]
  %v199 = vld [vmem:[%s1 + $0x4a8] sm:$0xff]
  %v200 = vld [vmem:[%s1 + $0x4b0] sm:$0xff]
  %v201 = vld [vmem:[%s1 + $0x4b8] sm:$0xff]
  %v202 = vld [vmem:[%s1 + $0x4c0] sm:$0xff]
  %v203 = vld [vmem:[%s1 + $0x4c8] sm:$0xff]
  %v204 = vld [vmem:[%s1 + $0x4d0] sm:$0xff]
  %v205 = vld [vmem:[%s1 + $0x4d8] sm:$0xff]
  %v206 = vld [vmem:[%s1 + $0x4e0] sm:$0xff]
  %v207 = vld [vmem:[%s1 + $0x4e8] sm:$0xff]
  %v208 = vld [vmem:[%s1 + $0x4f0] sm:$0xff]
  %v209 = vld [vmem:[%s1 + $0x4f8] sm:$0xff]
  %v210 = vld [vmem:[%s1 + $0x500] sm:$0xff]
  %v211 = vld [vmem:[%s1 + $0x508] sm:$0xff]
  %v212 = vld [vmem:[%s1 + $0x510] sm:$0xff]
  %v213 = vld [vmem:[%s1 + $0x518] sm:$0xff]
  %v214 = vld [vmem:[%s1 + $0x520] sm:$0xff]
  %v215 = vld [vmem:[%s1 + $0x528] sm:$0xff]
  %v216 = vld [vmem:[%s1 + $0x530] sm:$0xff]
  %v217 = vld [vmem:[%s1 + $0x538] sm:$0xff]
  %v218 = vld [vmem:[%s1 + $0x540] sm:$0xff]
  %v219 = vld [vmem:[%s1 + $0x548] sm:$0xff]
  %v220 = vld [vmem:[%s1 + $0x550] sm:$0xff]
  %v221 = vld [vmem:[%s1 + $0x558] sm:$0xff]
  %v222 = vld [vmem:[%s1 + $0x560] sm:$0xff]
  %v223 = vld [vmem:[%s1 + $0x568] sm:$0xff]
  %v224 = vld [vmem:[%s1 + $0x570] sm:$0xff]
  %v225 = vld [vmem:[%s1 + $0x578] sm:$0xff]
  %v226 = vld [vmem:[%s1 + $0x580] sm:$0xff]
  %v227 = vld [vmem:[%s1 + $0x588] sm:$0xff]
  %v228 = vld [vmem:[%s1 + $0x590] sm:$0xff]
  %v229 = vld [vmem:[%s1 + $0x598] sm:$0xff]
  %v230 = vld [vmem:[%s1 + $0x5a0] sm:$0xff]
  %v231 = vld [vmem:[%s1 + $0x5a8] sm:$0xff]
  %v232 = vld [vmem:[%s1 + $0x5b0] sm:$0xff]
  %v233 = vld [vmem:[%s1 + $0x5b8] sm:$0xff]
  %v234 = vld [vmem:[%s1 + $0x5c0] sm:$0xff]
  %v235 = vld [vmem:[%s1 + $0x5c8] sm:$0xff]
  %v236 = vld [vmem:[%s1 + $0x5d0] sm:$0xff]
  %v237 = vld [vmem:[%s1 + $0x5d8] sm:$0xff]
  %v238 = vld [vmem:[%s1 + $0x5e0] sm:$0xff]
  %v239 = vld [vmem:[%s1 + $0x5e8] sm:$0xff]
  %v240 = vld [vmem:[%s1 + $0x5f0] sm:$0xff]
  %v241 = vld [vmem:[%s1 + $0x5f8] sm:$0xff]
  %v242 = vld [vmem:[%s1 + $0x600] sm:$0xff]
  %v243 = vld [vmem:[%s1 + $0x608] sm:$0xff]
  %v244 = vld [vmem:[%s1 + $0x610] sm:$0xff]
  %v245 = vld [vmem:[%s1 + $0x618] sm:$0xff]
  %v246 = vld [vmem:[%s1 + $0x620] sm:$0xff]
  %v247 = vld [vmem:[%s1 + $0x628] sm:$0xff]
  %v248 = vld [vmem:[%s1 + $0x630] sm:$0xff]
  %v249 = vld [vmem:[%s1 + $0x638] sm:$0xff]
  %v250 = vld [vmem:[%s1 + $0x640] sm:$0xff]
  %v251 = vld [vmem:[%s1 + $0x648] sm:$0xff]
  %v252 = vld [vmem:[%s1 + $0x650] sm:$0xff]
  %v253 = vld [vmem:[%s1 + $0x658] sm:$0xff]
  %v254 = vld [vmem:[%s1 + $0x660] sm:$0xff]
  %v255 = vld [vmem:[%s1 + $0x668] sm:$0xff]
  %v256 = vld [vmem:[%s1 + $0x670] sm:$0xff]
  %v257 = vld [vmem:[%s1 + $0x678] sm:$0xff]
  %v258 = vld [vmem:[%s1 + $0x680] sm:$0xff]
  %v259 = vld [vmem:[%s1 + $0x688] sm:$0xff]
  %v260 = vld [vmem:[%s1 + $0x690] sm:$0xff]
  %v261 = vld [vmem:[%s1 + $0x698] sm:$0xff]
  %v262 = vld [vmem:[%s1 + $0x6a0] sm:$0xff]
  %v263 = vld [vmem:[%s1 + $0x6a8] sm:$0xff]
  %v264 = vld [vmem:[%s1 + $0x6b0] sm:$0xff]
  %v265 = vld [vmem:[%s1 + $0x6b8] sm:$0xff]
  %v266 = vld [vmem:[%s1 + $0x6c0] sm:$0xff]
  %v267 = vld [vmem:[%s1 + $0x6c8] sm:$0xff]
  %v268 = vld [vmem:[%s1 + $0x6d0] sm:$0xff]
  %v269 = vld [vmem:[%s1 + $0x6d8] sm:$0xff]
  %v270 = vld [vmem:[%s1 + $0x6e0] sm:$0xff]
  %v271 = vld [vmem:[%s1 + $0x6e8] sm:$0xff]
  %v272 = vld [vmem:[%s1 + $0x6f0] sm:$0xff]
  %v273 = vld [vmem:[%s1 + $0x6f8] sm:$0xff]
  %v274 = vld [vmem:[%s1 + $0x700] sm:$0xff]
  %v275 = vld [vmem:[%s1 + $0x708] sm:$0xff]
  %v276 = vld [vmem:[%s1 + $0x710] sm:$0xff]
  %v277 = vld [vmem:[%s1 + $0x718] sm:$0xff]
  %v278 = vld [vmem:[%s1 + $0x720] sm:$0xff]
  %v279 = vld [vmem:[%s1 + $0x728] sm:$0xff]
  %v280 = vld [vmem:[%s1 + $0x730] sm:$0xff]
  %v281 = vld [vmem:[%s1 + $0x738] sm:$0xff]
  %v282 = vld [vmem:[%s1 + $0x740] sm:$0xff]
  %v283 = vld [vmem:[%s1 + $0x748] sm:$0xff]
  %v284 = vld [vmem:[%s1 + $0x750] sm:$0xff]
  %v285 = vld [vmem:[%s1 + $0x758] sm:$0xff]
  %v286 = vld [vmem:[%s1 + $0x760] sm:$0xff]
  %v287 = vld [vmem:[%s1 + $0x768] sm:$0xff]
  %v288 = vld [vmem:[%s1 + $0x770] sm:$0xff]
  %v289 = vld [vmem:[%s1 + $0x778] sm:$0xff]
  %v290 = vld [vmem:[%s1 + $0x780] sm:$0xff]
  %v291 = vld [vmem:[%s1 + $0x788] sm:$0xff]
  %v292 = vld [vmem:[%s1 + $0x790] sm:$0xff]
  %v293 = vld [vmem:[%s1 + $0x798] sm:$0xff]
  %v294 = vld [vmem:[%s1 + $0x7a0] sm:$0xff]
  %v295 = vld [vmem:[%s1 + $0x7a8] sm:$0xff]
  %v296 = vld [vmem:[%s1 + $0x7b0] sm:$0xff]
  %v297 = vld [vmem:[%s1 + $0x7b8] sm:$0xff]
  %v298 = vld [vmem:[%s1 + $0x7c0] sm:$0xff]
  %v299 = vld [vmem:[%s1 + $0x7c8] sm:$0xff]
  %v300 = vld [vmem:[%s1 + $0x7d0] sm:$0xff]
  %v301 = vld [vmem:[%s1 + $0x7d8] sm:$0xff]
  %v302 = vld [vmem:[%s1 + $0x7e0] sm:$0xff]
  %v303 = vld [vmem:[%s1 + $0x7e8] sm:$0xff]
  %v304 = vld [vmem:[%s1 + $0x7f0] sm:$0xff]
  %v305 = vld [vmem:[%s1 + $0x7f8] sm:$0xff]
  %v306 = vld [vmem:[%s1 + $0x800] sm:$0xff]
  %v307 = vld [vmem:[%s1 + $0x808] sm:$0xff]
  %v308 = vld [vmem:[%s1 + $0x810] sm:$0xff]
  %v309 = vld [vmem:[%s1 + $0x818] sm:$0xff]
  %v310 = vld [vmem:[%s1 + $0x820] sm:$0xff]
  %v311 = vld [vmem:[%s1 + $0x828] sm:$0xff]
  %v312 = vld [vmem:[%s1 + $0x830] sm:$0xff]
  %v313 = vld [vmem:[%s1 + $0x838] sm:$0xff]
  %v314 = vld [vmem:[%s1 + $0x840] sm:$0xff]
  %v315 = vld [vmem:[%s1 + $0x848] sm:$0xff]
  %v316 = vld [vmem:[%s1 + $0x850] sm:$0xff]
  %v317 = vld [vmem:[%s1 + $0x858] sm:$0xff]
  %v318 = vld [vmem:[%s1 + $0x860] sm:$0xff]
  %v319 = vld [vmem:[%s1 + $0x868] sm:$0xff]
  %v320 = vld [vmem:[%s1 + $0x870] sm:$0xff]
  %v321 = vld [vmem:[%s1 + $0x878] sm:$0xff]
  %v322 = vld [vmem:[%s1 + $0x880] sm:$0xff]
  %v323 = vld [vmem:[%s1 + $0x888] sm:$0xff]
  %v324 = vld [vmem:[%s1 + $0x890] sm:$0xff]
  %v325 = vld [vmem:[%s1 + $0x898] sm:$0xff]
  %v326 = vld [vmem:[%s1 + $0x8a0] sm:$0xff]
  %v327 = vld [vmem:[%s1 + $0x8a8] sm:$0xff]
  %v328 = vld [vmem:[%s1 + $0x8b0] sm:$0xff]
  %v329 = vld [vmem:[%s1 + $0x8b8] sm:$0xff]
  %v330 = vld [vmem:[%s1 + $0x8c0] sm:$0xff]
  %v331 = vld [vmem:[%s1 + $0x8c8] sm:$0xff]
  %v332 = vld [vmem:[%s1 + $0x8d0] sm:$0xff]
  %v333 = vld [vmem:[%s1 + $0x8d8] sm:$0xff]
  %v334 = vld [vmem:[%s1 + $0x8e0] sm:$0xff]
  %v335 = vld [vmem:[%s1 + $0x8e8] sm:$0xff]
  %v336 = vld [vmem:[%s1 + $0x8f0] sm:$0xff]
  %v337 = vld [vmem:[%s1 + $0x8f8] sm:$0xff]
  %v338 = vld [vmem:[%s2] sm:$0x3]
  %v340 = vlaneseq
  %v341 = vshrl.u32 %v340, 7
  %v342 = vsub.s32 0, %v341
  %v343 = vrot.slane %v338, %v342
  %v344 = vlaneseq
  %v345 = vshrl.u32 %v344, 7
  %v346 = vsub.s32 1, %v345
  %v347 = vrot.slane %v338, %v346
  %v386 = vunpack.c.l.b16 %v14
  %v387 = vunpack.c.h.b16 %v14
  %v388 = vunpack.c.l.b16 %v15
  %v389 = vunpack.c.h.b16 %v15
  %v390 = vunpack.c.l.b16 %v16
  %v391 = vunpack.c.h.b16 %v16
  %v392 = vunpack.c.l.b16 %v17
  %v393 = vunpack.c.h.b16 %v17
  %v394 = vunpack.c.l.b16 %v18
  %v395 = vunpack.c.h.b16 %v18
  %v396 = vunpack.c.l.b16 %v19
  %v397 = vunpack.c.h.b16 %v19
  %v398 = vunpack.c.l.b16 %v20
  %v399 = vunpack.c.h.b16 %v20
  %v400 = vunpack.c.l.b16 %v21
  %v401 = vunpack.c.h.b16 %v21
  %v402 = vunpack.c.l.b16 %v22
  %v403 = vunpack.c.h.b16 %v22
  %v404 = vunpack.c.l.b16 %v23
  %v405 = vunpack.c.h.b16 %v23
  %v406 = vunpack.c.l.b16 %v24
  %v407 = vunpack.c.h.b16 %v24
  %v408 = vunpack.c.l.b16 %v25
  %v409 = vunpack.c.h.b16 %v25
  %v410 = vunpack.c.l.b16 %v26
  %v411 = vunpack.c.h.b16 %v26
  %v412 = vunpack.c.l.b16 %v27
  %v413 = vunpack.c.h.b16 %v27
  %v414 = vunpack.c.l.b16 %v28
  %v415 = vunpack.c.h.b16 %v28
  %v416 = vunpack.c.l.b16 %v29
  %v417 = vunpack.c.h.b16 %v29
  %v418 = vunpack.c.l.b16 %v30
  %v419 = vunpack.c.h.b16 %v30
  %v420 = vunpack.c.l.b16 %v31
  %v421 = vunpack.c.h.b16 %v31
  %v422 = vunpack.c.l.b16 %v32
  %v423 = vunpack.c.h.b16 %v32
  %v424 = vunpack.c.l.b16 %v33
  %v425 = vunpack.c.h.b16 %v33
  %v426 = vunpack.c.l.b16 %v34
  %v427 = vunpack.c.h.b16 %v34
  %v428 = vunpack.c.l.b16 %v35
  %v429 = vunpack.c.h.b16 %v35
  %v430 = vunpack.c.l.b16 %v36
  %v431 = vunpack.c.h.b16 %v36
  %v432 = vunpack.c.l.b16 %v37
  %v433 = vunpack.c.h.b16 %v37
  %v434 = vunpack.c.l.b16 %v38
  %v435 = vunpack.c.h.b16 %v38
  %v436 = vunpack.c.l.b16 %v39
  %v437 = vunpack.c.h.b16 %v39
  %v438 = vunpack.c.l.b16 %v40
  %v439 = vunpack.c.h.b16 %v40
  %v440 = vunpack.c.l.b16 %v41
  %v441 = vunpack.c.h.b16 %v41
  %v442 = vunpack.c.l.b16 %v42
  %v443 = vunpack.c.h.b16 %v42
  %v444 = vunpack.c.l.b16 %v43
  %v445 = vunpack.c.h.b16 %v43
  %v446 = vunpack.c.l.b16 %v44
  %v447 = vunpack.c.h.b16 %v44
  %v448 = vunpack.c.l.b16 %v45
  %v449 = vunpack.c.h.b16 %v45
  %v450 = vunpack.c.l.b16 %v46
  %v451 = vunpack.c.h.b16 %v46
  %v452 = vunpack.c.l.b16 %v47
  %v453 = vunpack.c.h.b16 %v47
  %v454 = vunpack.c.l.b16 %v48
  %v455 = vunpack.c.h.b16 %v48
  %v456 = vunpack.c.l.b16 %v49
  %v457 = vunpack.c.h.b16 %v49
  %v458 = vpack.c.b16 %v404, %v386
  %v459 = vpack.c.b16 %v405, %v387
  %v460 = vpack.c.b16 %v406, %v388
  %v461 = vpack.c.b16 %v407, %v389
  %v462 = vpack.c.b16 %v408, %v390
  %v463 = vpack.c.b16 %v409, %v391
  %v464 = vpack.c.b16 %v410, %v392
  %v465 = vpack.c.b16 %v411, %v393
  %v466 = vpack.c.b16 %v412, %v394
  %v467 = vpack.c.b16 %v413, %v395
  %v468 = vpack.c.b16 %v414, %v396
  %v469 = vpack.c.b16 %v415, %v397
  %v470 = vpack.c.b16 %v416, %v398
  %v471 = vpack.c.b16 %v417, %v399
  %v472 = vpack.c.b16 %v418, %v400
  %v473 = vpack.c.b16 %v419, %v401
  %v474 = vpack.c.b16 %v420, %v402
  %v475 = vpack.c.b16 %v421, %v403
  %v476 = vpack.c.b16 %v440, %v422
  %v477 = vpack.c.b16 %v441, %v423
  %v478 = vpack.c.b16 %v442, %v424
  %v479 = vpack.c.b16 %v443, %v425
  %v480 = vpack.c.b16 %v444, %v426
  %v481 = vpack.c.b16 %v445, %v427
  %v482 = vpack.c.b16 %v446, %v428
  %v483 = vpack.c.b16 %v447, %v429
  %v484 = vpack.c.b16 %v448, %v430
  %v485 = vpack.c.b16 %v449, %v431
  %v486 = vpack.c.b16 %v450, %v432
  %v487 = vpack.c.b16 %v451, %v433
  %v488 = vpack.c.b16 %v452, %v434
  %v489 = vpack.c.b16 %v453, %v435
  %v490 = vpack.c.b16 %v454, %v436
  %v491 = vpack.c.b16 %v455, %v437
  %v492 = vpack.c.b16 %v456, %v438
  %v493 = vpack.c.b16 %v457, %v439
  %v818 = vunpack.c.l.b16 %v50
  %v819 = vunpack.c.h.b16 %v50
  %v820 = vunpack.c.l.b16 %v51
  %v821 = vunpack.c.h.b16 %v51
  %v822 = vunpack.c.l.b16 %v52
  %v823 = vunpack.c.h.b16 %v52
  %v824 = vunpack.c.l.b16 %v53
  %v825 = vunpack.c.h.b16 %v53
  %v826 = vunpack.c.l.b16 %v54
  %v827 = vunpack.c.h.b16 %v54
  %v828 = vunpack.c.l.b16 %v55
  %v829 = vunpack.c.h.b16 %v55
  %v830 = vunpack.c.l.b16 %v56
  %v831 = vunpack.c.h.b16 %v56
  %v832 = vunpack.c.l.b16 %v57
  %v833 = vunpack.c.h.b16 %v57
  %v834 = vunpack.c.l.b16 %v58
  %v835 = vunpack.c.h.b16 %v58
  %v836 = vunpack.c.l.b16 %v59
  %v837 = vunpack.c.h.b16 %v59
  %v838 = vunpack.c.l.b16 %v60
  %v839 = vunpack.c.h.b16 %v60
  %v840 = vunpack.c.l.b16 %v61
  %v841 = vunpack.c.h.b16 %v61
  %v842 = vunpack.c.l.b16 %v62
  %v843 = vunpack.c.h.b16 %v62
  %v844 = vunpack.c.l.b16 %v63
  %v845 = vunpack.c.h.b16 %v63
  %v846 = vunpack.c.l.b16 %v64
  %v847 = vunpack.c.h.b16 %v64
  %v848 = vunpack.c.l.b16 %v65
  %v849 = vunpack.c.h.b16 %v65
  %v850 = vunpack.c.l.b16 %v66
  %v851 = vunpack.c.h.b16 %v66
  %v852 = vunpack.c.l.b16 %v67
  %v853 = vunpack.c.h.b16 %v67
  %v854 = vunpack.c.l.b16 %v68
  %v855 = vunpack.c.h.b16 %v68
  %v856 = vunpack.c.l.b16 %v69
  %v857 = vunpack.c.h.b16 %v69
  %v858 = vunpack.c.l.b16 %v70
  %v859 = vunpack.c.h.b16 %v70
  %v860 = vunpack.c.l.b16 %v71
  %v861 = vunpack.c.h.b16 %v71
  %v862 = vunpack.c.l.b16 %v72
  %v863 = vunpack.c.h.b16 %v72
  %v864 = vunpack.c.l.b16 %v73
  %v865 = vunpack.c.h.b16 %v73
  %v866 = vunpack.c.l.b16 %v74
  %v867 = vunpack.c.h.b16 %v74
  %v868 = vunpack.c.l.b16 %v75
  %v869 = vunpack.c.h.b16 %v75
  %v870 = vunpack.c.l.b16 %v76
  %v871 = vunpack.c.h.b16 %v76
  %v872 = vunpack.c.l.b16 %v77
  %v873 = vunpack.c.h.b16 %v77
  %v874 = vunpack.c.l.b16 %v78
  %v875 = vunpack.c.h.b16 %v78
  %v876 = vunpack.c.l.b16 %v79
  %v877 = vunpack.c.h.b16 %v79
  %v878 = vunpack.c.l.b16 %v80
  %v879 = vunpack.c.h.b16 %v80
  %v880 = vunpack.c.l.b16 %v81
  %v881 = vunpack.c.h.b16 %v81
  %v882 = vunpack.c.l.b16 %v82
  %v883 = vunpack.c.h.b16 %v82
  %v884 = vunpack.c.l.b16 %v83
  %v885 = vunpack.c.h.b16 %v83
  %v886 = vunpack.c.l.b16 %v84
  %v887 = vunpack.c.h.b16 %v84
  %v888 = vunpack.c.l.b16 %v85
  %v889 = vunpack.c.h.b16 %v85
  %v890 = vunpack.c.l.b16 %v86
  %v891 = vunpack.c.h.b16 %v86
  %v892 = vunpack.c.l.b16 %v87
  %v893 = vunpack.c.h.b16 %v87
  %v894 = vunpack.c.l.b16 %v88
  %v895 = vunpack.c.h.b16 %v88
  %v896 = vunpack.c.l.b16 %v89
  %v897 = vunpack.c.h.b16 %v89
  %v898 = vunpack.c.l.b16 %v90
  %v899 = vunpack.c.h.b16 %v90
  %v900 = vunpack.c.l.b16 %v91
  %v901 = vunpack.c.h.b16 %v91
  %v902 = vunpack.c.l.b16 %v92
  %v903 = vunpack.c.h.b16 %v92
  %v904 = vunpack.c.l.b16 %v93
  %v905 = vunpack.c.h.b16 %v93
  %v906 = vunpack.c.l.b16 %v94
  %v907 = vunpack.c.h.b16 %v94
  %v908 = vunpack.c.l.b16 %v95
  %v909 = vunpack.c.h.b16 %v95
  %v910 = vunpack.c.l.b16 %v96
  %v911 = vunpack.c.h.b16 %v96
  %v912 = vunpack.c.l.b16 %v97
  %v913 = vunpack.c.h.b16 %v97
  %v914 = vunpack.c.l.b16 %v98
  %v915 = vunpack.c.h.b16 %v98
  %v916 = vunpack.c.l.b16 %v99
  %v917 = vunpack.c.h.b16 %v99
  %v918 = vunpack.c.l.b16 %v100
  %v919 = vunpack.c.h.b16 %v100
  %v920 = vunpack.c.l.b16 %v101
  %v921 = vunpack.c.h.b16 %v101
  %v922 = vunpack.c.l.b16 %v102
  %v923 = vunpack.c.h.b16 %v102
  %v924 = vunpack.c.l.b16 %v103
  %v925 = vunpack.c.h.b16 %v103
  %v926 = vunpack.c.l.b16 %v104
  %v927 = vunpack.c.h.b16 %v104
  %v928 = vunpack.c.l.b16 %v105
  %v929 = vunpack.c.h.b16 %v105
  %v930 = vunpack.c.l.b16 %v106
  %v931 = vunpack.c.h.b16 %v106
  %v932 = vunpack.c.l.b16 %v107
  %v933 = vunpack.c.h.b16 %v107
  %v934 = vunpack.c.l.b16 %v108
  %v935 = vunpack.c.h.b16 %v108
  %v936 = vunpack.c.l.b16 %v109
  %v937 = vunpack.c.h.b16 %v109
  %v938 = vunpack.c.l.b16 %v110
  %v939 = vunpack.c.h.b16 %v110
  %v940 = vunpack.c.l.b16 %v111
  %v941 = vunpack.c.h.b16 %v111
  %v942 = vunpack.c.l.b16 %v112
  %v943 = vunpack.c.h.b16 %v112
  %v944 = vunpack.c.l.b16 %v113
  %v945 = vunpack.c.h.b16 %v113
  %v946 = vunpack.c.l.b16 %v114
  %v947 = vunpack.c.h.b16 %v114
  %v948 = vunpack.c.l.b16 %v115
  %v949 = vunpack.c.h.b16 %v115
  %v950 = vunpack.c.l.b16 %v116
  %v951 = vunpack.c.h.b16 %v116
  %v952 = vunpack.c.l.b16 %v117
  %v953 = vunpack.c.h.b16 %v117
  %v954 = vunpack.c.l.b16 %v118
  %v955 = vunpack.c.h.b16 %v118
  %v956 = vunpack.c.l.b16 %v119
  %v957 = vunpack.c.h.b16 %v119
  %v958 = vunpack.c.l.b16 %v120
  %v959 = vunpack.c.h.b16 %v120
  %v960 = vunpack.c.l.b16 %v121
  %v961 = vunpack.c.h.b16 %v121
  %v962 = vunpack.c.l.b16 %v122
  %v963 = vunpack.c.h.b16 %v122
  %v964 = vunpack.c.l.b16 %v123
  %v965 = vunpack.c.h.b16 %v123
  %v966 = vunpack.c.l.b16 %v124
  %v967 = vunpack.c.h.b16 %v124
  %v968 = vunpack.c.l.b16 %v125
  %v969 = vunpack.c.h.b16 %v125
  %v970 = vunpack.c.l.b16 %v126
  %v971 = vunpack.c.h.b16 %v126
  %v972 = vunpack.c.l.b16 %v127
  %v973 = vunpack.c.h.b16 %v127
  %v974 = vunpack.c.l.b16 %v128
  %v975 = vunpack.c.h.b16 %v128
  %v976 = vunpack.c.l.b16 %v129
  %v977 = vunpack.c.h.b16 %v129
  %v978 = vunpack.c.l.b16 %v130
  %v979 = vunpack.c.h.b16 %v130
  %v980 = vunpack.c.l.b16 %v131
  %v981 = vunpack.c.h.b16 %v131
  %v982 = vunpack.c.l.b16 %v132
  %v983 = vunpack.c.h.b16 %v132
  %v984 = vunpack.c.l.b16 %v133
  %v985 = vunpack.c.h.b16 %v133
  %v986 = vunpack.c.l.b16 %v134
  %v987 = vunpack.c.h.b16 %v134
  %v988 = vunpack.c.l.b16 %v135
  %v989 = vunpack.c.h.b16 %v135
  %v990 = vunpack.c.l.b16 %v136
  %v991 = vunpack.c.h.b16 %v136
  %v992 = vunpack.c.l.b16 %v137
  %v993 = vunpack.c.h.b16 %v137
  %v994 = vunpack.c.l.b16 %v138
  %v995 = vunpack.c.h.b16 %v138
  %v996 = vunpack.c.l.b16 %v139
  %v997 = vunpack.c.h.b16 %v139
  %v998 = vunpack.c.l.b16 %v140
  %v999 = vunpack.c.h.b16 %v140
  %v1000 = vunpack.c.l.b16 %v141
  %v1001 = vunpack.c.h.b16 %v141
  %v1002 = vunpack.c.l.b16 %v142
  %v1003 = vunpack.c.h.b16 %v142
  %v1004 = vunpack.c.l.b16 %v143
  %v1005 = vunpack.c.h.b16 %v143
  %v1006 = vunpack.c.l.b16 %v144
  %v1007 = vunpack.c.h.b16 %v144
  %v1008 = vunpack.c.l.b16 %v145
  %v1009 = vunpack.c.h.b16 %v145
  %v1010 = vunpack.c.l.b16 %v146
  %v1011 = vunpack.c.h.b16 %v146
  %v1012 = vunpack.c.l.b16 %v147
  %v1013 = vunpack.c.h.b16 %v147
  %v1014 = vunpack.c.l.b16 %v148
  %v1015 = vunpack.c.h.b16 %v148
  %v1016 = vunpack.c.l.b16 %v149
  %v1017 = vunpack.c.h.b16 %v149
  %v1018 = vunpack.c.l.b16 %v150
  %v1019 = vunpack.c.h.b16 %v150
  %v1020 = vunpack.c.l.b16 %v151
  %v1021 = vunpack.c.h.b16 %v151
  %v1022 = vunpack.c.l.b16 %v152
  %v1023 = vunpack.c.h.b16 %v152
  %v1024 = vunpack.c.l.b16 %v153
  %v1025 = vunpack.c.h.b16 %v153
  %v1026 = vunpack.c.l.b16 %v154
  %v1027 = vunpack.c.h.b16 %v154
  %v1028 = vunpack.c.l.b16 %v155
  %v1029 = vunpack.c.h.b16 %v155
  %v1030 = vunpack.c.l.b16 %v156
  %v1031 = vunpack.c.h.b16 %v156
  %v1032 = vunpack.c.l.b16 %v157
  %v1033 = vunpack.c.h.b16 %v157
  %v1034 = vunpack.c.l.b16 %v158
  %v1035 = vunpack.c.h.b16 %v158
  %v1036 = vunpack.c.l.b16 %v159
  %v1037 = vunpack.c.h.b16 %v159
  %v1038 = vunpack.c.l.b16 %v160
  %v1039 = vunpack.c.h.b16 %v160
  %v1040 = vunpack.c.l.b16 %v161
  %v1041 = vunpack.c.h.b16 %v161
  %v1042 = vunpack.c.l.b16 %v162
  %v1043 = vunpack.c.h.b16 %v162
  %v1044 = vunpack.c.l.b16 %v163
  %v1045 = vunpack.c.h.b16 %v163
  %v1046 = vunpack.c.l.b16 %v164
  %v1047 = vunpack.c.h.b16 %v164
  %v1048 = vunpack.c.l.b16 %v165
  %v1049 = vunpack.c.h.b16 %v165
  %v1050 = vunpack.c.l.b16 %v166
  %v1051 = vunpack.c.h.b16 %v166
  %v1052 = vunpack.c.l.b16 %v167
  %v1053 = vunpack.c.h.b16 %v167
  %v1054 = vunpack.c.l.b16 %v168
  %v1055 = vunpack.c.h.b16 %v168
  %v1056 = vunpack.c.l.b16 %v169
  %v1057 = vunpack.c.h.b16 %v169
  %v1058 = vunpack.c.l.b16 %v170
  %v1059 = vunpack.c.h.b16 %v170
  %v1060 = vunpack.c.l.b16 %v171
  %v1061 = vunpack.c.h.b16 %v171
  %v1062 = vunpack.c.l.b16 %v172
  %v1063 = vunpack.c.h.b16 %v172
  %v1064 = vunpack.c.l.b16 %v173
  %v1065 = vunpack.c.h.b16 %v173
  %v1066 = vunpack.c.l.b16 %v174
  %v1067 = vunpack.c.h.b16 %v174
  %v1068 = vunpack.c.l.b16 %v175
  %v1069 = vunpack.c.h.b16 %v175
  %v1070 = vunpack.c.l.b16 %v176
  %v1071 = vunpack.c.h.b16 %v176
  %v1072 = vunpack.c.l.b16 %v177
  %v1073 = vunpack.c.h.b16 %v177
  %v1074 = vunpack.c.l.b16 %v178
  %v1075 = vunpack.c.h.b16 %v178
  %v1076 = vunpack.c.l.b16 %v179
  %v1077 = vunpack.c.h.b16 %v179
  %v1078 = vunpack.c.l.b16 %v180
  %v1079 = vunpack.c.h.b16 %v180
  %v1080 = vunpack.c.l.b16 %v181
  %v1081 = vunpack.c.h.b16 %v181
  %v1082 = vunpack.c.l.b16 %v182
  %v1083 = vunpack.c.h.b16 %v182
  %v1084 = vunpack.c.l.b16 %v183
  %v1085 = vunpack.c.h.b16 %v183
  %v1086 = vunpack.c.l.b16 %v184
  %v1087 = vunpack.c.h.b16 %v184
  %v1088 = vunpack.c.l.b16 %v185
  %v1089 = vunpack.c.h.b16 %v185
  %v1090 = vunpack.c.l.b16 %v186
  %v1091 = vunpack.c.h.b16 %v186
  %v1092 = vunpack.c.l.b16 %v187
  %v1093 = vunpack.c.h.b16 %v187
  %v1094 = vunpack.c.l.b16 %v188
  %v1095 = vunpack.c.h.b16 %v188
  %v1096 = vunpack.c.l.b16 %v189
  %v1097 = vunpack.c.h.b16 %v189
  %v1098 = vunpack.c.l.b16 %v190
  %v1099 = vunpack.c.h.b16 %v190
  %v1100 = vunpack.c.l.b16 %v191
  %v1101 = vunpack.c.h.b16 %v191
  %v1102 = vunpack.c.l.b16 %v192
  %v1103 = vunpack.c.h.b16 %v192
  %v1104 = vunpack.c.l.b16 %v193
  %v1105 = vunpack.c.h.b16 %v193
  %v1106 = vunpack.c.l.b16 %v194
  %v1107 = vunpack.c.h.b16 %v194
  %v1108 = vunpack.c.l.b16 %v195
  %v1109 = vunpack.c.h.b16 %v195
  %v1110 = vunpack.c.l.b16 %v196
  %v1111 = vunpack.c.h.b16 %v196
  %v1112 = vunpack.c.l.b16 %v197
  %v1113 = vunpack.c.h.b16 %v197
  %v1114 = vunpack.c.l.b16 %v198
  %v1115 = vunpack.c.h.b16 %v198
  %v1116 = vunpack.c.l.b16 %v199
  %v1117 = vunpack.c.h.b16 %v199
  %v1118 = vunpack.c.l.b16 %v200
  %v1119 = vunpack.c.h.b16 %v200
  %v1120 = vunpack.c.l.b16 %v201
  %v1121 = vunpack.c.h.b16 %v201
  %v1122 = vunpack.c.l.b16 %v202
  %v1123 = vunpack.c.h.b16 %v202
  %v1124 = vunpack.c.l.b16 %v203
  %v1125 = vunpack.c.h.b16 %v203
  %v1126 = vunpack.c.l.b16 %v204
  %v1127 = vunpack.c.h.b16 %v204
  %v1128 = vunpack.c.l.b16 %v205
  %v1129 = vunpack.c.h.b16 %v205
  %v1130 = vunpack.c.l.b16 %v206
  %v1131 = vunpack.c.h.b16 %v206
  %v1132 = vunpack.c.l.b16 %v207
  %v1133 = vunpack.c.h.b16 %v207
  %v1134 = vunpack.c.l.b16 %v208
  %v1135 = vunpack.c.h.b16 %v208
  %v1136 = vunpack.c.l.b16 %v209
  %v1137 = vunpack.c.h.b16 %v209
  %v1138 = vunpack.c.l.b16 %v210
  %v1139 = vunpack.c.h.b16 %v210
  %v1140 = vunpack.c.l.b16 %v211
  %v1141 = vunpack.c.h.b16 %v211
  %v1142 = vunpack.c.l.b16 %v212
  %v1143 = vunpack.c.h.b16 %v212
  %v1144 = vunpack.c.l.b16 %v213
  %v1145 = vunpack.c.h.b16 %v213
  %v1146 = vunpack.c.l.b16 %v214
  %v1147 = vunpack.c.h.b16 %v214
  %v1148 = vunpack.c.l.b16 %v215
  %v1149 = vunpack.c.h.b16 %v215
  %v1150 = vunpack.c.l.b16 %v216
  %v1151 = vunpack.c.h.b16 %v216
  %v1152 = vunpack.c.l.b16 %v217
  %v1153 = vunpack.c.h.b16 %v217
  %v1154 = vunpack.c.l.b16 %v218
  %v1155 = vunpack.c.h.b16 %v218
  %v1156 = vunpack.c.l.b16 %v219
  %v1157 = vunpack.c.h.b16 %v219
  %v1158 = vunpack.c.l.b16 %v220
  %v1159 = vunpack.c.h.b16 %v220
  %v1160 = vunpack.c.l.b16 %v221
  %v1161 = vunpack.c.h.b16 %v221
  %v1162 = vunpack.c.l.b16 %v222
  %v1163 = vunpack.c.h.b16 %v222
  %v1164 = vunpack.c.l.b16 %v223
  %v1165 = vunpack.c.h.b16 %v223
  %v1166 = vunpack.c.l.b16 %v224
  %v1167 = vunpack.c.h.b16 %v224
  %v1168 = vunpack.c.l.b16 %v225
  %v1169 = vunpack.c.h.b16 %v225
  %v1170 = vunpack.c.l.b16 %v226
  %v1171 = vunpack.c.h.b16 %v226
  %v1172 = vunpack.c.l.b16 %v227
  %v1173 = vunpack.c.h.b16 %v227
  %v1174 = vunpack.c.l.b16 %v228
  %v1175 = vunpack.c.h.b16 %v228
  %v1176 = vunpack.c.l.b16 %v229
  %v1177 = vunpack.c.h.b16 %v229
  %v1178 = vunpack.c.l.b16 %v230
  %v1179 = vunpack.c.h.b16 %v230
  %v1180 = vunpack.c.l.b16 %v231
  %v1181 = vunpack.c.h.b16 %v231
  %v1182 = vunpack.c.l.b16 %v232
  %v1183 = vunpack.c.h.b16 %v232
  %v1184 = vunpack.c.l.b16 %v233
  %v1185 = vunpack.c.h.b16 %v233
  %v1186 = vunpack.c.l.b16 %v234
  %v1187 = vunpack.c.h.b16 %v234
  %v1188 = vunpack.c.l.b16 %v235
  %v1189 = vunpack.c.h.b16 %v235
  %v1190 = vunpack.c.l.b16 %v236
  %v1191 = vunpack.c.h.b16 %v236
  %v1192 = vunpack.c.l.b16 %v237
  %v1193 = vunpack.c.h.b16 %v237
  %v1194 = vunpack.c.l.b16 %v238
  %v1195 = vunpack.c.h.b16 %v238
  %v1196 = vunpack.c.l.b16 %v239
  %v1197 = vunpack.c.h.b16 %v239
  %v1198 = vunpack.c.l.b16 %v240
  %v1199 = vunpack.c.h.b16 %v240
  %v1200 = vunpack.c.l.b16 %v241
  %v1201 = vunpack.c.h.b16 %v241
  %v1202 = vunpack.c.l.b16 %v242
  %v1203 = vunpack.c.h.b16 %v242
  %v1204 = vunpack.c.l.b16 %v243
  %v1205 = vunpack.c.h.b16 %v243
  %v1206 = vunpack.c.l.b16 %v244
  %v1207 = vunpack.c.h.b16 %v244
  %v1208 = vunpack.c.l.b16 %v245
  %v1209 = vunpack.c.h.b16 %v245
  %v1210 = vunpack.c.l.b16 %v246
  %v1211 = vunpack.c.h.b16 %v246
  %v1212 = vunpack.c.l.b16 %v247
  %v1213 = vunpack.c.h.b16 %v247
  %v1214 = vunpack.c.l.b16 %v248
  %v1215 = vunpack.c.h.b16 %v248
  %v1216 = vunpack.c.l.b16 %v249
  %v1217 = vunpack.c.h.b16 %v249
  %v1218 = vunpack.c.l.b16 %v250
  %v1219 = vunpack.c.h.b16 %v250
  %v1220 = vunpack.c.l.b16 %v251
  %v1221 = vunpack.c.h.b16 %v251
  %v1222 = vunpack.c.l.b16 %v252
  %v1223 = vunpack.c.h.b16 %v252
  %v1224 = vunpack.c.l.b16 %v253
  %v1225 = vunpack.c.h.b16 %v253
  %v1226 = vunpack.c.l.b16 %v254
  %v1227 = vunpack.c.h.b16 %v254
  %v1228 = vunpack.c.l.b16 %v255
  %v1229 = vunpack.c.h.b16 %v255
  %v1230 = vunpack.c.l.b16 %v256
  %v1231 = vunpack.c.h.b16 %v256
  %v1232 = vunpack.c.l.b16 %v257
  %v1233 = vunpack.c.h.b16 %v257
  %v1234 = vunpack.c.l.b16 %v258
  %v1235 = vunpack.c.h.b16 %v258
  %v1236 = vunpack.c.l.b16 %v259
  %v1237 = vunpack.c.h.b16 %v259
  %v1238 = vunpack.c.l.b16 %v260
  %v1239 = vunpack.c.h.b16 %v260
  %v1240 = vunpack.c.l.b16 %v261
  %v1241 = vunpack.c.h.b16 %v261
  %v1242 = vunpack.c.l.b16 %v262
  %v1243 = vunpack.c.h.b16 %v262
  %v1244 = vunpack.c.l.b16 %v263
  %v1245 = vunpack.c.h.b16 %v263
  %v1246 = vunpack.c.l.b16 %v264
  %v1247 = vunpack.c.h.b16 %v264
  %v1248 = vunpack.c.l.b16 %v265
  %v1249 = vunpack.c.h.b16 %v265
  %v1250 = vunpack.c.l.b16 %v266
  %v1251 = vunpack.c.h.b16 %v266
  %v1252 = vunpack.c.l.b16 %v267
  %v1253 = vunpack.c.h.b16 %v267
  %v1254 = vunpack.c.l.b16 %v268
  %v1255 = vunpack.c.h.b16 %v268
  %v1256 = vunpack.c.l.b16 %v269
  %v1257 = vunpack.c.h.b16 %v269
  %v1258 = vunpack.c.l.b16 %v270
  %v1259 = vunpack.c.h.b16 %v270
  %v1260 = vunpack.c.l.b16 %v271
  %v1261 = vunpack.c.h.b16 %v271
  %v1262 = vunpack.c.l.b16 %v272
  %v1263 = vunpack.c.h.b16 %v272
  %v1264 = vunpack.c.l.b16 %v273
  %v1265 = vunpack.c.h.b16 %v273
  %v1266 = vunpack.c.l.b16 %v274
  %v1267 = vunpack.c.h.b16 %v274
  %v1268 = vunpack.c.l.b16 %v275
  %v1269 = vunpack.c.h.b16 %v275
  %v1270 = vunpack.c.l.b16 %v276
  %v1271 = vunpack.c.h.b16 %v276
  %v1272 = vunpack.c.l.b16 %v277
  %v1273 = vunpack.c.h.b16 %v277
  %v1274 = vunpack.c.l.b16 %v278
  %v1275 = vunpack.c.h.b16 %v278
  %v1276 = vunpack.c.l.b16 %v279
  %v1277 = vunpack.c.h.b16 %v279
  %v1278 = vunpack.c.l.b16 %v280
  %v1279 = vunpack.c.h.b16 %v280
  %v1280 = vunpack.c.l.b16 %v281
  %v1281 = vunpack.c.h.b16 %v281
  %v1282 = vunpack.c.l.b16 %v282
  %v1283 = vunpack.c.h.b16 %v282
  %v1284 = vunpack.c.l.b16 %v283
  %v1285 = vunpack.c.h.b16 %v283
  %v1286 = vunpack.c.l.b16 %v284
  %v1287 = vunpack.c.h.b16 %v284
  %v1288 = vunpack.c.l.b16 %v285
  %v1289 = vunpack.c.h.b16 %v285
  %v1290 = vunpack.c.l.b16 %v286
  %v1291 = vunpack.c.h.b16 %v286
  %v1292 = vunpack.c.l.b16 %v287
  %v1293 = vunpack.c.h.b16 %v287
  %v1294 = vunpack.c.l.b16 %v288
  %v1295 = vunpack.c.h.b16 %v288
  %v1296 = vunpack.c.l.b16 %v289
  %v1297 = vunpack.c.h.b16 %v289
  %v1298 = vunpack.c.l.b16 %v290
  %v1299 = vunpack.c.h.b16 %v290
  %v1300 = vunpack.c.l.b16 %v291
  %v1301 = vunpack.c.h.b16 %v291
  %v1302 = vunpack.c.l.b16 %v292
  %v1303 = vunpack.c.h.b16 %v292
  %v1304 = vunpack.c.l.b16 %v293
  %v1305 = vunpack.c.h.b16 %v293
  %v1306 = vunpack.c.l.b16 %v294
  %v1307 = vunpack.c.h.b16 %v294
  %v1308 = vunpack.c.l.b16 %v295
  %v1309 = vunpack.c.h.b16 %v295
  %v1310 = vunpack.c.l.b16 %v296
  %v1311 = vunpack.c.h.b16 %v296
  %v1312 = vunpack.c.l.b16 %v297
  %v1313 = vunpack.c.h.b16 %v297
  %v1314 = vunpack.c.l.b16 %v298
  %v1315 = vunpack.c.h.b16 %v298
  %v1316 = vunpack.c.l.b16 %v299
  %v1317 = vunpack.c.h.b16 %v299
  %v1318 = vunpack.c.l.b16 %v300
  %v1319 = vunpack.c.h.b16 %v300
  %v1320 = vunpack.c.l.b16 %v301
  %v1321 = vunpack.c.h.b16 %v301
  %v1322 = vunpack.c.l.b16 %v302
  %v1323 = vunpack.c.h.b16 %v302
  %v1324 = vunpack.c.l.b16 %v303
  %v1325 = vunpack.c.h.b16 %v303
  %v1326 = vunpack.c.l.b16 %v304
  %v1327 = vunpack.c.h.b16 %v304
  %v1328 = vunpack.c.l.b16 %v305
  %v1329 = vunpack.c.h.b16 %v305
  %v1330 = vunpack.c.l.b16 %v306
  %v1331 = vunpack.c.h.b16 %v306
  %v1332 = vunpack.c.l.b16 %v307
  %v1333 = vunpack.c.h.b16 %v307
  %v1334 = vunpack.c.l.b16 %v308
  %v1335 = vunpack.c.h.b16 %v308
  %v1336 = vunpack.c.l.b16 %v309
  %v1337 = vunpack.c.h.b16 %v309
  %v1338 = vunpack.c.l.b16 %v310
  %v1339 = vunpack.c.h.b16 %v310
  %v1340 = vunpack.c.l.b16 %v311
  %v1341 = vunpack.c.h.b16 %v311
  %v1342 = vunpack.c.l.b16 %v312
  %v1343 = vunpack.c.h.b16 %v312
  %v1344 = vunpack.c.l.b16 %v313
  %v1345 = vunpack.c.h.b16 %v313
  %v1346 = vunpack.c.l.b16 %v314
  %v1347 = vunpack.c.h.b16 %v314
  %v1348 = vunpack.c.l.b16 %v315
  %v1349 = vunpack.c.h.b16 %v315
  %v1350 = vunpack.c.l.b16 %v316
  %v1351 = vunpack.c.h.b16 %v316
  %v1352 = vunpack.c.l.b16 %v317
  %v1353 = vunpack.c.h.b16 %v317
  %v1354 = vunpack.c.l.b16 %v318
  %v1355 = vunpack.c.h.b16 %v318
  %v1356 = vunpack.c.l.b16 %v319
  %v1357 = vunpack.c.h.b16 %v319
  %v1358 = vunpack.c.l.b16 %v320
  %v1359 = vunpack.c.h.b16 %v320
  %v1360 = vunpack.c.l.b16 %v321
  %v1361 = vunpack.c.h.b16 %v321
  %v1362 = vunpack.c.l.b16 %v322
  %v1363 = vunpack.c.h.b16 %v322
  %v1364 = vunpack.c.l.b16 %v323
  %v1365 = vunpack.c.h.b16 %v323
  %v1366 = vunpack.c.l.b16 %v324
  %v1367 = vunpack.c.h.b16 %v324
  %v1368 = vunpack.c.l.b16 %v325
  %v1369 = vunpack.c.h.b16 %v325
  %v1370 = vunpack.c.l.b16 %v326
  %v1371 = vunpack.c.h.b16 %v326
  %v1372 = vunpack.c.l.b16 %v327
  %v1373 = vunpack.c.h.b16 %v327
  %v1374 = vunpack.c.l.b16 %v328
  %v1375 = vunpack.c.h.b16 %v328
  %v1376 = vunpack.c.l.b16 %v329
  %v1377 = vunpack.c.h.b16 %v329
  %v1378 = vunpack.c.l.b16 %v330
  %v1379 = vunpack.c.h.b16 %v330
  %v1380 = vunpack.c.l.b16 %v331
  %v1381 = vunpack.c.h.b16 %v331
  %v1382 = vunpack.c.l.b16 %v332
  %v1383 = vunpack.c.h.b16 %v332
  %v1384 = vunpack.c.l.b16 %v333
  %v1385 = vunpack.c.h.b16 %v333
  %v1386 = vunpack.c.l.b16 %v334
  %v1387 = vunpack.c.h.b16 %v334
  %v1388 = vunpack.c.l.b16 %v335
  %v1389 = vunpack.c.h.b16 %v335
  %v1390 = vunpack.c.l.b16 %v336
  %v1391 = vunpack.c.h.b16 %v336
  %v1392 = vunpack.c.l.b16 %v337
  %v1393 = vunpack.c.h.b16 %v337
  %v1394 = vpack.c.b16 %v820, %v818
  %v1395 = vpack.c.b16 %v821, %v819
  %v1396 = vpack.c.b16 %v824, %v822
  %v1397 = vpack.c.b16 %v825, %v823
  %v1398 = vpack.c.b16 %v828, %v826
  %v1399 = vpack.c.b16 %v829, %v827
  %v1400 = vpack.c.b16 %v832, %v830
  %v1401 = vpack.c.b16 %v833, %v831
  %v1402 = vpack.c.b16 %v836, %v834
  %v1403 = vpack.c.b16 %v837, %v835
  %v1404 = vpack.c.b16 %v840, %v838
  %v1405 = vpack.c.b16 %v841, %v839
  %v1406 = vpack.c.b16 %v844, %v842
  %v1407 = vpack.c.b16 %v845, %v843
  %v1408 = vpack.c.b16 %v848, %v846
  %v1409 = vpack.c.b16 %v849, %v847
  %v1410 = vpack.c.b16 %v852, %v850
  %v1411 = vpack.c.b16 %v853, %v851
  %v1412 = vpack.c.b16 %v856, %v854
  %v1413 = vpack.c.b16 %v857, %v855
  %v1414 = vpack.c.b16 %v860, %v858
  %v1415 = vpack.c.b16 %v861, %v859
  %v1416 = vpack.c.b16 %v864, %v862
  %v1417 = vpack.c.b16 %v865, %v863
  %v1418 = vpack.c.b16 %v868, %v866
  %v1419 = vpack.c.b16 %v869, %v867
  %v1420 = vpack.c.b16 %v872, %v870
  %v1421 = vpack.c.b16 %v873, %v871
  %v1422 = vpack.c.b16 %v876, %v874
  %v1423 = vpack.c.b16 %v877, %v875
  %v1424 = vpack.c.b16 %v880, %v878
  %v1425 = vpack.c.b16 %v881, %v879
  %v1426 = vpack.c.b16 %v884, %v882
  %v1427 = vpack.c.b16 %v885, %v883
  %v1428 = vpack.c.b16 %v888, %v886
  %v1429 = vpack.c.b16 %v889, %v887
  %v1430 = vpack.c.b16 %v892, %v890
  %v1431 = vpack.c.b16 %v893, %v891
  %v1432 = vpack.c.b16 %v896, %v894
  %v1433 = vpack.c.b16 %v897, %v895
  %v1434 = vpack.c.b16 %v900, %v898
  %v1435 = vpack.c.b16 %v901, %v899
  %v1436 = vpack.c.b16 %v904, %v902
  %v1437 = vpack.c.b16 %v905, %v903
  %v1438 = vpack.c.b16 %v908, %v906
  %v1439 = vpack.c.b16 %v909, %v907
  %v1440 = vpack.c.b16 %v912, %v910
  %v1441 = vpack.c.b16 %v913, %v911
  %v1442 = vpack.c.b16 %v916, %v914
  %v1443 = vpack.c.b16 %v917, %v915
  %v1444 = vpack.c.b16 %v920, %v918
  %v1445 = vpack.c.b16 %v921, %v919
  %v1446 = vpack.c.b16 %v924, %v922
  %v1447 = vpack.c.b16 %v925, %v923
  %v1448 = vpack.c.b16 %v928, %v926
  %v1449 = vpack.c.b16 %v929, %v927
  %v1450 = vpack.c.b16 %v932, %v930
  %v1451 = vpack.c.b16 %v933, %v931
  %v1452 = vpack.c.b16 %v936, %v934
  %v1453 = vpack.c.b16 %v937, %v935
  %v1454 = vpack.c.b16 %v940, %v938
  %v1455 = vpack.c.b16 %v941, %v939
  %v1456 = vpack.c.b16 %v944, %v942
  %v1457 = vpack.c.b16 %v945, %v943
  %v1458 = vpack.c.b16 %v948, %v946
  %v1459 = vpack.c.b16 %v949, %v947
  %v1460 = vpack.c.b16 %v952, %v950
  %v1461 = vpack.c.b16 %v953, %v951
  %v1462 = vpack.c.b16 %v956, %v954
  %v1463 = vpack.c.b16 %v957, %v955
  %v1464 = vpack.c.b16 %v960, %v958
  %v1465 = vpack.c.b16 %v961, %v959
  %v1466 = vpack.c.b16 %v964, %v962
  %v1467 = vpack.c.b16 %v965, %v963
  %v1468 = vpack.c.b16 %v968, %v966
  %v1469 = vpack.c.b16 %v969, %v967
  %v1470 = vpack.c.b16 %v972, %v970
  %v1471 = vpack.c.b16 %v973, %v971
  %v1472 = vpack.c.b16 %v976, %v974
  %v1473 = vpack.c.b16 %v977, %v975
  %v1474 = vpack.c.b16 %v980, %v978
  %v1475 = vpack.c.b16 %v981, %v979
  %v1476 = vpack.c.b16 %v984, %v982
  %v1477 = vpack.c.b16 %v985, %v983
  %v1478 = vpack.c.b16 %v988, %v986
  %v1479 = vpack.c.b16 %v989, %v987
  %v1480 = vpack.c.b16 %v992, %v990
  %v1481 = vpack.c.b16 %v993, %v991
  %v1482 = vpack.c.b16 %v996, %v994
  %v1483 = vpack.c.b16 %v997, %v995
  %v1484 = vpack.c.b16 %v1000, %v998
  %v1485 = vpack.c.b16 %v1001, %v999
  %v1486 = vpack.c.b16 %v1004, %v1002
  %v1487 = vpack.c.b16 %v1005, %v1003
  %v1488 = vpack.c.b16 %v1008, %v1006
  %v1489 = vpack.c.b16 %v1009, %v1007
  %v1490 = vpack.c.b16 %v1012, %v1010
  %v1491 = vpack.c.b16 %v1013, %v1011
  %v1492 = vpack.c.b16 %v1016, %v1014
  %v1493 = vpack.c.b16 %v1017, %v1015
  %v1494 = vpack.c.b16 %v1020, %v1018
  %v1495 = vpack.c.b16 %v1021, %v1019
  %v1496 = vpack.c.b16 %v1024, %v1022
  %v1497 = vpack.c.b16 %v1025, %v1023
  %v1498 = vpack.c.b16 %v1028, %v1026
  %v1499 = vpack.c.b16 %v1029, %v1027
  %v1500 = vpack.c.b16 %v1032, %v1030
  %v1501 = vpack.c.b16 %v1033, %v1031
  %v1502 = vpack.c.b16 %v1036, %v1034
  %v1503 = vpack.c.b16 %v1037, %v1035
  %v1504 = vpack.c.b16 %v1040, %v1038
  %v1505 = vpack.c.b16 %v1041, %v1039
  %v1506 = vpack.c.b16 %v1044, %v1042
  %v1507 = vpack.c.b16 %v1045, %v1043
  %v1508 = vpack.c.b16 %v1048, %v1046
  %v1509 = vpack.c.b16 %v1049, %v1047
  %v1510 = vpack.c.b16 %v1052, %v1050
  %v1511 = vpack.c.b16 %v1053, %v1051
  %v1512 = vpack.c.b16 %v1056, %v1054
  %v1513 = vpack.c.b16 %v1057, %v1055
  %v1514 = vpack.c.b16 %v1060, %v1058
  %v1515 = vpack.c.b16 %v1061, %v1059
  %v1516 = vpack.c.b16 %v1064, %v1062
  %v1517 = vpack.c.b16 %v1065, %v1063
  %v1518 = vpack.c.b16 %v1068, %v1066
  %v1519 = vpack.c.b16 %v1069, %v1067
  %v1520 = vpack.c.b16 %v1072, %v1070
  %v1521 = vpack.c.b16 %v1073, %v1071
  %v1522 = vpack.c.b16 %v1076, %v1074
  %v1523 = vpack.c.b16 %v1077, %v1075
  %v1524 = vpack.c.b16 %v1080, %v1078
  %v1525 = vpack.c.b16 %v1081, %v1079
  %v1526 = vpack.c.b16 %v1084, %v1082
  %v1527 = vpack.c.b16 %v1085, %v1083
  %v1528 = vpack.c.b16 %v1088, %v1086
  %v1529 = vpack.c.b16 %v1089, %v1087
  %v1530 = vpack.c.b16 %v1092, %v1090
  %v1531 = vpack.c.b16 %v1093, %v1091
  %v1532 = vpack.c.b16 %v1096, %v1094
  %v1533 = vpack.c.b16 %v1097, %v1095
  %v1534 = vpack.c.b16 %v1100, %v1098
  %v1535 = vpack.c.b16 %v1101, %v1099
  %v1536 = vpack.c.b16 %v1104, %v1102
  %v1537 = vpack.c.b16 %v1105, %v1103
  %v1538 = vpack.c.b16 %v1108, %v1106
  %v1539 = vpack.c.b16 %v1109, %v1107
  %v1540 = vpack.c.b16 %v1112, %v1110
  %v1541 = vpack.c.b16 %v1113, %v1111
  %v1542 = vpack.c.b16 %v1116, %v1114
  %v1543 = vpack.c.b16 %v1117, %v1115
  %v1544 = vpack.c.b16 %v1120, %v1118
  %v1545 = vpack.c.b16 %v1121, %v1119
  %v1546 = vpack.c.b16 %v1124, %v1122
  %v1547 = vpack.c.b16 %v1125, %v1123
  %v1548 = vpack.c.b16 %v1128, %v1126
  %v1549 = vpack.c.b16 %v1129, %v1127
  %v1550 = vpack.c.b16 %v1132, %v1130
  %v1551 = vpack.c.b16 %v1133, %v1131
  %v1552 = vpack.c.b16 %v1136, %v1134
  %v1553 = vpack.c.b16 %v1137, %v1135
  %v1554 = vpack.c.b16 %v1140, %v1138
  %v1555 = vpack.c.b16 %v1141, %v1139
  %v1556 = vpack.c.b16 %v1144, %v1142
  %v1557 = vpack.c.b16 %v1145, %v1143
  %v1558 = vpack.c.b16 %v1148, %v1146
  %v1559 = vpack.c.b16 %v1149, %v1147
  %v1560 = vpack.c.b16 %v1152, %v1150
  %v1561 = vpack.c.b16 %v1153, %v1151
  %v1562 = vpack.c.b16 %v1156, %v1154
  %v1563 = vpack.c.b16 %v1157, %v1155
  %v1564 = vpack.c.b16 %v1160, %v1158
  %v1565 = vpack.c.b16 %v1161, %v1159
  %v1566 = vpack.c.b16 %v1164, %v1162
  %v1567 = vpack.c.b16 %v1165, %v1163
  %v1568 = vpack.c.b16 %v1168, %v1166
  %v1569 = vpack.c.b16 %v1169, %v1167
  %v1570 = vpack.c.b16 %v1172, %v1170
  %v1571 = vpack.c.b16 %v1173, %v1171
  %v1572 = vpack.c.b16 %v1176, %v1174
  %v1573 = vpack.c.b16 %v1177, %v1175
  %v1574 = vpack.c.b16 %v1180, %v1178
  %v1575 = vpack.c.b16 %v1181, %v1179
  %v1576 = vpack.c.b16 %v1184, %v1182
  %v1577 = vpack.c.b16 %v1185, %v1183
  %v1578 = vpack.c.b16 %v1188, %v1186
  %v1579 = vpack.c.b16 %v1189, %v1187
  %v1580 = vpack.c.b16 %v1192, %v1190
  %v1581 = vpack.c.b16 %v1193, %v1191
  %v1582 = vpack.c.b16 %v1196, %v1194
  %v1583 = vpack.c.b16 %v1197, %v1195
  %v1584 = vpack.c.b16 %v1200, %v1198
  %v1585 = vpack.c.b16 %v1201, %v1199
  %v1586 = vpack.c.b16 %v1204, %v1202
  %v1587 = vpack.c.b16 %v1205, %v1203
  %v1588 = vpack.c.b16 %v1208, %v1206
  %v1589 = vpack.c.b16 %v1209, %v1207
  %v1590 = vpack.c.b16 %v1212, %v1210
  %v1591 = vpack.c.b16 %v1213, %v1211
  %v1592 = vpack.c.b16 %v1216, %v1214
  %v1593 = vpack.c.b16 %v1217, %v1215
  %v1594 = vpack.c.b16 %v1220, %v1218
  %v1595 = vpack.c.b16 %v1221, %v1219
  %v1596 = vpack.c.b16 %v1224, %v1222
  %v1597 = vpack.c.b16 %v1225, %v1223
  %v1598 = vpack.c.b16 %v1228, %v1226
  %v1599 = vpack.c.b16 %v1229, %v1227
  %v1600 = vpack.c.b16 %v1232, %v1230
  %v1601 = vpack.c.b16 %v1233, %v1231
  %v1602 = vpack.c.b16 %v1236, %v1234
  %v1603 = vpack.c.b16 %v1237, %v1235
  %v1604 = vpack.c.b16 %v1240, %v1238
  %v1605 = vpack.c.b16 %v1241, %v1239
  %v1606 = vpack.c.b16 %v1244, %v1242
  %v1607 = vpack.c.b16 %v1245, %v1243
  %v1608 = vpack.c.b16 %v1248, %v1246
  %v1609 = vpack.c.b16 %v1249, %v1247
  %v1610 = vpack.c.b16 %v1252, %v1250
  %v1611 = vpack.c.b16 %v1253, %v1251
  %v1612 = vpack.c.b16 %v1256, %v1254
  %v1613 = vpack.c.b16 %v1257, %v1255
  %v1614 = vpack.c.b16 %v1260, %v1258
  %v1615 = vpack.c.b16 %v1261, %v1259
  %v1616 = vpack.c.b16 %v1264, %v1262
  %v1617 = vpack.c.b16 %v1265, %v1263
  %v1618 = vpack.c.b16 %v1268, %v1266
  %v1619 = vpack.c.b16 %v1269, %v1267
  %v1620 = vpack.c.b16 %v1272, %v1270
  %v1621 = vpack.c.b16 %v1273, %v1271
  %v1622 = vpack.c.b16 %v1276, %v1274
  %v1623 = vpack.c.b16 %v1277, %v1275
  %v1624 = vpack.c.b16 %v1280, %v1278
  %v1625 = vpack.c.b16 %v1281, %v1279
  %v1626 = vpack.c.b16 %v1284, %v1282
  %v1627 = vpack.c.b16 %v1285, %v1283
  %v1628 = vpack.c.b16 %v1288, %v1286
  %v1629 = vpack.c.b16 %v1289, %v1287
  %v1630 = vpack.c.b16 %v1292, %v1290
  %v1631 = vpack.c.b16 %v1293, %v1291
  %v1632 = vpack.c.b16 %v1296, %v1294
  %v1633 = vpack.c.b16 %v1297, %v1295
  %v1634 = vpack.c.b16 %v1300, %v1298
  %v1635 = vpack.c.b16 %v1301, %v1299
  %v1636 = vpack.c.b16 %v1304, %v1302
  %v1637 = vpack.c.b16 %v1305, %v1303
  %v1638 = vpack.c.b16 %v1308, %v1306
  %v1639 = vpack.c.b16 %v1309, %v1307
  %v1640 = vpack.c.b16 %v1312, %v1310
  %v1641 = vpack.c.b16 %v1313, %v1311
  %v1642 = vpack.c.b16 %v1316, %v1314
  %v1643 = vpack.c.b16 %v1317, %v1315
  %v1644 = vpack.c.b16 %v1320, %v1318
  %v1645 = vpack.c.b16 %v1321, %v1319
  %v1646 = vpack.c.b16 %v1324, %v1322
  %v1647 = vpack.c.b16 %v1325, %v1323
  %v1648 = vpack.c.b16 %v1328, %v1326
  %v1649 = vpack.c.b16 %v1329, %v1327
  %v1650 = vpack.c.b16 %v1332, %v1330
  %v1651 = vpack.c.b16 %v1333, %v1331
  %v1652 = vpack.c.b16 %v1336, %v1334
  %v1653 = vpack.c.b16 %v1337, %v1335
  %v1654 = vpack.c.b16 %v1340, %v1338
  %v1655 = vpack.c.b16 %v1341, %v1339
  %v1656 = vpack.c.b16 %v1344, %v1342
  %v1657 = vpack.c.b16 %v1345, %v1343
  %v1658 = vpack.c.b16 %v1348, %v1346
  %v1659 = vpack.c.b16 %v1349, %v1347
  %v1660 = vpack.c.b16 %v1352, %v1350
  %v1661 = vpack.c.b16 %v1353, %v1351
  %v1662 = vpack.c.b16 %v1356, %v1354
  %v1663 = vpack.c.b16 %v1357, %v1355
  %v1664 = vpack.c.b16 %v1360, %v1358
  %v1665 = vpack.c.b16 %v1361, %v1359
  %v1666 = vpack.c.b16 %v1364, %v1362
  %v1667 = vpack.c.b16 %v1365, %v1363
  %v1668 = vpack.c.b16 %v1368, %v1366
  %v1669 = vpack.c.b16 %v1369, %v1367
  %v1670 = vpack.c.b16 %v1372, %v1370
  %v1671 = vpack.c.b16 %v1373, %v1371
  %v1672 = vpack.c.b16 %v1376, %v1374
  %v1673 = vpack.c.b16 %v1377, %v1375
  %v1674 = vpack.c.b16 %v1380, %v1378
  %v1675 = vpack.c.b16 %v1381, %v1379
  %v1676 = vpack.c.b16 %v1384, %v1382
  %v1677 = vpack.c.b16 %v1385, %v1383
  %v1678 = vpack.c.b16 %v1388, %v1386
  %v1679 = vpack.c.b16 %v1389, %v1387
  %v1680 = vpack.c.b16 %v1392, %v1390
  %v1681 = vpack.c.b16 %v1393, %v1391
  %1970 = vmatprep.subr.bf16.mxu0 %v1395
  %1971 = vmatpush1.bf16.msra.mxu0 %v1394
  %1972 = vmatprep.subr.bf16.mxu0 %v1397
  %1973 = vmatpush1.bf16.msra.mxu0 %v1396
  %1974 = vmatprep.subr.bf16.mxu0 %v1399
  %1975 = vmatpush1.bf16.msra.mxu0 %v1398
  %1976 = vmatprep.subr.bf16.mxu0 %v1401
  %1977 = vmatpush1.bf16.msra.mxu0 %v1400
  %1978 = vmatprep.subr.bf16.mxu0 %v1403
  %1979 = vmatpush1.bf16.msra.mxu0 %v1402
  %1980 = vmatprep.subr.bf16.mxu0 %v1405
  %1981 = vmatpush1.bf16.msra.mxu0 %v1404
  %1982 = vmatprep.subr.bf16.mxu0 %v1407
  %1983 = vmatpush1.bf16.msra.mxu0 %v1406
  %1984 = vmatprep.subr.bf16.mxu0 %v1409
  %1985 = vmatpush1.bf16.msra.mxu0 %v1408
  %1986 = vmatprep.subr.bf16.mxu0 %v1411
  %1987 = vmatpush1.bf16.msra.mxu0 %v1410
  %1988 = vmatprep.subr.bf16.mxu0 %v1413
  %1989 = vmatpush1.bf16.msra.mxu0 %v1412
  %1990 = vmatprep.subr.bf16.mxu0 %v1415
  %1991 = vmatpush1.bf16.msra.mxu0 %v1414
  %1992 = vmatprep.subr.bf16.mxu0 %v1417
  %1993 = vmatpush1.bf16.msra.mxu0 %v1416
  %1994 = vmatprep.subr.bf16.mxu0 %v1419
  %1995 = vmatpush1.bf16.msra.mxu0 %v1418
  %1996 = vmatprep.subr.bf16.mxu0 %v1421
  %1997 = vmatpush1.bf16.msra.mxu0 %v1420
  %1998 = vmatprep.subr.bf16.mxu0 %v1423
  %1999 = vmatpush1.bf16.msra.mxu0 %v1422
  %2000 = vmatprep.subr.bf16.mxu0 %v1425
  %2001 = vmatpush1.bf16.msra.mxu0 %v1424
  %2002 = vmatprep.mubr.bf16.mxu0 %v459
  %2003 = vmatmul.mubr.bf16.gmra.mrb[0].mxu0 %v458
  %v2004 = vpop.f32.mrb[0].mxu0
  %v2005 = vadd.f32 %v343, %v2004
  %v2006 = vpop.f32.mrb[0].mxu0
  %v2007 = vadd.f32 %v347, %v2006
  %v2008 = vpop.f32.mrb[0].mxu0
  %v2009 = vadd.f32 %v343, %v2008
  %v2010 = vpop.f32.mrb[0].mxu0
  %v2011 = vadd.f32 %v347, %v2010
  %2012 = vmatprep.mubr.bf16.mxu0 %v477
  %2013 = vmatmul.mubr.bf16.gmra.mrb[0].mxu0 %v476
  %v2014 = vpop.f32.mrb[0].mxu0
  %v2015 = vadd.f32 %v343, %v2014
  %v2016 = vpop.f32.mrb[0].mxu0
  %v2017 = vadd.f32 %v347, %v2016
  %v2018 = vpop.f32.mrb[0].mxu0
  %v2019 = vadd.f32 %v343, %v2018
  %v2020 = vpop.f32.mrb[0].mxu0
  %v2021 = vadd.f32 %v347, %v2020
  %2022 = vdwg.mxu0
  %2023 = vmatprep.subr.bf16.mxu0 %v1427
  %2024 = vmatpush1.bf16.msra.mxu0 %v1426
  %2025 = vmatprep.subr.bf16.mxu0 %v1429
  %2026 = vmatpush1.bf16.msra.mxu0 %v1428
  %2027 = vmatprep.subr.bf16.mxu0 %v1431
  %2028 = vmatpush1.bf16.msra.mxu0 %v1430
  %2029 = vmatprep.subr.bf16.mxu0 %v1433
  %2030 = vmatpush1.bf16.msra.mxu0 %v1432
  %2031 = vmatprep.subr.bf16.mxu0 %v1435
  %2032 = vmatpush1.bf16.msra.mxu0 %v1434
  %2033 = vmatprep.subr.bf16.mxu0 %v1437
  %2034 = vmatpush1.bf16.msra.mxu0 %v1436
  %2035 = vmatprep.subr.bf16.mxu0 %v1439
  %2036 = vmatpush1.bf16.msra.mxu0 %v1438
  %2037 = vmatprep.subr.bf16.mxu0 %v1441
  %2038 = vmatpush1.bf16.msra.mxu0 %v1440
  %2039 = vmatprep.subr.bf16.mxu0 %v1443
  %2040 = vmatpush1.bf16.msra.mxu0 %v1442
  %2041 = vmatprep.subr.bf16.mxu0 %v1445
  %2042 = vmatpush1.bf16.msra.mxu0 %v1444
  %2043 = vmatprep.subr.bf16.mxu0 %v1447
  %2044 = vmatpush1.bf16.msra.mxu0 %v1446
  %2045 = vmatprep.subr.bf16.mxu0 %v1449
  %2046 = vmatpush1.bf16.msra.mxu0 %v1448
  %2047 = vmatprep.subr.bf16.mxu0 %v1451
  %2048 = vmatpush1.bf16.msra.mxu0 %v1450
  %2049 = vmatprep.subr.bf16.mxu0 %v1453
  %2050 = vmatpush1.bf16.msra.mxu0 %v1452
  %2051 = vmatprep.subr.bf16.mxu0 %v1455
  %2052 = vmatpush1.bf16.msra.mxu0 %v1454
  %2053 = vmatprep.subr.bf16.mxu0 %v1457
  %2054 = vmatpush1.bf16.msra.mxu0 %v1456
  %2055 = vmatprep.mubr.bf16.mxu0 %v461
  %2056 = vmatmul.mubr.bf16.gmra.mrb[0].mxu0 %v460
  %v2057 = vpop.f32.mrb[0].mxu0
  %v2058 = vadd.f32 %v2005, %v2057
  %v2059 = vpop.f32.mrb[0].mxu0
  %v2060 = vadd.f32 %v2007, %v2059
  %v2061 = vpop.f32.mrb[0].mxu0
  %v2062 = vadd.f32 %v2009, %v2061
  %v2063 = vpop.f32.mrb[0].mxu0
  %v2064 = vadd.f32 %v2011, %v2063
  %2065 = vmatprep.mubr.bf16.mxu0 %v479
  %2066 = vmatmul.mubr.bf16.gmra.mrb[0].mxu0 %v478
  %v2067 = vpop.f32.mrb[0].mxu0
  %v2068 = vadd.f32 %v2015, %v2067
  %v2069 = vpop.f32.mrb[0].mxu0
  %v2070 = vadd.f32 %v2017, %v2069
  %v2071 = vpop.f32.mrb[0].mxu0
  %v2072 = vadd.f32 %v2019, %v2071
  %v2073 = vpop.f32.mrb[0].mxu0
  %v2074 = vadd.f32 %v2021, %v2073
  %2075 = vdwg.mxu0
  %2076 = vmatprep.subr.bf16.mxu0 %v1459
  %2077 = vmatpush1.bf16.msra.mxu0 %v1458
  %2078 = vmatprep.subr.bf16.mxu0 %v1461
  %2079 = vmatpush1.bf16.msra.mxu0 %v1460
  %2080 = vmatprep.subr.bf16.mxu0 %v1463
  %2081 = vmatpush1.bf16.msra.mxu0 %v1462
  %2082 = vmatprep.subr.bf16.mxu0 %v1465
  %2083 = vmatpush1.bf16.msra.mxu0 %v1464
  %2084 = vmatprep.subr.bf16.mxu0 %v1467
  %2085 = vmatpush1.bf16.msra.mxu0 %v1466
  %2086 = vmatprep.subr.bf16.mxu0 %v1469
  %2087 = vmatpush1.bf16.msra.mxu0 %v1468
  %2088 = vmatprep.subr.bf16.mxu0 %v1471
  %2089 = vmatpush1.bf16.msra.mxu0 %v1470
  %2090 = vmatprep.subr.bf16.mxu0 %v1473
  %2091 = vmatpush1.bf16.msra.mxu0 %v1472
  %2092 = vmatprep.subr.bf16.mxu0 %v1475
  %2093 = vmatpush1.bf16.msra.mxu0 %v1474
  %2094 = vmatprep.subr.bf16.mxu0 %v1477
  %2095 = vmatpush1.bf16.msra.mxu0 %v1476
  %2096 = vmatprep.subr.bf16.mxu0 %v1479
  %2097 = vmatpush1.bf16.msra.mxu0 %v1478
  %2098 = vmatprep.subr.bf16.mxu0 %v1481
  %2099 = vmatpush1.bf16.msra.mxu0 %v1480
  %2100 = vmatprep.subr.bf16.mxu0 %v1483
  %2101 = vmatpush1.bf16.msra.mxu0 %v1482
  %2102 = vmatprep.subr.bf16.mxu0 %v1485
  %2103 = vmatpush1.bf16.msra.mxu0 %v1484
  %2104 = vmatprep.subr.bf16.mxu0 %v1487
  %2105 = vmatpush1.bf16.msra.mxu0 %v1486
  %2106 = vmatprep.subr.bf16.mxu0 %v1489
  %2107 = vmatpush1.bf16.msra.mxu0 %v1488
  %2108 = vmatprep.mubr.bf16.mxu0 %v463
  %2109 = vmatmul.mubr.bf16.gmra.mrb[0].mxu0 %v462
  %v2110 = vpop.f32.mrb[0].mxu0
  %v2111 = vadd.f32 %v2058, %v2110
  %v2112 = vpop.f32.mrb[0].mxu0
  %v2113 = vadd.f32 %v2060, %v2112
  %v2114 = vpop.f32.mrb[0].mxu0
  %v2115 = vadd.f32 %v2062, %v2114
  %v2116 = vpop.f32.mrb[0].mxu0
  %v2117 = vadd.f32 %v2064, %v2116
  %2118 = vmatprep.mubr.bf16.mxu0 %v481
  %2119 = vmatmul.mubr.bf16.gmra.mrb[0].mxu0 %v480
  %v2120 = vpop.f32.mrb[0].mxu0
  %v2121 = vadd.f32 %v2068, %v2120
  %v2122 = vpop.f32.mrb[0].mxu0
  %v2123 = vadd.f32 %v2070, %v2122
  %v2124 = vpop.f32.mrb[0].mxu0
  %v2125 = vadd.f32 %v2072, %v2124
  %v2126 = vpop.f32.mrb[0].mxu0
  %v2127 = vadd.f32 %v2074, %v2126
  %2128 = vdwg.mxu0
  %2129 = vmatprep.subr.bf16.mxu0 %v1491
  %2130 = vmatpush1.bf16.msra.mxu0 %v1490
  %2131 = vmatprep.subr.bf16.mxu0 %v1493
  %2132 = vmatpush1.bf16.msra.mxu0 %v1492
  %2133 = vmatprep.subr.bf16.mxu0 %v1495
  %2134 = vmatpush1.bf16.msra.mxu0 %v1494
  %2135 = vmatprep.subr.bf16.mxu0 %v1497
  %2136 = vmatpush1.bf16.msra.mxu0 %v1496
  %2137 = vmatprep.subr.bf16.mxu0 %v1499
  %2138 = vmatpush1.bf16.msra.mxu0 %v1498
  %2139 = vmatprep.subr.bf16.mxu0 %v1501
  %2140 = vmatpush1.bf16.msra.mxu0 %v1500
  %2141 = vmatprep.subr.bf16.mxu0 %v1503
  %2142 = vmatpush1.bf16.msra.mxu0 %v1502
  %2143 = vmatprep.subr.bf16.mxu0 %v1505
  %2144 = vmatpush1.bf16.msra.mxu0 %v1504
  %2145 = vmatprep.subr.bf16.mxu0 %v1507
  %2146 = vmatpush1.bf16.msra.mxu0 %v1506
  %2147 = vmatprep.subr.bf16.mxu0 %v1509
  %2148 = vmatpush1.bf16.msra.mxu0 %v1508
  %2149 = vmatprep.subr.bf16.mxu0 %v1511
  %2150 = vmatpush1.bf16.msra.mxu0 %v1510
  %2151 = vmatprep.subr.bf16.mxu0 %v1513
  %2152 = vmatpush1.bf16.msra.mxu0 %v1512
  %2153 = vmatprep.subr.bf16.mxu0 %v1515
  %2154 = vmatpush1.bf16.msra.mxu0 %v1514
  %2155 = vmatprep.subr.bf16.mxu0 %v1517
  %2156 = vmatpush1.bf16.msra.mxu0 %v1516
  %2157 = vmatprep.subr.bf16.mxu0 %v1519
  %2158 = vmatpush1.bf16.msra.mxu0 %v1518
  %2159 = vmatprep.subr.bf16.mxu0 %v1521
  %2160 = vmatpush1.bf16.msra.mxu0 %v1520
  %2161 = vmatprep.mubr.bf16.mxu0 %v465
  %2162 = vmatmul.mubr.bf16.gmra.mrb[0].mxu0 %v464
  %v2163 = vpop.f32.mrb[0].mxu0
  %v2164 = vadd.f32 %v2111, %v2163
  %v2165 = vpop.f32.mrb[0].mxu0
  %v2166 = vadd.f32 %v2113, %v2165
  %v2167 = vpop.f32.mrb[0].mxu0
  %v2168 = vadd.f32 %v2115, %v2167
  %v2169 = vpop.f32.mrb[0].mxu0
  %v2170 = vadd.f32 %v2117, %v2169
  %2171 = vmatprep.mubr.bf16.mxu0 %v483
  %2172 = vmatmul.mubr.bf16.gmra.mrb[0].mxu0 %v482
  %v2173 = vpop.f32.mrb[0].mxu0
  %v2174 = vadd.f32 %v2121, %v2173
  %v2175 = vpop.f32.mrb[0].mxu0
  %v2176 = vadd.f32 %v2123, %v2175
  %v2177 = vpop.f32.mrb[0].mxu0
  %v2178 = vadd.f32 %v2125, %v2177
  %v2179 = vpop.f32.mrb[0].mxu0
  %v2180 = vadd.f32 %v2127, %v2179
  %2181 = vdwg.mxu0
  %2182 = vmatprep.subr.bf16.mxu0 %v1523
  %2183 = vmatpush1.bf16.msra.mxu0 %v1522
  %2184 = vmatprep.subr.bf16.mxu0 %v1525
  %2185 = vmatpush1.bf16.msra.mxu0 %v1524
  %2186 = vmatprep.subr.bf16.mxu0 %v1527
  %2187 = vmatpush1.bf16.msra.mxu0 %v1526
  %2188 = vmatprep.subr.bf16.mxu0 %v1529
  %2189 = vmatpush1.bf16.msra.mxu0 %v1528
  %2190 = vmatprep.subr.bf16.mxu0 %v1531
  %2191 = vmatpush1.bf16.msra.mxu0 %v1530
  %2192 = vmatprep.subr.bf16.mxu0 %v1533
  %2193 = vmatpush1.bf16.msra.mxu0 %v1532
  %2194 = vmatprep.subr.bf16.mxu0 %v1535
  %2195 = vmatpush1.bf16.msra.mxu0 %v1534
  %2196 = vmatprep.subr.bf16.mxu0 %v1537
  %2197 = vmatpush1.bf16.msra.mxu0 %v1536
  %2198 = vmatprep.subr.bf16.mxu0 %v1539
  %2199 = vmatpush1.bf16.msra.mxu0 %v1538
  %2200 = vmatprep.subr.bf16.mxu0 %v1541
  %2201 = vmatpush1.bf16.msra.mxu0 %v1540
  %2202 = vmatprep.subr.bf16.mxu0 %v1543
  %2203 = vmatpush1.bf16.msra.mxu0 %v1542
  %2204 = vmatprep.subr.bf16.mxu0 %v1545
  %2205 = vmatpush1.bf16.msra.mxu0 %v1544
  %2206 = vmatprep.subr.bf16.mxu0 %v1547
  %2207 = vmatpush1.bf16.msra.mxu0 %v1546
  %2208 = vmatprep.subr.bf16.mxu0 %v1549
  %2209 = vmatpush1.bf16.msra.mxu0 %v1548
  %2210 = vmatprep.subr.bf16.mxu0 %v1551
  %2211 = vmatpush1.bf16.msra.mxu0 %v1550
  %2212 = vmatprep.subr.bf16.mxu0 %v1553
  %2213 = vmatpush1.bf16.msra.mxu0 %v1552
  %2214 = vmatprep.mubr.bf16.mxu0 %v467
  %2215 = vmatmul.mubr.bf16.gmra.mrb[0].mxu0 %v466
  %v2216 = vpop.f32.mrb[0].mxu0
  %v2217 = vadd.f32 %v2164, %v2216
  %v2218 = vpop.f32.mrb[0].mxu0
  %v2219 = vadd.f32 %v2166, %v2218
  %v2220 = vpop.f32.mrb[0].mxu0
  %v2221 = vadd.f32 %v2168, %v2220
  %v2222 = vpop.f32.mrb[0].mxu0
  %v2223 = vadd.f32 %v2170, %v2222
  %2224 = vmatprep.mubr.bf16.mxu0 %v485
  %2225 = vmatmul.mubr.bf16.gmra.mrb[0].mxu0 %v484
  %v2226 = vpop.f32.mrb[0].mxu0
  %v2227 = vadd.f32 %v2174, %v2226
  %v2228 = vpop.f32.mrb[0].mxu0
  %v2229 = vadd.f32 %v2176, %v2228
  %v2230 = vpop.f32.mrb[0].mxu0
  %v2231 = vadd.f32 %v2178, %v2230
  %v2232 = vpop.f32.mrb[0].mxu0
  %v2233 = vadd.f32 %v2180, %v2232
  %2234 = vdwg.mxu0
  %2235 = vmatprep.subr.bf16.mxu0 %v1555
  %2236 = vmatpush1.bf16.msra.mxu0 %v1554
  %2237 = vmatprep.subr.bf16.mxu0 %v1557
  %2238 = vmatpush1.bf16.msra.mxu0 %v1556
  %2239 = vmatprep.subr.bf16.mxu0 %v1559
  %2240 = vmatpush1.bf16.msra.mxu0 %v1558
  %2241 = vmatprep.subr.bf16.mxu0 %v1561
  %2242 = vmatpush1.bf16.msra.mxu0 %v1560
  %2243 = vmatprep.subr.bf16.mxu0 %v1563
  %2244 = vmatpush1.bf16.msra.mxu0 %v1562
  %2245 = vmatprep.subr.bf16.mxu0 %v1565
  %2246 = vmatpush1.bf16.msra.mxu0 %v1564
  %2247 = vmatprep.subr.bf16.mxu0 %v1567
  %2248 = vmatpush1.bf16.msra.mxu0 %v1566
  %2249 = vmatprep.subr.bf16.mxu0 %v1569
  %2250 = vmatpush1.bf16.msra.mxu0 %v1568
  %2251 = vmatprep.subr.bf16.mxu0 %v1571
  %2252 = vmatpush1.bf16.msra.mxu0 %v1570
  %2253 = vmatprep.subr.bf16.mxu0 %v1573
  %2254 = vmatpush1.bf16.msra.mxu0 %v1572
  %2255 = vmatprep.subr.bf16.mxu0 %v1575
  %2256 = vmatpush1.bf16.msra.mxu0 %v1574
  %2257 = vmatprep.subr.bf16.mxu0 %v1577
  %2258 = vmatpush1.bf16.msra.mxu0 %v1576
  %2259 = vmatprep.subr.bf16.mxu0 %v1579
  %2260 = vmatpush1.bf16.msra.mxu0 %v1578
  %2261 = vmatprep.subr.bf16.mxu0 %v1581
  %2262 = vmatpush1.bf16.msra.mxu0 %v1580
  %2263 = vmatprep.subr.bf16.mxu0 %v1583
  %2264 = vmatpush1.bf16.msra.mxu0 %v1582
  %2265 = vmatprep.subr.bf16.mxu0 %v1585
  %2266 = vmatpush1.bf16.msra.mxu0 %v1584
  %2267 = vmatprep.mubr.bf16.mxu0 %v469
  %2268 = vmatmul.mubr.bf16.gmra.mrb[0].mxu0 %v468
  %v2269 = vpop.f32.mrb[0].mxu0
  %v2270 = vadd.f32 %v2217, %v2269
  %v2271 = vpop.f32.mrb[0].mxu0
  %v2272 = vadd.f32 %v2219, %v2271
  %v2273 = vpop.f32.mrb[0].mxu0
  %v2274 = vadd.f32 %v2221, %v2273
  %v2275 = vpop.f32.mrb[0].mxu0
  %v2276 = vadd.f32 %v2223, %v2275
  %2277 = vmatprep.mubr.bf16.mxu0 %v487
  %2278 = vmatmul.mubr.bf16.gmra.mrb[0].mxu0 %v486
  %v2279 = vpop.f32.mrb[0].mxu0
  %v2280 = vadd.f32 %v2227, %v2279
  %v2281 = vpop.f32.mrb[0].mxu0
  %v2282 = vadd.f32 %v2229, %v2281
  %v2283 = vpop.f32.mrb[0].mxu0
  %v2284 = vadd.f32 %v2231, %v2283
  %v2285 = vpop.f32.mrb[0].mxu0
  %v2286 = vadd.f32 %v2233, %v2285
  %2287 = vdwg.mxu0
  %2288 = vmatprep.subr.bf16.mxu0 %v1587
  %2289 = vmatpush1.bf16.msra.mxu0 %v1586
  %2290 = vmatprep.subr.bf16.mxu0 %v1589
  %2291 = vmatpush1.bf16.msra.mxu0 %v1588
  %2292 = vmatprep.subr.bf16.mxu0 %v1591
  %2293 = vmatpush1.bf16.msra.mxu0 %v1590
  %2294 = vmatprep.subr.bf16.mxu0 %v1593
  %2295 = vmatpush1.bf16.msra.mxu0 %v1592
  %2296 = vmatprep.subr.bf16.mxu0 %v1595
  %2297 = vmatpush1.bf16.msra.mxu0 %v1594
  %2298 = vmatprep.subr.bf16.mxu0 %v1597
  %2299 = vmatpush1.bf16.msra.mxu0 %v1596
  %2300 = vmatprep.subr.bf16.mxu0 %v1599
  %2301 = vmatpush1.bf16.msra.mxu0 %v1598
  %2302 = vmatprep.subr.bf16.mxu0 %v1601
  %2303 = vmatpush1.bf16.msra.mxu0 %v1600
  %2304 = vmatprep.subr.bf16.mxu0 %v1603
  %2305 = vmatpush1.bf16.msra.mxu0 %v1602
  %2306 = vmatprep.subr.bf16.mxu0 %v1605
  %2307 = vmatpush1.bf16.msra.mxu0 %v1604
  %2308 = vmatprep.subr.bf16.mxu0 %v1607
  %2309 = vmatpush1.bf16.msra.mxu0 %v1606
  %2310 = vmatprep.subr.bf16.mxu0 %v1609
  %2311 = vmatpush1.bf16.msra.mxu0 %v1608
  %2312 = vmatprep.subr.bf16.mxu0 %v1611
  %2313 = vmatpush1.bf16.msra.mxu0 %v1610
  %2314 = vmatprep.subr.bf16.mxu0 %v1613
  %2315 = vmatpush1.bf16.msra.mxu0 %v1612
  %2316 = vmatprep.subr.bf16.mxu0 %v1615
  %2317 = vmatpush1.bf16.msra.mxu0 %v1614
  %2318 = vmatprep.subr.bf16.mxu0 %v1617
  %2319 = vmatpush1.bf16.msra.mxu0 %v1616
  %2320 = vmatprep.mubr.bf16.mxu0 %v471
  %2321 = vmatmul.mubr.bf16.gmra.mrb[0].mxu0 %v470
  %v2322 = vpop.f32.mrb[0].mxu0
  %v2323 = vadd.f32 %v2270, %v2322
  %v2324 = vpop.f32.mrb[0].mxu0
  %v2325 = vadd.f32 %v2272, %v2324
  %v2326 = vpop.f32.mrb[0].mxu0
  %v2327 = vadd.f32 %v2274, %v2326
  %v2328 = vpop.f32.mrb[0].mxu0
  %v2329 = vadd.f32 %v2276, %v2328
  %2330 = vmatprep.mubr.bf16.mxu0 %v489
  %2331 = vmatmul.mubr.bf16.gmra.mrb[0].mxu0 %v488
  %v2332 = vpop.f32.mrb[0].mxu0
  %v2333 = vadd.f32 %v2280, %v2332
  %v2334 = vpop.f32.mrb[0].mxu0
  %v2335 = vadd.f32 %v2282, %v2334
  %v2336 = vpop.f32.mrb[0].mxu0
  %v2337 = vadd.f32 %v2284, %v2336
  %v2338 = vpop.f32.mrb[0].mxu0
  %v2339 = vadd.f32 %v2286, %v2338
  %2340 = vdwg.mxu0
  %2341 = vmatprep.subr.bf16.mxu0 %v1619
  %2342 = vmatpush1.bf16.msra.mxu0 %v1618
  %2343 = vmatprep.subr.bf16.mxu0 %v1621
  %2344 = vmatpush1.bf16.msra.mxu0 %v1620
  %2345 = vmatprep.subr.bf16.mxu0 %v1623
  %2346 = vmatpush1.bf16.msra.mxu0 %v1622
  %2347 = vmatprep.subr.bf16.mxu0 %v1625
  %2348 = vmatpush1.bf16.msra.mxu0 %v1624
  %2349 = vmatprep.subr.bf16.mxu0 %v1627
  %2350 = vmatpush1.bf16.msra.mxu0 %v1626
  %2351 = vmatprep.subr.bf16.mxu0 %v1629
  %2352 = vmatpush1.bf16.msra.mxu0 %v1628
  %2353 = vmatprep.subr.bf16.mxu0 %v1631
  %2354 = vmatpush1.bf16.msra.mxu0 %v1630
  %2355 = vmatprep.subr.bf16.mxu0 %v1633
  %2356 = vmatpush1.bf16.msra.mxu0 %v1632
  %2357 = vmatprep.subr.bf16.mxu0 %v1635
  %2358 = vmatpush1.bf16.msra.mxu0 %v1634
  %2359 = vmatprep.subr.bf16.mxu0 %v1637
  %2360 = vmatpush1.bf16.msra.mxu0 %v1636
  %2361 = vmatprep.subr.bf16.mxu0 %v1639
  %2362 = vmatpush1.bf16.msra.mxu0 %v1638
  %2363 = vmatprep.subr.bf16.mxu0 %v1641
  %2364 = vmatpush1.bf16.msra.mxu0 %v1640
  %2365 = vmatprep.subr.bf16.mxu0 %v1643
  %2366 = vmatpush1.bf16.msra.mxu0 %v1642
  %2367 = vmatprep.subr.bf16.mxu0 %v1645
  %2368 = vmatpush1.bf16.msra.mxu0 %v1644
  %2369 = vmatprep.subr.bf16.mxu0 %v1647
  %2370 = vmatpush1.bf16.msra.mxu0 %v1646
  %2371 = vmatprep.subr.bf16.mxu0 %v1649
  %2372 = vmatpush1.bf16.msra.mxu0 %v1648
  %2373 = vmatprep.mubr.bf16.mxu0 %v473
  %2374 = vmatmul.mubr.bf16.gmra.mrb[0].mxu0 %v472
  %v2375 = vpop.f32.mrb[0].mxu0
  %v2376 = vadd.f32 %v2323, %v2375
  %v2377 = vpop.f32.mrb[0].mxu0
  %v2378 = vadd.f32 %v2325, %v2377
  %v2379 = vpop.f32.mrb[0].mxu0
  %v2380 = vadd.f32 %v2327, %v2379
  %v2381 = vpop.f32.mrb[0].mxu0
  %v2382 = vadd.f32 %v2329, %v2381
  %2383 = vmatprep.mubr.bf16.mxu0 %v491
  %2384 = vmatmul.mubr.bf16.gmra.mrb[0].mxu0 %v490
  %v2385 = vpop.f32.mrb[0].mxu0
  %v2386 = vadd.f32 %v2333, %v2385
  %v2387 = vpop.f32.mrb[0].mxu0
  %v2388 = vadd.f32 %v2335, %v2387
  %v2389 = vpop.f32.mrb[0].mxu0
  %v2390 = vadd.f32 %v2337, %v2389
  %v2391 = vpop.f32.mrb[0].mxu0
  %v2392 = vadd.f32 %v2339, %v2391
  %2393 = vdwg.mxu0
  %2394 = vmatprep.subr.bf16.mxu0 %v1651
  %2395 = vmatpush1.bf16.msra.mxu0 %v1650
  %2396 = vmatprep.subr.bf16.mxu0 %v1653
  %2397 = vmatpush1.bf16.msra.mxu0 %v1652
  %2398 = vmatprep.subr.bf16.mxu0 %v1655
  %2399 = vmatpush1.bf16.msra.mxu0 %v1654
  %2400 = vmatprep.subr.bf16.mxu0 %v1657
  %2401 = vmatpush1.bf16.msra.mxu0 %v1656
  %2402 = vmatprep.subr.bf16.mxu0 %v1659
  %2403 = vmatpush1.bf16.msra.mxu0 %v1658
  %2404 = vmatprep.subr.bf16.mxu0 %v1661
  %2405 = vmatpush1.bf16.msra.mxu0 %v1660
  %2406 = vmatprep.subr.bf16.mxu0 %v1663
  %2407 = vmatpush1.bf16.msra.mxu0 %v1662
  %2408 = vmatprep.subr.bf16.mxu0 %v1665
  %2409 = vmatpush1.bf16.msra.mxu0 %v1664
  %2410 = vmatprep.subr.bf16.mxu0 %v1667
  %2411 = vmatpush1.bf16.msra.mxu0 %v1666
  %2412 = vmatprep.subr.bf16.mxu0 %v1669
  %2413 = vmatpush1.bf16.msra.mxu0 %v1668
  %2414 = vmatprep.subr.bf16.mxu0 %v1671
  %2415 = vmatpush1.bf16.msra.mxu0 %v1670
  %2416 = vmatprep.subr.bf16.mxu0 %v1673
  %2417 = vmatpush1.bf16.msra.mxu0 %v1672
  %2418 = vmatprep.subr.bf16.mxu0 %v1675
  %2419 = vmatpush1.bf16.msra.mxu0 %v1674
  %2420 = vmatprep.subr.bf16.mxu0 %v1677
  %2421 = vmatpush1.bf16.msra.mxu0 %v1676
  %2422 = vmatprep.subr.bf16.mxu0 %v1679
  %2423 = vmatpush1.bf16.msra.mxu0 %v1678
  %2424 = vmatprep.subr.bf16.mxu0 %v1681
  %2425 = vmatpush1.bf16.msra.mxu0 %v1680
  %2426 = vmatprep.mubr.bf16.mxu0 %v475
  %2427 = vmatmul.mubr.bf16.gmra.mrb[0].mxu0 %v474
  %v2428 = vpop.f32.mrb[0].mxu0
  %v2429 = vadd.f32 %v2376, %v2428
  %v2430 = vpop.f32.mrb[0].mxu0
  %v2431 = vadd.f32 %v2378, %v2430
  %v2432 = vpop.f32.mrb[0].mxu0
  %v2433 = vadd.f32 %v2380, %v2432
  %v2434 = vpop.f32.mrb[0].mxu0
  %v2435 = vadd.f32 %v2382, %v2434
  %2436 = vmatprep.mubr.bf16.mxu0 %v493
  %2437 = vmatmul.mubr.bf16.gmra.mrb[0].mxu0 %v492
  %v2438 = vpop.f32.mrb[0].mxu0
  %v2439 = vadd.f32 %v2386, %v2438
  %v2440 = vpop.f32.mrb[0].mxu0
  %v2441 = vadd.f32 %v2388, %v2440
  %v2442 = vpop.f32.mrb[0].mxu0
  %v2443 = vadd.f32 %v2390, %v2442
  %v2444 = vpop.f32.mrb[0].mxu0
  %v2445 = vadd.f32 %v2392, %v2444
  %2446 = vdwg.mxu0
  %v2447 = vmax.f32 %v2429, 0.0
  %v2448 = vmax.f32 %v2431, 0.0
  %v2449 = vmax.f32 %v2433, 0.0
  %v2450 = vmax.f32 %v2435, 0.0
  %v2451 = vmax.f32 %v2439, 0.0
  %v2452 = vmax.f32 %v2441, 0.0
  %v2453 = vmax.f32 %v2443, 0.0
  %v2454 = vmax.f32 %v2445, 0.0
  %v2455 = vpack.c.bf16 %v2449, %v2447
  %v2456 = vpack.c.bf16 %v2450, %v2448
  %v2457 = vpack.c.bf16 %v2453, %v2451
  %v2458 = vpack.c.bf16 %v2454, %v2452
  %v2463 = vunpack.c.l.b16 %v2455
  %v2464 = vunpack.c.l.b16 %v2456
  %v2465 = vunpack.c.h.b16 %v2455
  %v2466 = vunpack.c.h.b16 %v2456
  %v2467 = vunpack.c.l.b16 %v2457
  %v2468 = vunpack.c.l.b16 %v2458
  %v2469 = vunpack.c.h.b16 %v2457
  %v2470 = vunpack.c.h.b16 %v2458
  %v2471 = vpack.c.b16 %v2464, %v2463
  %v2472 = vpack.c.b16 %v2466, %v2465
  %v2473 = vpack.c.b16 %v2468, %v2467
  %v2474 = vpack.c.b16 %v2470, %v2469
  %2479 = vst [vmem:[%s3] sm:$0xff] %v2471
  %2480 = vst [vmem:[%s3 + $0x8] sm:$0xff] %v2472
  %2481 = vst [vmem:[%s3 + $0x10] sm:$0xff] %v2473
  %2482 = vst [vmem:[%s3 + $0x18] sm:$0xff] %v2474
  // Predicated region
  $region14: #{lst_encoder4_forward.19} parent=0 // pred_check
    _
  $region15: #{lst_encoder4_forward.19} parent=0 // pred_check_branch
    %2484 = sbr.rel (0) target = $region17
  $region16: #{lst_encoder4_forward.19} parent=0 // pred_region
    _
  $region17: #{lst_encoder4_forward.19} parent=0 // pred_fallthru
    _
  // Predicated region
  $region18: #{lst_encoder4_forward.19} parent=0 // pred_check
    _
  $region19: #{lst_encoder4_forward.19} parent=0 // pred_check_branch
    %2486 = sbr.rel (0) target = $region21
  $region20: #{lst_encoder4_forward.19} parent=0 // pred_region
    _
  $region21: #{lst_encoder4_forward.19} parent=0 // pred_fallthru
    _

// kernel: lst_encoder4_forward.23
$region0: #{lst_encoder4_forward.23}
  #allocation0 [shape = 'u32[]', space=smem, size = 0x4, offset = 0x4, fixed_abs, tag = 'smem constant byte address 0x4 - core index']
  #allocation1 [shape = 'u32[144,128]{1,0:T(1,128)}', space=vmem, size = 0x12000, scoped, tag = 'internal scratch']
  %s0 = inlined_call_operand.vmem [shape: bf16[8,2304], index: 0, kind: input, shape index: {}]
  %s1 = inlined_call_operand.vmem [shape: bf16[2304,512], index: 1, kind: input, shape index: {}]
  %s2 = inlined_call_operand.vmem [shape: f32[1,512], index: 2, kind: input, shape index: {}]
  %s3 = inlined_call_operand.vmem [shape: bf16[8,512], index: 3, kind: output, shape index: {}]
  %s4 = sld [smem:[#allocation0]]
  $region22: #{lst_encoder4_forward.23} parent=0
    _
  %s6 = ssub.s32 1, %s4
  %s7 = scalar_select 0, %s6, %s4
  // Predicated region
  $region2: #{lst_encoder4_forward.23} parent=0 // pred_check
    _
  $region3: #{lst_encoder4_forward.23} parent=0 // pred_check_branch
    %9 = sbr.rel (0) target = $region5
  $region4: #{lst_encoder4_forward.23} parent=0 // pred_region
    _
  $region5: #{lst_encoder4_forward.23} parent=0 // pred_fallthru
    _
  // Predicated region
  $region6: #{lst_encoder4_forward.23} parent=0 // pred_check
    _
  $region7: #{lst_encoder4_forward.23} parent=0 // pred_check_branch
    %11 = sbr.rel (0) target = $region9
  $region8: #{lst_encoder4_forward.23} parent=0 // pred_region
    _
  $region9: #{lst_encoder4_forward.23} parent=0 // pred_fallthru
    _
  // Predicated region
  $region10: #{lst_encoder4_forward.23} parent=0 // pred_check
    _
  $region11: #{lst_encoder4_forward.23} parent=0 // pred_check_branch
    %13 = sbr.rel (0) target = $region13
  $region12: #{lst_encoder4_forward.23} parent=0 // pred_region
    _
  $region13: #{lst_encoder4_forward.23} parent=0 // pred_fallthru
    _
  %v14 = vld [vmem:[%s0] sm:$0xff]
  %v15 = vld [vmem:[%s0 + $0x8] sm:$0xff]
  %v16 = vld [vmem:[%s0 + $0x10] sm:$0xff]
  %v17 = vld [vmem:[%s0 + $0x18] sm:$0xff]
  %v18 = vld [vmem:[%s0 + $0x20] sm:$0xff]
  %v19 = vld [vmem:[%s0 + $0x28] sm:$0xff]
  %v20 = vld [vmem:[%s0 + $0x30] sm:$0xff]
  %v21 = vld [vmem:[%s0 + $0x38] sm:$0xff]
  %v22 = vld [vmem:[%s0 + $0x40] sm:$0xff]
  %v23 = vld [vmem:[%s1] sm:$0xff]
  %v24 = vld [vmem:[%s1 + $0x8] sm:$0xff]
  %v25 = vld [vmem:[%s1 + $0x10] sm:$0xff]
  %v26 = vld [vmem:[%s1 + $0x18] sm:$0xff]
  %v27 = vld [vmem:[%s1 + $0x20] sm:$0xff]
  %v28 = vld [vmem:[%s1 + $0x28] sm:$0xff]
  %v29 = vld [vmem:[%s1 + $0x30] sm:$0xff]
  %v30 = vld [vmem:[%s1 + $0x38] sm:$0xff]
  %v31 = vld [vmem:[%s1 + $0x40] sm:$0xff]
  %v32 = vld [vmem:[%s1 + $0x48] sm:$0xff]
  %v33 = vld [vmem:[%s1 + $0x50] sm:$0xff]
  %v34 = vld [vmem:[%s1 + $0x58] sm:$0xff]
  %v35 = vld [vmem:[%s1 + $0x60] sm:$0xff]
  %v36 = vld [vmem:[%s1 + $0x68] sm:$0xff]
  %v37 = vld [vmem:[%s1 + $0x70] sm:$0xff]
  %v38 = vld [vmem:[%s1 + $0x78] sm:$0xff]
  %v39 = vld [vmem:[%s1 + $0x80] sm:$0xff]
  %v40 = vld [vmem:[%s1 + $0x88] sm:$0xff]
  %v41 = vld [vmem:[%s1 + $0x90] sm:$0xff]
  %v42 = vld [vmem:[%s1 + $0x98] sm:$0xff]
  %v43 = vld [vmem:[%s1 + $0xa0] sm:$0xff]
  %v44 = vld [vmem:[%s1 + $0xa8] sm:$0xff]
  %v45 = vld [vmem:[%s1 + $0xb0] sm:$0xff]
  %v46 = vld [vmem:[%s1 + $0xb8] sm:$0xff]
  %v47 = vld [vmem:[%s1 + $0xc0] sm:$0xff]
  %v48 = vld [vmem:[%s1 + $0xc8] sm:$0xff]
  %v49 = vld [vmem:[%s1 + $0xd0] sm:$0xff]
  %v50 = vld [vmem:[%s1 + $0xd8] sm:$0xff]
  %v51 = vld [vmem:[%s1 + $0xe0] sm:$0xff]
  %v52 = vld [vmem:[%s1 + $0xe8] sm:$0xff]
  %v53 = vld [vmem:[%s1 + $0xf0] sm:$0xff]
  %v54 = vld [vmem:[%s1 + $0xf8] sm:$0xff]
  %v55 = vld [vmem:[%s1 + $0x100] sm:$0xff]
  %v56 = vld [vmem:[%s1 + $0x108] sm:$0xff]
  %v57 = vld [vmem:[%s1 + $0x110] sm:$0xff]
  %v58 = vld [vmem:[%s1 + $0x118] sm:$0xff]
  %v59 = vld [vmem:[%s1 + $0x120] sm:$0xff]
  %v60 = vld [vmem:[%s1 + $0x128] sm:$0xff]
  %v61 = vld [vmem:[%s1 + $0x130] sm:$0xff]
  %v62 = vld [vmem:[%s1 + $0x138] sm:$0xff]
  %v63 = vld [vmem:[%s1 + $0x140] sm:$0xff]
  %v64 = vld [vmem:[%s1 + $0x148] sm:$0xff]
  %v65 = vld [vmem:[%s1 + $0x150] sm:$0xff]
  %v66 = vld [vmem:[%s1 + $0x158] sm:$0xff]
  %v67 = vld [vmem:[%s1 + $0x160] sm:$0xff]
  %v68 = vld [vmem:[%s1 + $0x168] sm:$0xff]
  %v69 = vld [vmem:[%s1 + $0x170] sm:$0xff]
  %v70 = vld [vmem:[%s1 + $0x178] sm:$0xff]
  %v71 = vld [vmem:[%s1 + $0x180] sm:$0xff]
  %v72 = vld [vmem:[%s1 + $0x188] sm:$0xff]
  %v73 = vld [vmem:[%s1 + $0x190] sm:$0xff]
  %v74 = vld [vmem:[%s1 + $0x198] sm:$0xff]
  %v75 = vld [vmem:[%s1 + $0x1a0] sm:$0xff]
  %v76 = vld [vmem:[%s1 + $0x1a8] sm:$0xff]
  %v77 = vld [vmem:[%s1 + $0x1b0] sm:$0xff]
  %v78 = vld [vmem:[%s1 + $0x1b8] sm:$0xff]
  %v79 = vld [vmem:[%s1 + $0x1c0] sm:$0xff]
  %v80 = vld [vmem:[%s1 + $0x1c8] sm:$0xff]
  %v81 = vld [vmem:[%s1 + $0x1d0] sm:$0xff]
  %v82 = vld [vmem:[%s1 + $0x1d8] sm:$0xff]
  %v83 = vld [vmem:[%s1 + $0x1e0] sm:$0xff]
  %v84 = vld [vmem:[%s1 + $0x1e8] sm:$0xff]
  %v85 = vld [vmem:[%s1 + $0x1f0] sm:$0xff]
  %v86 = vld [vmem:[%s1 + $0x1f8] sm:$0xff]
  %v87 = vld [vmem:[%s1 + $0x200] sm:$0xff]
  %v88 = vld [vmem:[%s1 + $0x208] sm:$0xff]
  %v89 = vld [vmem:[%s1 + $0x210] sm:$0xff]
  %v90 = vld [vmem:[%s1 + $0x218] sm:$0xff]
  %v91 = vld [vmem:[%s1 + $0x220] sm:$0xff]
  %v92 = vld [vmem:[%s1 + $0x228] sm:$0xff]
  %v93 = vld [vmem:[%s1 + $0x230] sm:$0xff]
  %v94 = vld [vmem:[%s1 + $0x238] sm:$0xff]
  %v95 = vld [vmem:[%s1 + $0x240] sm:$0xff]
  %v96 = vld [vmem:[%s1 + $0x248] sm:$0xff]
  %v97 = vld [vmem:[%s1 + $0x250] sm:$0xff]
  %v98 = vld [vmem:[%s1 + $0x258] sm:$0xff]
  %v99 = vld [vmem:[%s1 + $0x260] sm:$0xff]
  %v100 = vld [vmem:[%s1 + $0x268] sm:$0xff]
  %v101 = vld [vmem:[%s1 + $0x270] sm:$0xff]
  %v102 = vld [vmem:[%s1 + $0x278] sm:$0xff]
  %v103 = vld [vmem:[%s1 + $0x280] sm:$0xff]
  %v104 = vld [vmem:[%s1 + $0x288] sm:$0xff]
  %v105 = vld [vmem:[%s1 + $0x290] sm:$0xff]
  %v106 = vld [vmem:[%s1 + $0x298] sm:$0xff]
  %v107 = vld [vmem:[%s1 + $0x2a0] sm:$0xff]
  %v108 = vld [vmem:[%s1 + $0x2a8] sm:$0xff]
  %v109 = vld [vmem:[%s1 + $0x2b0] sm:$0xff]
  %v110 = vld [vmem:[%s1 + $0x2b8] sm:$0xff]
  %v111 = vld [vmem:[%s1 + $0x2c0] sm:$0xff]
  %v112 = vld [vmem:[%s1 + $0x2c8] sm:$0xff]
  %v113 = vld [vmem:[%s1 + $0x2d0] sm:$0xff]
  %v114 = vld [vmem:[%s1 + $0x2d8] sm:$0xff]
  %v115 = vld [vmem:[%s1 + $0x2e0] sm:$0xff]
  %v116 = vld [vmem:[%s1 + $0x2e8] sm:$0xff]
  %v117 = vld [vmem:[%s1 + $0x2f0] sm:$0xff]
  %v118 = vld [vmem:[%s1 + $0x2f8] sm:$0xff]
  %v119 = vld [vmem:[%s1 + $0x300] sm:$0xff]
  %v120 = vld [vmem:[%s1 + $0x308] sm:$0xff]
  %v121 = vld [vmem:[%s1 + $0x310] sm:$0xff]
  %v122 = vld [vmem:[%s1 + $0x318] sm:$0xff]
  %v123 = vld [vmem:[%s1 + $0x320] sm:$0xff]
  %v124 = vld [vmem:[%s1 + $0x328] sm:$0xff]
  %v125 = vld [vmem:[%s1 + $0x330] sm:$0xff]
  %v126 = vld [vmem:[%s1 + $0x338] sm:$0xff]
  %v127 = vld [vmem:[%s1 + $0x340] sm:$0xff]
  %v128 = vld [vmem:[%s1 + $0x348] sm:$0xff]
  %v129 = vld [vmem:[%s1 + $0x350] sm:$0xff]
  %v130 = vld [vmem:[%s1 + $0x358] sm:$0xff]
  %v131 = vld [vmem:[%s1 + $0x360] sm:$0xff]
  %v132 = vld [vmem:[%s1 + $0x368] sm:$0xff]
  %v133 = vld [vmem:[%s1 + $0x370] sm:$0xff]
  %v134 = vld [vmem:[%s1 + $0x378] sm:$0xff]
  %v135 = vld [vmem:[%s1 + $0x380] sm:$0xff]
  %v136 = vld [vmem:[%s1 + $0x388] sm:$0xff]
  %v137 = vld [vmem:[%s1 + $0x390] sm:$0xff]
  %v138 = vld [vmem:[%s1 + $0x398] sm:$0xff]
  %v139 = vld [vmem:[%s1 + $0x3a0] sm:$0xff]
  %v140 = vld [vmem:[%s1 + $0x3a8] sm:$0xff]
  %v141 = vld [vmem:[%s1 + $0x3b0] sm:$0xff]
  %v142 = vld [vmem:[%s1 + $0x3b8] sm:$0xff]
  %v143 = vld [vmem:[%s1 + $0x3c0] sm:$0xff]
  %v144 = vld [vmem:[%s1 + $0x3c8] sm:$0xff]
  %v145 = vld [vmem:[%s1 + $0x3d0] sm:$0xff]
  %v146 = vld [vmem:[%s1 + $0x3d8] sm:$0xff]
  %v147 = vld [vmem:[%s1 + $0x3e0] sm:$0xff]
  %v148 = vld [vmem:[%s1 + $0x3e8] sm:$0xff]
  %v149 = vld [vmem:[%s1 + $0x3f0] sm:$0xff]
  %v150 = vld [vmem:[%s1 + $0x3f8] sm:$0xff]
  %v151 = vld [vmem:[%s1 + $0x400] sm:$0xff]
  %v152 = vld [vmem:[%s1 + $0x408] sm:$0xff]
  %v153 = vld [vmem:[%s1 + $0x410] sm:$0xff]
  %v154 = vld [vmem:[%s1 + $0x418] sm:$0xff]
  %v155 = vld [vmem:[%s1 + $0x420] sm:$0xff]
  %v156 = vld [vmem:[%s1 + $0x428] sm:$0xff]
  %v157 = vld [vmem:[%s1 + $0x430] sm:$0xff]
  %v158 = vld [vmem:[%s1 + $0x438] sm:$0xff]
  %v159 = vld [vmem:[%s1 + $0x440] sm:$0xff]
  %v160 = vld [vmem:[%s1 + $0x448] sm:$0xff]
  %v161 = vld [vmem:[%s1 + $0x450] sm:$0xff]
  %v162 = vld [vmem:[%s1 + $0x458] sm:$0xff]
  %v163 = vld [vmem:[%s1 + $0x460] sm:$0xff]
  %v164 = vld [vmem:[%s1 + $0x468] sm:$0xff]
  %v165 = vld [vmem:[%s1 + $0x470] sm:$0xff]
  %v166 = vld [vmem:[%s1 + $0x478] sm:$0xff]
  %v167 = vld [vmem:[%s1 + $0x480] sm:$0xff]
  %v168 = vld [vmem:[%s1 + $0x488] sm:$0xff]
  %v169 = vld [vmem:[%s1 + $0x490] sm:$0xff]
  %v170 = vld [vmem:[%s1 + $0x498] sm:$0xff]
  %v171 = vld [vmem:[%s1 + $0x4a0] sm:$0xff]
  %v172 = vld [vmem:[%s1 + $0x4a8] sm:$0xff]
  %v173 = vld [vmem:[%s1 + $0x4b0] sm:$0xff]
  %v174 = vld [vmem:[%s1 + $0x4b8] sm:$0xff]
  %v175 = vld [vmem:[%s1 + $0x4c0] sm:$0xff]
  %v176 = vld [vmem:[%s1 + $0x4c8] sm:$0xff]
  %v177 = vld [vmem:[%s1 + $0x4d0] sm:$0xff]
  %v178 = vld [vmem:[%s1 + $0x4d8] sm:$0xff]
  %v179 = vld [vmem:[%s1 + $0x4e0] sm:$0xff]
  %v180 = vld [vmem:[%s1 + $0x4e8] sm:$0xff]
  %v181 = vld [vmem:[%s1 + $0x4f0] sm:$0xff]
  %v182 = vld [vmem:[%s1 + $0x4f8] sm:$0xff]
  %v183 = vld [vmem:[%s1 + $0x500] sm:$0xff]
  %v184 = vld [vmem:[%s1 + $0x508] sm:$0xff]
  %v185 = vld [vmem:[%s1 + $0x510] sm:$0xff]
  %v186 = vld [vmem:[%s1 + $0x518] sm:$0xff]
  %v187 = vld [vmem:[%s1 + $0x520] sm:$0xff]
  %v188 = vld [vmem:[%s1 + $0x528] sm:$0xff]
  %v189 = vld [vmem:[%s1 + $0x530] sm:$0xff]
  %v190 = vld [vmem:[%s1 + $0x538] sm:$0xff]
  %v191 = vld [vmem:[%s1 + $0x540] sm:$0xff]
  %v192 = vld [vmem:[%s1 + $0x548] sm:$0xff]
  %v193 = vld [vmem:[%s1 + $0x550] sm:$0xff]
  %v194 = vld [vmem:[%s1 + $0x558] sm:$0xff]
  %v195 = vld [vmem:[%s1 + $0x560] sm:$0xff]
  %v196 = vld [vmem:[%s1 + $0x568] sm:$0xff]
  %v197 = vld [vmem:[%s1 + $0x570] sm:$0xff]
  %v198 = vld [vmem:[%s1 + $0x578] sm:$0xff]
  %v199 = vld [vmem:[%s1 + $0x580] sm:$0xff]
  %v200 = vld [vmem:[%s1 + $0x588] sm:$0xff]
  %v201 = vld [vmem:[%s1 + $0x590] sm:$0xff]
  %v202 = vld [vmem:[%s1 + $0x598] sm:$0xff]
  %v203 = vld [vmem:[%s1 + $0x5a0] sm:$0xff]
  %v204 = vld [vmem:[%s1 + $0x5a8] sm:$0xff]
  %v205 = vld [vmem:[%s1 + $0x5b0] sm:$0xff]
  %v206 = vld [vmem:[%s1 + $0x5b8] sm:$0xff]
  %v207 = vld [vmem:[%s1 + $0x5c0] sm:$0xff]
  %v208 = vld [vmem:[%s1 + $0x5c8] sm:$0xff]
  %v209 = vld [vmem:[%s1 + $0x5d0] sm:$0xff]
  %v210 = vld [vmem:[%s1 + $0x5d8] sm:$0xff]
  %v211 = vld [vmem:[%s1 + $0x5e0] sm:$0xff]
  %v212 = vld [vmem:[%s1 + $0x5e8] sm:$0xff]
  %v213 = vld [vmem:[%s1 + $0x5f0] sm:$0xff]
  %v214 = vld [vmem:[%s1 + $0x5f8] sm:$0xff]
  %v215 = vld [vmem:[%s1 + $0x600] sm:$0xff]
  %v216 = vld [vmem:[%s1 + $0x608] sm:$0xff]
  %v217 = vld [vmem:[%s1 + $0x610] sm:$0xff]
  %v218 = vld [vmem:[%s1 + $0x618] sm:$0xff]
  %v219 = vld [vmem:[%s1 + $0x620] sm:$0xff]
  %v220 = vld [vmem:[%s1 + $0x628] sm:$0xff]
  %v221 = vld [vmem:[%s1 + $0x630] sm:$0xff]
  %v222 = vld [vmem:[%s1 + $0x638] sm:$0xff]
  %v223 = vld [vmem:[%s1 + $0x640] sm:$0xff]
  %v224 = vld [vmem:[%s1 + $0x648] sm:$0xff]
  %v225 = vld [vmem:[%s1 + $0x650] sm:$0xff]
  %v226 = vld [vmem:[%s1 + $0x658] sm:$0xff]
  %v227 = vld [vmem:[%s1 + $0x660] sm:$0xff]
  %v228 = vld [vmem:[%s1 + $0x668] sm:$0xff]
  %v229 = vld [vmem:[%s1 + $0x670] sm:$0xff]
  %v230 = vld [vmem:[%s1 + $0x678] sm:$0xff]
  %v231 = vld [vmem:[%s1 + $0x680] sm:$0xff]
  %v232 = vld [vmem:[%s1 + $0x688] sm:$0xff]
  %v233 = vld [vmem:[%s1 + $0x690] sm:$0xff]
  %v234 = vld [vmem:[%s1 + $0x698] sm:$0xff]
  %v235 = vld [vmem:[%s1 + $0x6a0] sm:$0xff]
  %v236 = vld [vmem:[%s1 + $0x6a8] sm:$0xff]
  %v237 = vld [vmem:[%s1 + $0x6b0] sm:$0xff]
  %v238 = vld [vmem:[%s1 + $0x6b8] sm:$0xff]
  %v239 = vld [vmem:[%s1 + $0x6c0] sm:$0xff]
  %v240 = vld [vmem:[%s1 + $0x6c8] sm:$0xff]
  %v241 = vld [vmem:[%s1 + $0x6d0] sm:$0xff]
  %v242 = vld [vmem:[%s1 + $0x6d8] sm:$0xff]
  %v243 = vld [vmem:[%s1 + $0x6e0] sm:$0xff]
  %v244 = vld [vmem:[%s1 + $0x6e8] sm:$0xff]
  %v245 = vld [vmem:[%s1 + $0x6f0] sm:$0xff]
  %v246 = vld [vmem:[%s1 + $0x6f8] sm:$0xff]
  %v247 = vld [vmem:[%s1 + $0x700] sm:$0xff]
  %v248 = vld [vmem:[%s1 + $0x708] sm:$0xff]
  %v249 = vld [vmem:[%s1 + $0x710] sm:$0xff]
  %v250 = vld [vmem:[%s1 + $0x718] sm:$0xff]
  %v251 = vld [vmem:[%s1 + $0x720] sm:$0xff]
  %v252 = vld [vmem:[%s1 + $0x728] sm:$0xff]
  %v253 = vld [vmem:[%s1 + $0x730] sm:$0xff]
  %v254 = vld [vmem:[%s1 + $0x738] sm:$0xff]
  %v255 = vld [vmem:[%s1 + $0x740] sm:$0xff]
  %v256 = vld [vmem:[%s1 + $0x748] sm:$0xff]
  %v257 = vld [vmem:[%s1 + $0x750] sm:$0xff]
  %v258 = vld [vmem:[%s1 + $0x758] sm:$0xff]
  %v259 = vld [vmem:[%s1 + $0x760] sm:$0xff]
  %v260 = vld [vmem:[%s1 + $0x768] sm:$0xff]
  %v261 = vld [vmem:[%s1 + $0x770] sm:$0xff]
  %v262 = vld [vmem:[%s1 + $0x778] sm:$0xff]
  %v263 = vld [vmem:[%s1 + $0x780] sm:$0xff]
  %v264 = vld [vmem:[%s1 + $0x788] sm:$0xff]
  %v265 = vld [vmem:[%s1 + $0x790] sm:$0xff]
  %v266 = vld [vmem:[%s1 + $0x798] sm:$0xff]
  %v267 = vld [vmem:[%s1 + $0x7a0] sm:$0xff]
  %v268 = vld [vmem:[%s1 + $0x7a8] sm:$0xff]
  %v269 = vld [vmem:[%s1 + $0x7b0] sm:$0xff]
  %v270 = vld [vmem:[%s1 + $0x7b8] sm:$0xff]
  %v271 = vld [vmem:[%s1 + $0x7c0] sm:$0xff]
  %v272 = vld [vmem:[%s1 + $0x7c8] sm:$0xff]
  %v273 = vld [vmem:[%s1 + $0x7d0] sm:$0xff]
  %v274 = vld [vmem:[%s1 + $0x7d8] sm:$0xff]
  %v275 = vld [vmem:[%s1 + $0x7e0] sm:$0xff]
  %v276 = vld [vmem:[%s1 + $0x7e8] sm:$0xff]
  %v277 = vld [vmem:[%s1 + $0x7f0] sm:$0xff]
  %v278 = vld [vmem:[%s1 + $0x7f8] sm:$0xff]
  %v279 = vld [vmem:[%s1 + $0x800] sm:$0xff]
  %v280 = vld [vmem:[%s1 + $0x808] sm:$0xff]
  %v281 = vld [vmem:[%s1 + $0x810] sm:$0xff]
  %v282 = vld [vmem:[%s1 + $0x818] sm:$0xff]
  %v283 = vld [vmem:[%s1 + $0x820] sm:$0xff]
  %v284 = vld [vmem:[%s1 + $0x828] sm:$0xff]
  %v285 = vld [vmem:[%s1 + $0x830] sm:$0xff]
  %v286 = vld [vmem:[%s1 + $0x838] sm:$0xff]
  %v287 = vld [vmem:[%s1 + $0x840] sm:$0xff]
  %v288 = vld [vmem:[%s1 + $0x848] sm:$0xff]
  %v289 = vld [vmem:[%s1 + $0x850] sm:$0xff]
  %v290 = vld [vmem:[%s1 + $0x858] sm:$0xff]
  %v291 = vld [vmem:[%s1 + $0x860] sm:$0xff]
  %v292 = vld [vmem:[%s1 + $0x868] sm:$0xff]
  %v293 = vld [vmem:[%s1 + $0x870] sm:$0xff]
  %v294 = vld [vmem:[%s1 + $0x878] sm:$0xff]
  %v295 = vld [vmem:[%s1 + $0x880] sm:$0xff]
  %v296 = vld [vmem:[%s1 + $0x888] sm:$0xff]
  %v297 = vld [vmem:[%s1 + $0x890] sm:$0xff]
  %v298 = vld [vmem:[%s1 + $0x898] sm:$0xff]
  %v299 = vld [vmem:[%s1 + $0x8a0] sm:$0xff]
  %v300 = vld [vmem:[%s1 + $0x8a8] sm:$0xff]
  %v301 = vld [vmem:[%s1 + $0x8b0] sm:$0xff]
  %v302 = vld [vmem:[%s1 + $0x8b8] sm:$0xff]
  %v303 = vld [vmem:[%s1 + $0x8c0] sm:$0xff]
  %v304 = vld [vmem:[%s1 + $0x8c8] sm:$0xff]
  %v305 = vld [vmem:[%s1 + $0x8d0] sm:$0xff]
  %v306 = vld [vmem:[%s1 + $0x8d8] sm:$0xff]
  %v307 = vld [vmem:[%s1 + $0x8e0] sm:$0xff]
  %v308 = vld [vmem:[%s1 + $0x8e8] sm:$0xff]
  %v309 = vld [vmem:[%s1 + $0x8f0] sm:$0xff]
  %v310 = vld [vmem:[%s1 + $0x8f8] sm:$0xff]
  %v311 = vld [vmem:[%s1 + $0x900] sm:$0xff]
  %v312 = vld [vmem:[%s1 + $0x908] sm:$0xff]
  %v313 = vld [vmem:[%s1 + $0x910] sm:$0xff]
  %v314 = vld [vmem:[%s1 + $0x918] sm:$0xff]
  %v315 = vld [vmem:[%s1 + $0x920] sm:$0xff]
  %v316 = vld [vmem:[%s1 + $0x928] sm:$0xff]
  %v317 = vld [vmem:[%s1 + $0x930] sm:$0xff]
  %v318 = vld [vmem:[%s1 + $0x938] sm:$0xff]
  %v319 = vld [vmem:[%s1 + $0x940] sm:$0xff]
  %v320 = vld [vmem:[%s1 + $0x948] sm:$0xff]
  %v321 = vld [vmem:[%s1 + $0x950] sm:$0xff]
  %v322 = vld [vmem:[%s1 + $0x958] sm:$0xff]
  %v323 = vld [vmem:[%s1 + $0x960] sm:$0xff]
  %v324 = vld [vmem:[%s1 + $0x968] sm:$0xff]
  %v325 = vld [vmem:[%s1 + $0x970] sm:$0xff]
  %v326 = vld [vmem:[%s1 + $0x978] sm:$0xff]
  %v327 = vld [vmem:[%s1 + $0x980] sm:$0xff]
  %v328 = vld [vmem:[%s1 + $0x988] sm:$0xff]
  %v329 = vld [vmem:[%s1 + $0x990] sm:$0xff]
  %v330 = vld [vmem:[%s1 + $0x998] sm:$0xff]
  %v331 = vld [vmem:[%s1 + $0x9a0] sm:$0xff]
  %v332 = vld [vmem:[%s1 + $0x9a8] sm:$0xff]
  %v333 = vld [vmem:[%s1 + $0x9b0] sm:$0xff]
  %v334 = vld [vmem:[%s1 + $0x9b8] sm:$0xff]
  %v335 = vld [vmem:[%s1 + $0x9c0] sm:$0xff]
  %v336 = vld [vmem:[%s1 + $0x9c8] sm:$0xff]
  %v337 = vld [vmem:[%s1 + $0x9d0] sm:$0xff]
  %v338 = vld [vmem:[%s1 + $0x9d8] sm:$0xff]
  %v339 = vld [vmem:[%s1 + $0x9e0] sm:$0xff]
  %v340 = vld [vmem:[%s1 + $0x9e8] sm:$0xff]
  %v341 = vld [vmem:[%s1 + $0x9f0] sm:$0xff]
  %v342 = vld [vmem:[%s1 + $0x9f8] sm:$0xff]
  %v343 = vld [vmem:[%s1 + $0xa00] sm:$0xff]
  %v344 = vld [vmem:[%s1 + $0xa08] sm:$0xff]
  %v345 = vld [vmem:[%s1 + $0xa10] sm:$0xff]
  %v346 = vld [vmem:[%s1 + $0xa18] sm:$0xff]
  %v347 = vld [vmem:[%s1 + $0xa20] sm:$0xff]
  %v348 = vld [vmem:[%s1 + $0xa28] sm:$0xff]
  %v349 = vld [vmem:[%s1 + $0xa30] sm:$0xff]
  %v350 = vld [vmem:[%s1 + $0xa38] sm:$0xff]
  %v351 = vld [vmem:[%s1 + $0xa40] sm:$0xff]
  %v352 = vld [vmem:[%s1 + $0xa48] sm:$0xff]
  %v353 = vld [vmem:[%s1 + $0xa50] sm:$0xff]
  %v354 = vld [vmem:[%s1 + $0xa58] sm:$0xff]
  %v355 = vld [vmem:[%s1 + $0xa60] sm:$0xff]
  %v356 = vld [vmem:[%s1 + $0xa68] sm:$0xff]
  %v357 = vld [vmem:[%s1 + $0xa70] sm:$0xff]
  %v358 = vld [vmem:[%s1 + $0xa78] sm:$0xff]
  %v359 = vld [vmem:[%s1 + $0xa80] sm:$0xff]
  %v360 = vld [vmem:[%s1 + $0xa88] sm:$0xff]
  %v361 = vld [vmem:[%s1 + $0xa90] sm:$0xff]
  %v362 = vld [vmem:[%s1 + $0xa98] sm:$0xff]
  %v363 = vld [vmem:[%s1 + $0xaa0] sm:$0xff]
  %v364 = vld [vmem:[%s1 + $0xaa8] sm:$0xff]
  %v365 = vld [vmem:[%s1 + $0xab0] sm:$0xff]
  %v366 = vld [vmem:[%s1 + $0xab8] sm:$0xff]
  %v367 = vld [vmem:[%s1 + $0xac0] sm:$0xff]
  %v368 = vld [vmem:[%s1 + $0xac8] sm:$0xff]
  %v369 = vld [vmem:[%s1 + $0xad0] sm:$0xff]
  %v370 = vld [vmem:[%s1 + $0xad8] sm:$0xff]
  %v371 = vld [vmem:[%s1 + $0xae0] sm:$0xff]
  %v372 = vld [vmem:[%s1 + $0xae8] sm:$0xff]
  %v373 = vld [vmem:[%s1 + $0xaf0] sm:$0xff]
  %v374 = vld [vmem:[%s1 + $0xaf8] sm:$0xff]
  %v375 = vld [vmem:[%s1 + $0xb00] sm:$0xff]
  %v376 = vld [vmem:[%s1 + $0xb08] sm:$0xff]
  %v377 = vld [vmem:[%s1 + $0xb10] sm:$0xff]
  %v378 = vld [vmem:[%s1 + $0xb18] sm:$0xff]
  %v379 = vld [vmem:[%s1 + $0xb20] sm:$0xff]
  %v380 = vld [vmem:[%s1 + $0xb28] sm:$0xff]
  %v381 = vld [vmem:[%s1 + $0xb30] sm:$0xff]
  %v382 = vld [vmem:[%s1 + $0xb38] sm:$0xff]
  %v383 = vld [vmem:[%s1 + $0xb40] sm:$0xff]
  %v384 = vld [vmem:[%s1 + $0xb48] sm:$0xff]
  %v385 = vld [vmem:[%s1 + $0xb50] sm:$0xff]
  %v386 = vld [vmem:[%s1 + $0xb58] sm:$0xff]
  %v387 = vld [vmem:[%s1 + $0xb60] sm:$0xff]
  %v388 = vld [vmem:[%s1 + $0xb68] sm:$0xff]
  %v389 = vld [vmem:[%s1 + $0xb70] sm:$0xff]
  %v390 = vld [vmem:[%s1 + $0xb78] sm:$0xff]
  %v391 = vld [vmem:[%s1 + $0xb80] sm:$0xff]
  %v392 = vld [vmem:[%s1 + $0xb88] sm:$0xff]
  %v393 = vld [vmem:[%s1 + $0xb90] sm:$0xff]
  %v394 = vld [vmem:[%s1 + $0xb98] sm:$0xff]
  %v395 = vld [vmem:[%s1 + $0xba0] sm:$0xff]
  %v396 = vld [vmem:[%s1 + $0xba8] sm:$0xff]
  %v397 = vld [vmem:[%s1 + $0xbb0] sm:$0xff]
  %v398 = vld [vmem:[%s1 + $0xbb8] sm:$0xff]
  %v399 = vld [vmem:[%s1 + $0xbc0] sm:$0xff]
  %v400 = vld [vmem:[%s1 + $0xbc8] sm:$0xff]
  %v401 = vld [vmem:[%s1 + $0xbd0] sm:$0xff]
  %v402 = vld [vmem:[%s1 + $0xbd8] sm:$0xff]
  %v403 = vld [vmem:[%s1 + $0xbe0] sm:$0xff]
  %v404 = vld [vmem:[%s1 + $0xbe8] sm:$0xff]
  %v405 = vld [vmem:[%s1 + $0xbf0] sm:$0xff]
  %v406 = vld [vmem:[%s1 + $0xbf8] sm:$0xff]
  %v407 = vld [vmem:[%s1 + $0xc00] sm:$0xff]
  %v408 = vld [vmem:[%s1 + $0xc08] sm:$0xff]
  %v409 = vld [vmem:[%s1 + $0xc10] sm:$0xff]
  %v410 = vld [vmem:[%s1 + $0xc18] sm:$0xff]
  %v411 = vld [vmem:[%s1 + $0xc20] sm:$0xff]
  %v412 = vld [vmem:[%s1 + $0xc28] sm:$0xff]
  %v413 = vld [vmem:[%s1 + $0xc30] sm:$0xff]
  %v414 = vld [vmem:[%s1 + $0xc38] sm:$0xff]
  %v415 = vld [vmem:[%s1 + $0xc40] sm:$0xff]
  %v416 = vld [vmem:[%s1 + $0xc48] sm:$0xff]
  %v417 = vld [vmem:[%s1 + $0xc50] sm:$0xff]
  %v418 = vld [vmem:[%s1 + $0xc58] sm:$0xff]
  %v419 = vld [vmem:[%s1 + $0xc60] sm:$0xff]
  %v420 = vld [vmem:[%s1 + $0xc68] sm:$0xff]
  %v421 = vld [vmem:[%s1 + $0xc70] sm:$0xff]
  %v422 = vld [vmem:[%s1 + $0xc78] sm:$0xff]
  %v423 = vld [vmem:[%s1 + $0xc80] sm:$0xff]
  %v424 = vld [vmem:[%s1 + $0xc88] sm:$0xff]
  %v425 = vld [vmem:[%s1 + $0xc90] sm:$0xff]
  %v426 = vld [vmem:[%s1 + $0xc98] sm:$0xff]
  %v427 = vld [vmem:[%s1 + $0xca0] sm:$0xff]
  %v428 = vld [vmem:[%s1 + $0xca8] sm:$0xff]
  %v429 = vld [vmem:[%s1 + $0xcb0] sm:$0xff]
  %v430 = vld [vmem:[%s1 + $0xcb8] sm:$0xff]
  %v431 = vld [vmem:[%s1 + $0xcc0] sm:$0xff]
  %v432 = vld [vmem:[%s1 + $0xcc8] sm:$0xff]
  %v433 = vld [vmem:[%s1 + $0xcd0] sm:$0xff]
  %v434 = vld [vmem:[%s1 + $0xcd8] sm:$0xff]
  %v435 = vld [vmem:[%s1 + $0xce0] sm:$0xff]
  %v436 = vld [vmem:[%s1 + $0xce8] sm:$0xff]
  %v437 = vld [vmem:[%s1 + $0xcf0] sm:$0xff]
  %v438 = vld [vmem:[%s1 + $0xcf8] sm:$0xff]
  %v439 = vld [vmem:[%s1 + $0xd00] sm:$0xff]
  %v440 = vld [vmem:[%s1 + $0xd08] sm:$0xff]
  %v441 = vld [vmem:[%s1 + $0xd10] sm:$0xff]
  %v442 = vld [vmem:[%s1 + $0xd18] sm:$0xff]
  %v443 = vld [vmem:[%s1 + $0xd20] sm:$0xff]
  %v444 = vld [vmem:[%s1 + $0xd28] sm:$0xff]
  %v445 = vld [vmem:[%s1 + $0xd30] sm:$0xff]
  %v446 = vld [vmem:[%s1 + $0xd38] sm:$0xff]
  %v447 = vld [vmem:[%s1 + $0xd40] sm:$0xff]
  %v448 = vld [vmem:[%s1 + $0xd48] sm:$0xff]
  %v449 = vld [vmem:[%s1 + $0xd50] sm:$0xff]
  %v450 = vld [vmem:[%s1 + $0xd58] sm:$0xff]
  %v451 = vld [vmem:[%s1 + $0xd60] sm:$0xff]
  %v452 = vld [vmem:[%s1 + $0xd68] sm:$0xff]
  %v453 = vld [vmem:[%s1 + $0xd70] sm:$0xff]
  %v454 = vld [vmem:[%s1 + $0xd78] sm:$0xff]
  %v455 = vld [vmem:[%s1 + $0xd80] sm:$0xff]
  %v456 = vld [vmem:[%s1 + $0xd88] sm:$0xff]
  %v457 = vld [vmem:[%s1 + $0xd90] sm:$0xff]
  %v458 = vld [vmem:[%s1 + $0xd98] sm:$0xff]
  %v459 = vld [vmem:[%s1 + $0xda0] sm:$0xff]
  %v460 = vld [vmem:[%s1 + $0xda8] sm:$0xff]
  %v461 = vld [vmem:[%s1 + $0xdb0] sm:$0xff]
  %v462 = vld [vmem:[%s1 + $0xdb8] sm:$0xff]
  %v463 = vld [vmem:[%s1 + $0xdc0] sm:$0xff]
  %v464 = vld [vmem:[%s1 + $0xdc8] sm:$0xff]
  %v465 = vld [vmem:[%s1 + $0xdd0] sm:$0xff]
  %v466 = vld [vmem:[%s1 + $0xdd8] sm:$0xff]
  %v467 = vld [vmem:[%s1 + $0xde0] sm:$0xff]
  %v468 = vld [vmem:[%s1 + $0xde8] sm:$0xff]
  %v469 = vld [vmem:[%s1 + $0xdf0] sm:$0xff]
  %v470 = vld [vmem:[%s1 + $0xdf8] sm:$0xff]
  %v471 = vld [vmem:[%s1 + $0xe00] sm:$0xff]
  %v472 = vld [vmem:[%s1 + $0xe08] sm:$0xff]
  %v473 = vld [vmem:[%s1 + $0xe10] sm:$0xff]
  %v474 = vld [vmem:[%s1 + $0xe18] sm:$0xff]
  %v475 = vld [vmem:[%s1 + $0xe20] sm:$0xff]
  %v476 = vld [vmem:[%s1 + $0xe28] sm:$0xff]
  %v477 = vld [vmem:[%s1 + $0xe30] sm:$0xff]
  %v478 = vld [vmem:[%s1 + $0xe38] sm:$0xff]
  %v479 = vld [vmem:[%s1 + $0xe40] sm:$0xff]
  %v480 = vld [vmem:[%s1 + $0xe48] sm:$0xff]
  %v481 = vld [vmem:[%s1 + $0xe50] sm:$0xff]
  %v482 = vld [vmem:[%s1 + $0xe58] sm:$0xff]
  %v483 = vld [vmem:[%s1 + $0xe60] sm:$0xff]
  %v484 = vld [vmem:[%s1 + $0xe68] sm:$0xff]
  %v485 = vld [vmem:[%s1 + $0xe70] sm:$0xff]
  %v486 = vld [vmem:[%s1 + $0xe78] sm:$0xff]
  %v487 = vld [vmem:[%s1 + $0xe80] sm:$0xff]
  %v488 = vld [vmem:[%s1 + $0xe88] sm:$0xff]
  %v489 = vld [vmem:[%s1 + $0xe90] sm:$0xff]
  %v490 = vld [vmem:[%s1 + $0xe98] sm:$0xff]
  %v491 = vld [vmem:[%s1 + $0xea0] sm:$0xff]
  %v492 = vld [vmem:[%s1 + $0xea8] sm:$0xff]
  %v493 = vld [vmem:[%s1 + $0xeb0] sm:$0xff]
  %v494 = vld [vmem:[%s1 + $0xeb8] sm:$0xff]
  %v495 = vld [vmem:[%s1 + $0xec0] sm:$0xff]
  %v496 = vld [vmem:[%s1 + $0xec8] sm:$0xff]
  %v497 = vld [vmem:[%s1 + $0xed0] sm:$0xff]
  %v498 = vld [vmem:[%s1 + $0xed8] sm:$0xff]
  %v499 = vld [vmem:[%s1 + $0xee0] sm:$0xff]
  %v500 = vld [vmem:[%s1 + $0xee8] sm:$0xff]
  %v501 = vld [vmem:[%s1 + $0xef0] sm:$0xff]
  %v502 = vld [vmem:[%s1 + $0xef8] sm:$0xff]
  %v503 = vld [vmem:[%s1 + $0xf00] sm:$0xff]
  %v504 = vld [vmem:[%s1 + $0xf08] sm:$0xff]
  %v505 = vld [vmem:[%s1 + $0xf10] sm:$0xff]
  %v506 = vld [vmem:[%s1 + $0xf18] sm:$0xff]
  %v507 = vld [vmem:[%s1 + $0xf20] sm:$0xff]
  %v508 = vld [vmem:[%s1 + $0xf28] sm:$0xff]
  %v509 = vld [vmem:[%s1 + $0xf30] sm:$0xff]
  %v510 = vld [vmem:[%s1 + $0xf38] sm:$0xff]
  %v511 = vld [vmem:[%s1 + $0xf40] sm:$0xff]
  %v512 = vld [vmem:[%s1 + $0xf48] sm:$0xff]
  %v513 = vld [vmem:[%s1 + $0xf50] sm:$0xff]
  %v514 = vld [vmem:[%s1 + $0xf58] sm:$0xff]
  %v515 = vld [vmem:[%s1 + $0xf60] sm:$0xff]
  %v516 = vld [vmem:[%s1 + $0xf68] sm:$0xff]
  %v517 = vld [vmem:[%s1 + $0xf70] sm:$0xff]
  %v518 = vld [vmem:[%s1 + $0xf78] sm:$0xff]
  %v519 = vld [vmem:[%s1 + $0xf80] sm:$0xff]
  %v520 = vld [vmem:[%s1 + $0xf88] sm:$0xff]
  %v521 = vld [vmem:[%s1 + $0xf90] sm:$0xff]
  %v522 = vld [vmem:[%s1 + $0xf98] sm:$0xff]
  %v523 = vld [vmem:[%s1 + $0xfa0] sm:$0xff]
  %v524 = vld [vmem:[%s1 + $0xfa8] sm:$0xff]
  %v525 = vld [vmem:[%s1 + $0xfb0] sm:$0xff]
  %v526 = vld [vmem:[%s1 + $0xfb8] sm:$0xff]
  %v527 = vld [vmem:[%s1 + $0xfc0] sm:$0xff]
  %v528 = vld [vmem:[%s1 + $0xfc8] sm:$0xff]
  %v529 = vld [vmem:[%s1 + $0xfd0] sm:$0xff]
  %v530 = vld [vmem:[%s1 + $0xfd8] sm:$0xff]
  %v531 = vld [vmem:[%s1 + $0xfe0] sm:$0xff]
  %v532 = vld [vmem:[%s1 + $0xfe8] sm:$0xff]
  %v533 = vld [vmem:[%s1 + $0xff0] sm:$0xff]
  %v534 = vld [vmem:[%s1 + $0xff8] sm:$0xff]
  %v535 = vld [vmem:[%s1 + $0x1000] sm:$0xff]
  %v536 = vld [vmem:[%s1 + $0x1008] sm:$0xff]
  %v537 = vld [vmem:[%s1 + $0x1010] sm:$0xff]
  %v538 = vld [vmem:[%s1 + $0x1018] sm:$0xff]
  %v539 = vld [vmem:[%s1 + $0x1020] sm:$0xff]
  %v540 = vld [vmem:[%s1 + $0x1028] sm:$0xff]
  %v541 = vld [vmem:[%s1 + $0x1030] sm:$0xff]
  %v542 = vld [vmem:[%s1 + $0x1038] sm:$0xff]
  %v543 = vld [vmem:[%s1 + $0x1040] sm:$0xff]
  %v544 = vld [vmem:[%s1 + $0x1048] sm:$0xff]
  %v545 = vld [vmem:[%s1 + $0x1050] sm:$0xff]
  %v546 = vld [vmem:[%s1 + $0x1058] sm:$0xff]
  %v547 = vld [vmem:[%s1 + $0x1060] sm:$0xff]
  %v548 = vld [vmem:[%s1 + $0x1068] sm:$0xff]
  %v549 = vld [vmem:[%s1 + $0x1070] sm:$0xff]
  %v550 = vld [vmem:[%s1 + $0x1078] sm:$0xff]
  %v551 = vld [vmem:[%s1 + $0x1080] sm:$0xff]
  %v552 = vld [vmem:[%s1 + $0x1088] sm:$0xff]
  %v553 = vld [vmem:[%s1 + $0x1090] sm:$0xff]
  %v554 = vld [vmem:[%s1 + $0x1098] sm:$0xff]
  %v555 = vld [vmem:[%s1 + $0x10a0] sm:$0xff]
  %v556 = vld [vmem:[%s1 + $0x10a8] sm:$0xff]
  %v557 = vld [vmem:[%s1 + $0x10b0] sm:$0xff]
  %v558 = vld [vmem:[%s1 + $0x10b8] sm:$0xff]
  %v559 = vld [vmem:[%s1 + $0x10c0] sm:$0xff]
  %v560 = vld [vmem:[%s1 + $0x10c8] sm:$0xff]
  %v561 = vld [vmem:[%s1 + $0x10d0] sm:$0xff]
  %v562 = vld [vmem:[%s1 + $0x10d8] sm:$0xff]
  %v563 = vld [vmem:[%s1 + $0x10e0] sm:$0xff]
  %v564 = vld [vmem:[%s1 + $0x10e8] sm:$0xff]
  %v565 = vld [vmem:[%s1 + $0x10f0] sm:$0xff]
  %v566 = vld [vmem:[%s1 + $0x10f8] sm:$0xff]
  %v567 = vld [vmem:[%s1 + $0x1100] sm:$0xff]
  %v568 = vld [vmem:[%s1 + $0x1108] sm:$0xff]
  %v569 = vld [vmem:[%s1 + $0x1110] sm:$0xff]
  %v570 = vld [vmem:[%s1 + $0x1118] sm:$0xff]
  %v571 = vld [vmem:[%s1 + $0x1120] sm:$0xff]
  %v572 = vld [vmem:[%s1 + $0x1128] sm:$0xff]
  %v573 = vld [vmem:[%s1 + $0x1130] sm:$0xff]
  %v574 = vld [vmem:[%s1 + $0x1138] sm:$0xff]
  %v575 = vld [vmem:[%s1 + $0x1140] sm:$0xff]
  %v576 = vld [vmem:[%s1 + $0x1148] sm:$0xff]
  %v577 = vld [vmem:[%s1 + $0x1150] sm:$0xff]
  %v578 = vld [vmem:[%s1 + $0x1158] sm:$0xff]
  %v579 = vld [vmem:[%s1 + $0x1160] sm:$0xff]
  %v580 = vld [vmem:[%s1 + $0x1168] sm:$0xff]
  %v581 = vld [vmem:[%s1 + $0x1170] sm:$0xff]
  %v582 = vld [vmem:[%s1 + $0x1178] sm:$0xff]
  %v583 = vld [vmem:[%s1 + $0x1180] sm:$0xff]
  %v584 = vld [vmem:[%s1 + $0x1188] sm:$0xff]
  %v585 = vld [vmem:[%s1 + $0x1190] sm:$0xff]
  %v586 = vld [vmem:[%s1 + $0x1198] sm:$0xff]
  %v587 = vld [vmem:[%s1 + $0x11a0] sm:$0xff]
  %v588 = vld [vmem:[%s1 + $0x11a8] sm:$0xff]
  %v589 = vld [vmem:[%s1 + $0x11b0] sm:$0xff]
  %v590 = vld [vmem:[%s1 + $0x11b8] sm:$0xff]
  %v591 = vld [vmem:[%s1 + $0x11c0] sm:$0xff]
  %v592 = vld [vmem:[%s1 + $0x11c8] sm:$0xff]
  %v593 = vld [vmem:[%s1 + $0x11d0] sm:$0xff]
  %v594 = vld [vmem:[%s1 + $0x11d8] sm:$0xff]
  %v595 = vld [vmem:[%s1 + $0x11e0] sm:$0xff]
  %v596 = vld [vmem:[%s1 + $0x11e8] sm:$0xff]
  %v597 = vld [vmem:[%s1 + $0x11f0] sm:$0xff]
  %v598 = vld [vmem:[%s1 + $0x11f8] sm:$0xff]
  %v599 = vld [vmem:[%s2] sm:$0xf]
  %v601 = vlaneseq
  %v602 = vshrl.u32 %v601, 7
  %v603 = vsub.s32 0, %v602
  %v604 = vrot.slane %v599, %v603
  %v605 = vlaneseq
  %v606 = vshrl.u32 %v605, 7
  %v607 = vsub.s32 1, %v606
  %v608 = vrot.slane %v599, %v607
  %v609 = vlaneseq
  %v610 = vshrl.u32 %v609, 7
  %v611 = vsub.s32 2, %v610
  %v612 = vrot.slane %v599, %v611
  %v613 = vlaneseq
  %v614 = vshrl.u32 %v613, 7
  %v615 = vsub.s32 3, %v614
  %v616 = vrot.slane %v599, %v615
  %v630 = vunpack.c.l.b16 %v14
  %v631 = vunpack.c.h.b16 %v14
  %v632 = vunpack.c.l.b16 %v15
  %v633 = vunpack.c.h.b16 %v15
  %v634 = vunpack.c.l.b16 %v16
  %v635 = vunpack.c.h.b16 %v16
  %v636 = vunpack.c.l.b16 %v17
  %v637 = vunpack.c.h.b16 %v17
  %v638 = vunpack.c.l.b16 %v18
  %v639 = vunpack.c.h.b16 %v18
  %v640 = vunpack.c.l.b16 %v19
  %v641 = vunpack.c.h.b16 %v19
  %v642 = vunpack.c.l.b16 %v20
  %v643 = vunpack.c.h.b16 %v20
  %v644 = vunpack.c.l.b16 %v21
  %v645 = vunpack.c.h.b16 %v21
  %v646 = vunpack.c.l.b16 %v22
  %v647 = vunpack.c.h.b16 %v22
  %v648 = vpack.c.b16 %v630, %v630
  %v649 = vpack.c.b16 %v631, %v631
  %v650 = vpack.c.b16 %v632, %v632
  %v651 = vpack.c.b16 %v633, %v633
  %v652 = vpack.c.b16 %v634, %v634
  %v653 = vpack.c.b16 %v635, %v635
  %v654 = vpack.c.b16 %v636, %v636
  %v655 = vpack.c.b16 %v637, %v637
  %v656 = vpack.c.b16 %v638, %v638
  %v657 = vpack.c.b16 %v639, %v639
  %v658 = vpack.c.b16 %v640, %v640
  %v659 = vpack.c.b16 %v641, %v641
  %v660 = vpack.c.b16 %v642, %v642
  %v661 = vpack.c.b16 %v643, %v643
  %v662 = vpack.c.b16 %v644, %v644
  %v663 = vpack.c.b16 %v645, %v645
  %v664 = vpack.c.b16 %v646, %v646
  %v665 = vpack.c.b16 %v647, %v647
  %v1260 = vunpack.c.l.b16 %v23
  %v1261 = vunpack.c.h.b16 %v23
  %v1262 = vunpack.c.l.b16 %v24
  %v1263 = vunpack.c.h.b16 %v24
  %v1264 = vunpack.c.l.b16 %v25
  %v1265 = vunpack.c.h.b16 %v25
  %v1266 = vunpack.c.l.b16 %v26
  %v1267 = vunpack.c.h.b16 %v26
  %v1268 = vunpack.c.l.b16 %v27
  %v1269 = vunpack.c.h.b16 %v27
  %v1270 = vunpack.c.l.b16 %v28
  %v1271 = vunpack.c.h.b16 %v28
  %v1272 = vunpack.c.l.b16 %v29
  %v1273 = vunpack.c.h.b16 %v29
  %v1274 = vunpack.c.l.b16 %v30
  %v1275 = vunpack.c.h.b16 %v30
  %v1276 = vunpack.c.l.b16 %v31
  %v1277 = vunpack.c.h.b16 %v31
  %v1278 = vunpack.c.l.b16 %v32
  %v1279 = vunpack.c.h.b16 %v32
  %v1280 = vunpack.c.l.b16 %v33
  %v1281 = vunpack.c.h.b16 %v33
  %v1282 = vunpack.c.l.b16 %v34
  %v1283 = vunpack.c.h.b16 %v34
  %v1284 = vunpack.c.l.b16 %v35
  %v1285 = vunpack.c.h.b16 %v35
  %v1286 = vunpack.c.l.b16 %v36
  %v1287 = vunpack.c.h.b16 %v36
  %v1288 = vunpack.c.l.b16 %v37
  %v1289 = vunpack.c.h.b16 %v37
  %v1290 = vunpack.c.l.b16 %v38
  %v1291 = vunpack.c.h.b16 %v38
  %v1292 = vunpack.c.l.b16 %v39
  %v1293 = vunpack.c.h.b16 %v39
  %v1294 = vunpack.c.l.b16 %v40
  %v1295 = vunpack.c.h.b16 %v40
  %v1296 = vunpack.c.l.b16 %v41
  %v1297 = vunpack.c.h.b16 %v41
  %v1298 = vunpack.c.l.b16 %v42
  %v1299 = vunpack.c.h.b16 %v42
  %v1300 = vunpack.c.l.b16 %v43
  %v1301 = vunpack.c.h.b16 %v43
  %v1302 = vunpack.c.l.b16 %v44
  %v1303 = vunpack.c.h.b16 %v44
  %v1304 = vunpack.c.l.b16 %v45
  %v1305 = vunpack.c.h.b16 %v45
  %v1306 = vunpack.c.l.b16 %v46
  %v1307 = vunpack.c.h.b16 %v46
  %v1308 = vunpack.c.l.b16 %v47
  %v1309 = vunpack.c.h.b16 %v47
  %v1310 = vunpack.c.l.b16 %v48
  %v1311 = vunpack.c.h.b16 %v48
  %v1312 = vunpack.c.l.b16 %v49
  %v1313 = vunpack.c.h.b16 %v49
  %v1314 = vunpack.c.l.b16 %v50
  %v1315 = vunpack.c.h.b16 %v50
  %v1316 = vunpack.c.l.b16 %v51
  %v1317 = vunpack.c.h.b16 %v51
  %v1318 = vunpack.c.l.b16 %v52
  %v1319 = vunpack.c.h.b16 %v52
  %v1320 = vunpack.c.l.b16 %v53
  %v1321 = vunpack.c.h.b16 %v53
  %v1322 = vunpack.c.l.b16 %v54
  %v1323 = vunpack.c.h.b16 %v54
  %v1324 = vunpack.c.l.b16 %v55
  %v1325 = vunpack.c.h.b16 %v55
  %v1326 = vunpack.c.l.b16 %v56
  %v1327 = vunpack.c.h.b16 %v56
  %v1328 = vunpack.c.l.b16 %v57
  %v1329 = vunpack.c.h.b16 %v57
  %v1330 = vunpack.c.l.b16 %v58
  %v1331 = vunpack.c.h.b16 %v58
  %v1332 = vunpack.c.l.b16 %v59
  %v1333 = vunpack.c.h.b16 %v59
  %v1334 = vunpack.c.l.b16 %v60
  %v1335 = vunpack.c.h.b16 %v60
  %v1336 = vunpack.c.l.b16 %v61
  %v1337 = vunpack.c.h.b16 %v61
  %v1338 = vunpack.c.l.b16 %v62
  %v1339 = vunpack.c.h.b16 %v62
  %v1340 = vunpack.c.l.b16 %v63
  %v1341 = vunpack.c.h.b16 %v63
  %v1342 = vunpack.c.l.b16 %v64
  %v1343 = vunpack.c.h.b16 %v64
  %v1344 = vunpack.c.l.b16 %v65
  %v1345 = vunpack.c.h.b16 %v65
  %v1346 = vunpack.c.l.b16 %v66
  %v1347 = vunpack.c.h.b16 %v66
  %v1348 = vunpack.c.l.b16 %v67
  %v1349 = vunpack.c.h.b16 %v67
  %v1350 = vunpack.c.l.b16 %v68
  %v1351 = vunpack.c.h.b16 %v68
  %v1352 = vunpack.c.l.b16 %v69
  %v1353 = vunpack.c.h.b16 %v69
  %v1354 = vunpack.c.l.b16 %v70
  %v1355 = vunpack.c.h.b16 %v70
  %v1356 = vunpack.c.l.b16 %v71
  %v1357 = vunpack.c.h.b16 %v71
  %v1358 = vunpack.c.l.b16 %v72
  %v1359 = vunpack.c.h.b16 %v72
  %v1360 = vunpack.c.l.b16 %v73
  %v1361 = vunpack.c.h.b16 %v73
  %v1362 = vunpack.c.l.b16 %v74
  %v1363 = vunpack.c.h.b16 %v74
  %v1364 = vunpack.c.l.b16 %v75
  %v1365 = vunpack.c.h.b16 %v75
  %v1366 = vunpack.c.l.b16 %v76
  %v1367 = vunpack.c.h.b16 %v76
  %v1368 = vunpack.c.l.b16 %v77
  %v1369 = vunpack.c.h.b16 %v77
  %v1370 = vunpack.c.l.b16 %v78
  %v1371 = vunpack.c.h.b16 %v78
  %v1372 = vunpack.c.l.b16 %v79
  %v1373 = vunpack.c.h.b16 %v79
  %v1374 = vunpack.c.l.b16 %v80
  %v1375 = vunpack.c.h.b16 %v80
  %v1376 = vunpack.c.l.b16 %v81
  %v1377 = vunpack.c.h.b16 %v81
  %v1378 = vunpack.c.l.b16 %v82
  %v1379 = vunpack.c.h.b16 %v82
  %v1380 = vunpack.c.l.b16 %v83
  %v1381 = vunpack.c.h.b16 %v83
  %v1382 = vunpack.c.l.b16 %v84
  %v1383 = vunpack.c.h.b16 %v84
  %v1384 = vunpack.c.l.b16 %v85
  %v1385 = vunpack.c.h.b16 %v85
  %v1386 = vunpack.c.l.b16 %v86
  %v1387 = vunpack.c.h.b16 %v86
  %v1388 = vunpack.c.l.b16 %v87
  %v1389 = vunpack.c.h.b16 %v87
  %v1390 = vunpack.c.l.b16 %v88
  %v1391 = vunpack.c.h.b16 %v88
  %v1392 = vunpack.c.l.b16 %v89
  %v1393 = vunpack.c.h.b16 %v89
  %v1394 = vunpack.c.l.b16 %v90
  %v1395 = vunpack.c.h.b16 %v90
  %v1396 = vunpack.c.l.b16 %v91
  %v1397 = vunpack.c.h.b16 %v91
  %v1398 = vunpack.c.l.b16 %v92
  %v1399 = vunpack.c.h.b16 %v92
  %v1400 = vunpack.c.l.b16 %v93
  %v1401 = vunpack.c.h.b16 %v93
  %v1402 = vunpack.c.l.b16 %v94
  %v1403 = vunpack.c.h.b16 %v94
  %v1404 = vunpack.c.l.b16 %v95
  %v1405 = vunpack.c.h.b16 %v95
  %v1406 = vunpack.c.l.b16 %v96
  %v1407 = vunpack.c.h.b16 %v96
  %v1408 = vunpack.c.l.b16 %v97
  %v1409 = vunpack.c.h.b16 %v97
  %v1410 = vunpack.c.l.b16 %v98
  %v1411 = vunpack.c.h.b16 %v98
  %v1412 = vunpack.c.l.b16 %v99
  %v1413 = vunpack.c.h.b16 %v99
  %v1414 = vunpack.c.l.b16 %v100
  %v1415 = vunpack.c.h.b16 %v100
  %v1416 = vunpack.c.l.b16 %v101
  %v1417 = vunpack.c.h.b16 %v101
  %v1418 = vunpack.c.l.b16 %v102
  %v1419 = vunpack.c.h.b16 %v102
  %v1420 = vunpack.c.l.b16 %v103
  %v1421 = vunpack.c.h.b16 %v103
  %v1422 = vunpack.c.l.b16 %v104
  %v1423 = vunpack.c.h.b16 %v104
  %v1424 = vunpack.c.l.b16 %v105
  %v1425 = vunpack.c.h.b16 %v105
  %v1426 = vunpack.c.l.b16 %v106
  %v1427 = vunpack.c.h.b16 %v106
  %v1428 = vunpack.c.l.b16 %v107
  %v1429 = vunpack.c.h.b16 %v107
  %v1430 = vunpack.c.l.b16 %v108
  %v1431 = vunpack.c.h.b16 %v108
  %v1432 = vunpack.c.l.b16 %v109
  %v1433 = vunpack.c.h.b16 %v109
  %v1434 = vunpack.c.l.b16 %v110
  %v1435 = vunpack.c.h.b16 %v110
  %v1436 = vunpack.c.l.b16 %v111
  %v1437 = vunpack.c.h.b16 %v111
  %v1438 = vunpack.c.l.b16 %v112
  %v1439 = vunpack.c.h.b16 %v112
  %v1440 = vunpack.c.l.b16 %v113
  %v1441 = vunpack.c.h.b16 %v113
  %v1442 = vunpack.c.l.b16 %v114
  %v1443 = vunpack.c.h.b16 %v114
  %v1444 = vunpack.c.l.b16 %v115
  %v1445 = vunpack.c.h.b16 %v115
  %v1446 = vunpack.c.l.b16 %v116
  %v1447 = vunpack.c.h.b16 %v116
  %v1448 = vunpack.c.l.b16 %v117
  %v1449 = vunpack.c.h.b16 %v117
  %v1450 = vunpack.c.l.b16 %v118
  %v1451 = vunpack.c.h.b16 %v118
  %v1452 = vunpack.c.l.b16 %v119
  %v1453 = vunpack.c.h.b16 %v119
  %v1454 = vunpack.c.l.b16 %v120
  %v1455 = vunpack.c.h.b16 %v120
  %v1456 = vunpack.c.l.b16 %v121
  %v1457 = vunpack.c.h.b16 %v121
  %v1458 = vunpack.c.l.b16 %v122
  %v1459 = vunpack.c.h.b16 %v122
  %v1460 = vunpack.c.l.b16 %v123
  %v1461 = vunpack.c.h.b16 %v123
  %v1462 = vunpack.c.l.b16 %v124
  %v1463 = vunpack.c.h.b16 %v124
  %v1464 = vunpack.c.l.b16 %v125
  %v1465 = vunpack.c.h.b16 %v125
  %v1466 = vunpack.c.l.b16 %v126
  %v1467 = vunpack.c.h.b16 %v126
  %v1468 = vunpack.c.l.b16 %v127
  %v1469 = vunpack.c.h.b16 %v127
  %v1470 = vunpack.c.l.b16 %v128
  %v1471 = vunpack.c.h.b16 %v128
  %v1472 = vunpack.c.l.b16 %v129
  %v1473 = vunpack.c.h.b16 %v129
  %v1474 = vunpack.c.l.b16 %v130
  %v1475 = vunpack.c.h.b16 %v130
  %v1476 = vunpack.c.l.b16 %v131
  %v1477 = vunpack.c.h.b16 %v131
  %v1478 = vunpack.c.l.b16 %v132
  %v1479 = vunpack.c.h.b16 %v132
  %v1480 = vunpack.c.l.b16 %v133
  %v1481 = vunpack.c.h.b16 %v133
  %v1482 = vunpack.c.l.b16 %v134
  %v1483 = vunpack.c.h.b16 %v134
  %v1484 = vunpack.c.l.b16 %v135
  %v1485 = vunpack.c.h.b16 %v135
  %v1486 = vunpack.c.l.b16 %v136
  %v1487 = vunpack.c.h.b16 %v136
  %v1488 = vunpack.c.l.b16 %v137
  %v1489 = vunpack.c.h.b16 %v137
  %v1490 = vunpack.c.l.b16 %v138
  %v1491 = vunpack.c.h.b16 %v138
  %v1492 = vunpack.c.l.b16 %v139
  %v1493 = vunpack.c.h.b16 %v139
  %v1494 = vunpack.c.l.b16 %v140
  %v1495 = vunpack.c.h.b16 %v140
  %v1496 = vunpack.c.l.b16 %v141
  %v1497 = vunpack.c.h.b16 %v141
  %v1498 = vunpack.c.l.b16 %v142
  %v1499 = vunpack.c.h.b16 %v142
  %v1500 = vunpack.c.l.b16 %v143
  %v1501 = vunpack.c.h.b16 %v143
  %v1502 = vunpack.c.l.b16 %v144
  %v1503 = vunpack.c.h.b16 %v144
  %v1504 = vunpack.c.l.b16 %v145
  %v1505 = vunpack.c.h.b16 %v145
  %v1506 = vunpack.c.l.b16 %v146
  %v1507 = vunpack.c.h.b16 %v146
  %v1508 = vunpack.c.l.b16 %v147
  %v1509 = vunpack.c.h.b16 %v147
  %v1510 = vunpack.c.l.b16 %v148
  %v1511 = vunpack.c.h.b16 %v148
  %v1512 = vunpack.c.l.b16 %v149
  %v1513 = vunpack.c.h.b16 %v149
  %v1514 = vunpack.c.l.b16 %v150
  %v1515 = vunpack.c.h.b16 %v150
  %v1516 = vunpack.c.l.b16 %v151
  %v1517 = vunpack.c.h.b16 %v151
  %v1518 = vunpack.c.l.b16 %v152
  %v1519 = vunpack.c.h.b16 %v152
  %v1520 = vunpack.c.l.b16 %v153
  %v1521 = vunpack.c.h.b16 %v153
  %v1522 = vunpack.c.l.b16 %v154
  %v1523 = vunpack.c.h.b16 %v154
  %v1524 = vunpack.c.l.b16 %v155
  %v1525 = vunpack.c.h.b16 %v155
  %v1526 = vunpack.c.l.b16 %v156
  %v1527 = vunpack.c.h.b16 %v156
  %v1528 = vunpack.c.l.b16 %v157
  %v1529 = vunpack.c.h.b16 %v157
  %v1530 = vunpack.c.l.b16 %v158
  %v1531 = vunpack.c.h.b16 %v158
  %v1532 = vunpack.c.l.b16 %v159
  %v1533 = vunpack.c.h.b16 %v159
  %v1534 = vunpack.c.l.b16 %v160
  %v1535 = vunpack.c.h.b16 %v160
  %v1536 = vunpack.c.l.b16 %v161
  %v1537 = vunpack.c.h.b16 %v161
  %v1538 = vunpack.c.l.b16 %v162
  %v1539 = vunpack.c.h.b16 %v162
  %v1540 = vunpack.c.l.b16 %v163
  %v1541 = vunpack.c.h.b16 %v163
  %v1542 = vunpack.c.l.b16 %v164
  %v1543 = vunpack.c.h.b16 %v164
  %v1544 = vunpack.c.l.b16 %v165
  %v1545 = vunpack.c.h.b16 %v165
  %v1546 = vunpack.c.l.b16 %v166
  %v1547 = vunpack.c.h.b16 %v166
  %v1548 = vunpack.c.l.b16 %v167
  %v1549 = vunpack.c.h.b16 %v167
  %v1550 = vunpack.c.l.b16 %v168
  %v1551 = vunpack.c.h.b16 %v168
  %v1552 = vunpack.c.l.b16 %v169
  %v1553 = vunpack.c.h.b16 %v169
  %v1554 = vunpack.c.l.b16 %v170
  %v1555 = vunpack.c.h.b16 %v170
  %v1556 = vunpack.c.l.b16 %v171
  %v1557 = vunpack.c.h.b16 %v171
  %v1558 = vunpack.c.l.b16 %v172
  %v1559 = vunpack.c.h.b16 %v172
  %v1560 = vunpack.c.l.b16 %v173
  %v1561 = vunpack.c.h.b16 %v173
  %v1562 = vunpack.c.l.b16 %v174
  %v1563 = vunpack.c.h.b16 %v174
  %v1564 = vunpack.c.l.b16 %v175
  %v1565 = vunpack.c.h.b16 %v175
  %v1566 = vunpack.c.l.b16 %v176
  %v1567 = vunpack.c.h.b16 %v176
  %v1568 = vunpack.c.l.b16 %v177
  %v1569 = vunpack.c.h.b16 %v177
  %v1570 = vunpack.c.l.b16 %v178
  %v1571 = vunpack.c.h.b16 %v178
  %v1572 = vunpack.c.l.b16 %v179
  %v1573 = vunpack.c.h.b16 %v179
  %v1574 = vunpack.c.l.b16 %v180
  %v1575 = vunpack.c.h.b16 %v180
  %v1576 = vunpack.c.l.b16 %v181
  %v1577 = vunpack.c.h.b16 %v181
  %v1578 = vunpack.c.l.b16 %v182
  %v1579 = vunpack.c.h.b16 %v182
  %v1580 = vunpack.c.l.b16 %v183
  %v1581 = vunpack.c.h.b16 %v183
  %v1582 = vunpack.c.l.b16 %v184
  %v1583 = vunpack.c.h.b16 %v184
  %v1584 = vunpack.c.l.b16 %v185
  %v1585 = vunpack.c.h.b16 %v185
  %v1586 = vunpack.c.l.b16 %v186
  %v1587 = vunpack.c.h.b16 %v186
  %v1588 = vunpack.c.l.b16 %v187
  %v1589 = vunpack.c.h.b16 %v187
  %v1590 = vunpack.c.l.b16 %v188
  %v1591 = vunpack.c.h.b16 %v188
  %v1592 = vunpack.c.l.b16 %v189
  %v1593 = vunpack.c.h.b16 %v189
  %v1594 = vunpack.c.l.b16 %v190
  %v1595 = vunpack.c.h.b16 %v190
  %v1596 = vunpack.c.l.b16 %v191
  %v1597 = vunpack.c.h.b16 %v191
  %v1598 = vunpack.c.l.b16 %v192
  %v1599 = vunpack.c.h.b16 %v192
  %v1600 = vunpack.c.l.b16 %v193
  %v1601 = vunpack.c.h.b16 %v193
  %v1602 = vunpack.c.l.b16 %v194
  %v1603 = vunpack.c.h.b16 %v194
  %v1604 = vunpack.c.l.b16 %v195
  %v1605 = vunpack.c.h.b16 %v195
  %v1606 = vunpack.c.l.b16 %v196
  %v1607 = vunpack.c.h.b16 %v196
  %v1608 = vunpack.c.l.b16 %v197
  %v1609 = vunpack.c.h.b16 %v197
  %v1610 = vunpack.c.l.b16 %v198
  %v1611 = vunpack.c.h.b16 %v198
  %v1612 = vunpack.c.l.b16 %v199
  %v1613 = vunpack.c.h.b16 %v199
  %v1614 = vunpack.c.l.b16 %v200
  %v1615 = vunpack.c.h.b16 %v200
  %v1616 = vunpack.c.l.b16 %v201
  %v1617 = vunpack.c.h.b16 %v201
  %v1618 = vunpack.c.l.b16 %v202
  %v1619 = vunpack.c.h.b16 %v202
  %v1620 = vunpack.c.l.b16 %v203
  %v1621 = vunpack.c.h.b16 %v203
  %v1622 = vunpack.c.l.b16 %v204
  %v1623 = vunpack.c.h.b16 %v204
  %v1624 = vunpack.c.l.b16 %v205
  %v1625 = vunpack.c.h.b16 %v205
  %v1626 = vunpack.c.l.b16 %v206
  %v1627 = vunpack.c.h.b16 %v206
  %v1628 = vunpack.c.l.b16 %v207
  %v1629 = vunpack.c.h.b16 %v207
  %v1630 = vunpack.c.l.b16 %v208
  %v1631 = vunpack.c.h.b16 %v208
  %v1632 = vunpack.c.l.b16 %v209
  %v1633 = vunpack.c.h.b16 %v209
  %v1634 = vunpack.c.l.b16 %v210
  %v1635 = vunpack.c.h.b16 %v210
  %v1636 = vunpack.c.l.b16 %v211
  %v1637 = vunpack.c.h.b16 %v211
  %v1638 = vunpack.c.l.b16 %v212
  %v1639 = vunpack.c.h.b16 %v212
  %v1640 = vunpack.c.l.b16 %v213
  %v1641 = vunpack.c.h.b16 %v213
  %v1642 = vunpack.c.l.b16 %v214
  %v1643 = vunpack.c.h.b16 %v214
  %v1644 = vunpack.c.l.b16 %v215
  %v1645 = vunpack.c.h.b16 %v215
  %v1646 = vunpack.c.l.b16 %v216
  %v1647 = vunpack.c.h.b16 %v216
  %v1648 = vunpack.c.l.b16 %v217
  %v1649 = vunpack.c.h.b16 %v217
  %v1650 = vunpack.c.l.b16 %v218
  %v1651 = vunpack.c.h.b16 %v218
  %v1652 = vunpack.c.l.b16 %v219
  %v1653 = vunpack.c.h.b16 %v219
  %v1654 = vunpack.c.l.b16 %v220
  %v1655 = vunpack.c.h.b16 %v220
  %v1656 = vunpack.c.l.b16 %v221
  %v1657 = vunpack.c.h.b16 %v221
  %v1658 = vunpack.c.l.b16 %v222
  %v1659 = vunpack.c.h.b16 %v222
  %v1660 = vunpack.c.l.b16 %v223
  %v1661 = vunpack.c.h.b16 %v223
  %v1662 = vunpack.c.l.b16 %v224
  %v1663 = vunpack.c.h.b16 %v224
  %v1664 = vunpack.c.l.b16 %v225
  %v1665 = vunpack.c.h.b16 %v225
  %v1666 = vunpack.c.l.b16 %v226
  %v1667 = vunpack.c.h.b16 %v226
  %v1668 = vunpack.c.l.b16 %v227
  %v1669 = vunpack.c.h.b16 %v227
  %v1670 = vunpack.c.l.b16 %v228
  %v1671 = vunpack.c.h.b16 %v228
  %v1672 = vunpack.c.l.b16 %v229
  %v1673 = vunpack.c.h.b16 %v229
  %v1674 = vunpack.c.l.b16 %v230
  %v1675 = vunpack.c.h.b16 %v230
  %v1676 = vunpack.c.l.b16 %v231
  %v1677 = vunpack.c.h.b16 %v231
  %v1678 = vunpack.c.l.b16 %v232
  %v1679 = vunpack.c.h.b16 %v232
  %v1680 = vunpack.c.l.b16 %v233
  %v1681 = vunpack.c.h.b16 %v233
  %v1682 = vunpack.c.l.b16 %v234
  %v1683 = vunpack.c.h.b16 %v234
  %v1684 = vunpack.c.l.b16 %v235
  %v1685 = vunpack.c.h.b16 %v235
  %v1686 = vunpack.c.l.b16 %v236
  %v1687 = vunpack.c.h.b16 %v236
  %v1688 = vunpack.c.l.b16 %v237
  %v1689 = vunpack.c.h.b16 %v237
  %v1690 = vunpack.c.l.b16 %v238
  %v1691 = vunpack.c.h.b16 %v238
  %v1692 = vunpack.c.l.b16 %v239
  %v1693 = vunpack.c.h.b16 %v239
  %v1694 = vunpack.c.l.b16 %v240
  %v1695 = vunpack.c.h.b16 %v240
  %v1696 = vunpack.c.l.b16 %v241
  %v1697 = vunpack.c.h.b16 %v241
  %v1698 = vunpack.c.l.b16 %v242
  %v1699 = vunpack.c.h.b16 %v242
  %v1700 = vunpack.c.l.b16 %v243
  %v1701 = vunpack.c.h.b16 %v243
  %v1702 = vunpack.c.l.b16 %v244
  %v1703 = vunpack.c.h.b16 %v244
  %v1704 = vunpack.c.l.b16 %v245
  %v1705 = vunpack.c.h.b16 %v245
  %v1706 = vunpack.c.l.b16 %v246
  %v1707 = vunpack.c.h.b16 %v246
  %v1708 = vunpack.c.l.b16 %v247
  %v1709 = vunpack.c.h.b16 %v247
  %v1710 = vunpack.c.l.b16 %v248
  %v1711 = vunpack.c.h.b16 %v248
  %v1712 = vunpack.c.l.b16 %v249
  %v1713 = vunpack.c.h.b16 %v249
  %v1714 = vunpack.c.l.b16 %v250
  %v1715 = vunpack.c.h.b16 %v250
  %v1716 = vunpack.c.l.b16 %v251
  %v1717 = vunpack.c.h.b16 %v251
  %v1718 = vunpack.c.l.b16 %v252
  %v1719 = vunpack.c.h.b16 %v252
  %v1720 = vunpack.c.l.b16 %v253
  %v1721 = vunpack.c.h.b16 %v253
  %v1722 = vunpack.c.l.b16 %v254
  %v1723 = vunpack.c.h.b16 %v254
  %v1724 = vunpack.c.l.b16 %v255
  %v1725 = vunpack.c.h.b16 %v255
  %v1726 = vunpack.c.l.b16 %v256
  %v1727 = vunpack.c.h.b16 %v256
  %v1728 = vunpack.c.l.b16 %v257
  %v1729 = vunpack.c.h.b16 %v257
  %v1730 = vunpack.c.l.b16 %v258
  %v1731 = vunpack.c.h.b16 %v258
  %v1732 = vunpack.c.l.b16 %v259
  %v1733 = vunpack.c.h.b16 %v259
  %v1734 = vunpack.c.l.b16 %v260
  %v1735 = vunpack.c.h.b16 %v260
  %v1736 = vunpack.c.l.b16 %v261
  %v1737 = vunpack.c.h.b16 %v261
  %v1738 = vunpack.c.l.b16 %v262
  %v1739 = vunpack.c.h.b16 %v262
  %v1740 = vunpack.c.l.b16 %v263
  %v1741 = vunpack.c.h.b16 %v263
  %v1742 = vunpack.c.l.b16 %v264
  %v1743 = vunpack.c.h.b16 %v264
  %v1744 = vunpack.c.l.b16 %v265
  %v1745 = vunpack.c.h.b16 %v265
  %v1746 = vunpack.c.l.b16 %v266
  %v1747 = vunpack.c.h.b16 %v266
  %v1748 = vunpack.c.l.b16 %v267
  %v1749 = vunpack.c.h.b16 %v267
  %v1750 = vunpack.c.l.b16 %v268
  %v1751 = vunpack.c.h.b16 %v268
  %v1752 = vunpack.c.l.b16 %v269
  %v1753 = vunpack.c.h.b16 %v269
  %v1754 = vunpack.c.l.b16 %v270
  %v1755 = vunpack.c.h.b16 %v270
  %v1756 = vunpack.c.l.b16 %v271
  %v1757 = vunpack.c.h.b16 %v271
  %v1758 = vunpack.c.l.b16 %v272
  %v1759 = vunpack.c.h.b16 %v272
  %v1760 = vunpack.c.l.b16 %v273
  %v1761 = vunpack.c.h.b16 %v273
  %v1762 = vunpack.c.l.b16 %v274
  %v1763 = vunpack.c.h.b16 %v274
  %v1764 = vunpack.c.l.b16 %v275
  %v1765 = vunpack.c.h.b16 %v275
  %v1766 = vunpack.c.l.b16 %v276
  %v1767 = vunpack.c.h.b16 %v276
  %v1768 = vunpack.c.l.b16 %v277
  %v1769 = vunpack.c.h.b16 %v277
  %v1770 = vunpack.c.l.b16 %v278
  %v1771 = vunpack.c.h.b16 %v278
  %v1772 = vunpack.c.l.b16 %v279
  %v1773 = vunpack.c.h.b16 %v279
  %v1774 = vunpack.c.l.b16 %v280
  %v1775 = vunpack.c.h.b16 %v280
  %v1776 = vunpack.c.l.b16 %v281
  %v1777 = vunpack.c.h.b16 %v281
  %v1778 = vunpack.c.l.b16 %v282
  %v1779 = vunpack.c.h.b16 %v282
  %v1780 = vunpack.c.l.b16 %v283
  %v1781 = vunpack.c.h.b16 %v283
  %v1782 = vunpack.c.l.b16 %v284
  %v1783 = vunpack.c.h.b16 %v284
  %v1784 = vunpack.c.l.b16 %v285
  %v1785 = vunpack.c.h.b16 %v285
  %v1786 = vunpack.c.l.b16 %v286
  %v1787 = vunpack.c.h.b16 %v286
  %v1788 = vunpack.c.l.b16 %v287
  %v1789 = vunpack.c.h.b16 %v287
  %v1790 = vunpack.c.l.b16 %v288
  %v1791 = vunpack.c.h.b16 %v288
  %v1792 = vunpack.c.l.b16 %v289
  %v1793 = vunpack.c.h.b16 %v289
  %v1794 = vunpack.c.l.b16 %v290
  %v1795 = vunpack.c.h.b16 %v290
  %v1796 = vunpack.c.l.b16 %v291
  %v1797 = vunpack.c.h.b16 %v291
  %v1798 = vunpack.c.l.b16 %v292
  %v1799 = vunpack.c.h.b16 %v292
  %v1800 = vunpack.c.l.b16 %v293
  %v1801 = vunpack.c.h.b16 %v293
  %v1802 = vunpack.c.l.b16 %v294
  %v1803 = vunpack.c.h.b16 %v294
  %v1804 = vunpack.c.l.b16 %v295
  %v1805 = vunpack.c.h.b16 %v295
  %v1806 = vunpack.c.l.b16 %v296
  %v1807 = vunpack.c.h.b16 %v296
  %v1808 = vunpack.c.l.b16 %v297
  %v1809 = vunpack.c.h.b16 %v297
  %v1810 = vunpack.c.l.b16 %v298
  %v1811 = vunpack.c.h.b16 %v298
  %v1812 = vunpack.c.l.b16 %v299
  %v1813 = vunpack.c.h.b16 %v299
  %v1814 = vunpack.c.l.b16 %v300
  %v1815 = vunpack.c.h.b16 %v300
  %v1816 = vunpack.c.l.b16 %v301
  %v1817 = vunpack.c.h.b16 %v301
  %v1818 = vunpack.c.l.b16 %v302
  %v1819 = vunpack.c.h.b16 %v302
  %v1820 = vunpack.c.l.b16 %v303
  %v1821 = vunpack.c.h.b16 %v303
  %v1822 = vunpack.c.l.b16 %v304
  %v1823 = vunpack.c.h.b16 %v304
  %v1824 = vunpack.c.l.b16 %v305
  %v1825 = vunpack.c.h.b16 %v305
  %v1826 = vunpack.c.l.b16 %v306
  %v1827 = vunpack.c.h.b16 %v306
  %v1828 = vunpack.c.l.b16 %v307
  %v1829 = vunpack.c.h.b16 %v307
  %v1830 = vunpack.c.l.b16 %v308
  %v1831 = vunpack.c.h.b16 %v308
  %v1832 = vunpack.c.l.b16 %v309
  %v1833 = vunpack.c.h.b16 %v309
  %v1834 = vunpack.c.l.b16 %v310
  %v1835 = vunpack.c.h.b16 %v310
  %v1836 = vunpack.c.l.b16 %v311
  %v1837 = vunpack.c.h.b16 %v311
  %v1838 = vunpack.c.l.b16 %v312
  %v1839 = vunpack.c.h.b16 %v312
  %v1840 = vunpack.c.l.b16 %v313
  %v1841 = vunpack.c.h.b16 %v313
  %v1842 = vunpack.c.l.b16 %v314
  %v1843 = vunpack.c.h.b16 %v314
  %v1844 = vunpack.c.l.b16 %v315
  %v1845 = vunpack.c.h.b16 %v315
  %v1846 = vunpack.c.l.b16 %v316
  %v1847 = vunpack.c.h.b16 %v316
  %v1848 = vunpack.c.l.b16 %v317
  %v1849 = vunpack.c.h.b16 %v317
  %v1850 = vunpack.c.l.b16 %v318
  %v1851 = vunpack.c.h.b16 %v318
  %v1852 = vunpack.c.l.b16 %v319
  %v1853 = vunpack.c.h.b16 %v319
  %v1854 = vunpack.c.l.b16 %v320
  %v1855 = vunpack.c.h.b16 %v320
  %v1856 = vunpack.c.l.b16 %v321
  %v1857 = vunpack.c.h.b16 %v321
  %v1858 = vunpack.c.l.b16 %v322
  %v1859 = vunpack.c.h.b16 %v322
  %v1860 = vunpack.c.l.b16 %v323
  %v1861 = vunpack.c.h.b16 %v323
  %v1862 = vunpack.c.l.b16 %v324
  %v1863 = vunpack.c.h.b16 %v324
  %v1864 = vunpack.c.l.b16 %v325
  %v1865 = vunpack.c.h.b16 %v325
  %v1866 = vunpack.c.l.b16 %v326
  %v1867 = vunpack.c.h.b16 %v326
  %v1868 = vunpack.c.l.b16 %v327
  %v1869 = vunpack.c.h.b16 %v327
  %v1870 = vunpack.c.l.b16 %v328
  %v1871 = vunpack.c.h.b16 %v328
  %v1872 = vunpack.c.l.b16 %v329
  %v1873 = vunpack.c.h.b16 %v329
  %v1874 = vunpack.c.l.b16 %v330
  %v1875 = vunpack.c.h.b16 %v330
  %v1876 = vunpack.c.l.b16 %v331
  %v1877 = vunpack.c.h.b16 %v331
  %v1878 = vunpack.c.l.b16 %v332
  %v1879 = vunpack.c.h.b16 %v332
  %v1880 = vunpack.c.l.b16 %v333
  %v1881 = vunpack.c.h.b16 %v333
  %v1882 = vunpack.c.l.b16 %v334
  %v1883 = vunpack.c.h.b16 %v334
  %v1884 = vunpack.c.l.b16 %v335
  %v1885 = vunpack.c.h.b16 %v335
  %v1886 = vunpack.c.l.b16 %v336
  %v1887 = vunpack.c.h.b16 %v336
  %v1888 = vunpack.c.l.b16 %v337
  %v1889 = vunpack.c.h.b16 %v337
  %v1890 = vunpack.c.l.b16 %v338
  %v1891 = vunpack.c.h.b16 %v338
  %v1892 = vunpack.c.l.b16 %v339
  %v1893 = vunpack.c.h.b16 %v339
  %v1894 = vunpack.c.l.b16 %v340
  %v1895 = vunpack.c.h.b16 %v340
  %v1896 = vunpack.c.l.b16 %v341
  %v1897 = vunpack.c.h.b16 %v341
  %v1898 = vunpack.c.l.b16 %v342
  %v1899 = vunpack.c.h.b16 %v342
  %v1900 = vunpack.c.l.b16 %v343
  %v1901 = vunpack.c.h.b16 %v343
  %v1902 = vunpack.c.l.b16 %v344
  %v1903 = vunpack.c.h.b16 %v344
  %v1904 = vunpack.c.l.b16 %v345
  %v1905 = vunpack.c.h.b16 %v345
  %v1906 = vunpack.c.l.b16 %v346
  %v1907 = vunpack.c.h.b16 %v346
  %v1908 = vunpack.c.l.b16 %v347
  %v1909 = vunpack.c.h.b16 %v347
  %v1910 = vunpack.c.l.b16 %v348
  %v1911 = vunpack.c.h.b16 %v348
  %v1912 = vunpack.c.l.b16 %v349
  %v1913 = vunpack.c.h.b16 %v349
  %v1914 = vunpack.c.l.b16 %v350
  %v1915 = vunpack.c.h.b16 %v350
  %v1916 = vunpack.c.l.b16 %v351
  %v1917 = vunpack.c.h.b16 %v351
  %v1918 = vunpack.c.l.b16 %v352
  %v1919 = vunpack.c.h.b16 %v352
  %v1920 = vunpack.c.l.b16 %v353
  %v1921 = vunpack.c.h.b16 %v353
  %v1922 = vunpack.c.l.b16 %v354
  %v1923 = vunpack.c.h.b16 %v354
  %v1924 = vunpack.c.l.b16 %v355
  %v1925 = vunpack.c.h.b16 %v355
  %v1926 = vunpack.c.l.b16 %v356
  %v1927 = vunpack.c.h.b16 %v356
  %v1928 = vunpack.c.l.b16 %v357
  %v1929 = vunpack.c.h.b16 %v357
  %v1930 = vunpack.c.l.b16 %v358
  %v1931 = vunpack.c.h.b16 %v358
  %v1932 = vunpack.c.l.b16 %v359
  %v1933 = vunpack.c.h.b16 %v359
  %v1934 = vunpack.c.l.b16 %v360
  %v1935 = vunpack.c.h.b16 %v360
  %v1936 = vunpack.c.l.b16 %v361
  %v1937 = vunpack.c.h.b16 %v361
  %v1938 = vunpack.c.l.b16 %v362
  %v1939 = vunpack.c.h.b16 %v362
  %v1940 = vunpack.c.l.b16 %v363
  %v1941 = vunpack.c.h.b16 %v363
  %v1942 = vunpack.c.l.b16 %v364
  %v1943 = vunpack.c.h.b16 %v364
  %v1944 = vunpack.c.l.b16 %v365
  %v1945 = vunpack.c.h.b16 %v365
  %v1946 = vunpack.c.l.b16 %v366
  %v1947 = vunpack.c.h.b16 %v366
  %v1948 = vunpack.c.l.b16 %v367
  %v1949 = vunpack.c.h.b16 %v367
  %v1950 = vunpack.c.l.b16 %v368
  %v1951 = vunpack.c.h.b16 %v368
  %v1952 = vunpack.c.l.b16 %v369
  %v1953 = vunpack.c.h.b16 %v369
  %v1954 = vunpack.c.l.b16 %v370
  %v1955 = vunpack.c.h.b16 %v370
  %v1956 = vunpack.c.l.b16 %v371
  %v1957 = vunpack.c.h.b16 %v371
  %v1958 = vunpack.c.l.b16 %v372
  %v1959 = vunpack.c.h.b16 %v372
  %v1960 = vunpack.c.l.b16 %v373
  %v1961 = vunpack.c.h.b16 %v373
  %v1962 = vunpack.c.l.b16 %v374
  %v1963 = vunpack.c.h.b16 %v374
  %v1964 = vunpack.c.l.b16 %v375
  %v1965 = vunpack.c.h.b16 %v375
  %v1966 = vunpack.c.l.b16 %v376
  %v1967 = vunpack.c.h.b16 %v376
  %v1968 = vunpack.c.l.b16 %v377
  %v1969 = vunpack.c.h.b16 %v377
  %v1970 = vunpack.c.l.b16 %v378
  %v1971 = vunpack.c.h.b16 %v378
  %v1972 = vunpack.c.l.b16 %v379
  %v1973 = vunpack.c.h.b16 %v379
  %v1974 = vunpack.c.l.b16 %v380
  %v1975 = vunpack.c.h.b16 %v380
  %v1976 = vunpack.c.l.b16 %v381
  %v1977 = vunpack.c.h.b16 %v381
  %v1978 = vunpack.c.l.b16 %v382
  %v1979 = vunpack.c.h.b16 %v382
  %v1980 = vunpack.c.l.b16 %v383
  %v1981 = vunpack.c.h.b16 %v383
  %v1982 = vunpack.c.l.b16 %v384
  %v1983 = vunpack.c.h.b16 %v384
  %v1984 = vunpack.c.l.b16 %v385
  %v1985 = vunpack.c.h.b16 %v385
  %v1986 = vunpack.c.l.b16 %v386
  %v1987 = vunpack.c.h.b16 %v386
  %v1988 = vunpack.c.l.b16 %v387
  %v1989 = vunpack.c.h.b16 %v387
  %v1990 = vunpack.c.l.b16 %v388
  %v1991 = vunpack.c.h.b16 %v388
  %v1992 = vunpack.c.l.b16 %v389
  %v1993 = vunpack.c.h.b16 %v389
  %v1994 = vunpack.c.l.b16 %v390
  %v1995 = vunpack.c.h.b16 %v390
  %v1996 = vunpack.c.l.b16 %v391
  %v1997 = vunpack.c.h.b16 %v391
  %v1998 = vunpack.c.l.b16 %v392
  %v1999 = vunpack.c.h.b16 %v392
  %v2000 = vunpack.c.l.b16 %v393
  %v2001 = vunpack.c.h.b16 %v393
  %v2002 = vunpack.c.l.b16 %v394
  %v2003 = vunpack.c.h.b16 %v394
  %v2004 = vunpack.c.l.b16 %v395
  %v2005 = vunpack.c.h.b16 %v395
  %v2006 = vunpack.c.l.b16 %v396
  %v2007 = vunpack.c.h.b16 %v396
  %v2008 = vunpack.c.l.b16 %v397
  %v2009 = vunpack.c.h.b16 %v397
  %v2010 = vunpack.c.l.b16 %v398
  %v2011 = vunpack.c.h.b16 %v398
  %v2012 = vunpack.c.l.b16 %v399
  %v2013 = vunpack.c.h.b16 %v399
  %v2014 = vunpack.c.l.b16 %v400
  %v2015 = vunpack.c.h.b16 %v400
  %v2016 = vunpack.c.l.b16 %v401
  %v2017 = vunpack.c.h.b16 %v401
  %v2018 = vunpack.c.l.b16 %v402
  %v2019 = vunpack.c.h.b16 %v402
  %v2020 = vunpack.c.l.b16 %v403
  %v2021 = vunpack.c.h.b16 %v403
  %v2022 = vunpack.c.l.b16 %v404
  %v2023 = vunpack.c.h.b16 %v404
  %v2024 = vunpack.c.l.b16 %v405
  %v2025 = vunpack.c.h.b16 %v405
  %v2026 = vunpack.c.l.b16 %v406
  %v2027 = vunpack.c.h.b16 %v406
  %v2028 = vunpack.c.l.b16 %v407
  %v2029 = vunpack.c.h.b16 %v407
  %v2030 = vunpack.c.l.b16 %v408
  %v2031 = vunpack.c.h.b16 %v408
  %v2032 = vunpack.c.l.b16 %v409
  %v2033 = vunpack.c.h.b16 %v409
  %v2034 = vunpack.c.l.b16 %v410
  %v2035 = vunpack.c.h.b16 %v410
  %v2036 = vunpack.c.l.b16 %v411
  %v2037 = vunpack.c.h.b16 %v411
  %v2038 = vunpack.c.l.b16 %v412
  %v2039 = vunpack.c.h.b16 %v412
  %v2040 = vunpack.c.l.b16 %v413
  %v2041 = vunpack.c.h.b16 %v413
  %v2042 = vunpack.c.l.b16 %v414
  %v2043 = vunpack.c.h.b16 %v414
  %v2044 = vunpack.c.l.b16 %v415
  %v2045 = vunpack.c.h.b16 %v415
  %v2046 = vunpack.c.l.b16 %v416
  %v2047 = vunpack.c.h.b16 %v416
  %v2048 = vunpack.c.l.b16 %v417
  %v2049 = vunpack.c.h.b16 %v417
  %v2050 = vunpack.c.l.b16 %v418
  %v2051 = vunpack.c.h.b16 %v418
  %v2052 = vunpack.c.l.b16 %v419
  %v2053 = vunpack.c.h.b16 %v419
  %v2054 = vunpack.c.l.b16 %v420
  %v2055 = vunpack.c.h.b16 %v420
  %v2056 = vunpack.c.l.b16 %v421
  %v2057 = vunpack.c.h.b16 %v421
  %v2058 = vunpack.c.l.b16 %v422
  %v2059 = vunpack.c.h.b16 %v422
  %v2060 = vunpack.c.l.b16 %v423
  %v2061 = vunpack.c.h.b16 %v423
  %v2062 = vunpack.c.l.b16 %v424
  %v2063 = vunpack.c.h.b16 %v424
  %v2064 = vunpack.c.l.b16 %v425
  %v2065 = vunpack.c.h.b16 %v425
  %v2066 = vunpack.c.l.b16 %v426
  %v2067 = vunpack.c.h.b16 %v426
  %v2068 = vunpack.c.l.b16 %v427
  %v2069 = vunpack.c.h.b16 %v427
  %v2070 = vunpack.c.l.b16 %v428
  %v2071 = vunpack.c.h.b16 %v428
  %v2072 = vunpack.c.l.b16 %v429
  %v2073 = vunpack.c.h.b16 %v429
  %v2074 = vunpack.c.l.b16 %v430
  %v2075 = vunpack.c.h.b16 %v430
  %v2076 = vunpack.c.l.b16 %v431
  %v2077 = vunpack.c.h.b16 %v431
  %v2078 = vunpack.c.l.b16 %v432
  %v2079 = vunpack.c.h.b16 %v432
  %v2080 = vunpack.c.l.b16 %v433
  %v2081 = vunpack.c.h.b16 %v433
  %v2082 = vunpack.c.l.b16 %v434
  %v2083 = vunpack.c.h.b16 %v434
  %v2084 = vunpack.c.l.b16 %v435
  %v2085 = vunpack.c.h.b16 %v435
  %v2086 = vunpack.c.l.b16 %v436
  %v2087 = vunpack.c.h.b16 %v436
  %v2088 = vunpack.c.l.b16 %v437
  %v2089 = vunpack.c.h.b16 %v437
  %v2090 = vunpack.c.l.b16 %v438
  %v2091 = vunpack.c.h.b16 %v438
  %v2092 = vunpack.c.l.b16 %v439
  %v2093 = vunpack.c.h.b16 %v439
  %v2094 = vunpack.c.l.b16 %v440
  %v2095 = vunpack.c.h.b16 %v440
  %v2096 = vunpack.c.l.b16 %v441
  %v2097 = vunpack.c.h.b16 %v441
  %v2098 = vunpack.c.l.b16 %v442
  %v2099 = vunpack.c.h.b16 %v442
  %v2100 = vunpack.c.l.b16 %v443
  %v2101 = vunpack.c.h.b16 %v443
  %v2102 = vunpack.c.l.b16 %v444
  %v2103 = vunpack.c.h.b16 %v444
  %v2104 = vunpack.c.l.b16 %v445
  %v2105 = vunpack.c.h.b16 %v445
  %v2106 = vunpack.c.l.b16 %v446
  %v2107 = vunpack.c.h.b16 %v446
  %v2108 = vunpack.c.l.b16 %v447
  %v2109 = vunpack.c.h.b16 %v447
  %v2110 = vunpack.c.l.b16 %v448
  %v2111 = vunpack.c.h.b16 %v448
  %v2112 = vunpack.c.l.b16 %v449
  %v2113 = vunpack.c.h.b16 %v449
  %v2114 = vunpack.c.l.b16 %v450
  %v2115 = vunpack.c.h.b16 %v450
  %v2116 = vunpack.c.l.b16 %v451
  %v2117 = vunpack.c.h.b16 %v451
  %v2118 = vunpack.c.l.b16 %v452
  %v2119 = vunpack.c.h.b16 %v452
  %v2120 = vunpack.c.l.b16 %v453
  %v2121 = vunpack.c.h.b16 %v453
  %v2122 = vunpack.c.l.b16 %v454
  %v2123 = vunpack.c.h.b16 %v454
  %v2124 = vunpack.c.l.b16 %v455
  %v2125 = vunpack.c.h.b16 %v455
  %v2126 = vunpack.c.l.b16 %v456
  %v2127 = vunpack.c.h.b16 %v456
  %v2128 = vunpack.c.l.b16 %v457
  %v2129 = vunpack.c.h.b16 %v457
  %v2130 = vunpack.c.l.b16 %v458
  %v2131 = vunpack.c.h.b16 %v458
  %v2132 = vunpack.c.l.b16 %v459
  %v2133 = vunpack.c.h.b16 %v459
  %v2134 = vunpack.c.l.b16 %v460
  %v2135 = vunpack.c.h.b16 %v460
  %v2136 = vunpack.c.l.b16 %v461
  %v2137 = vunpack.c.h.b16 %v461
  %v2138 = vunpack.c.l.b16 %v462
  %v2139 = vunpack.c.h.b16 %v462
  %v2140 = vunpack.c.l.b16 %v463
  %v2141 = vunpack.c.h.b16 %v463
  %v2142 = vunpack.c.l.b16 %v464
  %v2143 = vunpack.c.h.b16 %v464
  %v2144 = vunpack.c.l.b16 %v465
  %v2145 = vunpack.c.h.b16 %v465
  %v2146 = vunpack.c.l.b16 %v466
  %v2147 = vunpack.c.h.b16 %v466
  %v2148 = vunpack.c.l.b16 %v467
  %v2149 = vunpack.c.h.b16 %v467
  %v2150 = vunpack.c.l.b16 %v468
  %v2151 = vunpack.c.h.b16 %v468
  %v2152 = vunpack.c.l.b16 %v469
  %v2153 = vunpack.c.h.b16 %v469
  %v2154 = vunpack.c.l.b16 %v470
  %v2155 = vunpack.c.h.b16 %v470
  %v2156 = vunpack.c.l.b16 %v471
  %v2157 = vunpack.c.h.b16 %v471
  %v2158 = vunpack.c.l.b16 %v472
  %v2159 = vunpack.c.h.b16 %v472
  %v2160 = vunpack.c.l.b16 %v473
  %v2161 = vunpack.c.h.b16 %v473
  %v2162 = vunpack.c.l.b16 %v474
  %v2163 = vunpack.c.h.b16 %v474
  %v2164 = vunpack.c.l.b16 %v475
  %v2165 = vunpack.c.h.b16 %v475
  %v2166 = vunpack.c.l.b16 %v476
  %v2167 = vunpack.c.h.b16 %v476
  %v2168 = vunpack.c.l.b16 %v477
  %v2169 = vunpack.c.h.b16 %v477
  %v2170 = vunpack.c.l.b16 %v478
  %v2171 = vunpack.c.h.b16 %v478
  %v2172 = vunpack.c.l.b16 %v479
  %v2173 = vunpack.c.h.b16 %v479
  %v2174 = vunpack.c.l.b16 %v480
  %v2175 = vunpack.c.h.b16 %v480
  %v2176 = vunpack.c.l.b16 %v481
  %v2177 = vunpack.c.h.b16 %v481
  %v2178 = vunpack.c.l.b16 %v482
  %v2179 = vunpack.c.h.b16 %v482
  %v2180 = vunpack.c.l.b16 %v483
  %v2181 = vunpack.c.h.b16 %v483
  %v2182 = vunpack.c.l.b16 %v484
  %v2183 = vunpack.c.h.b16 %v484
  %v2184 = vunpack.c.l.b16 %v485
  %v2185 = vunpack.c.h.b16 %v485
  %v2186 = vunpack.c.l.b16 %v486
  %v2187 = vunpack.c.h.b16 %v486
  %v2188 = vunpack.c.l.b16 %v487
  %v2189 = vunpack.c.h.b16 %v487
  %v2190 = vunpack.c.l.b16 %v488
  %v2191 = vunpack.c.h.b16 %v488
  %v2192 = vunpack.c.l.b16 %v489
  %v2193 = vunpack.c.h.b16 %v489
  %v2194 = vunpack.c.l.b16 %v490
  %v2195 = vunpack.c.h.b16 %v490
  %v2196 = vunpack.c.l.b16 %v491
  %v2197 = vunpack.c.h.b16 %v491
  %v2198 = vunpack.c.l.b16 %v492
  %v2199 = vunpack.c.h.b16 %v492
  %v2200 = vunpack.c.l.b16 %v493
  %v2201 = vunpack.c.h.b16 %v493
  %v2202 = vunpack.c.l.b16 %v494
  %v2203 = vunpack.c.h.b16 %v494
  %v2204 = vunpack.c.l.b16 %v495
  %v2205 = vunpack.c.h.b16 %v495
  %v2206 = vunpack.c.l.b16 %v496
  %v2207 = vunpack.c.h.b16 %v496
  %v2208 = vunpack.c.l.b16 %v497
  %v2209 = vunpack.c.h.b16 %v497
  %v2210 = vunpack.c.l.b16 %v498
  %v2211 = vunpack.c.h.b16 %v498
  %v2212 = vunpack.c.l.b16 %v499
  %v2213 = vunpack.c.h.b16 %v499
  %v2214 = vunpack.c.l.b16 %v500
  %v2215 = vunpack.c.h.b16 %v500
  %v2216 = vunpack.c.l.b16 %v501
  %v2217 = vunpack.c.h.b16 %v501
  %v2218 = vunpack.c.l.b16 %v502
  %v2219 = vunpack.c.h.b16 %v502
  %v2220 = vunpack.c.l.b16 %v503
  %v2221 = vunpack.c.h.b16 %v503
  %v2222 = vunpack.c.l.b16 %v504
  %v2223 = vunpack.c.h.b16 %v504
  %v2224 = vunpack.c.l.b16 %v505
  %v2225 = vunpack.c.h.b16 %v505
  %v2226 = vunpack.c.l.b16 %v506
  %v2227 = vunpack.c.h.b16 %v506
  %v2228 = vunpack.c.l.b16 %v507
  %v2229 = vunpack.c.h.b16 %v507
  %v2230 = vunpack.c.l.b16 %v508
  %v2231 = vunpack.c.h.b16 %v508
  %v2232 = vunpack.c.l.b16 %v509
  %v2233 = vunpack.c.h.b16 %v509
  %v2234 = vunpack.c.l.b16 %v510
  %v2235 = vunpack.c.h.b16 %v510
  %v2236 = vunpack.c.l.b16 %v511
  %v2237 = vunpack.c.h.b16 %v511
  %v2238 = vunpack.c.l.b16 %v512
  %v2239 = vunpack.c.h.b16 %v512
  %v2240 = vunpack.c.l.b16 %v513
  %v2241 = vunpack.c.h.b16 %v513
  %v2242 = vunpack.c.l.b16 %v514
  %v2243 = vunpack.c.h.b16 %v514
  %v2244 = vunpack.c.l.b16 %v515
  %v2245 = vunpack.c.h.b16 %v515
  %v2246 = vunpack.c.l.b16 %v516
  %v2247 = vunpack.c.h.b16 %v516
  %v2248 = vunpack.c.l.b16 %v517
  %v2249 = vunpack.c.h.b16 %v517
  %v2250 = vunpack.c.l.b16 %v518
  %v2251 = vunpack.c.h.b16 %v518
  %v2252 = vunpack.c.l.b16 %v519
  %v2253 = vunpack.c.h.b16 %v519
  %v2254 = vunpack.c.l.b16 %v520
  %v2255 = vunpack.c.h.b16 %v520
  %v2256 = vunpack.c.l.b16 %v521
  %v2257 = vunpack.c.h.b16 %v521
  %v2258 = vunpack.c.l.b16 %v522
  %v2259 = vunpack.c.h.b16 %v522
  %v2260 = vunpack.c.l.b16 %v523
  %v2261 = vunpack.c.h.b16 %v523
  %v2262 = vunpack.c.l.b16 %v524
  %v2263 = vunpack.c.h.b16 %v524
  %v2264 = vunpack.c.l.b16 %v525
  %v2265 = vunpack.c.h.b16 %v525
  %v2266 = vunpack.c.l.b16 %v526
  %v2267 = vunpack.c.h.b16 %v526
  %v2268 = vunpack.c.l.b16 %v527
  %v2269 = vunpack.c.h.b16 %v527
  %v2270 = vunpack.c.l.b16 %v528
  %v2271 = vunpack.c.h.b16 %v528
  %v2272 = vunpack.c.l.b16 %v529
  %v2273 = vunpack.c.h.b16 %v529
  %v2274 = vunpack.c.l.b16 %v530
  %v2275 = vunpack.c.h.b16 %v530
  %v2276 = vunpack.c.l.b16 %v531
  %v2277 = vunpack.c.h.b16 %v531
  %v2278 = vunpack.c.l.b16 %v532
  %v2279 = vunpack.c.h.b16 %v532
  %v2280 = vunpack.c.l.b16 %v533
  %v2281 = vunpack.c.h.b16 %v533
  %v2282 = vunpack.c.l.b16 %v534
  %v2283 = vunpack.c.h.b16 %v534
  %v2284 = vunpack.c.l.b16 %v535
  %v2285 = vunpack.c.h.b16 %v535
  %v2286 = vunpack.c.l.b16 %v536
  %v2287 = vunpack.c.h.b16 %v536
  %v2288 = vunpack.c.l.b16 %v537
  %v2289 = vunpack.c.h.b16 %v537
  %v2290 = vunpack.c.l.b16 %v538
  %v2291 = vunpack.c.h.b16 %v538
  %v2292 = vunpack.c.l.b16 %v539
  %v2293 = vunpack.c.h.b16 %v539
  %v2294 = vunpack.c.l.b16 %v540
  %v2295 = vunpack.c.h.b16 %v540
  %v2296 = vunpack.c.l.b16 %v541
  %v2297 = vunpack.c.h.b16 %v541
  %v2298 = vunpack.c.l.b16 %v542
  %v2299 = vunpack.c.h.b16 %v542
  %v2300 = vunpack.c.l.b16 %v543
  %v2301 = vunpack.c.h.b16 %v543
  %v2302 = vunpack.c.l.b16 %v544
  %v2303 = vunpack.c.h.b16 %v544
  %v2304 = vunpack.c.l.b16 %v545
  %v2305 = vunpack.c.h.b16 %v545
  %v2306 = vunpack.c.l.b16 %v546
  %v2307 = vunpack.c.h.b16 %v546
  %v2308 = vunpack.c.l.b16 %v547
  %v2309 = vunpack.c.h.b16 %v547
  %v2310 = vunpack.c.l.b16 %v548
  %v2311 = vunpack.c.h.b16 %v548
  %v2312 = vunpack.c.l.b16 %v549
  %v2313 = vunpack.c.h.b16 %v549
  %v2314 = vunpack.c.l.b16 %v550
  %v2315 = vunpack.c.h.b16 %v550
  %v2316 = vunpack.c.l.b16 %v551
  %v2317 = vunpack.c.h.b16 %v551
  %v2318 = vunpack.c.l.b16 %v552
  %v2319 = vunpack.c.h.b16 %v552
  %v2320 = vunpack.c.l.b16 %v553
  %v2321 = vunpack.c.h.b16 %v553
  %v2322 = vunpack.c.l.b16 %v554
  %v2323 = vunpack.c.h.b16 %v554
  %v2324 = vunpack.c.l.b16 %v555
  %v2325 = vunpack.c.h.b16 %v555
  %v2326 = vunpack.c.l.b16 %v556
  %v2327 = vunpack.c.h.b16 %v556
  %v2328 = vunpack.c.l.b16 %v557
  %v2329 = vunpack.c.h.b16 %v557
  %v2330 = vunpack.c.l.b16 %v558
  %v2331 = vunpack.c.h.b16 %v558
  %v2332 = vunpack.c.l.b16 %v559
  %v2333 = vunpack.c.h.b16 %v559
  %v2334 = vunpack.c.l.b16 %v560
  %v2335 = vunpack.c.h.b16 %v560
  %v2336 = vunpack.c.l.b16 %v561
  %v2337 = vunpack.c.h.b16 %v561
  %v2338 = vunpack.c.l.b16 %v562
  %v2339 = vunpack.c.h.b16 %v562
  %v2340 = vunpack.c.l.b16 %v563
  %v2341 = vunpack.c.h.b16 %v563
  %v2342 = vunpack.c.l.b16 %v564
  %v2343 = vunpack.c.h.b16 %v564
  %v2344 = vunpack.c.l.b16 %v565
  %v2345 = vunpack.c.h.b16 %v565
  %v2346 = vunpack.c.l.b16 %v566
  %v2347 = vunpack.c.h.b16 %v566
  %v2348 = vunpack.c.l.b16 %v567
  %v2349 = vunpack.c.h.b16 %v567
  %v2350 = vunpack.c.l.b16 %v568
  %v2351 = vunpack.c.h.b16 %v568
  %v2352 = vunpack.c.l.b16 %v569
  %v2353 = vunpack.c.h.b16 %v569
  %v2354 = vunpack.c.l.b16 %v570
  %v2355 = vunpack.c.h.b16 %v570
  %v2356 = vunpack.c.l.b16 %v571
  %v2357 = vunpack.c.h.b16 %v571
  %v2358 = vunpack.c.l.b16 %v572
  %v2359 = vunpack.c.h.b16 %v572
  %v2360 = vunpack.c.l.b16 %v573
  %v2361 = vunpack.c.h.b16 %v573
  %v2362 = vunpack.c.l.b16 %v574
  %v2363 = vunpack.c.h.b16 %v574
  %v2364 = vunpack.c.l.b16 %v575
  %v2365 = vunpack.c.h.b16 %v575
  %v2366 = vunpack.c.l.b16 %v576
  %v2367 = vunpack.c.h.b16 %v576
  %v2368 = vunpack.c.l.b16 %v577
  %v2369 = vunpack.c.h.b16 %v577
  %v2370 = vunpack.c.l.b16 %v578
  %v2371 = vunpack.c.h.b16 %v578
  %v2372 = vunpack.c.l.b16 %v579
  %v2373 = vunpack.c.h.b16 %v579
  %v2374 = vunpack.c.l.b16 %v580
  %v2375 = vunpack.c.h.b16 %v580
  %v2376 = vunpack.c.l.b16 %v581
  %v2377 = vunpack.c.h.b16 %v581
  %v2378 = vunpack.c.l.b16 %v582
  %v2379 = vunpack.c.h.b16 %v582
  %v2380 = vunpack.c.l.b16 %v583
  %v2381 = vunpack.c.h.b16 %v583
  %v2382 = vunpack.c.l.b16 %v584
  %v2383 = vunpack.c.h.b16 %v584
  %v2384 = vunpack.c.l.b16 %v585
  %v2385 = vunpack.c.h.b16 %v585
  %v2386 = vunpack.c.l.b16 %v586
  %v2387 = vunpack.c.h.b16 %v586
  %v2388 = vunpack.c.l.b16 %v587
  %v2389 = vunpack.c.h.b16 %v587
  %v2390 = vunpack.c.l.b16 %v588
  %v2391 = vunpack.c.h.b16 %v588
  %v2392 = vunpack.c.l.b16 %v589
  %v2393 = vunpack.c.h.b16 %v589
  %v2394 = vunpack.c.l.b16 %v590
  %v2395 = vunpack.c.h.b16 %v590
  %v2396 = vunpack.c.l.b16 %v591
  %v2397 = vunpack.c.h.b16 %v591
  %v2398 = vunpack.c.l.b16 %v592
  %v2399 = vunpack.c.h.b16 %v592
  %v2400 = vunpack.c.l.b16 %v593
  %v2401 = vunpack.c.h.b16 %v593
  %v2402 = vunpack.c.l.b16 %v594
  %v2403 = vunpack.c.h.b16 %v594
  %v2404 = vunpack.c.l.b16 %v595
  %v2405 = vunpack.c.h.b16 %v595
  %v2406 = vunpack.c.l.b16 %v596
  %v2407 = vunpack.c.h.b16 %v596
  %v2408 = vunpack.c.l.b16 %v597
  %v2409 = vunpack.c.h.b16 %v597
  %v2410 = vunpack.c.l.b16 %v598
  %v2411 = vunpack.c.h.b16 %v598
  %v2412 = vpack.c.b16 %v1264, %v1260
  %v2413 = vpack.c.b16 %v1265, %v1261
  %v2414 = vpack.c.b16 %v1266, %v1262
  %v2415 = vpack.c.b16 %v1267, %v1263
  %v2416 = vpack.c.b16 %v1272, %v1268
  %v2417 = vpack.c.b16 %v1273, %v1269
  %v2418 = vpack.c.b16 %v1274, %v1270
  %v2419 = vpack.c.b16 %v1275, %v1271
  %v2420 = vpack.c.b16 %v1280, %v1276
  %v2421 = vpack.c.b16 %v1281, %v1277
  %v2422 = vpack.c.b16 %v1282, %v1278
  %v2423 = vpack.c.b16 %v1283, %v1279
  %v2424 = vpack.c.b16 %v1288, %v1284
  %v2425 = vpack.c.b16 %v1289, %v1285
  %v2426 = vpack.c.b16 %v1290, %v1286
  %v2427 = vpack.c.b16 %v1291, %v1287
  %v2428 = vpack.c.b16 %v1296, %v1292
  %v2429 = vpack.c.b16 %v1297, %v1293
  %v2430 = vpack.c.b16 %v1298, %v1294
  %v2431 = vpack.c.b16 %v1299, %v1295
  %v2432 = vpack.c.b16 %v1304, %v1300
  %v2433 = vpack.c.b16 %v1305, %v1301
  %v2434 = vpack.c.b16 %v1306, %v1302
  %v2435 = vpack.c.b16 %v1307, %v1303
  %v2436 = vpack.c.b16 %v1312, %v1308
  %v2437 = vpack.c.b16 %v1313, %v1309
  %v2438 = vpack.c.b16 %v1314, %v1310
  %v2439 = vpack.c.b16 %v1315, %v1311
  %v2440 = vpack.c.b16 %v1320, %v1316
  %v2441 = vpack.c.b16 %v1321, %v1317
  %v2442 = vpack.c.b16 %v1322, %v1318
  %v2443 = vpack.c.b16 %v1323, %v1319
  %v2444 = vpack.c.b16 %v1328, %v1324
  %v2445 = vpack.c.b16 %v1329, %v1325
  %v2446 = vpack.c.b16 %v1330, %v1326
  %v2447 = vpack.c.b16 %v1331, %v1327
  %v2448 = vpack.c.b16 %v1336, %v1332
  %v2449 = vpack.c.b16 %v1337, %v1333
  %v2450 = vpack.c.b16 %v1338, %v1334
  %v2451 = vpack.c.b16 %v1339, %v1335
  %v2452 = vpack.c.b16 %v1344, %v1340
  %v2453 = vpack.c.b16 %v1345, %v1341
  %v2454 = vpack.c.b16 %v1346, %v1342
  %v2455 = vpack.c.b16 %v1347, %v1343
  %v2456 = vpack.c.b16 %v1352, %v1348
  %v2457 = vpack.c.b16 %v1353, %v1349
  %v2458 = vpack.c.b16 %v1354, %v1350
  %v2459 = vpack.c.b16 %v1355, %v1351
  %v2460 = vpack.c.b16 %v1360, %v1356
  %v2461 = vpack.c.b16 %v1361, %v1357
  %v2462 = vpack.c.b16 %v1362, %v1358
  %v2463 = vpack.c.b16 %v1363, %v1359
  %v2464 = vpack.c.b16 %v1368, %v1364
  %v2465 = vpack.c.b16 %v1369, %v1365
  %v2466 = vpack.c.b16 %v1370, %v1366
  %v2467 = vpack.c.b16 %v1371, %v1367
  %v2468 = vpack.c.b16 %v1376, %v1372
  %v2469 = vpack.c.b16 %v1377, %v1373
  %v2470 = vpack.c.b16 %v1378, %v1374
  %v2471 = vpack.c.b16 %v1379, %v1375
  %v2472 = vpack.c.b16 %v1384, %v1380
  %v2473 = vpack.c.b16 %v1385, %v1381
  %v2474 = vpack.c.b16 %v1386, %v1382
  %v2475 = vpack.c.b16 %v1387, %v1383
  %v2476 = vpack.c.b16 %v1392, %v1388
  %v2477 = vpack.c.b16 %v1393, %v1389
  %v2478 = vpack.c.b16 %v1394, %v1390
  %v2479 = vpack.c.b16 %v1395, %v1391
  %v2480 = vpack.c.b16 %v1400, %v1396
  %v2481 = vpack.c.b16 %v1401, %v1397
  %v2482 = vpack.c.b16 %v1402, %v1398
  %v2483 = vpack.c.b16 %v1403, %v1399
  %v2484 = vpack.c.b16 %v1408, %v1404
  %v2485 = vpack.c.b16 %v1409, %v1405
  %v2486 = vpack.c.b16 %v1410, %v1406
  %v2487 = vpack.c.b16 %v1411, %v1407
  %v2488 = vpack.c.b16 %v1416, %v1412
  %v2489 = vpack.c.b16 %v1417, %v1413
  %v2490 = vpack.c.b16 %v1418, %v1414
  %v2491 = vpack.c.b16 %v1419, %v1415
  %v2492 = vpack.c.b16 %v1424, %v1420
  %v2493 = vpack.c.b16 %v1425, %v1421
  %v2494 = vpack.c.b16 %v1426, %v1422
  %v2495 = vpack.c.b16 %v1427, %v1423
  %v2496 = vpack.c.b16 %v1432, %v1428
  %v2497 = vpack.c.b16 %v1433, %v1429
  %v2498 = vpack.c.b16 %v1434, %v1430
  %v2499 = vpack.c.b16 %v1435, %v1431
  %v2500 = vpack.c.b16 %v1440, %v1436
  %v2501 = vpack.c.b16 %v1441, %v1437
  %v2502 = vpack.c.b16 %v1442, %v1438
  %v2503 = vpack.c.b16 %v1443, %v1439
  %v2504 = vpack.c.b16 %v1448, %v1444
  %v2505 = vpack.c.b16 %v1449, %v1445
  %v2506 = vpack.c.b16 %v1450, %v1446
  %v2507 = vpack.c.b16 %v1451, %v1447
  %v2508 = vpack.c.b16 %v1456, %v1452
  %v2509 = vpack.c.b16 %v1457, %v1453
  %v2510 = vpack.c.b16 %v1458, %v1454
  %v2511 = vpack.c.b16 %v1459, %v1455
  %v2512 = vpack.c.b16 %v1464, %v1460
  %v2513 = vpack.c.b16 %v1465, %v1461
  %v2514 = vpack.c.b16 %v1466, %v1462
  %v2515 = vpack.c.b16 %v1467, %v1463
  %v2516 = vpack.c.b16 %v1472, %v1468
  %v2517 = vpack.c.b16 %v1473, %v1469
  %v2518 = vpack.c.b16 %v1474, %v1470
  %v2519 = vpack.c.b16 %v1475, %v1471
  %v2520 = vpack.c.b16 %v1480, %v1476
  %v2521 = vpack.c.b16 %v1481, %v1477
  %v2522 = vpack.c.b16 %v1482, %v1478
  %v2523 = vpack.c.b16 %v1483, %v1479
  %v2524 = vpack.c.b16 %v1488, %v1484
  %v2525 = vpack.c.b16 %v1489, %v1485
  %v2526 = vpack.c.b16 %v1490, %v1486
  %v2527 = vpack.c.b16 %v1491, %v1487
  %v2528 = vpack.c.b16 %v1496, %v1492
  %v2529 = vpack.c.b16 %v1497, %v1493
  %v2530 = vpack.c.b16 %v1498, %v1494
  %v2531 = vpack.c.b16 %v1499, %v1495
  %v2532 = vpack.c.b16 %v1504, %v1500
  %v2533 = vpack.c.b16 %v1505, %v1501
  %v2534 = vpack.c.b16 %v1506, %v1502
  %v2535 = vpack.c.b16 %v1507, %v1503
  %v2536 = vpack.c.b16 %v1512, %v1508
  %v2537 = vpack.c.b16 %v1513, %v1509
  %v2538 = vpack.c.b16 %v1514, %v1510
  %v2539 = vpack.c.b16 %v1515, %v1511
  %v2540 = vpack.c.b16 %v1520, %v1516
  %v2541 = vpack.c.b16 %v1521, %v1517
  %v2542 = vpack.c.b16 %v1522, %v1518
  %v2543 = vpack.c.b16 %v1523, %v1519
  %v2544 = vpack.c.b16 %v1528, %v1524
  %v2545 = vpack.c.b16 %v1529, %v1525
  %v2546 = vpack.c.b16 %v1530, %v1526
  %v2547 = vpack.c.b16 %v1531, %v1527
  %v2548 = vpack.c.b16 %v1536, %v1532
  %v2549 = vpack.c.b16 %v1537, %v1533
  %v2550 = vpack.c.b16 %v1538, %v1534
  %v2551 = vpack.c.b16 %v1539, %v1535
  %v2552 = vpack.c.b16 %v1544, %v1540
  %v2553 = vpack.c.b16 %v1545, %v1541
  %v2554 = vpack.c.b16 %v1546, %v1542
  %v2555 = vpack.c.b16 %v1547, %v1543
  %v2556 = vpack.c.b16 %v1552, %v1548
  %v2557 = vpack.c.b16 %v1553, %v1549
  %v2558 = vpack.c.b16 %v1554, %v1550
  %v2559 = vpack.c.b16 %v1555, %v1551
  %v2560 = vpack.c.b16 %v1560, %v1556
  %v2561 = vpack.c.b16 %v1561, %v1557
  %v2562 = vpack.c.b16 %v1562, %v1558
  %v2563 = vpack.c.b16 %v1563, %v1559
  %v2564 = vpack.c.b16 %v1568, %v1564
  %v2565 = vpack.c.b16 %v1569, %v1565
  %v2566 = vpack.c.b16 %v1570, %v1566
  %v2567 = vpack.c.b16 %v1571, %v1567
  %v2568 = vpack.c.b16 %v1576, %v1572
  %v2569 = vpack.c.b16 %v1577, %v1573
  %v2570 = vpack.c.b16 %v1578, %v1574
  %v2571 = vpack.c.b16 %v1579, %v1575
  %v2572 = vpack.c.b16 %v1584, %v1580
  %v2573 = vpack.c.b16 %v1585, %v1581
  %v2574 = vpack.c.b16 %v1586, %v1582
  %v2575 = vpack.c.b16 %v1587, %v1583
  %v2576 = vpack.c.b16 %v1592, %v1588
  %v2577 = vpack.c.b16 %v1593, %v1589
  %v2578 = vpack.c.b16 %v1594, %v1590
  %v2579 = vpack.c.b16 %v1595, %v1591
  %v2580 = vpack.c.b16 %v1600, %v1596
  %v2581 = vpack.c.b16 %v1601, %v1597
  %v2582 = vpack.c.b16 %v1602, %v1598
  %v2583 = vpack.c.b16 %v1603, %v1599
  %v2584 = vpack.c.b16 %v1608, %v1604
  %v2585 = vpack.c.b16 %v1609, %v1605
  %v2586 = vpack.c.b16 %v1610, %v1606
  %v2587 = vpack.c.b16 %v1611, %v1607
  %v2588 = vpack.c.b16 %v1616, %v1612
  %v2589 = vpack.c.b16 %v1617, %v1613
  %v2590 = vpack.c.b16 %v1618, %v1614
  %v2591 = vpack.c.b16 %v1619, %v1615
  %v2592 = vpack.c.b16 %v1624, %v1620
  %v2593 = vpack.c.b16 %v1625, %v1621
  %v2594 = vpack.c.b16 %v1626, %v1622
  %v2595 = vpack.c.b16 %v1627, %v1623
  %v2596 = vpack.c.b16 %v1632, %v1628
  %v2597 = vpack.c.b16 %v1633, %v1629
  %v2598 = vpack.c.b16 %v1634, %v1630
  %v2599 = vpack.c.b16 %v1635, %v1631
  %v2600 = vpack.c.b16 %v1640, %v1636
  %v2601 = vpack.c.b16 %v1641, %v1637
  %v2602 = vpack.c.b16 %v1642, %v1638
  %v2603 = vpack.c.b16 %v1643, %v1639
  %v2604 = vpack.c.b16 %v1648, %v1644
  %v2605 = vpack.c.b16 %v1649, %v1645
  %v2606 = vpack.c.b16 %v1650, %v1646
  %v2607 = vpack.c.b16 %v1651, %v1647
  %v2608 = vpack.c.b16 %v1656, %v1652
  %v2609 = vpack.c.b16 %v1657, %v1653
  %v2610 = vpack.c.b16 %v1658, %v1654
  %v2611 = vpack.c.b16 %v1659, %v1655
  %v2612 = vpack.c.b16 %v1664, %v1660
  %v2613 = vpack.c.b16 %v1665, %v1661
  %v2614 = vpack.c.b16 %v1666, %v1662
  %v2615 = vpack.c.b16 %v1667, %v1663
  %v2616 = vpack.c.b16 %v1672, %v1668
  %v2617 = vpack.c.b16 %v1673, %v1669
  %v2618 = vpack.c.b16 %v1674, %v1670
  %v2619 = vpack.c.b16 %v1675, %v1671
  %v2620 = vpack.c.b16 %v1680, %v1676
  %v2621 = vpack.c.b16 %v1681, %v1677
  %v2622 = vpack.c.b16 %v1682, %v1678
  %v2623 = vpack.c.b16 %v1683, %v1679
  %v2624 = vpack.c.b16 %v1688, %v1684
  %v2625 = vpack.c.b16 %v1689, %v1685
  %v2626 = vpack.c.b16 %v1690, %v1686
  %v2627 = vpack.c.b16 %v1691, %v1687
  %v2628 = vpack.c.b16 %v1696, %v1692
  %v2629 = vpack.c.b16 %v1697, %v1693
  %v2630 = vpack.c.b16 %v1698, %v1694
  %v2631 = vpack.c.b16 %v1699, %v1695
  %v2632 = vpack.c.b16 %v1704, %v1700
  %v2633 = vpack.c.b16 %v1705, %v1701
  %v2634 = vpack.c.b16 %v1706, %v1702
  %v2635 = vpack.c.b16 %v1707, %v1703
  %v2636 = vpack.c.b16 %v1712, %v1708
  %v2637 = vpack.c.b16 %v1713, %v1709
  %v2638 = vpack.c.b16 %v1714, %v1710
  %v2639 = vpack.c.b16 %v1715, %v1711
  %v2640 = vpack.c.b16 %v1720, %v1716
  %v2641 = vpack.c.b16 %v1721, %v1717
  %v2642 = vpack.c.b16 %v1722, %v1718
  %v2643 = vpack.c.b16 %v1723, %v1719
  %v2644 = vpack.c.b16 %v1728, %v1724
  %v2645 = vpack.c.b16 %v1729, %v1725
  %v2646 = vpack.c.b16 %v1730, %v1726
  %v2647 = vpack.c.b16 %v1731, %v1727
  %v2648 = vpack.c.b16 %v1736, %v1732
  %v2649 = vpack.c.b16 %v1737, %v1733
  %v2650 = vpack.c.b16 %v1738, %v1734
  %v2651 = vpack.c.b16 %v1739, %v1735
  %v2652 = vpack.c.b16 %v1744, %v1740
  %v2653 = vpack.c.b16 %v1745, %v1741
  %v2654 = vpack.c.b16 %v1746, %v1742
  %v2655 = vpack.c.b16 %v1747, %v1743
  %v2656 = vpack.c.b16 %v1752, %v1748
  %v2657 = vpack.c.b16 %v1753, %v1749
  %v2658 = vpack.c.b16 %v1754, %v1750
  %v2659 = vpack.c.b16 %v1755, %v1751
  %v2660 = vpack.c.b16 %v1760, %v1756
  %v2661 = vpack.c.b16 %v1761, %v1757
  %v2662 = vpack.c.b16 %v1762, %v1758
  %v2663 = vpack.c.b16 %v1763, %v1759
  %v2664 = vpack.c.b16 %v1768, %v1764
  %v2665 = vpack.c.b16 %v1769, %v1765
  %v2666 = vpack.c.b16 %v1770, %v1766
  %v2667 = vpack.c.b16 %v1771, %v1767
  %v2668 = vpack.c.b16 %v1776, %v1772
  %v2669 = vpack.c.b16 %v1777, %v1773
  %v2670 = vpack.c.b16 %v1778, %v1774
  %v2671 = vpack.c.b16 %v1779, %v1775
  %v2672 = vpack.c.b16 %v1784, %v1780
  %v2673 = vpack.c.b16 %v1785, %v1781
  %v2674 = vpack.c.b16 %v1786, %v1782
  %v2675 = vpack.c.b16 %v1787, %v1783
  %v2676 = vpack.c.b16 %v1792, %v1788
  %v2677 = vpack.c.b16 %v1793, %v1789
  %v2678 = vpack.c.b16 %v1794, %v1790
  %v2679 = vpack.c.b16 %v1795, %v1791
  %v2680 = vpack.c.b16 %v1800, %v1796
  %v2681 = vpack.c.b16 %v1801, %v1797
  %v2682 = vpack.c.b16 %v1802, %v1798
  %v2683 = vpack.c.b16 %v1803, %v1799
  %v2684 = vpack.c.b16 %v1808, %v1804
  %v2685 = vpack.c.b16 %v1809, %v1805
  %v2686 = vpack.c.b16 %v1810, %v1806
  %v2687 = vpack.c.b16 %v1811, %v1807
  %v2688 = vpack.c.b16 %v1816, %v1812
  %v2689 = vpack.c.b16 %v1817, %v1813
  %v2690 = vpack.c.b16 %v1818, %v1814
  %v2691 = vpack.c.b16 %v1819, %v1815
  %v2692 = vpack.c.b16 %v1824, %v1820
  %v2693 = vpack.c.b16 %v1825, %v1821
  %v2694 = vpack.c.b16 %v1826, %v1822
  %v2695 = vpack.c.b16 %v1827, %v1823
  %v2696 = vpack.c.b16 %v1832, %v1828
  %v2697 = vpack.c.b16 %v1833, %v1829
  %v2698 = vpack.c.b16 %v1834, %v1830
  %v2699 = vpack.c.b16 %v1835, %v1831
  %v2700 = vpack.c.b16 %v1840, %v1836
  %v2701 = vpack.c.b16 %v1841, %v1837
  %v2702 = vpack.c.b16 %v1842, %v1838
  %v2703 = vpack.c.b16 %v1843, %v1839
  %v2704 = vpack.c.b16 %v1848, %v1844
  %v2705 = vpack.c.b16 %v1849, %v1845
  %v2706 = vpack.c.b16 %v1850, %v1846
  %v2707 = vpack.c.b16 %v1851, %v1847
  %v2708 = vpack.c.b16 %v1856, %v1852
  %v2709 = vpack.c.b16 %v1857, %v1853
  %v2710 = vpack.c.b16 %v1858, %v1854
  %v2711 = vpack.c.b16 %v1859, %v1855
  %v2712 = vpack.c.b16 %v1864, %v1860
  %v2713 = vpack.c.b16 %v1865, %v1861
  %v2714 = vpack.c.b16 %v1866, %v1862
  %v2715 = vpack.c.b16 %v1867, %v1863
  %v2716 = vpack.c.b16 %v1872, %v1868
  %v2717 = vpack.c.b16 %v1873, %v1869
  %v2718 = vpack.c.b16 %v1874, %v1870
  %v2719 = vpack.c.b16 %v1875, %v1871
  %v2720 = vpack.c.b16 %v1880, %v1876
  %v2721 = vpack.c.b16 %v1881, %v1877
  %v2722 = vpack.c.b16 %v1882, %v1878
  %v2723 = vpack.c.b16 %v1883, %v1879
  %v2724 = vpack.c.b16 %v1888, %v1884
  %v2725 = vpack.c.b16 %v1889, %v1885
  %v2726 = vpack.c.b16 %v1890, %v1886
  %v2727 = vpack.c.b16 %v1891, %v1887
  %v2728 = vpack.c.b16 %v1896, %v1892
  %v2729 = vpack.c.b16 %v1897, %v1893
  %v2730 = vpack.c.b16 %v1898, %v1894
  %v2731 = vpack.c.b16 %v1899, %v1895
  %v2732 = vpack.c.b16 %v1904, %v1900
  %v2733 = vpack.c.b16 %v1905, %v1901
  %v2734 = vpack.c.b16 %v1906, %v1902
  %v2735 = vpack.c.b16 %v1907, %v1903
  %v2736 = vpack.c.b16 %v1912, %v1908
  %v2737 = vpack.c.b16 %v1913, %v1909
  %v2738 = vpack.c.b16 %v1914, %v1910
  %v2739 = vpack.c.b16 %v1915, %v1911
  %v2740 = vpack.c.b16 %v1920, %v1916
  %v2741 = vpack.c.b16 %v1921, %v1917
  %v2742 = vpack.c.b16 %v1922, %v1918
  %v2743 = vpack.c.b16 %v1923, %v1919
  %v2744 = vpack.c.b16 %v1928, %v1924
  %v2745 = vpack.c.b16 %v1929, %v1925
  %v2746 = vpack.c.b16 %v1930, %v1926
  %v2747 = vpack.c.b16 %v1931, %v1927
  %v2748 = vpack.c.b16 %v1936, %v1932
  %v2749 = vpack.c.b16 %v1937, %v1933
  %v2750 = vpack.c.b16 %v1938, %v1934
  %v2751 = vpack.c.b16 %v1939, %v1935
  %v2752 = vpack.c.b16 %v1944, %v1940
  %v2753 = vpack.c.b16 %v1945, %v1941
  %v2754 = vpack.c.b16 %v1946, %v1942
  %v2755 = vpack.c.b16 %v1947, %v1943
  %v2756 = vpack.c.b16 %v1952, %v1948
  %v2757 = vpack.c.b16 %v1953, %v1949
  %v2758 = vpack.c.b16 %v1954, %v1950
  %v2759 = vpack.c.b16 %v1955, %v1951
  %v2760 = vpack.c.b16 %v1960, %v1956
  %v2761 = vpack.c.b16 %v1961, %v1957
  %v2762 = vpack.c.b16 %v1962, %v1958
  %v2763 = vpack.c.b16 %v1963, %v1959
  %v2764 = vpack.c.b16 %v1968, %v1964
  %v2765 = vpack.c.b16 %v1969, %v1965
  %v2766 = vpack.c.b16 %v1970, %v1966
  %v2767 = vpack.c.b16 %v1971, %v1967
  %v2768 = vpack.c.b16 %v1976, %v1972
  %v2769 = vpack.c.b16 %v1977, %v1973
  %v2770 = vpack.c.b16 %v1978, %v1974
  %v2771 = vpack.c.b16 %v1979, %v1975
  %v2772 = vpack.c.b16 %v1984, %v1980
  %v2773 = vpack.c.b16 %v1985, %v1981
  %v2774 = vpack.c.b16 %v1986, %v1982
  %v2775 = vpack.c.b16 %v1987, %v1983
  %v2776 = vpack.c.b16 %v1992, %v1988
  %v2777 = vpack.c.b16 %v1993, %v1989
  %v2778 = vpack.c.b16 %v1994, %v1990
  %v2779 = vpack.c.b16 %v1995, %v1991
  %v2780 = vpack.c.b16 %v2000, %v1996
  %v2781 = vpack.c.b16 %v2001, %v1997
  %v2782 = vpack.c.b16 %v2002, %v1998
  %v2783 = vpack.c.b16 %v2003, %v1999
  %v2784 = vpack.c.b16 %v2008, %v2004
  %v2785 = vpack.c.b16 %v2009, %v2005
  %v2786 = vpack.c.b16 %v2010, %v2006
  %v2787 = vpack.c.b16 %v2011, %v2007
  %v2788 = vpack.c.b16 %v2016, %v2012
  %v2789 = vpack.c.b16 %v2017, %v2013
  %v2790 = vpack.c.b16 %v2018, %v2014
  %v2791 = vpack.c.b16 %v2019, %v2015
  %v2792 = vpack.c.b16 %v2024, %v2020
  %v2793 = vpack.c.b16 %v2025, %v2021
  %v2794 = vpack.c.b16 %v2026, %v2022
  %v2795 = vpack.c.b16 %v2027, %v2023
  %v2796 = vpack.c.b16 %v2032, %v2028
  %v2797 = vpack.c.b16 %v2033, %v2029
  %v2798 = vpack.c.b16 %v2034, %v2030
  %v2799 = vpack.c.b16 %v2035, %v2031
  %v2800 = vpack.c.b16 %v2040, %v2036
  %v2801 = vpack.c.b16 %v2041, %v2037
  %v2802 = vpack.c.b16 %v2042, %v2038
  %v2803 = vpack.c.b16 %v2043, %v2039
  %v2804 = vpack.c.b16 %v2048, %v2044
  %v2805 = vpack.c.b16 %v2049, %v2045
  %v2806 = vpack.c.b16 %v2050, %v2046
  %v2807 = vpack.c.b16 %v2051, %v2047
  %v2808 = vpack.c.b16 %v2056, %v2052
  %v2809 = vpack.c.b16 %v2057, %v2053
  %v2810 = vpack.c.b16 %v2058, %v2054
  %v2811 = vpack.c.b16 %v2059, %v2055
  %v2812 = vpack.c.b16 %v2064, %v2060
  %v2813 = vpack.c.b16 %v2065, %v2061
  %v2814 = vpack.c.b16 %v2066, %v2062
  %v2815 = vpack.c.b16 %v2067, %v2063
  %v2816 = vpack.c.b16 %v2072, %v2068
  %v2817 = vpack.c.b16 %v2073, %v2069
  %v2818 = vpack.c.b16 %v2074, %v2070
  %v2819 = vpack.c.b16 %v2075, %v2071
  %v2820 = vpack.c.b16 %v2080, %v2076
  %v2821 = vpack.c.b16 %v2081, %v2077
  %v2822 = vpack.c.b16 %v2082, %v2078
  %v2823 = vpack.c.b16 %v2083, %v2079
  %v2824 = vpack.c.b16 %v2088, %v2084
  %v2825 = vpack.c.b16 %v2089, %v2085
  %v2826 = vpack.c.b16 %v2090, %v2086
  %v2827 = vpack.c.b16 %v2091, %v2087
  %v2828 = vpack.c.b16 %v2096, %v2092
  %v2829 = vpack.c.b16 %v2097, %v2093
  %v2830 = vpack.c.b16 %v2098, %v2094
  %v2831 = vpack.c.b16 %v2099, %v2095
  %v2832 = vpack.c.b16 %v2104, %v2100
  %v2833 = vpack.c.b16 %v2105, %v2101
  %v2834 = vpack.c.b16 %v2106, %v2102
  %v2835 = vpack.c.b16 %v2107, %v2103
  %v2836 = vpack.c.b16 %v2112, %v2108
  %v2837 = vpack.c.b16 %v2113, %v2109
  %v2838 = vpack.c.b16 %v2114, %v2110
  %v2839 = vpack.c.b16 %v2115, %v2111
  %v2840 = vpack.c.b16 %v2120, %v2116
  %v2841 = vpack.c.b16 %v2121, %v2117
  %v2842 = vpack.c.b16 %v2122, %v2118
  %v2843 = vpack.c.b16 %v2123, %v2119
  %v2844 = vpack.c.b16 %v2128, %v2124
  %v2845 = vpack.c.b16 %v2129, %v2125
  %v2846 = vpack.c.b16 %v2130, %v2126
  %v2847 = vpack.c.b16 %v2131, %v2127
  %v2848 = vpack.c.b16 %v2136, %v2132
  %v2849 = vpack.c.b16 %v2137, %v2133
  %v2850 = vpack.c.b16 %v2138, %v2134
  %v2851 = vpack.c.b16 %v2139, %v2135
  %v2852 = vpack.c.b16 %v2144, %v2140
  %v2853 = vpack.c.b16 %v2145, %v2141
  %v2854 = vpack.c.b16 %v2146, %v2142
  %v2855 = vpack.c.b16 %v2147, %v2143
  %v2856 = vpack.c.b16 %v2152, %v2148
  %v2857 = vpack.c.b16 %v2153, %v2149
  %v2858 = vpack.c.b16 %v2154, %v2150
  %v2859 = vpack.c.b16 %v2155, %v2151
  %v2860 = vpack.c.b16 %v2160, %v2156
  %v2861 = vpack.c.b16 %v2161, %v2157
  %v2862 = vpack.c.b16 %v2162, %v2158
  %v2863 = vpack.c.b16 %v2163, %v2159
  %v2864 = vpack.c.b16 %v2168, %v2164
  %v2865 = vpack.c.b16 %v2169, %v2165
  %v2866 = vpack.c.b16 %v2170, %v2166
  %v2867 = vpack.c.b16 %v2171, %v2167
  %v2868 = vpack.c.b16 %v2176, %v2172
  %v2869 = vpack.c.b16 %v2177, %v2173
  %v2870 = vpack.c.b16 %v2178, %v2174
  %v2871 = vpack.c.b16 %v2179, %v2175
  %v2872 = vpack.c.b16 %v2184, %v2180
  %v2873 = vpack.c.b16 %v2185, %v2181
  %v2874 = vpack.c.b16 %v2186, %v2182
  %v2875 = vpack.c.b16 %v2187, %v2183
  %v2876 = vpack.c.b16 %v2192, %v2188
  %v2877 = vpack.c.b16 %v2193, %v2189
  %v2878 = vpack.c.b16 %v2194, %v2190
  %v2879 = vpack.c.b16 %v2195, %v2191
  %v2880 = vpack.c.b16 %v2200, %v2196
  %v2881 = vpack.c.b16 %v2201, %v2197
  %v2882 = vpack.c.b16 %v2202, %v2198
  %v2883 = vpack.c.b16 %v2203, %v2199
  %v2884 = vpack.c.b16 %v2208, %v2204
  %v2885 = vpack.c.b16 %v2209, %v2205
  %v2886 = vpack.c.b16 %v2210, %v2206
  %v2887 = vpack.c.b16 %v2211, %v2207
  %v2888 = vpack.c.b16 %v2216, %v2212
  %v2889 = vpack.c.b16 %v2217, %v2213
  %v2890 = vpack.c.b16 %v2218, %v2214
  %v2891 = vpack.c.b16 %v2219, %v2215
  %v2892 = vpack.c.b16 %v2224, %v2220
  %v2893 = vpack.c.b16 %v2225, %v2221
  %v2894 = vpack.c.b16 %v2226, %v2222
  %v2895 = vpack.c.b16 %v2227, %v2223
  %v2896 = vpack.c.b16 %v2232, %v2228
  %v2897 = vpack.c.b16 %v2233, %v2229
  %v2898 = vpack.c.b16 %v2234, %v2230
  %v2899 = vpack.c.b16 %v2235, %v2231
  %v2900 = vpack.c.b16 %v2240, %v2236
  %v2901 = vpack.c.b16 %v2241, %v2237
  %v2902 = vpack.c.b16 %v2242, %v2238
  %v2903 = vpack.c.b16 %v2243, %v2239
  %v2904 = vpack.c.b16 %v2248, %v2244
  %v2905 = vpack.c.b16 %v2249, %v2245
  %v2906 = vpack.c.b16 %v2250, %v2246
  %v2907 = vpack.c.b16 %v2251, %v2247
  %v2908 = vpack.c.b16 %v2256, %v2252
  %v2909 = vpack.c.b16 %v2257, %v2253
  %v2910 = vpack.c.b16 %v2258, %v2254
  %v2911 = vpack.c.b16 %v2259, %v2255
  %v2912 = vpack.c.b16 %v2264, %v2260
  %v2913 = vpack.c.b16 %v2265, %v2261
  %v2914 = vpack.c.b16 %v2266, %v2262
  %v2915 = vpack.c.b16 %v2267, %v2263
  %v2916 = vpack.c.b16 %v2272, %v2268
  %v2917 = vpack.c.b16 %v2273, %v2269
  %v2918 = vpack.c.b16 %v2274, %v2270
  %v2919 = vpack.c.b16 %v2275, %v2271
  %v2920 = vpack.c.b16 %v2280, %v2276
  %v2921 = vpack.c.b16 %v2281, %v2277
  %v2922 = vpack.c.b16 %v2282, %v2278
  %v2923 = vpack.c.b16 %v2283, %v2279
  %v2924 = vpack.c.b16 %v2288, %v2284
  %v2925 = vpack.c.b16 %v2289, %v2285
  %v2926 = vpack.c.b16 %v2290, %v2286
  %v2927 = vpack.c.b16 %v2291, %v2287
  %v2928 = vpack.c.b16 %v2296, %v2292
  %v2929 = vpack.c.b16 %v2297, %v2293
  %v2930 = vpack.c.b16 %v2298, %v2294
  %v2931 = vpack.c.b16 %v2299, %v2295
  %v2932 = vpack.c.b16 %v2304, %v2300
  %v2933 = vpack.c.b16 %v2305, %v2301
  %v2934 = vpack.c.b16 %v2306, %v2302
  %v2935 = vpack.c.b16 %v2307, %v2303
  %v2936 = vpack.c.b16 %v2312, %v2308
  %v2937 = vpack.c.b16 %v2313, %v2309
  %v2938 = vpack.c.b16 %v2314, %v2310
  %v2939 = vpack.c.b16 %v2315, %v2311
  %v2940 = vpack.c.b16 %v2320, %v2316
  %v2941 = vpack.c.b16 %v2321, %v2317
  %v2942 = vpack.c.b16 %v2322, %v2318
  %v2943 = vpack.c.b16 %v2323, %v2319
  %v2944 = vpack.c.b16 %v2328, %v2324
  %v2945 = vpack.c.b16 %v2329, %v2325
  %v2946 = vpack.c.b16 %v2330, %v2326
  %v2947 = vpack.c.b16 %v2331, %v2327
  %v2948 = vpack.c.b16 %v2336, %v2332
  %v2949 = vpack.c.b16 %v2337, %v2333
  %v2950 = vpack.c.b16 %v2338, %v2334
  %v2951 = vpack.c.b16 %v2339, %v2335
  %v2952 = vpack.c.b16 %v2344, %v2340
  %v2953 = vpack.c.b16 %v2345, %v2341
  %v2954 = vpack.c.b16 %v2346, %v2342
  %v2955 = vpack.c.b16 %v2347, %v2343
  %v2956 = vpack.c.b16 %v2352, %v2348
  %v2957 = vpack.c.b16 %v2353, %v2349
  %v2958 = vpack.c.b16 %v2354, %v2350
  %v2959 = vpack.c.b16 %v2355, %v2351
  %v2960 = vpack.c.b16 %v2360, %v2356
  %v2961 = vpack.c.b16 %v2361, %v2357
  %v2962 = vpack.c.b16 %v2362, %v2358
  %v2963 = vpack.c.b16 %v2363, %v2359
  %v2964 = vpack.c.b16 %v2368, %v2364
  %v2965 = vpack.c.b16 %v2369, %v2365
  %v2966 = vpack.c.b16 %v2370, %v2366
  %v2967 = vpack.c.b16 %v2371, %v2367
  %v2968 = vpack.c.b16 %v2376, %v2372
  %v2969 = vpack.c.b16 %v2377, %v2373
  %v2970 = vpack.c.b16 %v2378, %v2374
  %v2971 = vpack.c.b16 %v2379, %v2375
  %v2972 = vpack.c.b16 %v2384, %v2380
  %v2973 = vpack.c.b16 %v2385, %v2381
  %v2974 = vpack.c.b16 %v2386, %v2382
  %v2975 = vpack.c.b16 %v2387, %v2383
  %v2976 = vpack.c.b16 %v2392, %v2388
  %v2977 = vpack.c.b16 %v2393, %v2389
  %v2978 = vpack.c.b16 %v2394, %v2390
  %v2979 = vpack.c.b16 %v2395, %v2391
  %v2980 = vpack.c.b16 %v2400, %v2396
  %v2981 = vpack.c.b16 %v2401, %v2397
  %v2982 = vpack.c.b16 %v2402, %v2398
  %v2983 = vpack.c.b16 %v2403, %v2399
  %v2984 = vpack.c.b16 %v2408, %v2404
  %v2985 = vpack.c.b16 %v2409, %v2405
  %v2986 = vpack.c.b16 %v2410, %v2406
  %v2987 = vpack.c.b16 %v2411, %v2407
  %3564 = vmatprep.subr.bf16.mxu0 %v2413
  %3565 = vmatpush1.bf16.msra.mxu0 %v2412
  %3566 = vmatprep.subr.bf16.mxu0 %v2417
  %3567 = vmatpush1.bf16.msra.mxu0 %v2416
  %3568 = vmatprep.subr.bf16.mxu0 %v2421
  %3569 = vmatpush1.bf16.msra.mxu0 %v2420
  %3570 = vmatprep.subr.bf16.mxu0 %v2425
  %3571 = vmatpush1.bf16.msra.mxu0 %v2424
  %3572 = vmatprep.subr.bf16.mxu0 %v2429
  %3573 = vmatpush1.bf16.msra.mxu0 %v2428
  %3574 = vmatprep.subr.bf16.mxu0 %v2433
  %3575 = vmatpush1.bf16.msra.mxu0 %v2432
  %3576 = vmatprep.subr.bf16.mxu0 %v2437
  %3577 = vmatpush1.bf16.msra.mxu0 %v2436
  %3578 = vmatprep.subr.bf16.mxu0 %v2441
  %3579 = vmatpush1.bf16.msra.mxu0 %v2440
  %3580 = vmatprep.subr.bf16.mxu0 %v2445
  %3581 = vmatpush1.bf16.msra.mxu0 %v2444
  %3582 = vmatprep.subr.bf16.mxu0 %v2449
  %3583 = vmatpush1.bf16.msra.mxu0 %v2448
  %3584 = vmatprep.subr.bf16.mxu0 %v2453
  %3585 = vmatpush1.bf16.msra.mxu0 %v2452
  %3586 = vmatprep.subr.bf16.mxu0 %v2457
  %3587 = vmatpush1.bf16.msra.mxu0 %v2456
  %3588 = vmatprep.subr.bf16.mxu0 %v2461
  %3589 = vmatpush1.bf16.msra.mxu0 %v2460
  %3590 = vmatprep.subr.bf16.mxu0 %v2465
  %3591 = vmatpush1.bf16.msra.mxu0 %v2464
  %3592 = vmatprep.subr.bf16.mxu0 %v2469
  %3593 = vmatpush1.bf16.msra.mxu0 %v2468
  %3594 = vmatprep.subr.bf16.mxu0 %v2473
  %3595 = vmatpush1.bf16.msra.mxu0 %v2472
  %3596 = vmatprep.mubr.bf16.mxu0 %v649
  %3597 = vmatmul.mubr.bf16.gmra.mrb[0].mxu0 %v648
  %v3598 = vpop.f32.mrb[0].mxu0
  %v3599 = vadd.f32 %v604, %v3598
  %v3600 = vpop.f32.mrb[0].mxu0
  %v3601 = vadd.f32 %v608, %v3600
  %v3602 = vpop.f32.mrb[0].mxu0
  %v3603 = vpop.f32.mrb[0].mxu0
  %3604 = vdwg.mxu0
  %3605 = vmatprep.subr.bf16.mxu0 %v2477
  %3606 = vmatpush1.bf16.msra.mxu0 %v2476
  %3607 = vmatprep.subr.bf16.mxu0 %v2481
  %3608 = vmatpush1.bf16.msra.mxu0 %v2480
  %3609 = vmatprep.subr.bf16.mxu0 %v2485
  %3610 = vmatpush1.bf16.msra.mxu0 %v2484
  %3611 = vmatprep.subr.bf16.mxu0 %v2489
  %3612 = vmatpush1.bf16.msra.mxu0 %v2488
  %3613 = vmatprep.subr.bf16.mxu0 %v2493
  %3614 = vmatpush1.bf16.msra.mxu0 %v2492
  %3615 = vmatprep.subr.bf16.mxu0 %v2497
  %3616 = vmatpush1.bf16.msra.mxu0 %v2496
  %3617 = vmatprep.subr.bf16.mxu0 %v2501
  %3618 = vmatpush1.bf16.msra.mxu0 %v2500
  %3619 = vmatprep.subr.bf16.mxu0 %v2505
  %3620 = vmatpush1.bf16.msra.mxu0 %v2504
  %3621 = vmatprep.subr.bf16.mxu0 %v2509
  %3622 = vmatpush1.bf16.msra.mxu0 %v2508
  %3623 = vmatprep.subr.bf16.mxu0 %v2513
  %3624 = vmatpush1.bf16.msra.mxu0 %v2512
  %3625 = vmatprep.subr.bf16.mxu0 %v2517
  %3626 = vmatpush1.bf16.msra.mxu0 %v2516
  %3627 = vmatprep.subr.bf16.mxu0 %v2521
  %3628 = vmatpush1.bf16.msra.mxu0 %v2520
  %3629 = vmatprep.subr.bf16.mxu0 %v2525
  %3630 = vmatpush1.bf16.msra.mxu0 %v2524
  %3631 = vmatprep.subr.bf16.mxu0 %v2529
  %3632 = vmatpush1.bf16.msra.mxu0 %v2528
  %3633 = vmatprep.subr.bf16.mxu0 %v2533
  %3634 = vmatpush1.bf16.msra.mxu0 %v2532
  %3635 = vmatprep.subr.bf16.mxu0 %v2537
  %3636 = vmatpush1.bf16.msra.mxu0 %v2536
  %3637 = vmatprep.mubr.bf16.mxu0 %v651
  %3638 = vmatmul.mubr.bf16.gmra.mrb[0].mxu0 %v650
  %v3639 = vpop.f32.mrb[0].mxu0
  %v3640 = vadd.f32 %v3599, %v3639
  %v3641 = vpop.f32.mrb[0].mxu0
  %v3642 = vadd.f32 %v3601, %v3641
  %v3643 = vpop.f32.mrb[0].mxu0
  %v3644 = vpop.f32.mrb[0].mxu0
  %3645 = vdwg.mxu0
  %3646 = vmatprep.subr.bf16.mxu0 %v2541
  %3647 = vmatpush1.bf16.msra.mxu0 %v2540
  %3648 = vmatprep.subr.bf16.mxu0 %v2545
  %3649 = vmatpush1.bf16.msra.mxu0 %v2544
  %3650 = vmatprep.subr.bf16.mxu0 %v2549
  %3651 = vmatpush1.bf16.msra.mxu0 %v2548
  %3652 = vmatprep.subr.bf16.mxu0 %v2553
  %3653 = vmatpush1.bf16.msra.mxu0 %v2552
  %3654 = vmatprep.subr.bf16.mxu0 %v2557
  %3655 = vmatpush1.bf16.msra.mxu0 %v2556
  %3656 = vmatprep.subr.bf16.mxu0 %v2561
  %3657 = vmatpush1.bf16.msra.mxu0 %v2560
  %3658 = vmatprep.subr.bf16.mxu0 %v2565
  %3659 = vmatpush1.bf16.msra.mxu0 %v2564
  %3660 = vmatprep.subr.bf16.mxu0 %v2569
  %3661 = vmatpush1.bf16.msra.mxu0 %v2568
  %3662 = vmatprep.subr.bf16.mxu0 %v2573
  %3663 = vmatpush1.bf16.msra.mxu0 %v2572
  %3664 = vmatprep.subr.bf16.mxu0 %v2577
  %3665 = vmatpush1.bf16.msra.mxu0 %v2576
  %3666 = vmatprep.subr.bf16.mxu0 %v2581
  %3667 = vmatpush1.bf16.msra.mxu0 %v2580
  %3668 = vmatprep.subr.bf16.mxu0 %v2585
  %3669 = vmatpush1.bf16.msra.mxu0 %v2584
  %3670 = vmatprep.subr.bf16.mxu0 %v2589
  %3671 = vmatpush1.bf16.msra.mxu0 %v2588
  %3672 = vmatprep.subr.bf16.mxu0 %v2593
  %3673 = vmatpush1.bf16.msra.mxu0 %v2592
  %3674 = vmatprep.subr.bf16.mxu0 %v2597
  %3675 = vmatpush1.bf16.msra.mxu0 %v2596
  %3676 = vmatprep.subr.bf16.mxu0 %v2601
  %3677 = vmatpush1.bf16.msra.mxu0 %v2600
  %3678 = vmatprep.mubr.bf16.mxu0 %v653
  %3679 = vmatmul.mubr.bf16.gmra.mrb[0].mxu0 %v652
  %v3680 = vpop.f32.mrb[0].mxu0
  %v3681 = vadd.f32 %v3640, %v3680
  %v3682 = vpop.f32.mrb[0].mxu0
  %v3683 = vadd.f32 %v3642, %v3682
  %v3684 = vpop.f32.mrb[0].mxu0
  %v3685 = vpop.f32.mrb[0].mxu0
  %3686 = vdwg.mxu0
  %3687 = vmatprep.subr.bf16.mxu0 %v2605
  %3688 = vmatpush1.bf16.msra.mxu0 %v2604
  %3689 = vmatprep.subr.bf16.mxu0 %v2609
  %3690 = vmatpush1.bf16.msra.mxu0 %v2608
  %3691 = vmatprep.subr.bf16.mxu0 %v2613
  %3692 = vmatpush1.bf16.msra.mxu0 %v2612
  %3693 = vmatprep.subr.bf16.mxu0 %v2617
  %3694 = vmatpush1.bf16.msra.mxu0 %v2616
  %3695 = vmatprep.subr.bf16.mxu0 %v2621
  %3696 = vmatpush1.bf16.msra.mxu0 %v2620
  %3697 = vmatprep.subr.bf16.mxu0 %v2625
  %3698 = vmatpush1.bf16.msra.mxu0 %v2624
  %3699 = vmatprep.subr.bf16.mxu0 %v2629
  %3700 = vmatpush1.bf16.msra.mxu0 %v2628
  %3701 = vmatprep.subr.bf16.mxu0 %v2633
  %3702 = vmatpush1.bf16.msra.mxu0 %v2632
  %3703 = vmatprep.subr.bf16.mxu0 %v2637
  %3704 = vmatpush1.bf16.msra.mxu0 %v2636
  %3705 = vmatprep.subr.bf16.mxu0 %v2641
  %3706 = vmatpush1.bf16.msra.mxu0 %v2640
  %3707 = vmatprep.subr.bf16.mxu0 %v2645
  %3708 = vmatpush1.bf16.msra.mxu0 %v2644
  %3709 = vmatprep.subr.bf16.mxu0 %v2649
  %3710 = vmatpush1.bf16.msra.mxu0 %v2648
  %3711 = vmatprep.subr.bf16.mxu0 %v2653
  %3712 = vmatpush1.bf16.msra.mxu0 %v2652
  %3713 = vmatprep.subr.bf16.mxu0 %v2657
  %3714 = vmatpush1.bf16.msra.mxu0 %v2656
  %3715 = vmatprep.subr.bf16.mxu0 %v2661
  %3716 = vmatpush1.bf16.msra.mxu0 %v2660
  %3717 = vmatprep.subr.bf16.mxu0 %v2665
  %3718 = vmatpush1.bf16.msra.mxu0 %v2664
  %3719 = vmatprep.mubr.bf16.mxu0 %v655
  %3720 = vmatmul.mubr.bf16.gmra.mrb[0].mxu0 %v654
  %v3721 = vpop.f32.mrb[0].mxu0
  %v3722 = vadd.f32 %v3681, %v3721
  %v3723 = vpop.f32.mrb[0].mxu0
  %v3724 = vadd.f32 %v3683, %v3723
  %v3725 = vpop.f32.mrb[0].mxu0
  %v3726 = vpop.f32.mrb[0].mxu0
  %3727 = vdwg.mxu0
  %3728 = vmatprep.subr.bf16.mxu0 %v2669
  %3729 = vmatpush1.bf16.msra.mxu0 %v2668
  %3730 = vmatprep.subr.bf16.mxu0 %v2673
  %3731 = vmatpush1.bf16.msra.mxu0 %v2672
  %3732 = vmatprep.subr.bf16.mxu0 %v2677
  %3733 = vmatpush1.bf16.msra.mxu0 %v2676
  %3734 = vmatprep.subr.bf16.mxu0 %v2681
  %3735 = vmatpush1.bf16.msra.mxu0 %v2680
  %3736 = vmatprep.subr.bf16.mxu0 %v2685
  %3737 = vmatpush1.bf16.msra.mxu0 %v2684
  %3738 = vmatprep.subr.bf16.mxu0 %v2689
  %3739 = vmatpush1.bf16.msra.mxu0 %v2688
  %3740 = vmatprep.subr.bf16.mxu0 %v2693
  %3741 = vmatpush1.bf16.msra.mxu0 %v2692
  %3742 = vmatprep.subr.bf16.mxu0 %v2697
  %3743 = vmatpush1.bf16.msra.mxu0 %v2696
  %3744 = vmatprep.subr.bf16.mxu0 %v2701
  %3745 = vmatpush1.bf16.msra.mxu0 %v2700
  %3746 = vmatprep.subr.bf16.mxu0 %v2705
  %3747 = vmatpush1.bf16.msra.mxu0 %v2704
  %3748 = vmatprep.subr.bf16.mxu0 %v2709
  %3749 = vmatpush1.bf16.msra.mxu0 %v2708
  %3750 = vmatprep.subr.bf16.mxu0 %v2713
  %3751 = vmatpush1.bf16.msra.mxu0 %v2712
  %3752 = vmatprep.subr.bf16.mxu0 %v2717
  %3753 = vmatpush1.bf16.msra.mxu0 %v2716
  %3754 = vmatprep.subr.bf16.mxu0 %v2721
  %3755 = vmatpush1.bf16.msra.mxu0 %v2720
  %3756 = vmatprep.subr.bf16.mxu0 %v2725
  %3757 = vmatpush1.bf16.msra.mxu0 %v2724
  %3758 = vmatprep.subr.bf16.mxu0 %v2729
  %3759 = vmatpush1.bf16.msra.mxu0 %v2728
  %3760 = vmatprep.mubr.bf16.mxu0 %v657
  %3761 = vmatmul.mubr.bf16.gmra.mrb[0].mxu0 %v656
  %v3762 = vpop.f32.mrb[0].mxu0
  %v3763 = vadd.f32 %v3722, %v3762
  %v3764 = vpop.f32.mrb[0].mxu0
  %v3765 = vadd.f32 %v3724, %v3764
  %v3766 = vpop.f32.mrb[0].mxu0
  %v3767 = vpop.f32.mrb[0].mxu0
  %3768 = vdwg.mxu0
  %3769 = vmatprep.subr.bf16.mxu0 %v2733
  %3770 = vmatpush1.bf16.msra.mxu0 %v2732
  %3771 = vmatprep.subr.bf16.mxu0 %v2737
  %3772 = vmatpush1.bf16.msra.mxu0 %v2736
  %3773 = vmatprep.subr.bf16.mxu0 %v2741
  %3774 = vmatpush1.bf16.msra.mxu0 %v2740
  %3775 = vmatprep.subr.bf16.mxu0 %v2745
  %3776 = vmatpush1.bf16.msra.mxu0 %v2744
  %3777 = vmatprep.subr.bf16.mxu0 %v2749
  %3778 = vmatpush1.bf16.msra.mxu0 %v2748
  %3779 = vmatprep.subr.bf16.mxu0 %v2753
  %3780 = vmatpush1.bf16.msra.mxu0 %v2752
  %3781 = vmatprep.subr.bf16.mxu0 %v2757
  %3782 = vmatpush1.bf16.msra.mxu0 %v2756
  %3783 = vmatprep.subr.bf16.mxu0 %v2761
  %3784 = vmatpush1.bf16.msra.mxu0 %v2760
  %3785 = vmatprep.subr.bf16.mxu0 %v2765
  %3786 = vmatpush1.bf16.msra.mxu0 %v2764
  %3787 = vmatprep.subr.bf16.mxu0 %v2769
  %3788 = vmatpush1.bf16.msra.mxu0 %v2768
  %3789 = vmatprep.subr.bf16.mxu0 %v2773
  %3790 = vmatpush1.bf16.msra.mxu0 %v2772
  %3791 = vmatprep.subr.bf16.mxu0 %v2777
  %3792 = vmatpush1.bf16.msra.mxu0 %v2776
  %3793 = vmatprep.subr.bf16.mxu0 %v2781
  %3794 = vmatpush1.bf16.msra.mxu0 %v2780
  %3795 = vmatprep.subr.bf16.mxu0 %v2785
  %3796 = vmatpush1.bf16.msra.mxu0 %v2784
  %3797 = vmatprep.subr.bf16.mxu0 %v2789
  %3798 = vmatpush1.bf16.msra.mxu0 %v2788
  %3799 = vmatprep.subr.bf16.mxu0 %v2793
  %3800 = vmatpush1.bf16.msra.mxu0 %v2792
  %3801 = vmatprep.mubr.bf16.mxu0 %v659
  %3802 = vmatmul.mubr.bf16.gmra.mrb[0].mxu0 %v658
  %v3803 = vpop.f32.mrb[0].mxu0
  %v3804 = vadd.f32 %v3763, %v3803
  %v3805 = vpop.f32.mrb[0].mxu0
  %v3806 = vadd.f32 %v3765, %v3805
  %v3807 = vpop.f32.mrb[0].mxu0
  %v3808 = vpop.f32.mrb[0].mxu0
  %3809 = vdwg.mxu0
  %3810 = vmatprep.subr.bf16.mxu0 %v2797
  %3811 = vmatpush1.bf16.msra.mxu0 %v2796
  %3812 = vmatprep.subr.bf16.mxu0 %v2801
  %3813 = vmatpush1.bf16.msra.mxu0 %v2800
  %3814 = vmatprep.subr.bf16.mxu0 %v2805
  %3815 = vmatpush1.bf16.msra.mxu0 %v2804
  %3816 = vmatprep.subr.bf16.mxu0 %v2809
  %3817 = vmatpush1.bf16.msra.mxu0 %v2808
  %3818 = vmatprep.subr.bf16.mxu0 %v2813
  %3819 = vmatpush1.bf16.msra.mxu0 %v2812
  %3820 = vmatprep.subr.bf16.mxu0 %v2817
  %3821 = vmatpush1.bf16.msra.mxu0 %v2816
  %3822 = vmatprep.subr.bf16.mxu0 %v2821
  %3823 = vmatpush1.bf16.msra.mxu0 %v2820
  %3824 = vmatprep.subr.bf16.mxu0 %v2825
  %3825 = vmatpush1.bf16.msra.mxu0 %v2824
  %3826 = vmatprep.subr.bf16.mxu0 %v2829
  %3827 = vmatpush1.bf16.msra.mxu0 %v2828
  %3828 = vmatprep.subr.bf16.mxu0 %v2833
  %3829 = vmatpush1.bf16.msra.mxu0 %v2832
  %3830 = vmatprep.subr.bf16.mxu0 %v2837
  %3831 = vmatpush1.bf16.msra.mxu0 %v2836
  %3832 = vmatprep.subr.bf16.mxu0 %v2841
  %3833 = vmatpush1.bf16.msra.mxu0 %v2840
  %3834 = vmatprep.subr.bf16.mxu0 %v2845
  %3835 = vmatpush1.bf16.msra.mxu0 %v2844
  %3836 = vmatprep.subr.bf16.mxu0 %v2849
  %3837 = vmatpush1.bf16.msra.mxu0 %v2848
  %3838 = vmatprep.subr.bf16.mxu0 %v2853
  %3839 = vmatpush1.bf16.msra.mxu0 %v2852
  %3840 = vmatprep.subr.bf16.mxu0 %v2857
  %3841 = vmatpush1.bf16.msra.mxu0 %v2856
  %3842 = vmatprep.mubr.bf16.mxu0 %v661
  %3843 = vmatmul.mubr.bf16.gmra.mrb[0].mxu0 %v660
  %v3844 = vpop.f32.mrb[0].mxu0
  %v3845 = vadd.f32 %v3804, %v3844
  %v3846 = vpop.f32.mrb[0].mxu0
  %v3847 = vadd.f32 %v3806, %v3846
  %v3848 = vpop.f32.mrb[0].mxu0
  %v3849 = vpop.f32.mrb[0].mxu0
  %3850 = vdwg.mxu0
  %3851 = vmatprep.subr.bf16.mxu0 %v2861
  %3852 = vmatpush1.bf16.msra.mxu0 %v2860
  %3853 = vmatprep.subr.bf16.mxu0 %v2865
  %3854 = vmatpush1.bf16.msra.mxu0 %v2864
  %3855 = vmatprep.subr.bf16.mxu0 %v2869
  %3856 = vmatpush1.bf16.msra.mxu0 %v2868
  %3857 = vmatprep.subr.bf16.mxu0 %v2873
  %3858 = vmatpush1.bf16.msra.mxu0 %v2872
  %3859 = vmatprep.subr.bf16.mxu0 %v2877
  %3860 = vmatpush1.bf16.msra.mxu0 %v2876
  %3861 = vmatprep.subr.bf16.mxu0 %v2881
  %3862 = vmatpush1.bf16.msra.mxu0 %v2880
  %3863 = vmatprep.subr.bf16.mxu0 %v2885
  %3864 = vmatpush1.bf16.msra.mxu0 %v2884
  %3865 = vmatprep.subr.bf16.mxu0 %v2889
  %3866 = vmatpush1.bf16.msra.mxu0 %v2888
  %3867 = vmatprep.subr.bf16.mxu0 %v2893
  %3868 = vmatpush1.bf16.msra.mxu0 %v2892
  %3869 = vmatprep.subr.bf16.mxu0 %v2897
  %3870 = vmatpush1.bf16.msra.mxu0 %v2896
  %3871 = vmatprep.subr.bf16.mxu0 %v2901
  %3872 = vmatpush1.bf16.msra.mxu0 %v2900
  %3873 = vmatprep.subr.bf16.mxu0 %v2905
  %3874 = vmatpush1.bf16.msra.mxu0 %v2904
  %3875 = vmatprep.subr.bf16.mxu0 %v2909
  %3876 = vmatpush1.bf16.msra.mxu0 %v2908
  %3877 = vmatprep.subr.bf16.mxu0 %v2913
  %3878 = vmatpush1.bf16.msra.mxu0 %v2912
  %3879 = vmatprep.subr.bf16.mxu0 %v2917
  %3880 = vmatpush1.bf16.msra.mxu0 %v2916
  %3881 = vmatprep.subr.bf16.mxu0 %v2921
  %3882 = vmatpush1.bf16.msra.mxu0 %v2920
  %3883 = vmatprep.mubr.bf16.mxu0 %v663
  %3884 = vmatmul.mubr.bf16.gmra.mrb[0].mxu0 %v662
  %v3885 = vpop.f32.mrb[0].mxu0
  %v3886 = vadd.f32 %v3845, %v3885
  %v3887 = vpop.f32.mrb[0].mxu0
  %v3888 = vadd.f32 %v3847, %v3887
  %v3889 = vpop.f32.mrb[0].mxu0
  %v3890 = vpop.f32.mrb[0].mxu0
  %3891 = vdwg.mxu0
  %3892 = vmatprep.subr.bf16.mxu0 %v2925
  %3893 = vmatpush1.bf16.msra.mxu0 %v2924
  %3894 = vmatprep.subr.bf16.mxu0 %v2929
  %3895 = vmatpush1.bf16.msra.mxu0 %v2928
  %3896 = vmatprep.subr.bf16.mxu0 %v2933
  %3897 = vmatpush1.bf16.msra.mxu0 %v2932
  %3898 = vmatprep.subr.bf16.mxu0 %v2937
  %3899 = vmatpush1.bf16.msra.mxu0 %v2936
  %3900 = vmatprep.subr.bf16.mxu0 %v2941
  %3901 = vmatpush1.bf16.msra.mxu0 %v2940
  %3902 = vmatprep.subr.bf16.mxu0 %v2945
  %3903 = vmatpush1.bf16.msra.mxu0 %v2944
  %3904 = vmatprep.subr.bf16.mxu0 %v2949
  %3905 = vmatpush1.bf16.msra.mxu0 %v2948
  %3906 = vmatprep.subr.bf16.mxu0 %v2953
  %3907 = vmatpush1.bf16.msra.mxu0 %v2952
  %3908 = vmatprep.subr.bf16.mxu0 %v2957
  %3909 = vmatpush1.bf16.msra.mxu0 %v2956
  %3910 = vmatprep.subr.bf16.mxu0 %v2961
  %3911 = vmatpush1.bf16.msra.mxu0 %v2960
  %3912 = vmatprep.subr.bf16.mxu0 %v2965
  %3913 = vmatpush1.bf16.msra.mxu0 %v2964
  %3914 = vmatprep.subr.bf16.mxu0 %v2969
  %3915 = vmatpush1.bf16.msra.mxu0 %v2968
  %3916 = vmatprep.subr.bf16.mxu0 %v2973
  %3917 = vmatpush1.bf16.msra.mxu0 %v2972
  %3918 = vmatprep.subr.bf16.mxu0 %v2977
  %3919 = vmatpush1.bf16.msra.mxu0 %v2976
  %3920 = vmatprep.subr.bf16.mxu0 %v2981
  %3921 = vmatpush1.bf16.msra.mxu0 %v2980
  %3922 = vmatprep.subr.bf16.mxu0 %v2985
  %3923 = vmatpush1.bf16.msra.mxu0 %v2984
  %3924 = vmatprep.mubr.bf16.mxu0 %v665
  %3925 = vmatmul.mubr.bf16.gmra.mrb[0].mxu0 %v664
  %v3926 = vpop.f32.mrb[0].mxu0
  %v3927 = vadd.f32 %v3886, %v3926
  %v3928 = vpop.f32.mrb[0].mxu0
  %v3929 = vadd.f32 %v3888, %v3928
  %v3930 = vpop.f32.mrb[0].mxu0
  %v3931 = vpop.f32.mrb[0].mxu0
  %3932 = vdwg.mxu0
  %3933 = vmatprep.subr.bf16.mxu0 %v2415
  %3934 = vmatpush1.bf16.msra.mxu0 %v2414
  %3935 = vmatprep.subr.bf16.mxu0 %v2419
  %3936 = vmatpush1.bf16.msra.mxu0 %v2418
  %3937 = vmatprep.subr.bf16.mxu0 %v2423
  %3938 = vmatpush1.bf16.msra.mxu0 %v2422
  %3939 = vmatprep.subr.bf16.mxu0 %v2427
  %3940 = vmatpush1.bf16.msra.mxu0 %v2426
  %3941 = vmatprep.subr.bf16.mxu0 %v2431
  %3942 = vmatpush1.bf16.msra.mxu0 %v2430
  %3943 = vmatprep.subr.bf16.mxu0 %v2435
  %3944 = vmatpush1.bf16.msra.mxu0 %v2434
  %3945 = vmatprep.subr.bf16.mxu0 %v2439
  %3946 = vmatpush1.bf16.msra.mxu0 %v2438
  %3947 = vmatprep.subr.bf16.mxu0 %v2443
  %3948 = vmatpush1.bf16.msra.mxu0 %v2442
  %3949 = vmatprep.subr.bf16.mxu0 %v2447
  %3950 = vmatpush1.bf16.msra.mxu0 %v2446
  %3951 = vmatprep.subr.bf16.mxu0 %v2451
  %3952 = vmatpush1.bf16.msra.mxu0 %v2450
  %3953 = vmatprep.subr.bf16.mxu0 %v2455
  %3954 = vmatpush1.bf16.msra.mxu0 %v2454
  %3955 = vmatprep.subr.bf16.mxu0 %v2459
  %3956 = vmatpush1.bf16.msra.mxu0 %v2458
  %3957 = vmatprep.subr.bf16.mxu0 %v2463
  %3958 = vmatpush1.bf16.msra.mxu0 %v2462
  %3959 = vmatprep.subr.bf16.mxu0 %v2467
  %3960 = vmatpush1.bf16.msra.mxu0 %v2466
  %3961 = vmatprep.subr.bf16.mxu0 %v2471
  %3962 = vmatpush1.bf16.msra.mxu0 %v2470
  %3963 = vmatprep.subr.bf16.mxu0 %v2475
  %3964 = vmatpush1.bf16.msra.mxu0 %v2474
  %3965 = vmatprep.mubr.bf16.mxu0 %v649
  %3966 = vmatmul.mubr.bf16.gmra.mrb[0].mxu0 %v648
  %v3967 = vpop.f32.mrb[0].mxu0
  %v3968 = vadd.f32 %v612, %v3967
  %v3969 = vpop.f32.mrb[0].mxu0
  %v3970 = vadd.f32 %v616, %v3969
  %v3971 = vpop.f32.mrb[0].mxu0
  %v3972 = vpop.f32.mrb[0].mxu0
  %3973 = vdwg.mxu0
  %3974 = vmatprep.subr.bf16.mxu0 %v2479
  %3975 = vmatpush1.bf16.msra.mxu0 %v2478
  %3976 = vmatprep.subr.bf16.mxu0 %v2483
  %3977 = vmatpush1.bf16.msra.mxu0 %v2482
  %3978 = vmatprep.subr.bf16.mxu0 %v2487
  %3979 = vmatpush1.bf16.msra.mxu0 %v2486
  %3980 = vmatprep.subr.bf16.mxu0 %v2491
  %3981 = vmatpush1.bf16.msra.mxu0 %v2490
  %3982 = vmatprep.subr.bf16.mxu0 %v2495
  %3983 = vmatpush1.bf16.msra.mxu0 %v2494
  %3984 = vmatprep.subr.bf16.mxu0 %v2499
  %3985 = vmatpush1.bf16.msra.mxu0 %v2498
  %3986 = vmatprep.subr.bf16.mxu0 %v2503
  %3987 = vmatpush1.bf16.msra.mxu0 %v2502
  %3988 = vmatprep.subr.bf16.mxu0 %v2507
  %3989 = vmatpush1.bf16.msra.mxu0 %v2506
  %3990 = vmatprep.subr.bf16.mxu0 %v2511
  %3991 = vmatpush1.bf16.msra.mxu0 %v2510
  %3992 = vmatprep.subr.bf16.mxu0 %v2515
  %3993 = vmatpush1.bf16.msra.mxu0 %v2514
  %3994 = vmatprep.subr.bf16.mxu0 %v2519
  %3995 = vmatpush1.bf16.msra.mxu0 %v2518
  %3996 = vmatprep.subr.bf16.mxu0 %v2523
  %3997 = vmatpush1.bf16.msra.mxu0 %v2522
  %3998 = vmatprep.subr.bf16.mxu0 %v2527
  %3999 = vmatpush1.bf16.msra.mxu0 %v2526
  %4000 = vmatprep.subr.bf16.mxu0 %v2531
  %4001 = vmatpush1.bf16.msra.mxu0 %v2530
  %4002 = vmatprep.subr.bf16.mxu0 %v2535
  %4003 = vmatpush1.bf16.msra.mxu0 %v2534
  %4004 = vmatprep.subr.bf16.mxu0 %v2539
  %4005 = vmatpush1.bf16.msra.mxu0 %v2538
  %4006 = vmatprep.mubr.bf16.mxu0 %v651
  %4007 = vmatmul.mubr.bf16.gmra.mrb[0].mxu0 %v650
  %v4008 = vpop.f32.mrb[0].mxu0
  %v4009 = vadd.f32 %v3968, %v4008
  %v4010 = vpop.f32.mrb[0].mxu0
  %v4011 = vadd.f32 %v3970, %v4010
  %v4012 = vpop.f32.mrb[0].mxu0
  %v4013 = vpop.f32.mrb[0].mxu0
  %4014 = vdwg.mxu0
  %4015 = vmatprep.subr.bf16.mxu0 %v2543
  %4016 = vmatpush1.bf16.msra.mxu0 %v2542
  %4017 = vmatprep.subr.bf16.mxu0 %v2547
  %4018 = vmatpush1.bf16.msra.mxu0 %v2546
  %4019 = vmatprep.subr.bf16.mxu0 %v2551
  %4020 = vmatpush1.bf16.msra.mxu0 %v2550
  %4021 = vmatprep.subr.bf16.mxu0 %v2555
  %4022 = vmatpush1.bf16.msra.mxu0 %v2554
  %4023 = vmatprep.subr.bf16.mxu0 %v2559
  %4024 = vmatpush1.bf16.msra.mxu0 %v2558
  %4025 = vmatprep.subr.bf16.mxu0 %v2563
  %4026 = vmatpush1.bf16.msra.mxu0 %v2562
  %4027 = vmatprep.subr.bf16.mxu0 %v2567
  %4028 = vmatpush1.bf16.msra.mxu0 %v2566
  %4029 = vmatprep.subr.bf16.mxu0 %v2571
  %4030 = vmatpush1.bf16.msra.mxu0 %v2570
  %4031 = vmatprep.subr.bf16.mxu0 %v2575
  %4032 = vmatpush1.bf16.msra.mxu0 %v2574
  %4033 = vmatprep.subr.bf16.mxu0 %v2579
  %4034 = vmatpush1.bf16.msra.mxu0 %v2578
  %4035 = vmatprep.subr.bf16.mxu0 %v2583
  %4036 = vmatpush1.bf16.msra.mxu0 %v2582
  %4037 = vmatprep.subr.bf16.mxu0 %v2587
  %4038 = vmatpush1.bf16.msra.mxu0 %v2586
  %4039 = vmatprep.subr.bf16.mxu0 %v2591
  %4040 = vmatpush1.bf16.msra.mxu0 %v2590
  %4041 = vmatprep.subr.bf16.mxu0 %v2595
  %4042 = vmatpush1.bf16.msra.mxu0 %v2594
  %4043 = vmatprep.subr.bf16.mxu0 %v2599
  %4044 = vmatpush1.bf16.msra.mxu0 %v2598
  %4045 = vmatprep.subr.bf16.mxu0 %v2603
  %4046 = vmatpush1.bf16.msra.mxu0 %v2602
  %4047 = vmatprep.mubr.bf16.mxu0 %v653
  %4048 = vmatmul.mubr.bf16.gmra.mrb[0].mxu0 %v652
  %v4049 = vpop.f32.mrb[0].mxu0
  %v4050 = vadd.f32 %v4009, %v4049
  %v4051 = vpop.f32.mrb[0].mxu0
  %v4052 = vadd.f32 %v4011, %v4051
  %v4053 = vpop.f32.mrb[0].mxu0
  %v4054 = vpop.f32.mrb[0].mxu0
  %4055 = vdwg.mxu0
  %4056 = vmatprep.subr.bf16.mxu0 %v2607
  %4057 = vmatpush1.bf16.msra.mxu0 %v2606
  %4058 = vmatprep.subr.bf16.mxu0 %v2611
  %4059 = vmatpush1.bf16.msra.mxu0 %v2610
  %4060 = vmatprep.subr.bf16.mxu0 %v2615
  %4061 = vmatpush1.bf16.msra.mxu0 %v2614
  %4062 = vmatprep.subr.bf16.mxu0 %v2619
  %4063 = vmatpush1.bf16.msra.mxu0 %v2618
  %4064 = vmatprep.subr.bf16.mxu0 %v2623
  %4065 = vmatpush1.bf16.msra.mxu0 %v2622
  %4066 = vmatprep.subr.bf16.mxu0 %v2627
  %4067 = vmatpush1.bf16.msra.mxu0 %v2626
  %4068 = vmatprep.subr.bf16.mxu0 %v2631
  %4069 = vmatpush1.bf16.msra.mxu0 %v2630
  %4070 = vmatprep.subr.bf16.mxu0 %v2635
  %4071 = vmatpush1.bf16.msra.mxu0 %v2634
  %4072 = vmatprep.subr.bf16.mxu0 %v2639
  %4073 = vmatpush1.bf16.msra.mxu0 %v2638
  %4074 = vmatprep.subr.bf16.mxu0 %v2643
  %4075 = vmatpush1.bf16.msra.mxu0 %v2642
  %4076 = vmatprep.subr.bf16.mxu0 %v2647
  %4077 = vmatpush1.bf16.msra.mxu0 %v2646
  %4078 = vmatprep.subr.bf16.mxu0 %v2651
  %4079 = vmatpush1.bf16.msra.mxu0 %v2650
  %4080 = vmatprep.subr.bf16.mxu0 %v2655
  %4081 = vmatpush1.bf16.msra.mxu0 %v2654
  %4082 = vmatprep.subr.bf16.mxu0 %v2659
  %4083 = vmatpush1.bf16.msra.mxu0 %v2658
  %4084 = vmatprep.subr.bf16.mxu0 %v2663
  %4085 = vmatpush1.bf16.msra.mxu0 %v2662
  %4086 = vmatprep.subr.bf16.mxu0 %v2667
  %4087 = vmatpush1.bf16.msra.mxu0 %v2666
  %4088 = vmatprep.mubr.bf16.mxu0 %v655
  %4089 = vmatmul.mubr.bf16.gmra.mrb[0].mxu0 %v654
  %v4090 = vpop.f32.mrb[0].mxu0
  %v4091 = vadd.f32 %v4050, %v4090
  %v4092 = vpop.f32.mrb[0].mxu0
  %v4093 = vadd.f32 %v4052, %v4092
  %v4094 = vpop.f32.mrb[0].mxu0
  %v4095 = vpop.f32.mrb[0].mxu0
  %4096 = vdwg.mxu0
  %4097 = vmatprep.subr.bf16.mxu0 %v2671
  %4098 = vmatpush1.bf16.msra.mxu0 %v2670
  %4099 = vmatprep.subr.bf16.mxu0 %v2675
  %4100 = vmatpush1.bf16.msra.mxu0 %v2674
  %4101 = vmatprep.subr.bf16.mxu0 %v2679
  %4102 = vmatpush1.bf16.msra.mxu0 %v2678
  %4103 = vmatprep.subr.bf16.mxu0 %v2683
  %4104 = vmatpush1.bf16.msra.mxu0 %v2682
  %4105 = vmatprep.subr.bf16.mxu0 %v2687
  %4106 = vmatpush1.bf16.msra.mxu0 %v2686
  %4107 = vmatprep.subr.bf16.mxu0 %v2691
  %4108 = vmatpush1.bf16.msra.mxu0 %v2690
  %4109 = vmatprep.subr.bf16.mxu0 %v2695
  %4110 = vmatpush1.bf16.msra.mxu0 %v2694
  %4111 = vmatprep.subr.bf16.mxu0 %v2699
  %4112 = vmatpush1.bf16.msra.mxu0 %v2698
  %4113 = vmatprep.subr.bf16.mxu0 %v2703
  %4114 = vmatpush1.bf16.msra.mxu0 %v2702
  %4115 = vmatprep.subr.bf16.mxu0 %v2707
  %4116 = vmatpush1.bf16.msra.mxu0 %v2706
  %4117 = vmatprep.subr.bf16.mxu0 %v2711
  %4118 = vmatpush1.bf16.msra.mxu0 %v2710
  %4119 = vmatprep.subr.bf16.mxu0 %v2715
  %4120 = vmatpush1.bf16.msra.mxu0 %v2714
  %4121 = vmatprep.subr.bf16.mxu0 %v2719
  %4122 = vmatpush1.bf16.msra.mxu0 %v2718
  %4123 = vmatprep.subr.bf16.mxu0 %v2723
  %4124 = vmatpush1.bf16.msra.mxu0 %v2722
  %4125 = vmatprep.subr.bf16.mxu0 %v2727
  %4126 = vmatpush1.bf16.msra.mxu0 %v2726
  %4127 = vmatprep.subr.bf16.mxu0 %v2731
  %4128 = vmatpush1.bf16.msra.mxu0 %v2730
  %4129 = vmatprep.mubr.bf16.mxu0 %v657
  %4130 = vmatmul.mubr.bf16.gmra.mrb[0].mxu0 %v656
  %v4131 = vpop.f32.mrb[0].mxu0
  %v4132 = vadd.f32 %v4091, %v4131
  %v4133 = vpop.f32.mrb[0].mxu0
  %v4134 = vadd.f32 %v4093, %v4133
  %v4135 = vpop.f32.mrb[0].mxu0
  %v4136 = vpop.f32.mrb[0].mxu0
  %4137 = vdwg.mxu0
  %4138 = vmatprep.subr.bf16.mxu0 %v2735
  %4139 = vmatpush1.bf16.msra.mxu0 %v2734
  %4140 = vmatprep.subr.bf16.mxu0 %v2739
  %4141 = vmatpush1.bf16.msra.mxu0 %v2738
  %4142 = vmatprep.subr.bf16.mxu0 %v2743
  %4143 = vmatpush1.bf16.msra.mxu0 %v2742
  %4144 = vmatprep.subr.bf16.mxu0 %v2747
  %4145 = vmatpush1.bf16.msra.mxu0 %v2746
  %4146 = vmatprep.subr.bf16.mxu0 %v2751
  %4147 = vmatpush1.bf16.msra.mxu0 %v2750
  %4148 = vmatprep.subr.bf16.mxu0 %v2755
  %4149 = vmatpush1.bf16.msra.mxu0 %v2754
  %4150 = vmatprep.subr.bf16.mxu0 %v2759
  %4151 = vmatpush1.bf16.msra.mxu0 %v2758
  %4152 = vmatprep.subr.bf16.mxu0 %v2763
  %4153 = vmatpush1.bf16.msra.mxu0 %v2762
  %4154 = vmatprep.subr.bf16.mxu0 %v2767
  %4155 = vmatpush1.bf16.msra.mxu0 %v2766
  %4156 = vmatprep.subr.bf16.mxu0 %v2771
  %4157 = vmatpush1.bf16.msra.mxu0 %v2770
  %4158 = vmatprep.subr.bf16.mxu0 %v2775
  %4159 = vmatpush1.bf16.msra.mxu0 %v2774
  %4160 = vmatprep.subr.bf16.mxu0 %v2779
  %4161 = vmatpush1.bf16.msra.mxu0 %v2778
  %4162 = vmatprep.subr.bf16.mxu0 %v2783
  %4163 = vmatpush1.bf16.msra.mxu0 %v2782
  %4164 = vmatprep.subr.bf16.mxu0 %v2787
  %4165 = vmatpush1.bf16.msra.mxu0 %v2786
  %4166 = vmatprep.subr.bf16.mxu0 %v2791
  %4167 = vmatpush1.bf16.msra.mxu0 %v2790
  %4168 = vmatprep.subr.bf16.mxu0 %v2795
  %4169 = vmatpush1.bf16.msra.mxu0 %v2794
  %4170 = vmatprep.mubr.bf16.mxu0 %v659
  %4171 = vmatmul.mubr.bf16.gmra.mrb[0].mxu0 %v658
  %v4172 = vpop.f32.mrb[0].mxu0
  %v4173 = vadd.f32 %v4132, %v4172
  %v4174 = vpop.f32.mrb[0].mxu0
  %v4175 = vadd.f32 %v4134, %v4174
  %v4176 = vpop.f32.mrb[0].mxu0
  %v4177 = vpop.f32.mrb[0].mxu0
  %4178 = vdwg.mxu0
  %4179 = vmatprep.subr.bf16.mxu0 %v2799
  %4180 = vmatpush1.bf16.msra.mxu0 %v2798
  %4181 = vmatprep.subr.bf16.mxu0 %v2803
  %4182 = vmatpush1.bf16.msra.mxu0 %v2802
  %4183 = vmatprep.subr.bf16.mxu0 %v2807
  %4184 = vmatpush1.bf16.msra.mxu0 %v2806
  %4185 = vmatprep.subr.bf16.mxu0 %v2811
  %4186 = vmatpush1.bf16.msra.mxu0 %v2810
  %4187 = vmatprep.subr.bf16.mxu0 %v2815
  %4188 = vmatpush1.bf16.msra.mxu0 %v2814
  %4189 = vmatprep.subr.bf16.mxu0 %v2819
  %4190 = vmatpush1.bf16.msra.mxu0 %v2818
  %4191 = vmatprep.subr.bf16.mxu0 %v2823
  %4192 = vmatpush1.bf16.msra.mxu0 %v2822
  %4193 = vmatprep.subr.bf16.mxu0 %v2827
  %4194 = vmatpush1.bf16.msra.mxu0 %v2826
  %4195 = vmatprep.subr.bf16.mxu0 %v2831
  %4196 = vmatpush1.bf16.msra.mxu0 %v2830
  %4197 = vmatprep.subr.bf16.mxu0 %v2835
  %4198 = vmatpush1.bf16.msra.mxu0 %v2834
  %4199 = vmatprep.subr.bf16.mxu0 %v2839
  %4200 = vmatpush1.bf16.msra.mxu0 %v2838
  %4201 = vmatprep.subr.bf16.mxu0 %v2843
  %4202 = vmatpush1.bf16.msra.mxu0 %v2842
  %4203 = vmatprep.subr.bf16.mxu0 %v2847
  %4204 = vmatpush1.bf16.msra.mxu0 %v2846
  %4205 = vmatprep.subr.bf16.mxu0 %v2851
  %4206 = vmatpush1.bf16.msra.mxu0 %v2850
  %4207 = vmatprep.subr.bf16.mxu0 %v2855
  %4208 = vmatpush1.bf16.msra.mxu0 %v2854
  %4209 = vmatprep.subr.bf16.mxu0 %v2859
  %4210 = vmatpush1.bf16.msra.mxu0 %v2858
  %4211 = vmatprep.mubr.bf16.mxu0 %v661
  %4212 = vmatmul.mubr.bf16.gmra.mrb[0].mxu0 %v660
  %v4213 = vpop.f32.mrb[0].mxu0
  %v4214 = vadd.f32 %v4173, %v4213
  %v4215 = vpop.f32.mrb[0].mxu0
  %v4216 = vadd.f32 %v4175, %v4215
  %v4217 = vpop.f32.mrb[0].mxu0
  %v4218 = vpop.f32.mrb[0].mxu0
  %4219 = vdwg.mxu0
  %4220 = vmatprep.subr.bf16.mxu0 %v2863
  %4221 = vmatpush1.bf16.msra.mxu0 %v2862
  %4222 = vmatprep.subr.bf16.mxu0 %v2867
  %4223 = vmatpush1.bf16.msra.mxu0 %v2866
  %4224 = vmatprep.subr.bf16.mxu0 %v2871
  %4225 = vmatpush1.bf16.msra.mxu0 %v2870
  %4226 = vmatprep.subr.bf16.mxu0 %v2875
  %4227 = vmatpush1.bf16.msra.mxu0 %v2874
  %4228 = vmatprep.subr.bf16.mxu0 %v2879
  %4229 = vmatpush1.bf16.msra.mxu0 %v2878
  %4230 = vmatprep.subr.bf16.mxu0 %v2883
  %4231 = vmatpush1.bf16.msra.mxu0 %v2882
  %4232 = vmatprep.subr.bf16.mxu0 %v2887
  %4233 = vmatpush1.bf16.msra.mxu0 %v2886
  %4234 = vmatprep.subr.bf16.mxu0 %v2891
  %4235 = vmatpush1.bf16.msra.mxu0 %v2890
  %4236 = vmatprep.subr.bf16.mxu0 %v2895
  %4237 = vmatpush1.bf16.msra.mxu0 %v2894
  %4238 = vmatprep.subr.bf16.mxu0 %v2899
  %4239 = vmatpush1.bf16.msra.mxu0 %v2898
  %4240 = vmatprep.subr.bf16.mxu0 %v2903
  %4241 = vmatpush1.bf16.msra.mxu0 %v2902
  %4242 = vmatprep.subr.bf16.mxu0 %v2907
  %4243 = vmatpush1.bf16.msra.mxu0 %v2906
  %4244 = vmatprep.subr.bf16.mxu0 %v2911
  %4245 = vmatpush1.bf16.msra.mxu0 %v2910
  %4246 = vmatprep.subr.bf16.mxu0 %v2915
  %4247 = vmatpush1.bf16.msra.mxu0 %v2914
  %4248 = vmatprep.subr.bf16.mxu0 %v2919
  %4249 = vmatpush1.bf16.msra.mxu0 %v2918
  %4250 = vmatprep.subr.bf16.mxu0 %v2923
  %4251 = vmatpush1.bf16.msra.mxu0 %v2922
  %4252 = vmatprep.mubr.bf16.mxu0 %v663
  %4253 = vmatmul.mubr.bf16.gmra.mrb[0].mxu0 %v662
  %v4254 = vpop.f32.mrb[0].mxu0
  %v4255 = vadd.f32 %v4214, %v4254
  %v4256 = vpop.f32.mrb[0].mxu0
  %v4257 = vadd.f32 %v4216, %v4256
  %v4258 = vpop.f32.mrb[0].mxu0
  %v4259 = vpop.f32.mrb[0].mxu0
  %4260 = vdwg.mxu0
  %4261 = vmatprep.subr.bf16.mxu0 %v2927
  %4262 = vmatpush1.bf16.msra.mxu0 %v2926
  %4263 = vmatprep.subr.bf16.mxu0 %v2931
  %4264 = vmatpush1.bf16.msra.mxu0 %v2930
  %4265 = vmatprep.subr.bf16.mxu0 %v2935
  %4266 = vmatpush1.bf16.msra.mxu0 %v2934
  %4267 = vmatprep.subr.bf16.mxu0 %v2939
  %4268 = vmatpush1.bf16.msra.mxu0 %v2938
  %4269 = vmatprep.subr.bf16.mxu0 %v2943
  %4270 = vmatpush1.bf16.msra.mxu0 %v2942
  %4271 = vmatprep.subr.bf16.mxu0 %v2947
  %4272 = vmatpush1.bf16.msra.mxu0 %v2946
  %4273 = vmatprep.subr.bf16.mxu0 %v2951
  %4274 = vmatpush1.bf16.msra.mxu0 %v2950
  %4275 = vmatprep.subr.bf16.mxu0 %v2955
  %4276 = vmatpush1.bf16.msra.mxu0 %v2954
  %4277 = vmatprep.subr.bf16.mxu0 %v2959
  %4278 = vmatpush1.bf16.msra.mxu0 %v2958
  %4279 = vmatprep.subr.bf16.mxu0 %v2963
  %4280 = vmatpush1.bf16.msra.mxu0 %v2962
  %4281 = vmatprep.subr.bf16.mxu0 %v2967
  %4282 = vmatpush1.bf16.msra.mxu0 %v2966
  %4283 = vmatprep.subr.bf16.mxu0 %v2971
  %4284 = vmatpush1.bf16.msra.mxu0 %v2970
  %4285 = vmatprep.subr.bf16.mxu0 %v2975
  %4286 = vmatpush1.bf16.msra.mxu0 %v2974
  %4287 = vmatprep.subr.bf16.mxu0 %v2979
  %4288 = vmatpush1.bf16.msra.mxu0 %v2978
  %4289 = vmatprep.subr.bf16.mxu0 %v2983
  %4290 = vmatpush1.bf16.msra.mxu0 %v2982
  %4291 = vmatprep.subr.bf16.mxu0 %v2987
  %4292 = vmatpush1.bf16.msra.mxu0 %v2986
  %4293 = vmatprep.mubr.bf16.mxu0 %v665
  %4294 = vmatmul.mubr.bf16.gmra.mrb[0].mxu0 %v664
  %v4295 = vpop.f32.mrb[0].mxu0
  %v4296 = vadd.f32 %v4255, %v4295
  %v4297 = vpop.f32.mrb[0].mxu0
  %v4298 = vadd.f32 %v4257, %v4297
  %v4299 = vpop.f32.mrb[0].mxu0
  %v4300 = vpop.f32.mrb[0].mxu0
  %4301 = vdwg.mxu0
  %v4302 = vmax.f32 %v3927, 0.0
  %v4303 = vmax.f32 %v3929, 0.0
  %v4304 = vmax.f32 %v4296, 0.0
  %v4305 = vmax.f32 %v4298, 0.0
  %v4306 = vpack.c.bf16 %v4302, %v4302
  %v4307 = vpack.c.bf16 %v4303, %v4303
  %v4308 = vpack.c.bf16 %v4304, %v4304
  %v4309 = vpack.c.bf16 %v4305, %v4305
  %v4314 = vunpack.c.l.b16 %v4306
  %v4315 = vunpack.c.l.b16 %v4307
  %v4316 = vunpack.c.l.b16 %v4308
  %v4317 = vunpack.c.l.b16 %v4309
  %v4318 = vpack.c.b16 %v4315, %v4314
  %v4319 = vpack.c.b16 %v4317, %v4316
  %4322 = vst [vmem:[%s3] sm:$0xff] %v4318
  %4323 = vst [vmem:[%s3 + $0x8] sm:$0xff] %v4319
  // Predicated region
  $region14: #{lst_encoder4_forward.23} parent=0 // pred_check
    _
  $region15: #{lst_encoder4_forward.23} parent=0 // pred_check_branch
    %4325 = sbr.rel (0) target = $region17
  $region16: #{lst_encoder4_forward.23} parent=0 // pred_region
    _
  $region17: #{lst_encoder4_forward.23} parent=0 // pred_fallthru
    _
  // Predicated region
  $region18: #{lst_encoder4_forward.23} parent=0 // pred_check
    _
  $region19: #{lst_encoder4_forward.23} parent=0 // pred_check_branch
    %4327 = sbr.rel (0) target = $region21
  $region20: #{lst_encoder4_forward.23} parent=0 // pred_region
    _
  $region21: #{lst_encoder4_forward.23} parent=0 // pred_fallthru
    _

</llo_original>
